<compile_context>
chip_gen: v7x
topology: tpu7x:2x2x1
jax: 0.10.0
libtpu: 0.0.40
codegen_flags: <defaults>
</compile_context>

<pallas_src>
import functools

import jax
import jax.numpy as jnp
from jax.experimental import pallas as pl
from jax.experimental.pallas import tpu as pltpu


_PAD_L = 8   # left halo width: interior starts at a sublane-aligned column
_PAD_R = 8   # right halo width (only column _PAD_L + W is ever read)


def _zero_halo(ref):
    """Zero only the halo border of a padded scratch buffer.

    The interior [1:H+1, _PAD_L:_PAD_L+W, :] is fully overwritten every grid
    step before it is read, so the border is all that ever needs clearing.
    """
    Hp, Ws, C = ref.shape
    zrow = jnp.zeros((1, Ws, C), ref.dtype)
    ref[0:1, :, :] = zrow                                   # top halo row
    ref[Hp - 1:Hp, :, :] = zrow                             # bottom halo row
    ref[:, 0:_PAD_L, :] = jnp.zeros((Hp, _PAD_L, C), ref.dtype)        # left
    ref[:, Ws - _PAD_R:Ws, :] = jnp.zeros((Hp, _PAD_R, C), ref.dtype)  # right


def _conv3x3_strip(src_ref, w_ref, b_ref, *, r, sh, W, relu):
    """Rows [r, r+sh) of a 3x3 'same' conv read from a padded bf16 scratch ref.

    src_ref: (H+2, W+16, Cin) bf16; interior at rows [1:H+1],
             cols [_PAD_L:_PAD_L+W]; halo border is zero.
    w_ref:   (3, 3*Cin, Cout) bf16  -> kx-fused path (one matmul per ky, K=3*Cin)
             (3, 3, Cin, Cout) bf16 -> per-tap path (thin 6-channel first layer)
    b_ref:   (1, Cout) f32
    Returns (sh, W, Cout) f32 with bias (+ optional ReLU) applied.
    """
    Cout = w_ref.shape[-1]
    c0 = _PAD_L - 1
    # Three width-shifted slabs, loaded once per strip and reused for every ky.
    xs = [src_ref[r:r + sh + 2, c0 + kx:c0 + kx + W, :] for kx in range(3)]

    acc = jnp.zeros((sh, W, Cout), jnp.float32)
    if len(w_ref.shape) == 3:
        # kx-fused im2col: K = 3*Cin, 3 MXU matmuls per strip instead of 9.
        # TODO(synk): on v5e (128-wide MXU) prefer 9 per-tap K=Cin dots and
        #             skip the lane-axis concat.
        shifted = jnp.concatenate(xs, axis=-1)              # (sh+2, W, 3*Cin)
        for ky in range(3):
            acc += jax.lax.dot_general(
                shifted[ky:ky + sh], w_ref[ky],
                dimension_numbers=(((2,), (0,)), ((), ())),
                preferred_element_type=jnp.float32)
    else:
        # Thin-channel layer (Cin=6): 9 small taps, still reusing xs.
        for ky in range(3):
            for kx in range(3):
                acc += jax.lax.dot_general(
                    xs[kx][ky:ky + sh], w_ref[ky, kx],
                    dimension_numbers=(((2,), (0,)), ((), ())),
                    preferred_element_type=jnp.float32)

    acc = acc + b_ref[0].reshape(1, 1, Cout)                # f32 epilogue
    if relu:
        acc = jnp.maximum(acc, 0.0)
    return acc


def _fused_net_kernel(x_ref, w1_ref, b1_ref, w2_ref, b2_ref, w3_ref, b3_ref,
                      w4_ref, b4_ref, out_ref, xpad_ref, padA_ref, padB_ref,
                      *, strip_h):
    """All four conv layers for one batch element; activations stay in VMEM."""
    H, W = out_ref.shape[1], out_ref.shape[2]
    L = _PAD_L

    # Cheap border-only zeroing (every iteration -> megacore-safe).
    _zero_halo(xpad_ref)
    _zero_halo(padA_ref)
    _zero_halo(padB_ref)

    # Padded input interior; single f32->bf16 cast at the write point.
    xpad_ref[1:H + 1, L:L + W, :] = x_ref[0].astype(jnp.bfloat16)

    strips = [(r, min(strip_h, H - r)) for r in range(0, H, strip_h)]

    # layer 1: 6 -> 64, ReLU            (xpad -> padA)
    for r, sh in strips:
        a = _conv3x3_strip(xpad_ref, w1_ref, b1_ref, r=r, sh=sh, W=W, relu=True)
        padA_ref[1 + r:1 + r + sh, L:L + W, :] = a.astype(jnp.bfloat16)

    # layer 2: 64 -> 128, ReLU          (padA -> padB)
    for r, sh in strips:
        a = _conv3x3_strip(padA_ref, w2_ref, b2_ref, r=r, sh=sh, W=W, relu=True)
        padB_ref[1 + r:1 + r + sh, L:L + W, :] = a.astype(jnp.bfloat16)

    # layer 3: 128 -> 64, ReLU          (padB -> padA, scratch reuse is safe:
    # layer 3 only reads padB, and layer 2 finished all strips already)
    for r, sh in strips:
        a = _conv3x3_strip(padB_ref, w3_ref, b3_ref, r=r, sh=sh, W=W, relu=True)
        padA_ref[1 + r:1 + r + sh, L:L + W, :] = a.astype(jnp.bfloat16)

    # layer 4: 64 -> 3, no ReLU         (padA -> out)
    for r, sh in strips:
        a = _conv3x3_strip(padA_ref, w4_ref, b4_ref, r=r, sh=sh, W=W, relu=False)
        out_ref[0, r:r + sh, :, :] = a.astype(out_ref.dtype)


def fused_stereo_net_nhwc(x_nhwc, params):
    """x_nhwc: (B, H, W, 6) f32. Returns (B, H, W, 3) f32 (all 4 layers fused)."""
    B, H, W, Cin = x_nhwc.shape
    assert Cin == 6
    (w1, b1), (w2, b2), (w3, b3), (w4, b4) = params

    # Pack weights into matmul-ready bf16 form (kx-major K axis matches the
    # xs[0]|xs[1]|xs[2] channel concat order in the kernel).
    w1p = w1.astype(jnp.bfloat16)                               # (3, 3, 6, 64)
    w2p = w2.reshape(3, 3 * 64, 128).astype(jnp.bfloat16)       # (3, 192, 128)
    w3p = w3.reshape(3, 3 * 128, 64).astype(jnp.bfloat16)       # (3, 384, 64)
    w4p = w4.reshape(3, 3 * 64, 3).astype(jnp.bfloat16)         # (3, 192, 3)
    b1p = b1.reshape(1, 64).astype(jnp.float32)
    b2p = b2.reshape(1, 128).astype(jnp.float32)
    b3p = b3.reshape(1, 64).astype(jnp.float32)
    b4p = b4.reshape(1, 3).astype(jnp.float32)

    Ws = W + _PAD_L + _PAD_R

    # Row-strip height: bounds the per-strip im2col slab / xs slabs / f32
    # accumulator (~2 KiB per row per unit W for the widest layer) to ~4 MiB
    # so kernel temporaries stay resolution-independent.
    per_row_tmp = max(W, 1) * 2048
    strip_h = max(8, min(H, (4 * 2 ** 20) // per_row_tmp))

    # Generation-aware-ish VMEM budget: estimate actual need and clamp.
    def rup(v, m):
        return (v + m - 1) // m * m

    lane = 128
    scratch_bytes = 3 * (H + 2) * rup(Ws, 8) * lane * 2          # bf16, lane-padded
    io_block_bytes = 2 * 2 * H * rup(W, 8) * lane * 4            # in+out, dbl-buffered
    weight_bytes = 2 * 2 * (3 * 3 * 6 * 64 + 3 * 192 * 128 + 3 * 384 * 64 + 3 * 192 * 3)
    tmp_bytes = 2 * (strip_h + 2) * per_row_tmp
    est = scratch_bytes + io_block_bytes + weight_bytes + tmp_bytes
    vmem_limit = int(max(48 * 2 ** 20, min(est * 3 // 2, 100 * 2 ** 20)))

    def img_spec(c):
        return pl.BlockSpec((1, H, W, c), lambda b: (b, 0, 0, 0))

    def full_spec(shape):
        nd = len(shape)
        return pl.BlockSpec(tuple(shape), lambda b, _nd=nd: (0,) * _nd)

    kernel = functools.partial(_fused_net_kernel, strip_h=strip_h)

    return pl.pallas_call(
        kernel,
        out_shape=jax.ShapeDtypeStruct((B, H, W, 3), jnp.float32),
        grid=(B,),
        in_specs=[
            img_spec(6),
            full_spec(w1p.shape), full_spec(b1p.shape),
            full_spec(w2p.shape), full_spec(b2p.shape),
            full_spec(w3p.shape), full_spec(b3p.shape),
            full_spec(w4p.shape), full_spec(b4p.shape),
        ],
        out_specs=img_spec(3),
        scratch_shapes=[
            pltpu.VMEM((H + 2, Ws, 6), jnp.bfloat16),    # padded input
            pltpu.VMEM((H + 2, Ws, 64), jnp.bfloat16),   # padded act (64 ch)
            pltpu.VMEM((H + 2, Ws, 128), jnp.bfloat16),  # padded act (128 ch)
        ],
        compiler_params=pltpu.CompilerParams(
            dimension_semantics=("parallel",),
            vmem_limit_bytes=vmem_limit),
    )(x_nhwc, w1p, b1p, w2p, b2p, w3p, b3p, w4p, b4p)


def init_params(key):
    """Deterministic params; shapes match the PyTorch module (stored HWIO)."""
    layer_dims = [(6, 64), (64, 128), (128, 64), (64, 3)]
    params = []
    for i, (cin, cout) in enumerate(layer_dims):
        kw, kb = jax.random.split(jax.random.fold_in(key, i))
        fan_in = cin * 9
        bound = 1.0 / jnp.sqrt(fan_in)
        w = jax.random.uniform(kw, (3, 3, cin, cout), jnp.float32, -bound, bound)
        b = jax.random.uniform(kb, (cout,), jnp.float32, -bound, bound)
        params.append((w, b))
    return params


@jax.jit
def stereo_net_forward(x_nchw, params):
    """Forward pass matching the PyTorch module. x_nchw: (B, 6, H, W) f32."""
    # Only the thin 6-ch input / 3-ch output cross the transpose boundary;
    # all fat intermediates stay inside the single fused kernel.
    x = jnp.transpose(x_nchw, (0, 2, 3, 1))      # NCHW -> NHWC
    y = fused_stereo_net_nhwc(x, params)
    return jnp.transpose(y, (0, 3, 1, 2))        # NHWC -> NCHW


def reference_forward(x_nchw, params):
    """Pure-JAX f32 reference (XLA conv) for correctness check."""
    x = jnp.transpose(x_nchw, (0, 2, 3, 1))
    dn = jax.lax.conv_dimension_numbers(x.shape, params[0][0].shape,
                                        ("NHWC", "HWIO", "NHWC"))
    for i, (w, b) in enumerate(params):
        x = jax.lax.conv_general_dilated(x, w, (1, 1), "SAME",
                                         dimension_numbers=dn) + b
        if i < 3:
            x = jnp.maximum(x, 0.0)
    return jnp.transpose(x, (0, 3, 1, 2))


if __name__ == "__main__":
    key = jax.random.PRNGKey(0)
    kx, kp = jax.random.split(key)

    # Stereo pair => 6 input channels, small spatial size.
    x = jax.random.normal(kx, (2, 6, 16, 16), jnp.float32)
    params = init_params(kp)

    out = stereo_net_forward(x, params)
    out = jax.block_until_ready(out)
    assert out.shape == (2, 3, 16, 16), out.shape

    # bf16 matmul operands with f32 accumulation across 4 layers -> relaxed tol.
    ref = reference_forward(x, params)
    assert jnp.allclose(out, ref, rtol=2e-2, atol=2e-2), (
        float(jnp.max(jnp.abs(out - ref))))

    print("KERNEL_OK")
</pallas_src>

<mosaic_0001>
module attributes {stable_mosaic.version = 11 : i64} {
  func.func @_fused_net_kernel(%arg0: i32, %arg1: memref<1x16x16x6xf32, #tpu.memory_space<vmem>>, %arg2: memref<3x3x6x64xbf16, #tpu.memory_space<vmem>>, %arg3: memref<1x64xf32, #tpu.memory_space<vmem>>, %arg4: memref<3x192x128xbf16, #tpu.memory_space<vmem>>, %arg5: memref<1x128xf32, #tpu.memory_space<vmem>>, %arg6: memref<3x384x64xbf16, #tpu.memory_space<vmem>>, %arg7: memref<1x64xf32, #tpu.memory_space<vmem>>, %arg8: memref<3x192x3xbf16, #tpu.memory_space<vmem>>, %arg9: memref<1x3xf32, #tpu.memory_space<vmem>>, %arg10: memref<1x16x16x3xf32, #tpu.memory_space<vmem>>, %arg11: memref<18x32x6xbf16, #tpu.memory_space<vmem>>, %arg12: memref<18x32x64xbf16, #tpu.memory_space<vmem>>, %arg13: memref<18x32x128xbf16, #tpu.memory_space<vmem>>) attributes {dimension_semantics = [#tpu.dimension_semantics<parallel>], iteration_bounds = array<i64: 2>, scalar_prefetch = 0 : i64, scratch_operands = 3 : i64, tpu.core_type = #tpu.core_type<tc>, window_params = [{transform_indices = @transform_0, window_bounds = array<i64: 1, 16, 16, 6>}, {pipeline_mode = #tpu.pipeline_mode<synchronous>, transform_indices = @transform_1, window_bounds = array<i64: 3, 3, 6, 64>}, {pipeline_mode = #tpu.pipeline_mode<synchronous>, transform_indices = @transform_2, window_bounds = array<i64: 1, 64>}, {pipeline_mode = #tpu.pipeline_mode<synchronous>, transform_indices = @transform_3, window_bounds = array<i64: 3, 192, 128>}, {pipeline_mode = #tpu.pipeline_mode<synchronous>, transform_indices = @transform_4, window_bounds = array<i64: 1, 128>}, {pipeline_mode = #tpu.pipeline_mode<synchronous>, transform_indices = @transform_5, window_bounds = array<i64: 3, 384, 64>}, {pipeline_mode = #tpu.pipeline_mode<synchronous>, transform_indices = @transform_6, window_bounds = array<i64: 1, 64>}, {pipeline_mode = #tpu.pipeline_mode<synchronous>, transform_indices = @transform_7, window_bounds = array<i64: 3, 192, 3>}, {pipeline_mode = #tpu.pipeline_mode<synchronous>, transform_indices = @transform_8, window_bounds = array<i64: 1, 3>}, {transform_indices = @transform_9, window_bounds = array<i64: 1, 16, 16, 3>}]} {
    %cst = arith.constant 0.000000e+00 : bf16
    %0 = vector.broadcast %cst : bf16 to vector<1x32x6xbf16>
    %c0 = arith.constant 0 : index
    %c0_0 = arith.constant 0 : index
    %c0_1 = arith.constant 0 : index
    %1 = vector.load %arg11[%c0, %c0_0, %c0_1] : memref<18x32x6xbf16, #tpu.memory_space<vmem>>, vector<1x32x6xbf16>
    tpu.vector_store %arg11[%c0, %c0_0, %c0_1], %0 {strides = array<i32>} : memref<18x32x6xbf16, #tpu.memory_space<vmem>>, vector<1x32x6xbf16>,
    %c17 = arith.constant 17 : index
    %c0_2 = arith.constant 0 : index
    %c0_3 = arith.constant 0 : index
    %2 = vector.load %arg11[%c17, %c0_2, %c0_3] : memref<18x32x6xbf16, #tpu.memory_space<vmem>>, vector<1x32x6xbf16>
    tpu.vector_store %arg11[%c17, %c0_2, %c0_3], %0 {strides = array<i32>} : memref<18x32x6xbf16, #tpu.memory_space<vmem>>, vector<1x32x6xbf16>,
    %cst_4 = arith.constant 0.000000e+00 : bf16
    %3 = vector.broadcast %cst_4 : bf16 to vector<18x8x6xbf16>
    %c0_5 = arith.constant 0 : index
    %c0_6 = arith.constant 0 : index
    %c0_7 = arith.constant 0 : index
    %4 = vector.load %arg11[%c0_5, %c0_6, %c0_7] : memref<18x32x6xbf16, #tpu.memory_space<vmem>>, vector<18x8x6xbf16>
    tpu.vector_store %arg11[%c0_5, %c0_6, %c0_7], %3 {strides = array<i32>} : memref<18x32x6xbf16, #tpu.memory_space<vmem>>, vector<18x8x6xbf16>,
    %cst_8 = arith.constant 0.000000e+00 : bf16
    %5 = vector.broadcast %cst_8 : bf16 to vector<18x8x6xbf16>
    %c0_9 = arith.constant 0 : index
    %c24 = arith.constant 24 : index
    %c0_10 = arith.constant 0 : index
    %6 = vector.load %arg11[%c0_9, %c24, %c0_10] : memref<18x32x6xbf16, #tpu.memory_space<vmem>>, vector<18x8x6xbf16>
    tpu.vector_store %arg11[%c0_9, %c24, %c0_10], %5 {strides = array<i32>} : memref<18x32x6xbf16, #tpu.memory_space<vmem>>, vector<18x8x6xbf16>,
    %cst_11 = arith.constant 0.000000e+00 : bf16
    %7 = vector.broadcast %cst_11 : bf16 to vector<1x32x64xbf16>
    %c0_12 = arith.constant 0 : index
    %c0_13 = arith.constant 0 : index
    %c0_14 = arith.constant 0 : index
    %8 = vector.load %arg12[%c0_12, %c0_13, %c0_14] : memref<18x32x64xbf16, #tpu.memory_space<vmem>>, vector<1x32x64xbf16>
    tpu.vector_store %arg12[%c0_12, %c0_13, %c0_14], %7 {strides = array<i32>} : memref<18x32x64xbf16, #tpu.memory_space<vmem>>, vector<1x32x64xbf16>,
    %c17_15 = arith.constant 17 : index
    %c0_16 = arith.constant 0 : index
    %c0_17 = arith.constant 0 : index
    %9 = vector.load %arg12[%c17_15, %c0_16, %c0_17] : memref<18x32x64xbf16, #tpu.memory_space<vmem>>, vector<1x32x64xbf16>
    tpu.vector_store %arg12[%c17_15, %c0_16, %c0_17], %7 {strides = array<i32>} : memref<18x32x64xbf16, #tpu.memory_space<vmem>>, vector<1x32x64xbf16>,
    %cst_18 = arith.constant 0.000000e+00 : bf16
    %10 = vector.broadcast %cst_18 : bf16 to vector<18x8x64xbf16>
    %c0_19 = arith.constant 0 : index
    %c0_20 = arith.constant 0 : index
    %c0_21 = arith.constant 0 : index
    %11 = vector.load %arg12[%c0_19, %c0_20, %c0_21] : memref<18x32x64xbf16, #tpu.memory_space<vmem>>, vector<18x8x64xbf16>
    tpu.vector_store %arg12[%c0_19, %c0_20, %c0_21], %10 {strides = array<i32>} : memref<18x32x64xbf16, #tpu.memory_space<vmem>>, vector<18x8x64xbf16>,
    %cst_22 = arith.constant 0.000000e+00 : bf16
    %12 = vector.broadcast %cst_22 : bf16 to vector<18x8x64xbf16>
    %c0_23 = arith.constant 0 : index
    %c24_24 = arith.constant 24 : index
    %c0_25 = arith.constant 0 : index
    %13 = vector.load %arg12[%c0_23, %c24_24, %c0_25] : memref<18x32x64xbf16, #tpu.memory_space<vmem>>, vector<18x8x64xbf16>
    tpu.vector_store %arg12[%c0_23, %c24_24, %c0_25], %12 {strides = array<i32>} : memref<18x32x64xbf16, #tpu.memory_space<vmem>>, vector<18x8x64xbf16>,
    %cst_26 = arith.constant 0.000000e+00 : bf16
    %14 = vector.broadcast %cst_26 : bf16 to vector<1x32x128xbf16>
    %c0_27 = arith.constant 0 : index
    %c0_28 = arith.constant 0 : index
    %c0_29 = arith.constant 0 : index
    %15 = vector.load %arg13[%c0_27, %c0_28, %c0_29] : memref<18x32x128xbf16, #tpu.memory_space<vmem>>, vector<1x32x128xbf16>
    tpu.vector_store %arg13[%c0_27, %c0_28, %c0_29], %14 {strides = array<i32>} : memref<18x32x128xbf16, #tpu.memory_space<vmem>>, vector<1x32x128xbf16>,
    %c17_30 = arith.constant 17 : index
    %c0_31 = arith.constant 0 : index
    %c0_32 = arith.constant 0 : index
    %16 = vector.load %arg13[%c17_30, %c0_31, %c0_32] : memref<18x32x128xbf16, #tpu.memory_space<vmem>>, vector<1x32x128xbf16>
    tpu.vector_store %arg13[%c17_30, %c0_31, %c0_32], %14 {strides = array<i32>} : memref<18x32x128xbf16, #tpu.memory_space<vmem>>, vector<1x32x128xbf16>,
    %cst_33 = arith.constant 0.000000e+00 : bf16
    %17 = vector.broadcast %cst_33 : bf16 to vector<18x8x128xbf16>
    %c0_34 = arith.constant 0 : index
    %c0_35 = arith.constant 0 : index
    %c0_36 = arith.constant 0 : index
    %18 = vector.load %arg13[%c0_34, %c0_35, %c0_36] : memref<18x32x128xbf16, #tpu.memory_space<vmem>>, vector<18x8x128xbf16>
    tpu.vector_store %arg13[%c0_34, %c0_35, %c0_36], %17 {strides = array<i32>} : memref<18x32x128xbf16, #tpu.memory_space<vmem>>, vector<18x8x128xbf16>,
    %cst_37 = arith.constant 0.000000e+00 : bf16
    %19 = vector.broadcast %cst_37 : bf16 to vector<18x8x128xbf16>
    %c0_38 = arith.constant 0 : index
    %c24_39 = arith.constant 24 : index
    %c0_40 = arith.constant 0 : index
    %20 = vector.load %arg13[%c0_38, %c24_39, %c0_40] : memref<18x32x128xbf16, #tpu.memory_space<vmem>>, vector<18x8x128xbf16>
    tpu.vector_store %arg13[%c0_38, %c24_39, %c0_40], %19 {strides = array<i32>} : memref<18x32x128xbf16, #tpu.memory_space<vmem>>, vector<18x8x128xbf16>,
    %c0_41 = arith.constant 0 : index
    %c0_42 = arith.constant 0 : index
    %c0_43 = arith.constant 0 : index
    %c0_44 = arith.constant 0 : index
    %21 = vector.load %arg1[%c0_41, %c0_42, %c0_43, %c0_44] : memref<1x16x16x6xf32, #tpu.memory_space<vmem>>, vector<1x16x16x6xf32>
    %22 = vector.shape_cast %21 : vector<1x16x16x6xf32> to vector<16x16x6xf32>
    %23 = arith.truncf %22 : vector<16x16x6xf32> to vector<16x16x6xbf16>
    %c1 = arith.constant 1 : index
    %c8 = arith.constant 8 : index
    %c0_45 = arith.constant 0 : index
    %24 = vector.load %arg11[%c1, %c8, %c0_45] : memref<18x32x6xbf16, #tpu.memory_space<vmem>>, vector<16x16x6xbf16>
    tpu.vector_store %arg11[%c1, %c8, %c0_45], %23 {strides = array<i32>} : memref<18x32x6xbf16, #tpu.memory_space<vmem>>, vector<16x16x6xbf16>,
    %c0_46 = arith.constant 0 : index
    %c7 = arith.constant 7 : index
    %c0_47 = arith.constant 0 : index
    %25 = vector.load %arg11[%c0_46, %c7, %c0_47] : memref<18x32x6xbf16, #tpu.memory_space<vmem>>, vector<18x16x6xbf16>
    %c0_48 = arith.constant 0 : index
    %c8_49 = arith.constant 8 : index
    %c0_50 = arith.constant 0 : index
    %26 = vector.load %arg11[%c0_48, %c8_49, %c0_50] : memref<18x32x6xbf16, #tpu.memory_space<vmem>>, vector<18x16x6xbf16>
    %c0_51 = arith.constant 0 : index
    %c9 = arith.constant 9 : index
    %c0_52 = arith.constant 0 : index
    %27 = vector.load %arg11[%c0_51, %c9, %c0_52] : memref<18x32x6xbf16, #tpu.memory_space<vmem>>, vector<18x16x6xbf16>
    %cst_53 = arith.constant 0.000000e+00 : f32
    %28 = vector.broadcast %cst_53 : f32 to vector<16x16x64xf32>
    %29 = vector.extract_strided_slice %25 {offsets = [0, 0, 0], sizes = [16, 16, 6], strides = [1, 1, 1]} : vector<18x16x6xbf16> to vector<16x16x6xbf16>
    %c0_54 = arith.constant 0 : index
    %c0_55 = arith.constant 0 : index
    %c0_56 = arith.constant 0 : index
    %c0_57 = arith.constant 0 : index
    %30 = vector.load %arg2[%c0_54, %c0_55, %c0_56, %c0_57] : memref<3x3x6x64xbf16, #tpu.memory_space<vmem>>, vector<1x1x6x64xbf16>
    %31 = vector.shape_cast %30 : vector<1x1x6x64xbf16> to vector<6x64xbf16>
    %cst_58 = arith.constant dense<0.000000e+00> : vector<16x16x64xf32>
    %32 = tpu.matmul %29, %31, %cst_58 {dimension_numbers = #tpu.dot_dimension_numbers<[2], [0], [0, 1], [1], [0, 0, 0, 1, 1, 1], [], []>} : vector<16x16x6xbf16>, vector<6x64xbf16>, vector<16x16x64xf32> -> vector<16x16x64xf32>
    %33 = arith.addf %28, %32 : vector<16x16x64xf32>
    %34 = vector.extract_strided_slice %26 {offsets = [0, 0, 0], sizes = [16, 16, 6], strides = [1, 1, 1]} : vector<18x16x6xbf16> to vector<16x16x6xbf16>
    %c0_59 = arith.constant 0 : index
    %c1_60 = arith.constant 1 : index
    %c0_61 = arith.constant 0 : index
    %c0_62 = arith.constant 0 : index
    %35 = vector.load %arg2[%c0_59, %c1_60, %c0_61, %c0_62] : memref<3x3x6x64xbf16, #tpu.memory_space<vmem>>, vector<1x1x6x64xbf16>
    %36 = vector.shape_cast %35 : vector<1x1x6x64xbf16> to vector<6x64xbf16>
    %cst_63 = arith.constant dense<0.000000e+00> : vector<16x16x64xf32>
    %37 = tpu.matmul %34, %36, %cst_63 {dimension_numbers = #tpu.dot_dimension_numbers<[2], [0], [0, 1], [1], [0, 0, 0, 1, 1, 1], [], []>} : vector<16x16x6xbf16>, vector<6x64xbf16>, vector<16x16x64xf32> -> vector<16x16x64xf32>
    %38 = arith.addf %33, %37 : vector<16x16x64xf32>
    %39 = vector.extract_strided_slice %27 {offsets = [0, 0, 0], sizes = [16, 16, 6], strides = [1, 1, 1]} : vector<18x16x6xbf16> to vector<16x16x6xbf16>
    %c0_64 = arith.constant 0 : index
    %c2 = arith.constant 2 : index
    %c0_65 = arith.constant 0 : index
    %c0_66 = arith.constant 0 : index
    %40 = vector.load %arg2[%c0_64, %c2, %c0_65, %c0_66] : memref<3x3x6x64xbf16, #tpu.memory_space<vmem>>, vector<1x1x6x64xbf16>
    %41 = vector.shape_cast %40 : vector<1x1x6x64xbf16> to vector<6x64xbf16>
    %cst_67 = arith.constant dense<0.000000e+00> : vector<16x16x64xf32>
    %42 = tpu.matmul %39, %41, %cst_67 {dimension_numbers = #tpu.dot_dimension_numbers<[2], [0], [0, 1], [1], [0, 0, 0, 1, 1, 1], [], []>} : vector<16x16x6xbf16>, vector<6x64xbf16>, vector<16x16x64xf32> -> vector<16x16x64xf32>
    %43 = arith.addf %38, %42 : vector<16x16x64xf32>
    %44 = vector.extract_strided_slice %25 {offsets = [1, 0, 0], sizes = [16, 16, 6], strides = [1, 1, 1]} : vector<18x16x6xbf16> to vector<16x16x6xbf16>
    %c1_68 = arith.constant 1 : index
    %c0_69 = arith.constant 0 : index
    %c0_70 = arith.constant 0 : index
    %c0_71 = arith.constant 0 : index
    %45 = vector.load %arg2[%c1_68, %c0_69, %c0_70, %c0_71] : memref<3x3x6x64xbf16, #tpu.memory_space<vmem>>, vector<1x1x6x64xbf16>
    %46 = vector.shape_cast %45 : vector<1x1x6x64xbf16> to vector<6x64xbf16>
    %cst_72 = arith.constant dense<0.000000e+00> : vector<16x16x64xf32>
    %47 = tpu.matmul %44, %46, %cst_72 {dimension_numbers = #tpu.dot_dimension_numbers<[2], [0], [0, 1], [1], [0, 0, 0, 1, 1, 1], [], []>} : vector<16x16x6xbf16>, vector<6x64xbf16>, vector<16x16x64xf32> -> vector<16x16x64xf32>
    %48 = arith.addf %43, %47 : vector<16x16x64xf32>
    %49 = vector.extract_strided_slice %26 {offsets = [1, 0, 0], sizes = [16, 16, 6], strides = [1, 1, 1]} : vector<18x16x6xbf16> to vector<16x16x6xbf16>
    %c1_73 = arith.constant 1 : index
    %c1_74 = arith.constant 1 : index
    %c0_75 = arith.constant 0 : index
    %c0_76 = arith.constant 0 : index
    %50 = vector.load %arg2[%c1_73, %c1_74, %c0_75, %c0_76] : memref<3x3x6x64xbf16, #tpu.memory_space<vmem>>, vector<1x1x6x64xbf16>
    %51 = vector.shape_cast %50 : vector<1x1x6x64xbf16> to vector<6x64xbf16>
    %cst_77 = arith.constant dense<0.000000e+00> : vector<16x16x64xf32>
    %52 = tpu.matmul %49, %51, %cst_77 {dimension_numbers = #tpu.dot_dimension_numbers<[2], [0], [0, 1], [1], [0, 0, 0, 1, 1, 1], [], []>} : vector<16x16x6xbf16>, vector<6x64xbf16>, vector<16x16x64xf32> -> vector<16x16x64xf32>
    %53 = arith.addf %48, %52 : vector<16x16x64xf32>
    %54 = vector.extract_strided_slice %27 {offsets = [1, 0, 0], sizes = [16, 16, 6], strides = [1, 1, 1]} : vector<18x16x6xbf16> to vector<16x16x6xbf16>
    %c1_78 = arith.constant 1 : index
    %c2_79 = arith.constant 2 : index
    %c0_80 = arith.constant 0 : index
    %c0_81 = arith.constant 0 : index
    %55 = vector.load %arg2[%c1_78, %c2_79, %c0_80, %c0_81] : memref<3x3x6x64xbf16, #tpu.memory_space<vmem>>, vector<1x1x6x64xbf16>
    %56 = vector.shape_cast %55 : vector<1x1x6x64xbf16> to vector<6x64xbf16>
    %cst_82 = arith.constant dense<0.000000e+00> : vector<16x16x64xf32>
    %57 = tpu.matmul %54, %56, %cst_82 {dimension_numbers = #tpu.dot_dimension_numbers<[2], [0], [0, 1], [1], [0, 0, 0, 1, 1, 1], [], []>} : vector<16x16x6xbf16>, vector<6x64xbf16>, vector<16x16x64xf32> -> vector<16x16x64xf32>
    %58 = arith.addf %53, %57 : vector<16x16x64xf32>
    %59 = vector.extract_strided_slice %25 {offsets = [2, 0, 0], sizes = [16, 16, 6], strides = [1, 1, 1]} : vector<18x16x6xbf16> to vector<16x16x6xbf16>
    %c2_83 = arith.constant 2 : index
    %c0_84 = arith.constant 0 : index
    %c0_85 = arith.constant 0 : index
    %c0_86 = arith.constant 0 : index
    %60 = vector.load %arg2[%c2_83, %c0_84, %c0_85, %c0_86] : memref<3x3x6x64xbf16, #tpu.memory_space<vmem>>, vector<1x1x6x64xbf16>
    %61 = vector.shape_cast %60 : vector<1x1x6x64xbf16> to vector<6x64xbf16>
    %cst_87 = arith.constant dense<0.000000e+00> : vector<16x16x64xf32>
    %62 = tpu.matmul %59, %61, %cst_87 {dimension_numbers = #tpu.dot_dimension_numbers<[2], [0], [0, 1], [1], [0, 0, 0, 1, 1, 1], [], []>} : vector<16x16x6xbf16>, vector<6x64xbf16>, vector<16x16x64xf32> -> vector<16x16x64xf32>
    %63 = arith.addf %58, %62 : vector<16x16x64xf32>
    %64 = vector.extract_strided_slice %26 {offsets = [2, 0, 0], sizes = [16, 16, 6], strides = [1, 1, 1]} : vector<18x16x6xbf16> to vector<16x16x6xbf16>
    %c2_88 = arith.constant 2 : index
    %c1_89 = arith.constant 1 : index
    %c0_90 = arith.constant 0 : index
    %c0_91 = arith.constant 0 : index
    %65 = vector.load %arg2[%c2_88, %c1_89, %c0_90, %c0_91] : memref<3x3x6x64xbf16, #tpu.memory_space<vmem>>, vector<1x1x6x64xbf16>
    %66 = vector.shape_cast %65 : vector<1x1x6x64xbf16> to vector<6x64xbf16>
    %cst_92 = arith.constant dense<0.000000e+00> : vector<16x16x64xf32>
    %67 = tpu.matmul %64, %66, %cst_92 {dimension_numbers = #tpu.dot_dimension_numbers<[2], [0], [0, 1], [1], [0, 0, 0, 1, 1, 1], [], []>} : vector<16x16x6xbf16>, vector<6x64xbf16>, vector<16x16x64xf32> -> vector<16x16x64xf32>
    %68 = arith.addf %63, %67 : vector<16x16x64xf32>
    %69 = vector.extract_strided_slice %27 {offsets = [2, 0, 0], sizes = [16, 16, 6], strides = [1, 1, 1]} : vector<18x16x6xbf16> to vector<16x16x6xbf16>
    %c2_93 = arith.constant 2 : index
    %c2_94 = arith.constant 2 : index
    %c0_95 = arith.constant 0 : index
    %c0_96 = arith.constant 0 : index
    %70 = vector.load %arg2[%c2_93, %c2_94, %c0_95, %c0_96] : memref<3x3x6x64xbf16, #tpu.memory_space<vmem>>, vector<1x1x6x64xbf16>
    %71 = vector.shape_cast %70 : vector<1x1x6x64xbf16> to vector<6x64xbf16>
    %cst_97 = arith.constant dense<0.000000e+00> : vector<16x16x64xf32>
    %72 = tpu.matmul %69, %71, %cst_97 {dimension_numbers = #tpu.dot_dimension_numbers<[2], [0], [0, 1], [1], [0, 0, 0, 1, 1, 1], [], []>} : vector<16x16x6xbf16>, vector<6x64xbf16>, vector<16x16x64xf32> -> vector<16x16x64xf32>
    %73 = arith.addf %68, %72 : vector<16x16x64xf32>
    %c0_98 = arith.constant 0 : index
    %c0_99 = arith.constant 0 : index
    %74 = vector.load %arg3[%c0_98, %c0_99] : memref<1x64xf32, #tpu.memory_space<vmem>>, vector<1x64xf32>
    %75 = vector.shape_cast %74 : vector<1x64xf32> to vector<64xf32>
    %76 = vector.shape_cast %75 : vector<64xf32> to vector<1x1x64xf32>
    %77 = vector.broadcast %76 : vector<1x1x64xf32> to vector<16x16x64xf32>
    %78 = arith.addf %73, %77 : vector<16x16x64xf32>
    %cst_100 = arith.constant 0.000000e+00 : f32
    %79 = vector.broadcast %cst_100 : f32 to vector<16x16x64xf32>
    %80 = arith.maximumf %78, %79 : vector<16x16x64xf32>
    %81 = arith.truncf %80 : vector<16x16x64xf32> to vector<16x16x64xbf16>
    %c1_101 = arith.constant 1 : index
    %c8_102 = arith.constant 8 : index
    %c0_103 = arith.constant 0 : index
    %82 = vector.load %arg12[%c1_101, %c8_102, %c0_103] : memref<18x32x64xbf16, #tpu.memory_space<vmem>>, vector<16x16x64xbf16>
    tpu.vector_store %arg12[%c1_101, %c8_102, %c0_103], %81 {strides = array<i32>} : memref<18x32x64xbf16, #tpu.memory_space<vmem>>, vector<16x16x64xbf16>,
    %c0_104 = arith.constant 0 : index
    %c7_105 = arith.constant 7 : index
    %c0_106 = arith.constant 0 : index
    %83 = vector.load %arg12[%c0_104, %c7_105, %c0_106] : memref<18x32x64xbf16, #tpu.memory_space<vmem>>, vector<18x16x64xbf16>
    %c0_107 = arith.constant 0 : index
    %c8_108 = arith.constant 8 : index
    %c0_109 = arith.constant 0 : index
    %84 = vector.load %arg12[%c0_107, %c8_108, %c0_109] : memref<18x32x64xbf16, #tpu.memory_space<vmem>>, vector<18x16x64xbf16>
    %c0_110 = arith.constant 0 : index
    %c9_111 = arith.constant 9 : index
    %c0_112 = arith.constant 0 : index
    %85 = vector.load %arg12[%c0_110, %c9_111, %c0_112] : memref<18x32x64xbf16, #tpu.memory_space<vmem>>, vector<18x16x64xbf16>
    %cst_113 = arith.constant 0.000000e+00 : f32
    %86 = vector.broadcast %cst_113 : f32 to vector<16x16x128xf32>
    %87 = tpu.concatenate %83, %84, %85 in 2 : vector<18x16x64xbf16>, vector<18x16x64xbf16>, vector<18x16x64xbf16> -> vector<18x16x192xbf16>
    %88 = vector.extract_strided_slice %87 {offsets = [0, 0, 0], sizes = [16, 16, 192], strides = [1, 1, 1]} : vector<18x16x192xbf16> to vector<16x16x192xbf16>
    %c0_114 = arith.constant 0 : index
    %c0_115 = arith.constant 0 : index
    %c0_116 = arith.constant 0 : index
    %89 = vector.load %arg4[%c0_114, %c0_115, %c0_116] : memref<3x192x128xbf16, #tpu.memory_space<vmem>>, vector<1x192x128xbf16>
    %90 = vector.shape_cast %89 : vector<1x192x128xbf16> to vector<192x128xbf16>
    %cst_117 = arith.constant dense<0.000000e+00> : vector<16x16x128xf32>
    %91 = tpu.matmul %88, %90, %cst_117 {dimension_numbers = #tpu.dot_dimension_numbers<[2], [0], [0, 1], [1], [0, 0, 0, 1, 1, 1], [], []>} : vector<16x16x192xbf16>, vector<192x128xbf16>, vector<16x16x128xf32> -> vector<16x16x128xf32>
    %92 = arith.addf %86, %91 : vector<16x16x128xf32>
    %93 = vector.extract_strided_slice %87 {offsets = [1, 0, 0], sizes = [16, 16, 192], strides = [1, 1, 1]} : vector<18x16x192xbf16> to vector<16x16x192xbf16>
    %c1_118 = arith.constant 1 : index
    %c0_119 = arith.constant 0 : index
    %c0_120 = arith.constant 0 : index
    %94 = vector.load %arg4[%c1_118, %c0_119, %c0_120] : memref<3x192x128xbf16, #tpu.memory_space<vmem>>, vector<1x192x128xbf16>
    %95 = vector.shape_cast %94 : vector<1x192x128xbf16> to vector<192x128xbf16>
    %cst_121 = arith.constant dense<0.000000e+00> : vector<16x16x128xf32>
    %96 = tpu.matmul %93, %95, %cst_121 {dimension_numbers = #tpu.dot_dimension_numbers<[2], [0], [0, 1], [1], [0, 0, 0, 1, 1, 1], [], []>} : vector<16x16x192xbf16>, vector<192x128xbf16>, vector<16x16x128xf32> -> vector<16x16x128xf32>
    %97 = arith.addf %92, %96 : vector<16x16x128xf32>
    %98 = vector.extract_strided_slice %87 {offsets = [2, 0, 0], sizes = [16, 16, 192], strides = [1, 1, 1]} : vector<18x16x192xbf16> to vector<16x16x192xbf16>
    %c2_122 = arith.constant 2 : index
    %c0_123 = arith.constant 0 : index
    %c0_124 = arith.constant 0 : index
    %99 = vector.load %arg4[%c2_122, %c0_123, %c0_124] : memref<3x192x128xbf16, #tpu.memory_space<vmem>>, vector<1x192x128xbf16>
    %100 = vector.shape_cast %99 : vector<1x192x128xbf16> to vector<192x128xbf16>
    %cst_125 = arith.constant dense<0.000000e+00> : vector<16x16x128xf32>
    %101 = tpu.matmul %98, %100, %cst_125 {dimension_numbers = #tpu.dot_dimension_numbers<[2], [0], [0, 1], [1], [0, 0, 0, 1, 1, 1], [], []>} : vector<16x16x192xbf16>, vector<192x128xbf16>, vector<16x16x128xf32> -> vector<16x16x128xf32>
    %102 = arith.addf %97, %101 : vector<16x16x128xf32>
    %c0_126 = arith.constant 0 : index
    %c0_127 = arith.constant 0 : index
    %103 = vector.load %arg5[%c0_126, %c0_127] : memref<1x128xf32, #tpu.memory_space<vmem>>, vector<1x128xf32>
    %104 = vector.shape_cast %103 : vector<1x128xf32> to vector<128xf32>
    %105 = vector.shape_cast %104 : vector<128xf32> to vector<1x1x128xf32>
    %106 = vector.broadcast %105 : vector<1x1x128xf32> to vector<16x16x128xf32>
    %107 = arith.addf %102, %106 : vector<16x16x128xf32>
    %cst_128 = arith.constant 0.000000e+00 : f32
    %108 = vector.broadcast %cst_128 : f32 to vector<16x16x128xf32>
    %109 = arith.maximumf %107, %108 : vector<16x16x128xf32>
    %110 = arith.truncf %109 : vector<16x16x128xf32> to vector<16x16x128xbf16>
    %c1_129 = arith.constant 1 : index
    %c8_130 = arith.constant 8 : index
    %c0_131 = arith.constant 0 : index
    %111 = vector.load %arg13[%c1_129, %c8_130, %c0_131] : memref<18x32x128xbf16, #tpu.memory_space<vmem>>, vector<16x16x128xbf16>
    tpu.vector_store %arg13[%c1_129, %c8_130, %c0_131], %110 {strides = array<i32>} : memref<18x32x128xbf16, #tpu.memory_space<vmem>>, vector<16x16x128xbf16>,
    %c0_132 = arith.constant 0 : index
    %c7_133 = arith.constant 7 : index
    %c0_134 = arith.constant 0 : index
    %112 = vector.load %arg13[%c0_132, %c7_133, %c0_134] : memref<18x32x128xbf16, #tpu.memory_space<vmem>>, vector<18x16x128xbf16>
    %c0_135 = arith.constant 0 : index
    %c8_136 = arith.constant 8 : index
    %c0_137 = arith.constant 0 : index
    %113 = vector.load %arg13[%c0_135, %c8_136, %c0_137] : memref<18x32x128xbf16, #tpu.memory_space<vmem>>, vector<18x16x128xbf16>
    %c0_138 = arith.constant 0 : index
    %c9_139 = arith.constant 9 : index
    %c0_140 = arith.constant 0 : index
    %114 = vector.load %arg13[%c0_138, %c9_139, %c0_140] : memref<18x32x128xbf16, #tpu.memory_space<vmem>>, vector<18x16x128xbf16>
    %cst_141 = arith.constant 0.000000e+00 : f32
    %115 = vector.broadcast %cst_141 : f32 to vector<16x16x64xf32>
    %116 = tpu.concatenate %112, %113, %114 in 2 : vector<18x16x128xbf16>, vector<18x16x128xbf16>, vector<18x16x128xbf16> -> vector<18x16x384xbf16>
    %117 = vector.extract_strided_slice %116 {offsets = [0, 0, 0], sizes = [16, 16, 384], strides = [1, 1, 1]} : vector<18x16x384xbf16> to vector<16x16x384xbf16>
    %c0_142 = arith.constant 0 : index
    %c0_143 = arith.constant 0 : index
    %c0_144 = arith.constant 0 : index
    %118 = vector.load %arg6[%c0_142, %c0_143, %c0_144] : memref<3x384x64xbf16, #tpu.memory_space<vmem>>, vector<1x384x64xbf16>
    %119 = vector.shape_cast %118 : vector<1x384x64xbf16> to vector<384x64xbf16>
    %cst_145 = arith.constant dense<0.000000e+00> : vector<16x16x64xf32>
    %120 = tpu.matmul %117, %119, %cst_145 {dimension_numbers = #tpu.dot_dimension_numbers<[2], [0], [0, 1], [1], [0, 0, 0, 1, 1, 1], [], []>} : vector<16x16x384xbf16>, vector<384x64xbf16>, vector<16x16x64xf32> -> vector<16x16x64xf32>
    %121 = arith.addf %115, %120 : vector<16x16x64xf32>
    %122 = vector.extract_strided_slice %116 {offsets = [1, 0, 0], sizes = [16, 16, 384], strides = [1, 1, 1]} : vector<18x16x384xbf16> to vector<16x16x384xbf16>
    %c1_146 = arith.constant 1 : index
    %c0_147 = arith.constant 0 : index
    %c0_148 = arith.constant 0 : index
    %123 = vector.load %arg6[%c1_146, %c0_147, %c0_148] : memref<3x384x64xbf16, #tpu.memory_space<vmem>>, vector<1x384x64xbf16>
    %124 = vector.shape_cast %123 : vector<1x384x64xbf16> to vector<384x64xbf16>
    %cst_149 = arith.constant dense<0.000000e+00> : vector<16x16x64xf32>
    %125 = tpu.matmul %122, %124, %cst_149 {dimension_numbers = #tpu.dot_dimension_numbers<[2], [0], [0, 1], [1], [0, 0, 0, 1, 1, 1], [], []>} : vector<16x16x384xbf16>, vector<384x64xbf16>, vector<16x16x64xf32> -> vector<16x16x64xf32>
    %126 = arith.addf %121, %125 : vector<16x16x64xf32>
    %127 = vector.extract_strided_slice %116 {offsets = [2, 0, 0], sizes = [16, 16, 384], strides = [1, 1, 1]} : vector<18x16x384xbf16> to vector<16x16x384xbf16>
    %c2_150 = arith.constant 2 : index
    %c0_151 = arith.constant 0 : index
    %c0_152 = arith.constant 0 : index
    %128 = vector.load %arg6[%c2_150, %c0_151, %c0_152] : memref<3x384x64xbf16, #tpu.memory_space<vmem>>, vector<1x384x64xbf16>
    %129 = vector.shape_cast %128 : vector<1x384x64xbf16> to vector<384x64xbf16>
    %cst_153 = arith.constant dense<0.000000e+00> : vector<16x16x64xf32>
    %130 = tpu.matmul %127, %129, %cst_153 {dimension_numbers = #tpu.dot_dimension_numbers<[2], [0], [0, 1], [1], [0, 0, 0, 1, 1, 1], [], []>} : vector<16x16x384xbf16>, vector<384x64xbf16>, vector<16x16x64xf32> -> vector<16x16x64xf32>
    %131 = arith.addf %126, %130 : vector<16x16x64xf32>
    %c0_154 = arith.constant 0 : index
    %c0_155 = arith.constant 0 : index
    %132 = vector.load %arg7[%c0_154, %c0_155] : memref<1x64xf32, #tpu.memory_space<vmem>>, vector<1x64xf32>
    %133 = vector.shape_cast %132 : vector<1x64xf32> to vector<64xf32>
    %134 = vector.shape_cast %133 : vector<64xf32> to vector<1x1x64xf32>
    %135 = vector.broadcast %134 : vector<1x1x64xf32> to vector<16x16x64xf32>
    %136 = arith.addf %131, %135 : vector<16x16x64xf32>
    %cst_156 = arith.constant 0.000000e+00 : f32
    %137 = vector.broadcast %cst_156 : f32 to vector<16x16x64xf32>
    %138 = arith.maximumf %136, %137 : vector<16x16x64xf32>
    %139 = arith.truncf %138 : vector<16x16x64xf32> to vector<16x16x64xbf16>
    %c1_157 = arith.constant 1 : index
    %c8_158 = arith.constant 8 : index
    %c0_159 = arith.constant 0 : index
    %140 = vector.load %arg12[%c1_157, %c8_158, %c0_159] : memref<18x32x64xbf16, #tpu.memory_space<vmem>>, vector<16x16x64xbf16>
    tpu.vector_store %arg12[%c1_157, %c8_158, %c0_159], %139 {strides = array<i32>} : memref<18x32x64xbf16, #tpu.memory_space<vmem>>, vector<16x16x64xbf16>,
    %c0_160 = arith.constant 0 : index
    %c7_161 = arith.constant 7 : index
    %c0_162 = arith.constant 0 : index
    %141 = vector.load %arg12[%c0_160, %c7_161, %c0_162] : memref<18x32x64xbf16, #tpu.memory_space<vmem>>, vector<18x16x64xbf16>
    %c0_163 = arith.constant 0 : index
    %c8_164 = arith.constant 8 : index
    %c0_165 = arith.constant 0 : index
    %142 = vector.load %arg12[%c0_163, %c8_164, %c0_165] : memref<18x32x64xbf16, #tpu.memory_space<vmem>>, vector<18x16x64xbf16>
    %c0_166 = arith.constant 0 : index
    %c9_167 = arith.constant 9 : index
    %c0_168 = arith.constant 0 : index
    %143 = vector.load %arg12[%c0_166, %c9_167, %c0_168] : memref<18x32x64xbf16, #tpu.memory_space<vmem>>, vector<18x16x64xbf16>
    %cst_169 = arith.constant 0.000000e+00 : f32
    %144 = vector.broadcast %cst_169 : f32 to vector<16x16x3xf32>
    %145 = tpu.concatenate %141, %142, %143 in 2 : vector<18x16x64xbf16>, vector<18x16x64xbf16>, vector<18x16x64xbf16> -> vector<18x16x192xbf16>
    %146 = vector.extract_strided_slice %145 {offsets = [0, 0, 0], sizes = [16, 16, 192], strides = [1, 1, 1]} : vector<18x16x192xbf16> to vector<16x16x192xbf16>
    %c0_170 = arith.constant 0 : index
    %c0_171 = arith.constant 0 : index
    %c0_172 = arith.constant 0 : index
    %147 = vector.load %arg8[%c0_170, %c0_171, %c0_172] : memref<3x192x3xbf16, #tpu.memory_space<vmem>>, vector<1x192x3xbf16>
    %148 = vector.shape_cast %147 : vector<1x192x3xbf16> to vector<192x3xbf16>
    %cst_173 = arith.constant dense<0.000000e+00> : vector<16x16x3xf32>
    %149 = tpu.matmul %146, %148, %cst_173 {dimension_numbers = #tpu.dot_dimension_numbers<[2], [0], [0, 1], [1], [0, 0, 0, 1, 1, 1], [], []>} : vector<16x16x192xbf16>, vector<192x3xbf16>, vector<16x16x3xf32> -> vector<16x16x3xf32>
    %150 = arith.addf %144, %149 : vector<16x16x3xf32>
    %151 = vector.extract_strided_slice %145 {offsets = [1, 0, 0], sizes = [16, 16, 192], strides = [1, 1, 1]} : vector<18x16x192xbf16> to vector<16x16x192xbf16>
    %c1_174 = arith.constant 1 : index
    %c0_175 = arith.constant 0 : index
    %c0_176 = arith.constant 0 : index
    %152 = vector.load %arg8[%c1_174, %c0_175, %c0_176] : memref<3x192x3xbf16, #tpu.memory_space<vmem>>, vector<1x192x3xbf16>
    %153 = vector.shape_cast %152 : vector<1x192x3xbf16> to vector<192x3xbf16>
    %cst_177 = arith.constant dense<0.000000e+00> : vector<16x16x3xf32>
    %154 = tpu.matmul %151, %153, %cst_177 {dimension_numbers = #tpu.dot_dimension_numbers<[2], [0], [0, 1], [1], [0, 0, 0, 1, 1, 1], [], []>} : vector<16x16x192xbf16>, vector<192x3xbf16>, vector<16x16x3xf32> -> vector<16x16x3xf32>
    %155 = arith.addf %150, %154 : vector<16x16x3xf32>
    %156 = vector.extract_strided_slice %145 {offsets = [2, 0, 0], sizes = [16, 16, 192], strides = [1, 1, 1]} : vector<18x16x192xbf16> to vector<16x16x192xbf16>
    %c2_178 = arith.constant 2 : index
    %c0_179 = arith.constant 0 : index
    %c0_180 = arith.constant 0 : index
    %157 = vector.load %arg8[%c2_178, %c0_179, %c0_180] : memref<3x192x3xbf16, #tpu.memory_space<vmem>>, vector<1x192x3xbf16>
    %158 = vector.shape_cast %157 : vector<1x192x3xbf16> to vector<192x3xbf16>
    %cst_181 = arith.constant dense<0.000000e+00> : vector<16x16x3xf32>
    %159 = tpu.matmul %156, %158, %cst_181 {dimension_numbers = #tpu.dot_dimension_numbers<[2], [0], [0, 1], [1], [0, 0, 0, 1, 1, 1], [], []>} : vector<16x16x192xbf16>, vector<192x3xbf16>, vector<16x16x3xf32> -> vector<16x16x3xf32>
    %160 = arith.addf %155, %159 : vector<16x16x3xf32>
    %c0_182 = arith.constant 0 : index
    %c0_183 = arith.constant 0 : index
    %161 = vector.load %arg9[%c0_182, %c0_183] : memref<1x3xf32, #tpu.memory_space<vmem>>, vector<1x3xf32>
    %162 = vector.shape_cast %161 : vector<1x3xf32> to vector<3xf32>
    %163 = vector.shape_cast %162 : vector<3xf32> to vector<1x1x3xf32>
    %164 = vector.broadcast %163 : vector<1x1x3xf32> to vector<16x16x3xf32>
    %165 = arith.addf %160, %164 : vector<16x16x3xf32>
    %c0_184 = arith.constant 0 : index
    %c0_185 = arith.constant 0 : index
    %c0_186 = arith.constant 0 : index
    %c0_187 = arith.constant 0 : index
    %166 = vector.load %arg10[%c0_184, %c0_185, %c0_186, %c0_187] : memref<1x16x16x3xf32, #tpu.memory_space<vmem>>, vector<1x16x16x3xf32>
    %167 = vector.shape_cast %166 : vector<1x16x16x3xf32> to vector<16x16x3xf32>
    %168 = vector.shape_cast %165 : vector<16x16x3xf32> to vector<1x16x16x3xf32>
    tpu.vector_store %arg10[%c0_184, %c0_185, %c0_186, %c0_187], %168 {strides = array<i32>} : memref<1x16x16x3xf32, #tpu.memory_space<vmem>>, vector<1x16x16x3xf32>,
    return
  }
  func.func @transform_0(%arg0: i32) -> (i32, i32, i32, i32) {
    %c0_i32 = arith.constant 0 : i32
    %c0_i32_0 = arith.constant 0 : i32
    %c0_i32_1 = arith.constant 0 : i32
    %c0_i32_2 = arith.constant 0 : i32
    return %arg0, %c0_i32, %c0_i32_0, %c0_i32_1 : i32, i32, i32, i32
  }
  func.func @transform_1(%arg0: i32) -> (i32, i32, i32, i32) {
    %c0_i32 = arith.constant 0 : i32
    %c0_i32_0 = arith.constant 0 : i32
    %c0_i32_1 = arith.constant 0 : i32
    %c0_i32_2 = arith.constant 0 : i32
    %c0_i32_3 = arith.constant 0 : i32
    return %c0_i32, %c0_i32_0, %c0_i32_1, %c0_i32_2 : i32, i32, i32, i32
  }
  func.func @transform_2(%arg0: i32) -> (i32, i32) {
    %c0_i32 = arith.constant 0 : i32
    %c0_i32_0 = arith.constant 0 : i32
    %c0_i32_1 = arith.constant 0 : i32
    return %c0_i32, %c0_i32_0 : i32, i32
  }
  func.func @transform_3(%arg0: i32) -> (i32, i32, i32) {
    %c0_i32 = arith.constant 0 : i32
    %c0_i32_0 = arith.constant 0 : i32
    %c0_i32_1 = arith.constant 0 : i32
    %c0_i32_2 = arith.constant 0 : i32
    return %c0_i32, %c0_i32_0, %c0_i32_1 : i32, i32, i32
  }
  func.func @transform_4(%arg0: i32) -> (i32, i32) {
    %c0_i32 = arith.constant 0 : i32
    %c0_i32_0 = arith.constant 0 : i32
    %c0_i32_1 = arith.constant 0 : i32
    return %c0_i32, %c0_i32_0 : i32, i32
  }
  func.func @transform_5(%arg0: i32) -> (i32, i32, i32) {
    %c0_i32 = arith.constant 0 : i32
    %c0_i32_0 = arith.constant 0 : i32
    %c0_i32_1 = arith.constant 0 : i32
    %c0_i32_2 = arith.constant 0 : i32
    return %c0_i32, %c0_i32_0, %c0_i32_1 : i32, i32, i32
  }
  func.func @transform_6(%arg0: i32) -> (i32, i32) {
    %c0_i32 = arith.constant 0 : i32
    %c0_i32_0 = arith.constant 0 : i32
    %c0_i32_1 = arith.constant 0 : i32
    return %c0_i32, %c0_i32_0 : i32, i32
  }
  func.func @transform_7(%arg0: i32) -> (i32, i32, i32) {
    %c0_i32 = arith.constant 0 : i32
    %c0_i32_0 = arith.constant 0 : i32
    %c0_i32_1 = arith.constant 0 : i32
    %c0_i32_2 = arith.constant 0 : i32
    return %c0_i32, %c0_i32_0, %c0_i32_1 : i32, i32, i32
  }
  func.func @transform_8(%arg0: i32) -> (i32, i32) {
    %c0_i32 = arith.constant 0 : i32
    %c0_i32_0 = arith.constant 0 : i32
    %c0_i32_1 = arith.constant 0 : i32
    return %c0_i32, %c0_i32_0 : i32, i32
  }
  func.func @transform_9(%arg0: i32) -> (i32, i32, i32, i32) {
    %c0_i32 = arith.constant 0 : i32
    %c0_i32_0 = arith.constant 0 : i32
    %c0_i32_1 = arith.constant 0 : i32
    %c0_i32_2 = arith.constant 0 : i32
    return %arg0, %c0_i32, %c0_i32_0, %c0_i32_1 : i32, i32, i32, i32
  }
}

</mosaic_0001>

<llo_original>
// kernel: stereo_net_forward.1
$region0: #{stereo_net_forward.1}
  #allocation0 [shape = 'u32[]', space=smem, size = 0x4, offset = 0x4, fixed_abs, tag = 'smem constant byte address 0x4 - core index']
  #allocation1 [shape = 'u32[144,128]{1,0:T(1,128)}', space=vmem, size = 0x12000, scoped, tag = 'internal scratch']
  #allocation2 [shape = 'bf16[18,32,6]{2,1,0:T(16,128)(2,1)}', space=vmem, size = 0x24000, scoped, tag = 'scratch operand']
  #allocation3 [shape = 'bf16[18,32,64]{2,1,0:T(16,128)(2,1)}', space=vmem, size = 0x24000, scoped, tag = 'scratch operand']
  #allocation4 [shape = 'bf16[18,32,128]{2,1,0:T(16,128)(2,1)}', space=vmem, size = 0x24000, scoped, tag = 'scratch operand']
  %s0 = inlined_call_operand.vmem [shape: f32[2,16,16,6], index: 0, kind: input, shape index: {}]
  %s1 = inlined_call_operand.vmem [shape: bf16[3,3,6,64], index: 1, kind: input, shape index: {}]
  %s2 = inlined_call_operand.vmem [shape: f32[1,64], index: 2, kind: input, shape index: {}]
  %s3 = inlined_call_operand.vmem [shape: bf16[3,192,128], index: 3, kind: input, shape index: {}]
  %s4 = inlined_call_operand.vmem [shape: f32[1,128], index: 4, kind: input, shape index: {}]
  %s5 = inlined_call_operand.vmem [shape: bf16[3,384,64], index: 5, kind: input, shape index: {}]
  %s6 = inlined_call_operand.vmem [shape: f32[1,64], index: 6, kind: input, shape index: {}]
  %s7 = inlined_call_operand.vmem [shape: bf16[3,192,3], index: 7, kind: input, shape index: {}]
  %s8 = inlined_call_operand.vmem [shape: f32[1,3], index: 8, kind: input, shape index: {}]
  %s9 = inlined_call_operand.vmem [shape: f32[2,16,16,3], index: 9, kind: output, shape index: {}]
  %s10 = sld [smem:[#allocation0]]
  $region69: #{stereo_net_forward.1} parent=0
    _
  %s12 = ssub.s32 1, %s10
  %s13 = scalar_select 0, %s12, %s10
  loop: start=0, step=1, limit=4
  $region2: #{stereo_net_forward.1} parent=0 // loop_pre_header
    _
  $region3: #{stereo_net_forward.1} parent=0 // loop_header
    %s15 = sphi 0, %s19
    %p16 = scmp.ge.s32.totalorder %s15, 4
    %s25 = sphi 0, %s27
    %s28 = sphi 0, %s25
    %s29 = sphi 0, %s28
    %s45 = sphi 0, %s29
    %s49 = sphi 0, %s49
    %s51 = sphi 0, %s49
    %s52 = sphi 0, %s51
    %s66 = sphi 0, %s52
    %s70 = sphi 0, %s70
    %s72 = sphi 0, %s70
    %s73 = sphi 0, %s72
    %s87 = sphi 0, %s73
    %s91 = sphi 0, %s91
    %s93 = sphi 0, %s91
    %s94 = sphi 0, %s93
    %s108 = sphi 0, %s94
    %s112 = sphi 0, %s112
    %s114 = sphi 0, %s112
    %s115 = sphi 0, %s114
    %s129 = sphi 0, %s115
    %s133 = sphi 0, %s133
    %s135 = sphi 0, %s133
    %s136 = sphi 0, %s135
    %s150 = sphi 0, %s136
    %s154 = sphi 0, %s154
    %s156 = sphi 0, %s154
    %s157 = sphi 0, %s156
    %s171 = sphi 0, %s157
    %s175 = sphi 0, %s175
    %s177 = sphi 0, %s175
    %s178 = sphi 0, %s177
    %s192 = sphi 0, %s178
    %s196 = sphi 0, %s196
    %s198 = sphi 0, %s196
    %s199 = sphi 0, %s198
    %s213 = sphi 0, %s199
    %s219 = sphi 0, %s221
    %s222 = sphi 0, %s219
    %s223 = sphi 0, %s222
    %s239 = sphi 0, %s223
  $region4: #{stereo_net_forward.1} parent=0 // loop_header_branch
    %18 = sbr.rel (%p16) target = $region8
  $region5: #{stereo_net_forward.1} parent=0 // loop_body
    %s20 = ssub.s32 %s15, 1
    %s21 = ssub.s32 %s15, 2
    %s22 = sadd.s32 %s15, 1
    %s23 = ssub.s32 %s15, %s22
    %p24 = scmp.eq.s32.totalorder %s23, 0
    %s26 = sadd.s32 %s25, 1
    %s27 = scalar_select %p24, %s25, %s26
    %p30 = pneg %p24
    %p31 = scmp.eq.s32.totalorder %s15, 1
    %p32 = por %p30, %p31
    %p33 = scmp.ne.s32.totalorder %s25, %s28
    %p34 = scmp.eq.s32.totalorder %s15, 0
    %p35 = por %p33, %p34
    %p36 = scmp.ne.s32.totalorder %s25, %s28
    %p37 = scmp.eq.s32.totalorder %s20, 1
    %p38 = por %p36, %p37
    %p39 = scmp.ne.s32.totalorder %s28, %s29
    %p40 = scmp.eq.s32.totalorder %s20, 0
    %p41 = por %p39, %p40
    %p42 = scmp.ne.s32.totalorder %s28, %s29
    %p43 = scmp.eq.s32.totalorder %s21, 1
    %p44 = por %p42, %p43
    %p46 = scmp.ne.s32.totalorder %s29, %s45
    %p47 = scmp.eq.s32.totalorder %s21, 0
    %p48 = por %p46, %p47
    %s50 = sadd.s32 %s49, 1
    %p53 = scmp.eq.s32.totalorder %s15, 1
    %p54 = scmp.ne.s32.totalorder %s49, %s51
    %p55 = scmp.eq.s32.totalorder %s15, 0
    %p56 = por %p54, %p55
    %p57 = scmp.ne.s32.totalorder %s49, %s51
    %p58 = scmp.eq.s32.totalorder %s20, 1
    %p59 = por %p57, %p58
    %p60 = scmp.ne.s32.totalorder %s51, %s52
    %p61 = scmp.eq.s32.totalorder %s20, 0
    %p62 = por %p60, %p61
    %p63 = scmp.ne.s32.totalorder %s51, %s52
    %p64 = scmp.eq.s32.totalorder %s21, 1
    %p65 = por %p63, %p64
    %p67 = scmp.ne.s32.totalorder %s52, %s66
    %p68 = scmp.eq.s32.totalorder %s21, 0
    %p69 = por %p67, %p68
    %s71 = sadd.s32 %s70, 1
    %p74 = scmp.eq.s32.totalorder %s15, 1
    %p75 = scmp.ne.s32.totalorder %s70, %s72
    %p76 = scmp.eq.s32.totalorder %s15, 0
    %p77 = por %p75, %p76
    %p78 = scmp.ne.s32.totalorder %s70, %s72
    %p79 = scmp.eq.s32.totalorder %s20, 1
    %p80 = por %p78, %p79
    %p81 = scmp.ne.s32.totalorder %s72, %s73
    %p82 = scmp.eq.s32.totalorder %s20, 0
    %p83 = por %p81, %p82
    %p84 = scmp.ne.s32.totalorder %s72, %s73
    %p85 = scmp.eq.s32.totalorder %s21, 1
    %p86 = por %p84, %p85
    %p88 = scmp.ne.s32.totalorder %s73, %s87
    %p89 = scmp.eq.s32.totalorder %s21, 0
    %p90 = por %p88, %p89
    %s92 = sadd.s32 %s91, 1
    %p95 = scmp.eq.s32.totalorder %s15, 1
    %p96 = scmp.ne.s32.totalorder %s91, %s93
    %p97 = scmp.eq.s32.totalorder %s15, 0
    %p98 = por %p96, %p97
    %p99 = scmp.ne.s32.totalorder %s91, %s93
    %p100 = scmp.eq.s32.totalorder %s20, 1
    %p101 = por %p99, %p100
    %p102 = scmp.ne.s32.totalorder %s93, %s94
    %p103 = scmp.eq.s32.totalorder %s20, 0
    %p104 = por %p102, %p103
    %p105 = scmp.ne.s32.totalorder %s93, %s94
    %p106 = scmp.eq.s32.totalorder %s21, 1
    %p107 = por %p105, %p106
    %p109 = scmp.ne.s32.totalorder %s94, %s108
    %p110 = scmp.eq.s32.totalorder %s21, 0
    %p111 = por %p109, %p110
    %s113 = sadd.s32 %s112, 1
    %p116 = scmp.eq.s32.totalorder %s15, 1
    %p117 = scmp.ne.s32.totalorder %s112, %s114
    %p118 = scmp.eq.s32.totalorder %s15, 0
    %p119 = por %p117, %p118
    %p120 = scmp.ne.s32.totalorder %s112, %s114
    %p121 = scmp.eq.s32.totalorder %s20, 1
    %p122 = por %p120, %p121
    %p123 = scmp.ne.s32.totalorder %s114, %s115
    %p124 = scmp.eq.s32.totalorder %s20, 0
    %p125 = por %p123, %p124
    %p126 = scmp.ne.s32.totalorder %s114, %s115
    %p127 = scmp.eq.s32.totalorder %s21, 1
    %p128 = por %p126, %p127
    %p130 = scmp.ne.s32.totalorder %s115, %s129
    %p131 = scmp.eq.s32.totalorder %s21, 0
    %p132 = por %p130, %p131
    %s134 = sadd.s32 %s133, 1
    %p137 = scmp.eq.s32.totalorder %s15, 1
    %p138 = scmp.ne.s32.totalorder %s133, %s135
    %p139 = scmp.eq.s32.totalorder %s15, 0
    %p140 = por %p138, %p139
    %p141 = scmp.ne.s32.totalorder %s133, %s135
    %p142 = scmp.eq.s32.totalorder %s20, 1
    %p143 = por %p141, %p142
    %p144 = scmp.ne.s32.totalorder %s135, %s136
    %p145 = scmp.eq.s32.totalorder %s20, 0
    %p146 = por %p144, %p145
    %p147 = scmp.ne.s32.totalorder %s135, %s136
    %p148 = scmp.eq.s32.totalorder %s21, 1
    %p149 = por %p147, %p148
    %p151 = scmp.ne.s32.totalorder %s136, %s150
    %p152 = scmp.eq.s32.totalorder %s21, 0
    %p153 = por %p151, %p152
    %s155 = sadd.s32 %s154, 1
    %p158 = scmp.eq.s32.totalorder %s15, 1
    %p159 = scmp.ne.s32.totalorder %s154, %s156
    %p160 = scmp.eq.s32.totalorder %s15, 0
    %p161 = por %p159, %p160
    %p162 = scmp.ne.s32.totalorder %s154, %s156
    %p163 = scmp.eq.s32.totalorder %s20, 1
    %p164 = por %p162, %p163
    %p165 = scmp.ne.s32.totalorder %s156, %s157
    %p166 = scmp.eq.s32.totalorder %s20, 0
    %p167 = por %p165, %p166
    %p168 = scmp.ne.s32.totalorder %s156, %s157
    %p169 = scmp.eq.s32.totalorder %s21, 1
    %p170 = por %p168, %p169
    %p172 = scmp.ne.s32.totalorder %s157, %s171
    %p173 = scmp.eq.s32.totalorder %s21, 0
    %p174 = por %p172, %p173
    %s176 = sadd.s32 %s175, 1
    %p179 = scmp.eq.s32.totalorder %s15, 1
    %p180 = scmp.ne.s32.totalorder %s175, %s177
    %p181 = scmp.eq.s32.totalorder %s15, 0
    %p182 = por %p180, %p181
    %p183 = scmp.ne.s32.totalorder %s175, %s177
    %p184 = scmp.eq.s32.totalorder %s20, 1
    %p185 = por %p183, %p184
    %p186 = scmp.ne.s32.totalorder %s177, %s178
    %p187 = scmp.eq.s32.totalorder %s20, 0
    %p188 = por %p186, %p187
    %p189 = scmp.ne.s32.totalorder %s177, %s178
    %p190 = scmp.eq.s32.totalorder %s21, 1
    %p191 = por %p189, %p190
    %p193 = scmp.ne.s32.totalorder %s178, %s192
    %p194 = scmp.eq.s32.totalorder %s21, 0
    %p195 = por %p193, %p194
    %s197 = sadd.s32 %s196, 1
    %p200 = scmp.eq.s32.totalorder %s15, 1
    %p201 = scmp.ne.s32.totalorder %s196, %s198
    %p202 = scmp.eq.s32.totalorder %s15, 0
    %p203 = por %p201, %p202
    %p204 = scmp.ne.s32.totalorder %s196, %s198
    %p205 = scmp.eq.s32.totalorder %s20, 1
    %p206 = por %p204, %p205
    %p207 = scmp.ne.s32.totalorder %s198, %s199
    %p208 = scmp.eq.s32.totalorder %s20, 0
    %p209 = por %p207, %p208
    %p210 = scmp.ne.s32.totalorder %s198, %s199
    %p211 = scmp.eq.s32.totalorder %s21, 1
    %p212 = por %p210, %p211
    %p214 = scmp.ne.s32.totalorder %s199, %s213
    %p215 = scmp.eq.s32.totalorder %s21, 0
    %p216 = por %p214, %p215
    %s217 = ssub.s32 %s15, %s22
    %p218 = scmp.eq.s32.totalorder %s217, 0
    %s220 = sadd.s32 %s219, 1
    %s221 = scalar_select %p218, %s219, %s220
    %p224 = pneg %p218
    %p225 = scmp.eq.s32.totalorder %s15, 1
    %p226 = por %p224, %p225
    %p227 = scmp.ne.s32.totalorder %s219, %s222
    %p228 = scmp.eq.s32.totalorder %s15, 0
    %p229 = por %p227, %p228
    %p230 = scmp.ne.s32.totalorder %s219, %s222
    %p231 = scmp.eq.s32.totalorder %s20, 1
    %p232 = por %p230, %p231
    %p233 = scmp.ne.s32.totalorder %s222, %s223
    %p234 = scmp.eq.s32.totalorder %s20, 0
    %p235 = por %p233, %p234
    %p236 = scmp.ne.s32.totalorder %s222, %s223
    %p237 = scmp.eq.s32.totalorder %s21, 1
    %p238 = por %p236, %p237
    %p240 = scmp.ne.s32.totalorder %s223, %s239
    %p241 = scmp.eq.s32.totalorder %s21, 0
    %p242 = por %p240, %p241
    %p243 = scmp.le.s32.totalorder 1, %s15
    %p244 = scmp.lt.s32.totalorder %s15, 3
    %p245 = pnand %p243, %p244
    %p246 = pneg %p245
    // Predicated region
    $region9: #{stereo_net_forward.1} parent=5 // pred_check
      _
    $region10: #{stereo_net_forward.1} parent=5 // pred_check_branch
      %248 = sbr.rel (%p245) target = $region12
    $region11: #{stereo_net_forward.1} parent=5 // pred_region
      %s249 = ssub.s32 %s15, 1
      // Predicated region
      $region13: #{stereo_net_forward.1} parent=11 // pred_check
        %p250 = pneg %p62
      $region14: #{stereo_net_forward.1} parent=11 // pred_check_branch
        %252 = sbr.rel (%p250) target = $region16
      $region15: #{stereo_net_forward.1} parent=11 // pred_region
        _
      $region16: #{stereo_net_forward.1} parent=11 // pred_fallthru
        _
      // Predicated region
      $region17: #{stereo_net_forward.1} parent=11 // pred_check
        %p253 = pneg %p83
      $region18: #{stereo_net_forward.1} parent=11 // pred_check_branch
        %255 = sbr.rel (%p253) target = $region20
      $region19: #{stereo_net_forward.1} parent=11 // pred_region
        _
      $region20: #{stereo_net_forward.1} parent=11 // pred_fallthru
        _
      // Predicated region
      $region21: #{stereo_net_forward.1} parent=11 // pred_check
        %p256 = pneg %p104
      $region22: #{stereo_net_forward.1} parent=11 // pred_check_branch
        %258 = sbr.rel (%p256) target = $region24
      $region23: #{stereo_net_forward.1} parent=11 // pred_region
        _
      $region24: #{stereo_net_forward.1} parent=11 // pred_fallthru
        _
      // Predicated region
      $region25: #{stereo_net_forward.1} parent=11 // pred_check
        %p259 = pneg %p125
      $region26: #{stereo_net_forward.1} parent=11 // pred_check_branch
        %261 = sbr.rel (%p259) target = $region28
      $region27: #{stereo_net_forward.1} parent=11 // pred_region
        _
      $region28: #{stereo_net_forward.1} parent=11 // pred_fallthru
        _
      // Predicated region
      $region29: #{stereo_net_forward.1} parent=11 // pred_check
        %p262 = pneg %p146
      $region30: #{stereo_net_forward.1} parent=11 // pred_check_branch
        %264 = sbr.rel (%p262) target = $region32
      $region31: #{stereo_net_forward.1} parent=11 // pred_region
        _
      $region32: #{stereo_net_forward.1} parent=11 // pred_fallthru
        _
      // Predicated region
      $region33: #{stereo_net_forward.1} parent=11 // pred_check
        %p265 = pneg %p167
      $region34: #{stereo_net_forward.1} parent=11 // pred_check_branch
        %267 = sbr.rel (%p265) target = $region36
      $region35: #{stereo_net_forward.1} parent=11 // pred_region
        _
      $region36: #{stereo_net_forward.1} parent=11 // pred_fallthru
        _
      // Predicated region
      $region37: #{stereo_net_forward.1} parent=11 // pred_check
        %p268 = pneg %p188
      $region38: #{stereo_net_forward.1} parent=11 // pred_check_branch
        %270 = sbr.rel (%p268) target = $region40
      $region39: #{stereo_net_forward.1} parent=11 // pred_region
        _
      $region40: #{stereo_net_forward.1} parent=11 // pred_fallthru
        _
      // Predicated region
      $region41: #{stereo_net_forward.1} parent=11 // pred_check
        %p271 = pneg %p209
      $region42: #{stereo_net_forward.1} parent=11 // pred_check_branch
        %273 = sbr.rel (%p271) target = $region44
      $region43: #{stereo_net_forward.1} parent=11 // pred_region
        _
      $region44: #{stereo_net_forward.1} parent=11 // pred_fallthru
        _
    $region12: #{stereo_net_forward.1} parent=5 // pred_fallthru
      _
    %p274 = scmp.lt.s32.totalorder %s15, 2
    // Predicated region
    $region45: #{stereo_net_forward.1} parent=5 // pred_check
      %p275 = pneg %p274
    $region46: #{stereo_net_forward.1} parent=5 // pred_check_branch
      %277 = sbr.rel (%p275) target = $region48
    $region47: #{stereo_net_forward.1} parent=5 // pred_region
      // Predicated region
      $region49: #{stereo_net_forward.1} parent=47 // pred_check
        %p278 = pneg %p35
      $region50: #{stereo_net_forward.1} parent=47 // pred_check_branch
        %280 = sbr.rel (%p278) target = $region52
      $region51: #{stereo_net_forward.1} parent=47 // pred_region
        %p281 = scmp.lt.s32.totalorder %s15, 1
        %s282 = scalar_select %p281, %s15, 1
        %s283 = smul.addr %s282, 32
        %s284 = smul.addr %s283, 8
        %s285 = scalar_lea.vmem %s0, %s284
      $region52: #{stereo_net_forward.1} parent=47 // pred_fallthru
        _
    $region48: #{stereo_net_forward.1} parent=5 // pred_fallthru
      _
    %p286 = scmp.le.s32.totalorder 1, %s15
    %p287 = scmp.lt.s32.totalorder %s15, 3
    %p288 = pnand %p286, %p287
    %p289 = pneg %p288
    // Predicated region
    $region53: #{stereo_net_forward.1} parent=5 // pred_check
      _
    $region54: #{stereo_net_forward.1} parent=5 // pred_check_branch
      %291 = sbr.rel (%p288) target = $region56
    $region55: #{stereo_net_forward.1} parent=5 // pred_region
      %s292 = ssub.s32 %s15, 1
      %p293 = scmp.lt.s32.totalorder %s20, 1
      %s294 = scalar_select %p293, %s20, 1
      %s295 = smul.addr %s294, 32
      %s296 = smul.addr %s295, 8
      %s297 = scalar_lea.vmem %s0, %s296
      %p298 = pneg %p41
      %p299 = pneg %p38
      %p300 = pneg %p62
      %p301 = pneg %p59
      %p302 = pneg %p83
      %p303 = pneg %p80
      %p304 = pneg %p104
      %p305 = pneg %p101
      %p306 = pneg %p125
      %p307 = pneg %p122
      %p308 = pneg %p146
      %p309 = pneg %p143
      %p310 = pneg %p167
      %p311 = pneg %p164
      %p312 = pneg %p188
      %p313 = pneg %p185
      %p314 = pneg %p209
      %p315 = pneg %p206
      %p316 = pneg %p235
      %p317 = pneg %p232
      %p318 = scmp.lt.s32.totalorder %s20, 1
      %s319 = scalar_select %p318, %s20, 1
      %s320 = smul.addr %s319, 32
      %s321 = smul.addr %s320, 8
      %s322 = scalar_lea.vmem %s9, %s321
      %p323 = scmp.lt.s32.totalorder %s20, 1
      %s324 = scalar_select %p323, %s20, 1
      %s325 = smul.addr %s324, 32
      %s326 = smul.addr %s325, 8
      %s327 = scalar_lea.vmem %s0, %s326
      %p328 = scmp.lt.s32.totalorder %s20, 1
      %s329 = scalar_select %p328, %s20, 1
      %s330 = smul.addr %s329, 32
      %s331 = smul.addr %s330, 8
      %s332 = scalar_lea.vmem %s9, %s331
      %vm334 = vcmask 48128
      %335 = vst.msk [vmem:[#allocation2] sm:$0xff] %vm334, 0
      %336 = vst.msk [vmem:[#allocation2 + $0x8] sm:$0xff] %vm334, 0
      %s337 = scalar_lea.vmem [#allocation2], 272
      %338 = vst.msk [vmem:[%s337] sm:$0xff] %vm334, 0
      %339 = vst.msk [vmem:[%s337 + $0x8] sm:$0xff] %vm334, 0
      %vm340 = vcmask 44032
      %341 = vst.msk [vmem:[#allocation2] sm:$0xf] %vm340, 0
      %342 = vst.msk [vmem:[#allocation2 + $0x10] sm:$0xf] %vm340, 0
      %343 = vst.msk [vmem:[#allocation2 + $0x20] sm:$0xf] %vm340, 0
      %344 = vst.msk [vmem:[#allocation2 + $0x30] sm:$0xf] %vm340, 0
      %345 = vst.msk [vmem:[#allocation2 + $0x40] sm:$0xf] %vm340, 0
      %346 = vst.msk [vmem:[#allocation2 + $0x50] sm:$0xf] %vm340, 0
      %347 = vst.msk [vmem:[#allocation2 + $0x60] sm:$0xf] %vm340, 0
      %348 = vst.msk [vmem:[#allocation2 + $0x70] sm:$0xf] %vm340, 0
      %349 = vst.msk [vmem:[#allocation2 + $0x80] sm:$0xf] %vm340, 0
      %350 = vst.msk [vmem:[#allocation2 + $0x90] sm:$0xf] %vm340, 0
      %351 = vst.msk [vmem:[#allocation2 + $0xa0] sm:$0xf] %vm340, 0
      %352 = vst.msk [vmem:[#allocation2 + $0xb0] sm:$0xf] %vm340, 0
      %353 = vst.msk [vmem:[#allocation2 + $0xc0] sm:$0xf] %vm340, 0
      %354 = vst.msk [vmem:[#allocation2 + $0xd0] sm:$0xf] %vm340, 0
      %355 = vst.msk [vmem:[#allocation2 + $0xe0] sm:$0xf] %vm340, 0
      %356 = vst.msk [vmem:[#allocation2 + $0xf0] sm:$0xf] %vm340, 0
      %357 = vst.msk [vmem:[#allocation2 + $0x100] sm:$0xf] %vm340, 0
      %358 = vst.msk [vmem:[#allocation2 + $0x110] sm:$0xf] %vm340, 0
      %vm359 = vcmask 48132
      %360 = vst.msk [vmem:[#allocation2 + $0x8] sm:$0xf0] %vm359, 0
      %361 = vst.msk [vmem:[#allocation2 + $0x18] sm:$0xf0] %vm359, 0
      %362 = vst.msk [vmem:[#allocation2 + $0x28] sm:$0xf0] %vm359, 0
      %363 = vst.msk [vmem:[#allocation2 + $0x38] sm:$0xf0] %vm359, 0
      %364 = vst.msk [vmem:[#allocation2 + $0x48] sm:$0xf0] %vm359, 0
      %365 = vst.msk [vmem:[#allocation2 + $0x58] sm:$0xf0] %vm359, 0
      %366 = vst.msk [vmem:[#allocation2 + $0x68] sm:$0xf0] %vm359, 0
      %367 = vst.msk [vmem:[#allocation2 + $0x78] sm:$0xf0] %vm359, 0
      %368 = vst.msk [vmem:[#allocation2 + $0x88] sm:$0xf0] %vm359, 0
      %369 = vst.msk [vmem:[#allocation2 + $0x98] sm:$0xf0] %vm359, 0
      %370 = vst.msk [vmem:[#allocation2 + $0xa8] sm:$0xf0] %vm359, 0
      %371 = vst.msk [vmem:[#allocation2 + $0xb8] sm:$0xf0] %vm359, 0
      %372 = vst.msk [vmem:[#allocation2 + $0xc8] sm:$0xf0] %vm359, 0
      %373 = vst.msk [vmem:[#allocation2 + $0xd8] sm:$0xf0] %vm359, 0
      %374 = vst.msk [vmem:[#allocation2 + $0xe8] sm:$0xf0] %vm359, 0
      %375 = vst.msk [vmem:[#allocation2 + $0xf8] sm:$0xf0] %vm359, 0
      %376 = vst.msk [vmem:[#allocation2 + $0x108] sm:$0xf0] %vm359, 0
      %377 = vst.msk [vmem:[#allocation2 + $0x118] sm:$0xf0] %vm359, 0
      %vm378 = vcmask 523264
      %379 = vst.msk [vmem:[#allocation3] sm:$0xff] %vm378, 0
      %380 = vst.msk [vmem:[#allocation3 + $0x8] sm:$0xff] %vm378, 0
      %s381 = scalar_lea.vmem [#allocation3], 272
      %382 = vst.msk [vmem:[%s381] sm:$0xff] %vm378, 0
      %383 = vst.msk [vmem:[%s381 + $0x8] sm:$0xff] %vm378, 0
      %vm384 = vcmask 519168
      %385 = vst.msk [vmem:[#allocation3] sm:$0xf] %vm384, 0
      %386 = vst.msk [vmem:[#allocation3 + $0x10] sm:$0xf] %vm384, 0
      %387 = vst.msk [vmem:[#allocation3 + $0x20] sm:$0xf] %vm384, 0
      %388 = vst.msk [vmem:[#allocation3 + $0x30] sm:$0xf] %vm384, 0
      %389 = vst.msk [vmem:[#allocation3 + $0x40] sm:$0xf] %vm384, 0
      %390 = vst.msk [vmem:[#allocation3 + $0x50] sm:$0xf] %vm384, 0
      %391 = vst.msk [vmem:[#allocation3 + $0x60] sm:$0xf] %vm384, 0
      %392 = vst.msk [vmem:[#allocation3 + $0x70] sm:$0xf] %vm384, 0
      %393 = vst.msk [vmem:[#allocation3 + $0x80] sm:$0xf] %vm384, 0
      %394 = vst.msk [vmem:[#allocation3 + $0x90] sm:$0xf] %vm384, 0
      %395 = vst.msk [vmem:[#allocation3 + $0xa0] sm:$0xf] %vm384, 0
      %396 = vst.msk [vmem:[#allocation3 + $0xb0] sm:$0xf] %vm384, 0
      %397 = vst.msk [vmem:[#allocation3 + $0xc0] sm:$0xf] %vm384, 0
      %398 = vst.msk [vmem:[#allocation3 + $0xd0] sm:$0xf] %vm384, 0
      %399 = vst.msk [vmem:[#allocation3 + $0xe0] sm:$0xf] %vm384, 0
      %400 = vst.msk [vmem:[#allocation3 + $0xf0] sm:$0xf] %vm384, 0
      %401 = vst.msk [vmem:[#allocation3 + $0x100] sm:$0xf] %vm384, 0
      %402 = vst.msk [vmem:[#allocation3 + $0x110] sm:$0xf] %vm384, 0
      %vm403 = vcmask 523268
      %404 = vst.msk [vmem:[#allocation3 + $0x8] sm:$0xf0] %vm403, 0
      %405 = vst.msk [vmem:[#allocation3 + $0x18] sm:$0xf0] %vm403, 0
      %406 = vst.msk [vmem:[#allocation3 + $0x28] sm:$0xf0] %vm403, 0
      %407 = vst.msk [vmem:[#allocation3 + $0x38] sm:$0xf0] %vm403, 0
      %408 = vst.msk [vmem:[#allocation3 + $0x48] sm:$0xf0] %vm403, 0
      %409 = vst.msk [vmem:[#allocation3 + $0x58] sm:$0xf0] %vm403, 0
      %410 = vst.msk [vmem:[#allocation3 + $0x68] sm:$0xf0] %vm403, 0
      %411 = vst.msk [vmem:[#allocation3 + $0x78] sm:$0xf0] %vm403, 0
      %412 = vst.msk [vmem:[#allocation3 + $0x88] sm:$0xf0] %vm403, 0
      %413 = vst.msk [vmem:[#allocation3 + $0x98] sm:$0xf0] %vm403, 0
      %414 = vst.msk [vmem:[#allocation3 + $0xa8] sm:$0xf0] %vm403, 0
      %415 = vst.msk [vmem:[#allocation3 + $0xb8] sm:$0xf0] %vm403, 0
      %416 = vst.msk [vmem:[#allocation3 + $0xc8] sm:$0xf0] %vm403, 0
      %417 = vst.msk [vmem:[#allocation3 + $0xd8] sm:$0xf0] %vm403, 0
      %418 = vst.msk [vmem:[#allocation3 + $0xe8] sm:$0xf0] %vm403, 0
      %419 = vst.msk [vmem:[#allocation3 + $0xf8] sm:$0xf0] %vm403, 0
      %420 = vst.msk [vmem:[#allocation3 + $0x108] sm:$0xf0] %vm403, 0
      %421 = vst.msk [vmem:[#allocation3 + $0x118] sm:$0xf0] %vm403, 0
      %422 = vst [vmem:[#allocation4] sm:$0xff] 0
      %423 = vst [vmem:[#allocation4 + $0x8] sm:$0xff] 0
      %s424 = scalar_lea.vmem [#allocation4], 272
      %425 = vst [vmem:[%s424] sm:$0xff] 0
      %426 = vst [vmem:[%s424 + $0x8] sm:$0xff] 0
      %427 = vst [vmem:[#allocation4] sm:$0xf] 0
      %428 = vst [vmem:[#allocation4 + $0x10] sm:$0xf] 0
      %429 = vst [vmem:[#allocation4 + $0x20] sm:$0xf] 0
      %430 = vst [vmem:[#allocation4 + $0x30] sm:$0xf] 0
      %431 = vst [vmem:[#allocation4 + $0x40] sm:$0xf] 0
      %432 = vst [vmem:[#allocation4 + $0x50] sm:$0xf] 0
      %433 = vst [vmem:[#allocation4 + $0x60] sm:$0xf] 0
      %434 = vst [vmem:[#allocation4 + $0x70] sm:$0xf] 0
      %435 = vst [vmem:[#allocation4 + $0x80] sm:$0xf] 0
      %436 = vst [vmem:[#allocation4 + $0x90] sm:$0xf] 0
      %437 = vst [vmem:[#allocation4 + $0xa0] sm:$0xf] 0
      %438 = vst [vmem:[#allocation4 + $0xb0] sm:$0xf] 0
      %439 = vst [vmem:[#allocation4 + $0xc0] sm:$0xf] 0
      %440 = vst [vmem:[#allocation4 + $0xd0] sm:$0xf] 0
      %441 = vst [vmem:[#allocation4 + $0xe0] sm:$0xf] 0
      %442 = vst [vmem:[#allocation4 + $0xf0] sm:$0xf] 0
      %443 = vst [vmem:[#allocation4 + $0x100] sm:$0xf] 0
      %444 = vst [vmem:[#allocation4 + $0x110] sm:$0xf] 0
      %445 = vst [vmem:[#allocation4 + $0x8] sm:$0xf0] 0
      %446 = vst [vmem:[#allocation4 + $0x18] sm:$0xf0] 0
      %447 = vst [vmem:[#allocation4 + $0x28] sm:$0xf0] 0
      %448 = vst [vmem:[#allocation4 + $0x38] sm:$0xf0] 0
      %449 = vst [vmem:[#allocation4 + $0x48] sm:$0xf0] 0
      %450 = vst [vmem:[#allocation4 + $0x58] sm:$0xf0] 0
      %451 = vst [vmem:[#allocation4 + $0x68] sm:$0xf0] 0
      %452 = vst [vmem:[#allocation4 + $0x78] sm:$0xf0] 0
      %453 = vst [vmem:[#allocation4 + $0x88] sm:$0xf0] 0
      %454 = vst [vmem:[#allocation4 + $0x98] sm:$0xf0] 0
      %455 = vst [vmem:[#allocation4 + $0xa8] sm:$0xf0] 0
      %456 = vst [vmem:[#allocation4 + $0xb8] sm:$0xf0] 0
      %457 = vst [vmem:[#allocation4 + $0xc8] sm:$0xf0] 0
      %458 = vst [vmem:[#allocation4 + $0xd8] sm:$0xf0] 0
      %459 = vst [vmem:[#allocation4 + $0xe8] sm:$0xf0] 0
      %460 = vst [vmem:[#allocation4 + $0xf8] sm:$0xf0] 0
      %461 = vst [vmem:[#allocation4 + $0x108] sm:$0xf0] 0
      %462 = vst [vmem:[#allocation4 + $0x118] sm:$0xf0] 0
      %v463 = vld [vmem:[%s327] sm:$0xff]
      %v464 = vld [vmem:[%s327 + $0x8] sm:$0xff]
      %v465 = vld [vmem:[%s327 + $0x10] sm:$0xff]
      %v466 = vld [vmem:[%s327 + $0x18] sm:$0xff]
      %v467 = vld [vmem:[%s327 + $0x20] sm:$0xff]
      %v468 = vld [vmem:[%s327 + $0x28] sm:$0xff]
      %v469 = vld [vmem:[%s327 + $0x30] sm:$0xff]
      %v470 = vld [vmem:[%s327 + $0x38] sm:$0xff]
      %v471 = vld [vmem:[%s327 + $0x40] sm:$0xff]
      %v472 = vld [vmem:[%s327 + $0x48] sm:$0xff]
      %v473 = vld [vmem:[%s327 + $0x50] sm:$0xff]
      %v474 = vld [vmem:[%s327 + $0x58] sm:$0xff]
      %v475 = vld [vmem:[%s327 + $0x60] sm:$0xff]
      %v476 = vld [vmem:[%s327 + $0x68] sm:$0xff]
      %v477 = vld [vmem:[%s327 + $0x70] sm:$0xff]
      %v478 = vld [vmem:[%s327 + $0x78] sm:$0xff]
      %v479 = vld [vmem:[%s327 + $0x80] sm:$0xff]
      %v480 = vld [vmem:[%s327 + $0x88] sm:$0xff]
      %v481 = vld [vmem:[%s327 + $0x90] sm:$0xff]
      %v482 = vld [vmem:[%s327 + $0x98] sm:$0xff]
      %v483 = vld [vmem:[%s327 + $0xa0] sm:$0xff]
      %v484 = vld [vmem:[%s327 + $0xa8] sm:$0xff]
      %v485 = vld [vmem:[%s327 + $0xb0] sm:$0xff]
      %v486 = vld [vmem:[%s327 + $0xb8] sm:$0xff]
      %v487 = vld [vmem:[%s327 + $0xc0] sm:$0xff]
      %v488 = vld [vmem:[%s327 + $0xc8] sm:$0xff]
      %v489 = vld [vmem:[%s327 + $0xd0] sm:$0xff]
      %v490 = vld [vmem:[%s327 + $0xd8] sm:$0xff]
      %v491 = vld [vmem:[%s327 + $0xe0] sm:$0xff]
      %v492 = vld [vmem:[%s327 + $0xe8] sm:$0xff]
      %v493 = vld [vmem:[%s327 + $0xf0] sm:$0xff]
      %v494 = vld [vmem:[%s327 + $0xf8] sm:$0xff]
      %v495 = vpack.c.bf16 %v464, %v463
      %v496 = vpack.c.bf16 %v466, %v465
      %v497 = vpack.c.bf16 %v468, %v467
      %v498 = vpack.c.bf16 %v470, %v469
      %v499 = vpack.c.bf16 %v472, %v471
      %v500 = vpack.c.bf16 %v474, %v473
      %v501 = vpack.c.bf16 %v476, %v475
      %v502 = vpack.c.bf16 %v478, %v477
      %v503 = vpack.c.bf16 %v480, %v479
      %v504 = vpack.c.bf16 %v482, %v481
      %v505 = vpack.c.bf16 %v484, %v483
      %v506 = vpack.c.bf16 %v486, %v485
      %v507 = vpack.c.bf16 %v488, %v487
      %v508 = vpack.c.bf16 %v490, %v489
      %v509 = vpack.c.bf16 %v492, %v491
      %v510 = vpack.c.bf16 %v494, %v493
      %v527 = vrot.slane %v495, 4
      %v528 = vrot.slane %v496, 4
      %v529 = vrot.slane %v497, 4
      %v530 = vrot.slane %v498, 4
      %v531 = vrot.slane %v499, 4
      %v532 = vrot.slane %v500, 4
      %v533 = vrot.slane %v501, 4
      %v534 = vrot.slane %v502, 4
      %v535 = vrot.slane %v503, 4
      %v536 = vrot.slane %v504, 4
      %v537 = vrot.slane %v505, 4
      %v538 = vrot.slane %v506, 4
      %v539 = vrot.slane %v507, 4
      %v540 = vrot.slane %v508, 4
      %v541 = vrot.slane %v509, 4
      %v542 = vrot.slane %v510, 4
      %s559 = scalar_lea.vmem [#allocation2], 16
      %560 = vst.msk [vmem:[%s559] sm:$0xf0] %vm359, %v527
      %561 = vst.msk [vmem:[%s559 + $0x8] sm:$0xf] %vm340, %v527
      %562 = vst.msk [vmem:[%s559 + $0x10] sm:$0xf0] %vm359, %v528
      %563 = vst.msk [vmem:[%s559 + $0x18] sm:$0xf] %vm340, %v528
      %564 = vst.msk [vmem:[%s559 + $0x20] sm:$0xf0] %vm359, %v529
      %565 = vst.msk [vmem:[%s559 + $0x28] sm:$0xf] %vm340, %v529
      %566 = vst.msk [vmem:[%s559 + $0x30] sm:$0xf0] %vm359, %v530
      %567 = vst.msk [vmem:[%s559 + $0x38] sm:$0xf] %vm340, %v530
      %568 = vst.msk [vmem:[%s559 + $0x40] sm:$0xf0] %vm359, %v531
      %569 = vst.msk [vmem:[%s559 + $0x48] sm:$0xf] %vm340, %v531
      %570 = vst.msk [vmem:[%s559 + $0x50] sm:$0xf0] %vm359, %v532
      %571 = vst.msk [vmem:[%s559 + $0x58] sm:$0xf] %vm340, %v532
      %572 = vst.msk [vmem:[%s559 + $0x60] sm:$0xf0] %vm359, %v533
      %573 = vst.msk [vmem:[%s559 + $0x68] sm:$0xf] %vm340, %v533
      %574 = vst.msk [vmem:[%s559 + $0x70] sm:$0xf0] %vm359, %v534
      %575 = vst.msk [vmem:[%s559 + $0x78] sm:$0xf] %vm340, %v534
      %576 = vst.msk [vmem:[%s559 + $0x80] sm:$0xf0] %vm359, %v535
      %577 = vst.msk [vmem:[%s559 + $0x88] sm:$0xf] %vm340, %v535
      %578 = vst.msk [vmem:[%s559 + $0x90] sm:$0xf0] %vm359, %v536
      %579 = vst.msk [vmem:[%s559 + $0x98] sm:$0xf] %vm340, %v536
      %580 = vst.msk [vmem:[%s559 + $0xa0] sm:$0xf0] %vm359, %v537
      %581 = vst.msk [vmem:[%s559 + $0xa8] sm:$0xf] %vm340, %v537
      %582 = vst.msk [vmem:[%s559 + $0xb0] sm:$0xf0] %vm359, %v538
      %583 = vst.msk [vmem:[%s559 + $0xb8] sm:$0xf] %vm340, %v538
      %584 = vst.msk [vmem:[%s559 + $0xc0] sm:$0xf0] %vm359, %v539
      %585 = vst.msk [vmem:[%s559 + $0xc8] sm:$0xf] %vm340, %v539
      %586 = vst.msk [vmem:[%s559 + $0xd0] sm:$0xf0] %vm359, %v540
      %587 = vst.msk [vmem:[%s559 + $0xd8] sm:$0xf] %vm340, %v540
      %588 = vst.msk [vmem:[%s559 + $0xe0] sm:$0xf0] %vm359, %v541
      %589 = vst.msk [vmem:[%s559 + $0xe8] sm:$0xf] %vm340, %v541
      %590 = vst.msk [vmem:[%s559 + $0xf0] sm:$0xf0] %vm359, %v542
      %591 = vst.msk [vmem:[%s559 + $0xf8] sm:$0xf] %vm340, %v542
      %v592 = vld [vmem:[#allocation2] sm:$0xf8]
      %v593 = vld [vmem:[#allocation2 + $0x8] sm:$0xf]
      %v594 = vld [vmem:[#allocation2 + $0x10] sm:$0xf8]
      %v595 = vld [vmem:[#allocation2 + $0x18] sm:$0xf]
      %v596 = vld [vmem:[#allocation2 + $0x20] sm:$0xf8]
      %v597 = vld [vmem:[#allocation2 + $0x28] sm:$0xf]
      %v598 = vld [vmem:[#allocation2 + $0x30] sm:$0xf8]
      %v599 = vld [vmem:[#allocation2 + $0x38] sm:$0xf]
      %v600 = vld [vmem:[#allocation2 + $0x40] sm:$0xf8]
      %v601 = vld [vmem:[#allocation2 + $0x48] sm:$0xf]
      %v602 = vld [vmem:[#allocation2 + $0x50] sm:$0xf8]
      %v603 = vld [vmem:[#allocation2 + $0x58] sm:$0xf]
      %v604 = vld [vmem:[#allocation2 + $0x60] sm:$0xf8]
      %v605 = vld [vmem:[#allocation2 + $0x68] sm:$0xf]
      %v606 = vld [vmem:[#allocation2 + $0x70] sm:$0xf8]
      %v607 = vld [vmem:[#allocation2 + $0x78] sm:$0xf]
      %v608 = vld [vmem:[#allocation2 + $0x80] sm:$0xf8]
      %v609 = vld [vmem:[#allocation2 + $0x88] sm:$0xf]
      %v610 = vld [vmem:[#allocation2 + $0x90] sm:$0xf8]
      %v611 = vld [vmem:[#allocation2 + $0x98] sm:$0xf]
      %v612 = vld [vmem:[#allocation2 + $0xa0] sm:$0xf8]
      %v613 = vld [vmem:[#allocation2 + $0xa8] sm:$0xf]
      %v614 = vld [vmem:[#allocation2 + $0xb0] sm:$0xf8]
      %v615 = vld [vmem:[#allocation2 + $0xb8] sm:$0xf]
      %v616 = vld [vmem:[#allocation2 + $0xc0] sm:$0xf8]
      %v617 = vld [vmem:[#allocation2 + $0xc8] sm:$0xf]
      %v618 = vld [vmem:[#allocation2 + $0xd0] sm:$0xf8]
      %v619 = vld [vmem:[#allocation2 + $0xd8] sm:$0xf]
      %v620 = vld [vmem:[#allocation2 + $0xe0] sm:$0xf8]
      %v621 = vld [vmem:[#allocation2 + $0xe8] sm:$0xf]
      %v622 = vld [vmem:[#allocation2 + $0xf0] sm:$0xf8]
      %v623 = vld [vmem:[#allocation2 + $0xf8] sm:$0xf]
      %v624 = vld [vmem:[#allocation2 + $0x100] sm:$0xf8]
      %v625 = vld [vmem:[#allocation2 + $0x108] sm:$0xf]
      %v626 = vld [vmem:[#allocation2 + $0x110] sm:$0xf8]
      %v627 = vld [vmem:[#allocation2 + $0x118] sm:$0xf]
      %v628 = vld [vmem:[#allocation2] sm:$0xf0]
      %v629 = vld [vmem:[#allocation2 + $0x10] sm:$0xf0]
      %v630 = vld [vmem:[#allocation2 + $0x20] sm:$0xf0]
      %v631 = vld [vmem:[#allocation2 + $0x30] sm:$0xf0]
      %v632 = vld [vmem:[#allocation2 + $0x40] sm:$0xf0]
      %v633 = vld [vmem:[#allocation2 + $0x50] sm:$0xf0]
      %v634 = vld [vmem:[#allocation2 + $0x60] sm:$0xf0]
      %v635 = vld [vmem:[#allocation2 + $0x70] sm:$0xf0]
      %v636 = vld [vmem:[#allocation2 + $0x80] sm:$0xf0]
      %v637 = vld [vmem:[#allocation2 + $0x90] sm:$0xf0]
      %v638 = vld [vmem:[#allocation2 + $0xa0] sm:$0xf0]
      %v639 = vld [vmem:[#allocation2 + $0xb0] sm:$0xf0]
      %v640 = vld [vmem:[#allocation2 + $0xc0] sm:$0xf0]
      %v641 = vld [vmem:[#allocation2 + $0xd0] sm:$0xf0]
      %v642 = vld [vmem:[#allocation2 + $0xe0] sm:$0xf0]
      %v643 = vld [vmem:[#allocation2 + $0xf0] sm:$0xf0]
      %v644 = vld [vmem:[#allocation2 + $0x100] sm:$0xf0]
      %v645 = vld [vmem:[#allocation2 + $0x110] sm:$0xf0]
      %v646 = vld [vmem:[#allocation2 + $0x8] sm:$0x1f]
      %v647 = vld [vmem:[#allocation2 + $0x18] sm:$0x1f]
      %v648 = vld [vmem:[#allocation2 + $0x28] sm:$0x1f]
      %v649 = vld [vmem:[#allocation2 + $0x38] sm:$0x1f]
      %v650 = vld [vmem:[#allocation2 + $0x48] sm:$0x1f]
      %v651 = vld [vmem:[#allocation2 + $0x58] sm:$0x1f]
      %v652 = vld [vmem:[#allocation2 + $0x68] sm:$0x1f]
      %v653 = vld [vmem:[#allocation2 + $0x78] sm:$0x1f]
      %v654 = vld [vmem:[#allocation2 + $0x88] sm:$0x1f]
      %v655 = vld [vmem:[#allocation2 + $0x98] sm:$0x1f]
      %v656 = vld [vmem:[#allocation2 + $0xa8] sm:$0x1f]
      %v657 = vld [vmem:[#allocation2 + $0xb8] sm:$0x1f]
      %v658 = vld [vmem:[#allocation2 + $0xc8] sm:$0x1f]
      %v659 = vld [vmem:[#allocation2 + $0xd8] sm:$0x1f]
      %v660 = vld [vmem:[#allocation2 + $0xe8] sm:$0x1f]
      %v661 = vld [vmem:[#allocation2 + $0xf8] sm:$0x1f]
      %v662 = vld [vmem:[#allocation2 + $0x108] sm:$0x1f]
      %v663 = vld [vmem:[#allocation2 + $0x118] sm:$0x1f]
      %v664 = vld [vmem:[%s1] sm:$0x7]
      %s665 = scalar_lea.vmem %s1, 4
      %v666 = vld [vmem:[%s665] sm:$0x7]
      %vm699 = vcmask 1043456
      %v700 = vrot.slane %v628, 4
      %v701 = vrot.slane %v593, 4
      %v702 = vsel %vm699, %v700, %v701
      %v703 = vrot.slane %v629, 4
      %v704 = vrot.slane %v595, 4
      %v705 = vsel %vm699, %v703, %v704
      %v706 = vrot.slane %v630, 4
      %v707 = vrot.slane %v597, 4
      %v708 = vsel %vm699, %v706, %v707
      %v709 = vrot.slane %v631, 4
      %v710 = vrot.slane %v599, 4
      %v711 = vsel %vm699, %v709, %v710
      %v712 = vrot.slane %v632, 4
      %v713 = vrot.slane %v601, 4
      %v714 = vsel %vm699, %v712, %v713
      %v715 = vrot.slane %v633, 4
      %v716 = vrot.slane %v603, 4
      %v717 = vsel %vm699, %v715, %v716
      %v718 = vrot.slane %v634, 4
      %v719 = vrot.slane %v605, 4
      %v720 = vsel %vm699, %v718, %v719
      %v721 = vrot.slane %v635, 4
      %v722 = vrot.slane %v607, 4
      %v723 = vsel %vm699, %v721, %v722
      %v724 = vrot.slane %v636, 4
      %v725 = vrot.slane %v609, 4
      %v726 = vsel %vm699, %v724, %v725
      %v727 = vrot.slane %v637, 4
      %v728 = vrot.slane %v611, 4
      %v729 = vsel %vm699, %v727, %v728
      %v730 = vrot.slane %v638, 4
      %v731 = vrot.slane %v613, 4
      %v732 = vsel %vm699, %v730, %v731
      %v733 = vrot.slane %v639, 4
      %v734 = vrot.slane %v615, 4
      %v735 = vsel %vm699, %v733, %v734
      %v736 = vrot.slane %v640, 4
      %v737 = vrot.slane %v617, 4
      %v738 = vsel %vm699, %v736, %v737
      %v739 = vrot.slane %v641, 4
      %v740 = vrot.slane %v619, 4
      %v741 = vsel %vm699, %v739, %v740
      %v742 = vrot.slane %v642, 4
      %v743 = vrot.slane %v621, 4
      %v744 = vsel %vm699, %v742, %v743
      %v745 = vrot.slane %v643, 4
      %v746 = vrot.slane %v623, 4
      %v747 = vsel %vm699, %v745, %v746
      %v749 = vsel %vm334, %v702, 0
      %v752 = vsel %vm334, %v705, 0
      %v755 = vsel %vm334, %v708, 0
      %v758 = vsel %vm334, %v711, 0
      %v761 = vsel %vm334, %v714, 0
      %v764 = vsel %vm334, %v717, 0
      %v767 = vsel %vm334, %v720, 0
      %v770 = vsel %vm334, %v723, 0
      %v773 = vsel %vm334, %v726, 0
      %v776 = vsel %vm334, %v729, 0
      %v779 = vsel %vm334, %v732, 0
      %v782 = vsel %vm334, %v735, 0
      %v785 = vsel %vm334, %v738, 0
      %v788 = vsel %vm334, %v741, 0
      %v791 = vsel %vm334, %v744, 0
      %v794 = vsel %vm334, %v747, 0
      %vm796 = vcmask 1042432
      %v798 = vsel %vm796, %v666, 0
      %800 = vmatprep.subr.bf16.mxu0 0
      %801 = vmatpush1.bf16.msra.mxu0 %v798
      %802 = vmatprep.subr.bf16.mxu0 0
      %803 = vmatpush1.bf16.msra.mxu0 0
      %804 = vmatprep.subr.bf16.mxu0 0
      %805 = vmatpush1.bf16.msra.mxu0 0
      %806 = vmatprep.subr.bf16.mxu0 0
      %807 = vmatpush1.bf16.msra.mxu0 0
      %808 = vmatprep.subr.bf16.mxu0 0
      %809 = vmatpush1.bf16.msra.mxu0 0
      %810 = vmatprep.subr.bf16.mxu0 0
      %811 = vmatpush1.bf16.msra.mxu0 0
      %812 = vmatprep.subr.bf16.mxu0 0
      %813 = vmatpush1.bf16.msra.mxu0 0
      %814 = vmatprep.subr.bf16.mxu0 0
      %815 = vmatpush1.bf16.msra.mxu0 0
      %816 = vmatprep.subr.bf16.mxu0 0
      %817 = vmatpush1.bf16.msra.mxu0 0
      %818 = vmatprep.subr.bf16.mxu0 0
      %819 = vmatpush1.bf16.msra.mxu0 0
      %820 = vmatprep.subr.bf16.mxu0 0
      %821 = vmatpush1.bf16.msra.mxu0 0
      %822 = vmatprep.subr.bf16.mxu0 0
      %823 = vmatpush1.bf16.msra.mxu0 0
      %824 = vmatprep.subr.bf16.mxu0 0
      %825 = vmatpush1.bf16.msra.mxu0 0
      %826 = vmatprep.subr.bf16.mxu0 0
      %827 = vmatpush1.bf16.msra.mxu0 0
      %828 = vmatprep.subr.bf16.mxu0 0
      %829 = vmatpush1.bf16.msra.mxu0 0
      %830 = vmatprep.subr.bf16.mxu0 0
      %831 = vmatpush1.bf16.msra.mxu0 0
      %832 = vmatprep.mubr.bf16.mxu0 0
      %833 = vmatmul.mubr.bf16.gmra.mrb[0].mxu0 %v749
      %v834 = vpop.f32.mrb[0].mxu0
      %v835 = vadd.f32 0.0, %v834
      %v836 = vpop.f32.mrb[0].mxu0
      %v837 = vpop.f32.mrb[0].mxu0
      %v838 = vadd.f32 0.0, %v837
      %v839 = vpop.f32.mrb[0].mxu0
      %840 = vmatprep.mubr.bf16.mxu0 0
      %841 = vmatmul.mubr.bf16.gmra.mrb[0].mxu0 %v752
      %v842 = vpop.f32.mrb[0].mxu0
      %v843 = vadd.f32 0.0, %v842
      %v844 = vpop.f32.mrb[0].mxu0
      %v845 = vpop.f32.mrb[0].mxu0
      %v846 = vadd.f32 0.0, %v845
      %v847 = vpop.f32.mrb[0].mxu0
      %848 = vmatprep.mubr.bf16.mxu0 0
      %849 = vmatmul.mubr.bf16.gmra.mrb[0].mxu0 %v755
      %v850 = vpop.f32.mrb[0].mxu0
      %v851 = vadd.f32 0.0, %v850
      %v852 = vpop.f32.mrb[0].mxu0
      %v853 = vpop.f32.mrb[0].mxu0
      %v854 = vadd.f32 0.0, %v853
      %v855 = vpop.f32.mrb[0].mxu0
      %856 = vmatprep.mubr.bf16.mxu0 0
      %857 = vmatmul.mubr.bf16.gmra.mrb[0].mxu0 %v758
      %v858 = vpop.f32.mrb[0].mxu0
      %v859 = vadd.f32 0.0, %v858
      %v860 = vpop.f32.mrb[0].mxu0
      %v861 = vpop.f32.mrb[0].mxu0
      %v862 = vadd.f32 0.0, %v861
      %v863 = vpop.f32.mrb[0].mxu0
      %864 = vmatprep.mubr.bf16.mxu0 0
      %865 = vmatmul.mubr.bf16.gmra.mrb[0].mxu0 %v761
      %v866 = vpop.f32.mrb[0].mxu0
      %v867 = vadd.f32 0.0, %v866
      %v868 = vpop.f32.mrb[0].mxu0
      %v869 = vpop.f32.mrb[0].mxu0
      %v870 = vadd.f32 0.0, %v869
      %v871 = vpop.f32.mrb[0].mxu0
      %872 = vmatprep.mubr.bf16.mxu0 0
      %873 = vmatmul.mubr.bf16.gmra.mrb[0].mxu0 %v764
      %v874 = vpop.f32.mrb[0].mxu0
      %v875 = vadd.f32 0.0, %v874
      %v876 = vpop.f32.mrb[0].mxu0
      %v877 = vpop.f32.mrb[0].mxu0
      %v878 = vadd.f32 0.0, %v877
      %v879 = vpop.f32.mrb[0].mxu0
      %880 = vmatprep.mubr.bf16.mxu0 0
      %881 = vmatmul.mubr.bf16.gmra.mrb[0].mxu0 %v767
      %v882 = vpop.f32.mrb[0].mxu0
      %v883 = vadd.f32 0.0, %v882
      %v884 = vpop.f32.mrb[0].mxu0
      %v885 = vpop.f32.mrb[0].mxu0
      %v886 = vadd.f32 0.0, %v885
      %v887 = vpop.f32.mrb[0].mxu0
      %888 = vmatprep.mubr.bf16.mxu0 0
      %889 = vmatmul.mubr.bf16.gmra.mrb[0].mxu0 %v770
      %v890 = vpop.f32.mrb[0].mxu0
      %v891 = vadd.f32 0.0, %v890
      %v892 = vpop.f32.mrb[0].mxu0
      %v893 = vpop.f32.mrb[0].mxu0
      %v894 = vadd.f32 0.0, %v893
      %v895 = vpop.f32.mrb[0].mxu0
      %896 = vmatprep.mubr.bf16.mxu0 0
      %897 = vmatmul.mubr.bf16.gmra.mrb[0].mxu0 %v773
      %v898 = vpop.f32.mrb[0].mxu0
      %v899 = vadd.f32 0.0, %v898
      %v900 = vpop.f32.mrb[0].mxu0
      %v901 = vpop.f32.mrb[0].mxu0
      %v902 = vadd.f32 0.0, %v901
      %v903 = vpop.f32.mrb[0].mxu0
      %904 = vmatprep.mubr.bf16.mxu0 0
      %905 = vmatmul.mubr.bf16.gmra.mrb[0].mxu0 %v776
      %v906 = vpop.f32.mrb[0].mxu0
      %v907 = vadd.f32 0.0, %v906
      %v908 = vpop.f32.mrb[0].mxu0
      %v909 = vpop.f32.mrb[0].mxu0
      %v910 = vadd.f32 0.0, %v909
      %v911 = vpop.f32.mrb[0].mxu0
      %912 = vmatprep.mubr.bf16.mxu0 0
      %913 = vmatmul.mubr.bf16.gmra.mrb[0].mxu0 %v779
      %v914 = vpop.f32.mrb[0].mxu0
      %v915 = vadd.f32 0.0, %v914
      %v916 = vpop.f32.mrb[0].mxu0
      %v917 = vpop.f32.mrb[0].mxu0
      %v918 = vadd.f32 0.0, %v917
      %v919 = vpop.f32.mrb[0].mxu0
      %920 = vmatprep.mubr.bf16.mxu0 0
      %921 = vmatmul.mubr.bf16.gmra.mrb[0].mxu0 %v782
      %v922 = vpop.f32.mrb[0].mxu0
      %v923 = vadd.f32 0.0, %v922
      %v924 = vpop.f32.mrb[0].mxu0
      %v925 = vpop.f32.mrb[0].mxu0
      %v926 = vadd.f32 0.0, %v925
      %v927 = vpop.f32.mrb[0].mxu0
      %928 = vmatprep.mubr.bf16.mxu0 0
      %929 = vmatmul.mubr.bf16.gmra.mrb[0].mxu0 %v785
      %v930 = vpop.f32.mrb[0].mxu0
      %v931 = vadd.f32 0.0, %v930
      %v932 = vpop.f32.mrb[0].mxu0
      %v933 = vpop.f32.mrb[0].mxu0
      %v934 = vadd.f32 0.0, %v933
      %v935 = vpop.f32.mrb[0].mxu0
      %936 = vmatprep.mubr.bf16.mxu0 0
      %937 = vmatmul.mubr.bf16.gmra.mrb[0].mxu0 %v788
      %v938 = vpop.f32.mrb[0].mxu0
      %v939 = vadd.f32 0.0, %v938
      %v940 = vpop.f32.mrb[0].mxu0
      %v941 = vpop.f32.mrb[0].mxu0
      %v942 = vadd.f32 0.0, %v941
      %v943 = vpop.f32.mrb[0].mxu0
      %944 = vmatprep.mubr.bf16.mxu0 0
      %945 = vmatmul.mubr.bf16.gmra.mrb[0].mxu0 %v791
      %v946 = vpop.f32.mrb[0].mxu0
      %v947 = vadd.f32 0.0, %v946
      %v948 = vpop.f32.mrb[0].mxu0
      %v949 = vpop.f32.mrb[0].mxu0
      %v950 = vadd.f32 0.0, %v949
      %v951 = vpop.f32.mrb[0].mxu0
      %952 = vmatprep.mubr.bf16.mxu0 0
      %953 = vmatmul.mubr.bf16.gmra.mrb[0].mxu0 %v794
      %v954 = vpop.f32.mrb[0].mxu0
      %v955 = vadd.f32 0.0, %v954
      %v956 = vpop.f32.mrb[0].mxu0
      %v957 = vpop.f32.mrb[0].mxu0
      %v958 = vadd.f32 0.0, %v957
      %v959 = vpop.f32.mrb[0].mxu0
      %960 = vdwg.mxu0
      %vm961 = vsmask.f32 4352
      %v963 = vshrl.u32 %v592, 16
      %v965 = vrot.slane %v963, 3
      %v966 = vshll.u32 %v592, 16
      %v968 = vrot.slane %v966, 4
      %v969 = vor.u32 %v965, %v968
      %v971 = vshrl.u32 %v593, 16
      %v973 = vrot.slane %v971, 3
      %v974 = vshll.u32 %v593, 16
      %v976 = vrot.slane %v974, 4
      %v977 = vor.u32 %v973, %v976
      %v978 = vsel %vm961, %v969, %v977
      %v980 = vshrl.u32 %v594, 16
      %v982 = vrot.slane %v980, 3
      %v983 = vshll.u32 %v594, 16
      %v985 = vrot.slane %v983, 4
      %v986 = vor.u32 %v982, %v985
      %v988 = vshrl.u32 %v595, 16
      %v990 = vrot.slane %v988, 3
      %v991 = vshll.u32 %v595, 16
      %v993 = vrot.slane %v991, 4
      %v994 = vor.u32 %v990, %v993
      %v995 = vsel %vm961, %v986, %v994
      %v997 = vshrl.u32 %v596, 16
      %v999 = vrot.slane %v997, 3
      %v1000 = vshll.u32 %v596, 16
      %v1002 = vrot.slane %v1000, 4
      %v1003 = vor.u32 %v999, %v1002
      %v1005 = vshrl.u32 %v597, 16
      %v1007 = vrot.slane %v1005, 3
      %v1008 = vshll.u32 %v597, 16
      %v1010 = vrot.slane %v1008, 4
      %v1011 = vor.u32 %v1007, %v1010
      %v1012 = vsel %vm961, %v1003, %v1011
      %v1014 = vshrl.u32 %v598, 16
      %v1016 = vrot.slane %v1014, 3
      %v1017 = vshll.u32 %v598, 16
      %v1019 = vrot.slane %v1017, 4
      %v1020 = vor.u32 %v1016, %v1019
      %v1022 = vshrl.u32 %v599, 16
      %v1024 = vrot.slane %v1022, 3
      %v1025 = vshll.u32 %v599, 16
      %v1027 = vrot.slane %v1025, 4
      %v1028 = vor.u32 %v1024, %v1027
      %v1029 = vsel %vm961, %v1020, %v1028
      %v1031 = vshrl.u32 %v600, 16
      %v1033 = vrot.slane %v1031, 3
      %v1034 = vshll.u32 %v600, 16
      %v1036 = vrot.slane %v1034, 4
      %v1037 = vor.u32 %v1033, %v1036
      %v1039 = vshrl.u32 %v601, 16
      %v1041 = vrot.slane %v1039, 3
      %v1042 = vshll.u32 %v601, 16
      %v1044 = vrot.slane %v1042, 4
      %v1045 = vor.u32 %v1041, %v1044
      %v1046 = vsel %vm961, %v1037, %v1045
      %v1048 = vshrl.u32 %v602, 16
      %v1050 = vrot.slane %v1048, 3
      %v1051 = vshll.u32 %v602, 16
      %v1053 = vrot.slane %v1051, 4
      %v1054 = vor.u32 %v1050, %v1053
      %v1056 = vshrl.u32 %v603, 16
      %v1058 = vrot.slane %v1056, 3
      %v1059 = vshll.u32 %v603, 16
      %v1061 = vrot.slane %v1059, 4
      %v1062 = vor.u32 %v1058, %v1061
      %v1063 = vsel %vm961, %v1054, %v1062
      %v1065 = vshrl.u32 %v604, 16
      %v1067 = vrot.slane %v1065, 3
      %v1068 = vshll.u32 %v604, 16
      %v1070 = vrot.slane %v1068, 4
      %v1071 = vor.u32 %v1067, %v1070
      %v1073 = vshrl.u32 %v605, 16
      %v1075 = vrot.slane %v1073, 3
      %v1076 = vshll.u32 %v605, 16
      %v1078 = vrot.slane %v1076, 4
      %v1079 = vor.u32 %v1075, %v1078
      %v1080 = vsel %vm961, %v1071, %v1079
      %v1082 = vshrl.u32 %v606, 16
      %v1084 = vrot.slane %v1082, 3
      %v1085 = vshll.u32 %v606, 16
      %v1087 = vrot.slane %v1085, 4
      %v1088 = vor.u32 %v1084, %v1087
      %v1090 = vshrl.u32 %v607, 16
      %v1092 = vrot.slane %v1090, 3
      %v1093 = vshll.u32 %v607, 16
      %v1095 = vrot.slane %v1093, 4
      %v1096 = vor.u32 %v1092, %v1095
      %v1097 = vsel %vm961, %v1088, %v1096
      %v1099 = vshrl.u32 %v608, 16
      %v1101 = vrot.slane %v1099, 3
      %v1102 = vshll.u32 %v608, 16
      %v1104 = vrot.slane %v1102, 4
      %v1105 = vor.u32 %v1101, %v1104
      %v1107 = vshrl.u32 %v609, 16
      %v1109 = vrot.slane %v1107, 3
      %v1110 = vshll.u32 %v609, 16
      %v1112 = vrot.slane %v1110, 4
      %v1113 = vor.u32 %v1109, %v1112
      %v1114 = vsel %vm961, %v1105, %v1113
      %v1116 = vshrl.u32 %v610, 16
      %v1118 = vrot.slane %v1116, 3
      %v1119 = vshll.u32 %v610, 16
      %v1121 = vrot.slane %v1119, 4
      %v1122 = vor.u32 %v1118, %v1121
      %v1124 = vshrl.u32 %v611, 16
      %v1126 = vrot.slane %v1124, 3
      %v1127 = vshll.u32 %v611, 16
      %v1129 = vrot.slane %v1127, 4
      %v1130 = vor.u32 %v1126, %v1129
      %v1131 = vsel %vm961, %v1122, %v1130
      %v1133 = vshrl.u32 %v612, 16
      %v1135 = vrot.slane %v1133, 3
      %v1136 = vshll.u32 %v612, 16
      %v1138 = vrot.slane %v1136, 4
      %v1139 = vor.u32 %v1135, %v1138
      %v1141 = vshrl.u32 %v613, 16
      %v1143 = vrot.slane %v1141, 3
      %v1144 = vshll.u32 %v613, 16
      %v1146 = vrot.slane %v1144, 4
      %v1147 = vor.u32 %v1143, %v1146
      %v1148 = vsel %vm961, %v1139, %v1147
      %v1150 = vshrl.u32 %v614, 16
      %v1152 = vrot.slane %v1150, 3
      %v1153 = vshll.u32 %v614, 16
      %v1155 = vrot.slane %v1153, 4
      %v1156 = vor.u32 %v1152, %v1155
      %v1158 = vshrl.u32 %v615, 16
      %v1160 = vrot.slane %v1158, 3
      %v1161 = vshll.u32 %v615, 16
      %v1163 = vrot.slane %v1161, 4
      %v1164 = vor.u32 %v1160, %v1163
      %v1165 = vsel %vm961, %v1156, %v1164
      %v1167 = vshrl.u32 %v616, 16
      %v1169 = vrot.slane %v1167, 3
      %v1170 = vshll.u32 %v616, 16
      %v1172 = vrot.slane %v1170, 4
      %v1173 = vor.u32 %v1169, %v1172
      %v1175 = vshrl.u32 %v617, 16
      %v1177 = vrot.slane %v1175, 3
      %v1178 = vshll.u32 %v617, 16
      %v1180 = vrot.slane %v1178, 4
      %v1181 = vor.u32 %v1177, %v1180
      %v1182 = vsel %vm961, %v1173, %v1181
      %v1184 = vshrl.u32 %v618, 16
      %v1186 = vrot.slane %v1184, 3
      %v1187 = vshll.u32 %v618, 16
      %v1189 = vrot.slane %v1187, 4
      %v1190 = vor.u32 %v1186, %v1189
      %v1192 = vshrl.u32 %v619, 16
      %v1194 = vrot.slane %v1192, 3
      %v1195 = vshll.u32 %v619, 16
      %v1197 = vrot.slane %v1195, 4
      %v1198 = vor.u32 %v1194, %v1197
      %v1199 = vsel %vm961, %v1190, %v1198
      %v1201 = vshrl.u32 %v620, 16
      %v1203 = vrot.slane %v1201, 3
      %v1204 = vshll.u32 %v620, 16
      %v1206 = vrot.slane %v1204, 4
      %v1207 = vor.u32 %v1203, %v1206
      %v1209 = vshrl.u32 %v621, 16
      %v1211 = vrot.slane %v1209, 3
      %v1212 = vshll.u32 %v621, 16
      %v1214 = vrot.slane %v1212, 4
      %v1215 = vor.u32 %v1211, %v1214
      %v1216 = vsel %vm961, %v1207, %v1215
      %v1218 = vshrl.u32 %v622, 16
      %v1220 = vrot.slane %v1218, 3
      %v1221 = vshll.u32 %v622, 16
      %v1223 = vrot.slane %v1221, 4
      %v1224 = vor.u32 %v1220, %v1223
      %v1226 = vshrl.u32 %v623, 16
      %v1228 = vrot.slane %v1226, 3
      %v1229 = vshll.u32 %v623, 16
      %v1231 = vrot.slane %v1229, 4
      %v1232 = vor.u32 %v1228, %v1231
      %v1233 = vsel %vm961, %v1224, %v1232
      %v1235 = vsel %vm334, %v978, 0
      %v1238 = vsel %vm334, %v995, 0
      %v1241 = vsel %vm334, %v1012, 0
      %v1244 = vsel %vm334, %v1029, 0
      %v1247 = vsel %vm334, %v1046, 0
      %v1250 = vsel %vm334, %v1063, 0
      %v1253 = vsel %vm334, %v1080, 0
      %v1256 = vsel %vm334, %v1097, 0
      %v1259 = vsel %vm334, %v1114, 0
      %v1262 = vsel %vm334, %v1131, 0
      %v1265 = vsel %vm334, %v1148, 0
      %v1268 = vsel %vm334, %v1165, 0
      %v1271 = vsel %vm334, %v1182, 0
      %v1274 = vsel %vm334, %v1199, 0
      %v1277 = vsel %vm334, %v1216, 0
      %v1280 = vsel %vm334, %v1233, 0
      %v1283 = vsel %vm796, %v664, 0
      %1285 = vmatprep.subr.bf16.mxu0 0
      %1286 = vmatpush1.bf16.msra.mxu0 %v1283
      %1287 = vmatprep.subr.bf16.mxu0 0
      %1288 = vmatpush1.bf16.msra.mxu0 0
      %1289 = vmatprep.subr.bf16.mxu0 0
      %1290 = vmatpush1.bf16.msra.mxu0 0
      %1291 = vmatprep.subr.bf16.mxu0 0
      %1292 = vmatpush1.bf16.msra.mxu0 0
      %1293 = vmatprep.subr.bf16.mxu0 0
      %1294 = vmatpush1.bf16.msra.mxu0 0
      %1295 = vmatprep.subr.bf16.mxu0 0
      %1296 = vmatpush1.bf16.msra.mxu0 0
      %1297 = vmatprep.subr.bf16.mxu0 0
      %1298 = vmatpush1.bf16.msra.mxu0 0
      %1299 = vmatprep.subr.bf16.mxu0 0
      %1300 = vmatpush1.bf16.msra.mxu0 0
      %1301 = vmatprep.subr.bf16.mxu0 0
      %1302 = vmatpush1.bf16.msra.mxu0 0
      %1303 = vmatprep.subr.bf16.mxu0 0
      %1304 = vmatpush1.bf16.msra.mxu0 0
      %1305 = vmatprep.subr.bf16.mxu0 0
      %1306 = vmatpush1.bf16.msra.mxu0 0
      %1307 = vmatprep.subr.bf16.mxu0 0
      %1308 = vmatpush1.bf16.msra.mxu0 0
      %1309 = vmatprep.subr.bf16.mxu0 0
      %1310 = vmatpush1.bf16.msra.mxu0 0
      %1311 = vmatprep.subr.bf16.mxu0 0
      %1312 = vmatpush1.bf16.msra.mxu0 0
      %1313 = vmatprep.subr.bf16.mxu0 0
      %1314 = vmatpush1.bf16.msra.mxu0 0
      %1315 = vmatprep.subr.bf16.mxu0 0
      %1316 = vmatpush1.bf16.msra.mxu0 0
      %1317 = vmatprep.mubr.bf16.mxu0 0
      %1318 = vmatmul.mubr.bf16.gmra.mrb[0].mxu0 %v1235
      %v1319 = vpop.f32.mrb[0].mxu0
      %v1320 = vadd.f32 %v835, %v1319
      %v1321 = vpop.f32.mrb[0].mxu0
      %v1322 = vpop.f32.mrb[0].mxu0
      %v1323 = vadd.f32 %v838, %v1322
      %v1324 = vpop.f32.mrb[0].mxu0
      %1325 = vmatprep.mubr.bf16.mxu0 0
      %1326 = vmatmul.mubr.bf16.gmra.mrb[0].mxu0 %v1238
      %v1327 = vpop.f32.mrb[0].mxu0
      %v1328 = vadd.f32 %v843, %v1327
      %v1329 = vpop.f32.mrb[0].mxu0
      %v1330 = vpop.f32.mrb[0].mxu0
      %v1331 = vadd.f32 %v846, %v1330
      %v1332 = vpop.f32.mrb[0].mxu0
      %1333 = vmatprep.mubr.bf16.mxu0 0
      %1334 = vmatmul.mubr.bf16.gmra.mrb[0].mxu0 %v1241
      %v1335 = vpop.f32.mrb[0].mxu0
      %v1336 = vadd.f32 %v851, %v1335
      %v1337 = vpop.f32.mrb[0].mxu0
      %v1338 = vpop.f32.mrb[0].mxu0
      %v1339 = vadd.f32 %v854, %v1338
      %v1340 = vpop.f32.mrb[0].mxu0
      %1341 = vmatprep.mubr.bf16.mxu0 0
      %1342 = vmatmul.mubr.bf16.gmra.mrb[0].mxu0 %v1244
      %v1343 = vpop.f32.mrb[0].mxu0
      %v1344 = vadd.f32 %v859, %v1343
      %v1345 = vpop.f32.mrb[0].mxu0
      %v1346 = vpop.f32.mrb[0].mxu0
      %v1347 = vadd.f32 %v862, %v1346
      %v1348 = vpop.f32.mrb[0].mxu0
      %1349 = vmatprep.mubr.bf16.mxu0 0
      %1350 = vmatmul.mubr.bf16.gmra.mrb[0].mxu0 %v1247
      %v1351 = vpop.f32.mrb[0].mxu0
      %v1352 = vadd.f32 %v867, %v1351
      %v1353 = vpop.f32.mrb[0].mxu0
      %v1354 = vpop.f32.mrb[0].mxu0
      %v1355 = vadd.f32 %v870, %v1354
      %v1356 = vpop.f32.mrb[0].mxu0
      %1357 = vmatprep.mubr.bf16.mxu0 0
      %1358 = vmatmul.mubr.bf16.gmra.mrb[0].mxu0 %v1250
      %v1359 = vpop.f32.mrb[0].mxu0
      %v1360 = vadd.f32 %v875, %v1359
      %v1361 = vpop.f32.mrb[0].mxu0
      %v1362 = vpop.f32.mrb[0].mxu0
      %v1363 = vadd.f32 %v878, %v1362
      %v1364 = vpop.f32.mrb[0].mxu0
      %1365 = vmatprep.mubr.bf16.mxu0 0
      %1366 = vmatmul.mubr.bf16.gmra.mrb[0].mxu0 %v1253
      %v1367 = vpop.f32.mrb[0].mxu0
      %v1368 = vadd.f32 %v883, %v1367
      %v1369 = vpop.f32.mrb[0].mxu0
      %v1370 = vpop.f32.mrb[0].mxu0
      %v1371 = vadd.f32 %v886, %v1370
      %v1372 = vpop.f32.mrb[0].mxu0
      %1373 = vmatprep.mubr.bf16.mxu0 0
      %1374 = vmatmul.mubr.bf16.gmra.mrb[0].mxu0 %v1256
      %v1375 = vpop.f32.mrb[0].mxu0
      %v1376 = vadd.f32 %v891, %v1375
      %v1377 = vpop.f32.mrb[0].mxu0
      %v1378 = vpop.f32.mrb[0].mxu0
      %v1379 = vadd.f32 %v894, %v1378
      %v1380 = vpop.f32.mrb[0].mxu0
      %1381 = vmatprep.mubr.bf16.mxu0 0
      %1382 = vmatmul.mubr.bf16.gmra.mrb[0].mxu0 %v1259
      %v1383 = vpop.f32.mrb[0].mxu0
      %v1384 = vadd.f32 %v899, %v1383
      %v1385 = vpop.f32.mrb[0].mxu0
      %v1386 = vpop.f32.mrb[0].mxu0
      %v1387 = vadd.f32 %v902, %v1386
      %v1388 = vpop.f32.mrb[0].mxu0
      %1389 = vmatprep.mubr.bf16.mxu0 0
      %1390 = vmatmul.mubr.bf16.gmra.mrb[0].mxu0 %v1262
      %v1391 = vpop.f32.mrb[0].mxu0
      %v1392 = vadd.f32 %v907, %v1391
      %v1393 = vpop.f32.mrb[0].mxu0
      %v1394 = vpop.f32.mrb[0].mxu0
      %v1395 = vadd.f32 %v910, %v1394
      %v1396 = vpop.f32.mrb[0].mxu0
      %1397 = vmatprep.mubr.bf16.mxu0 0
      %1398 = vmatmul.mubr.bf16.gmra.mrb[0].mxu0 %v1265
      %v1399 = vpop.f32.mrb[0].mxu0
      %v1400 = vadd.f32 %v915, %v1399
      %v1401 = vpop.f32.mrb[0].mxu0
      %v1402 = vpop.f32.mrb[0].mxu0
      %v1403 = vadd.f32 %v918, %v1402
      %v1404 = vpop.f32.mrb[0].mxu0
      %1405 = vmatprep.mubr.bf16.mxu0 0
      %1406 = vmatmul.mubr.bf16.gmra.mrb[0].mxu0 %v1268
      %v1407 = vpop.f32.mrb[0].mxu0
      %v1408 = vadd.f32 %v923, %v1407
      %v1409 = vpop.f32.mrb[0].mxu0
      %v1410 = vpop.f32.mrb[0].mxu0
      %v1411 = vadd.f32 %v926, %v1410
      %v1412 = vpop.f32.mrb[0].mxu0
      %1413 = vmatprep.mubr.bf16.mxu0 0
      %1414 = vmatmul.mubr.bf16.gmra.mrb[0].mxu0 %v1271
      %v1415 = vpop.f32.mrb[0].mxu0
      %v1416 = vadd.f32 %v931, %v1415
      %v1417 = vpop.f32.mrb[0].mxu0
      %v1418 = vpop.f32.mrb[0].mxu0
      %v1419 = vadd.f32 %v934, %v1418
      %v1420 = vpop.f32.mrb[0].mxu0
      %1421 = vmatprep.mubr.bf16.mxu0 0
      %1422 = vmatmul.mubr.bf16.gmra.mrb[0].mxu0 %v1274
      %v1423 = vpop.f32.mrb[0].mxu0
      %v1424 = vadd.f32 %v939, %v1423
      %v1425 = vpop.f32.mrb[0].mxu0
      %v1426 = vpop.f32.mrb[0].mxu0
      %v1427 = vadd.f32 %v942, %v1426
      %v1428 = vpop.f32.mrb[0].mxu0
      %1429 = vmatprep.mubr.bf16.mxu0 0
      %1430 = vmatmul.mubr.bf16.gmra.mrb[0].mxu0 %v1277
      %v1431 = vpop.f32.mrb[0].mxu0
      %v1432 = vadd.f32 %v947, %v1431
      %v1433 = vpop.f32.mrb[0].mxu0
      %v1434 = vpop.f32.mrb[0].mxu0
      %v1435 = vadd.f32 %v950, %v1434
      %v1436 = vpop.f32.mrb[0].mxu0
      %1437 = vmatprep.mubr.bf16.mxu0 0
      %1438 = vmatmul.mubr.bf16.gmra.mrb[0].mxu0 %v1280
      %v1439 = vpop.f32.mrb[0].mxu0
      %v1440 = vadd.f32 %v955, %v1439
      %v1441 = vpop.f32.mrb[0].mxu0
      %v1442 = vpop.f32.mrb[0].mxu0
      %v1443 = vadd.f32 %v958, %v1442
      %v1444 = vpop.f32.mrb[0].mxu0
      %1445 = vdwg.mxu0
      %s1446 = scalar_lea.vmem %s1, 8
      %v1447 = vld [vmem:[%s1446] sm:$0x7]
      %vm1448 = vsmask.f32 3328
      %v1450 = vshrl.u32 %v628, 16
      %v1452 = vrot.slane %v1450, 4
      %v1453 = vshll.u32 %v628, 16
      %v1455 = vrot.slane %v1453, 5
      %v1456 = vor.u32 %v1452, %v1455
      %v1458 = vshrl.u32 %v646, 16
      %v1460 = vrot.slane %v1458, 4
      %v1461 = vshll.u32 %v646, 16
      %v1463 = vrot.slane %v1461, 5
      %v1464 = vor.u32 %v1460, %v1463
      %v1465 = vsel %vm1448, %v1456, %v1464
      %v1467 = vshrl.u32 %v629, 16
      %v1469 = vrot.slane %v1467, 4
      %v1470 = vshll.u32 %v629, 16
      %v1472 = vrot.slane %v1470, 5
      %v1473 = vor.u32 %v1469, %v1472
      %v1475 = vshrl.u32 %v647, 16
      %v1477 = vrot.slane %v1475, 4
      %v1478 = vshll.u32 %v647, 16
      %v1480 = vrot.slane %v1478, 5
      %v1481 = vor.u32 %v1477, %v1480
      %v1482 = vsel %vm1448, %v1473, %v1481
      %v1484 = vshrl.u32 %v630, 16
      %v1486 = vrot.slane %v1484, 4
      %v1487 = vshll.u32 %v630, 16
      %v1489 = vrot.slane %v1487, 5
      %v1490 = vor.u32 %v1486, %v1489
      %v1492 = vshrl.u32 %v648, 16
      %v1494 = vrot.slane %v1492, 4
      %v1495 = vshll.u32 %v648, 16
      %v1497 = vrot.slane %v1495, 5
      %v1498 = vor.u32 %v1494, %v1497
      %v1499 = vsel %vm1448, %v1490, %v1498
      %v1501 = vshrl.u32 %v631, 16
      %v1503 = vrot.slane %v1501, 4
      %v1504 = vshll.u32 %v631, 16
      %v1506 = vrot.slane %v1504, 5
      %v1507 = vor.u32 %v1503, %v1506
      %v1509 = vshrl.u32 %v649, 16
      %v1511 = vrot.slane %v1509, 4
      %v1512 = vshll.u32 %v649, 16
      %v1514 = vrot.slane %v1512, 5
      %v1515 = vor.u32 %v1511, %v1514
      %v1516 = vsel %vm1448, %v1507, %v1515
      %v1518 = vshrl.u32 %v632, 16
      %v1520 = vrot.slane %v1518, 4
      %v1521 = vshll.u32 %v632, 16
      %v1523 = vrot.slane %v1521, 5
      %v1524 = vor.u32 %v1520, %v1523
      %v1526 = vshrl.u32 %v650, 16
      %v1528 = vrot.slane %v1526, 4
      %v1529 = vshll.u32 %v650, 16
      %v1531 = vrot.slane %v1529, 5
      %v1532 = vor.u32 %v1528, %v1531
      %v1533 = vsel %vm1448, %v1524, %v1532
      %v1535 = vshrl.u32 %v633, 16
      %v1537 = vrot.slane %v1535, 4
      %v1538 = vshll.u32 %v633, 16
      %v1540 = vrot.slane %v1538, 5
      %v1541 = vor.u32 %v1537, %v1540
      %v1543 = vshrl.u32 %v651, 16
      %v1545 = vrot.slane %v1543, 4
      %v1546 = vshll.u32 %v651, 16
      %v1548 = vrot.slane %v1546, 5
      %v1549 = vor.u32 %v1545, %v1548
      %v1550 = vsel %vm1448, %v1541, %v1549
      %v1552 = vshrl.u32 %v634, 16
      %v1554 = vrot.slane %v1552, 4
      %v1555 = vshll.u32 %v634, 16
      %v1557 = vrot.slane %v1555, 5
      %v1558 = vor.u32 %v1554, %v1557
      %v1560 = vshrl.u32 %v652, 16
      %v1562 = vrot.slane %v1560, 4
      %v1563 = vshll.u32 %v652, 16
      %v1565 = vrot.slane %v1563, 5
      %v1566 = vor.u32 %v1562, %v1565
      %v1567 = vsel %vm1448, %v1558, %v1566
      %v1569 = vshrl.u32 %v635, 16
      %v1571 = vrot.slane %v1569, 4
      %v1572 = vshll.u32 %v635, 16
      %v1574 = vrot.slane %v1572, 5
      %v1575 = vor.u32 %v1571, %v1574
      %v1577 = vshrl.u32 %v653, 16
      %v1579 = vrot.slane %v1577, 4
      %v1580 = vshll.u32 %v653, 16
      %v1582 = vrot.slane %v1580, 5
      %v1583 = vor.u32 %v1579, %v1582
      %v1584 = vsel %vm1448, %v1575, %v1583
      %v1586 = vshrl.u32 %v636, 16
      %v1588 = vrot.slane %v1586, 4
      %v1589 = vshll.u32 %v636, 16
      %v1591 = vrot.slane %v1589, 5
      %v1592 = vor.u32 %v1588, %v1591
      %v1594 = vshrl.u32 %v654, 16
      %v1596 = vrot.slane %v1594, 4
      %v1597 = vshll.u32 %v654, 16
      %v1599 = vrot.slane %v1597, 5
      %v1600 = vor.u32 %v1596, %v1599
      %v1601 = vsel %vm1448, %v1592, %v1600
      %v1603 = vshrl.u32 %v637, 16
      %v1605 = vrot.slane %v1603, 4
      %v1606 = vshll.u32 %v637, 16
      %v1608 = vrot.slane %v1606, 5
      %v1609 = vor.u32 %v1605, %v1608
      %v1611 = vshrl.u32 %v655, 16
      %v1613 = vrot.slane %v1611, 4
      %v1614 = vshll.u32 %v655, 16
      %v1616 = vrot.slane %v1614, 5
      %v1617 = vor.u32 %v1613, %v1616
      %v1618 = vsel %vm1448, %v1609, %v1617
      %v1620 = vshrl.u32 %v638, 16
      %v1622 = vrot.slane %v1620, 4
      %v1623 = vshll.u32 %v638, 16
      %v1625 = vrot.slane %v1623, 5
      %v1626 = vor.u32 %v1622, %v1625
      %v1628 = vshrl.u32 %v656, 16
      %v1630 = vrot.slane %v1628, 4
      %v1631 = vshll.u32 %v656, 16
      %v1633 = vrot.slane %v1631, 5
      %v1634 = vor.u32 %v1630, %v1633
      %v1635 = vsel %vm1448, %v1626, %v1634
      %v1637 = vshrl.u32 %v639, 16
      %v1639 = vrot.slane %v1637, 4
      %v1640 = vshll.u32 %v639, 16
      %v1642 = vrot.slane %v1640, 5
      %v1643 = vor.u32 %v1639, %v1642
      %v1645 = vshrl.u32 %v657, 16
      %v1647 = vrot.slane %v1645, 4
      %v1648 = vshll.u32 %v657, 16
      %v1650 = vrot.slane %v1648, 5
      %v1651 = vor.u32 %v1647, %v1650
      %v1652 = vsel %vm1448, %v1643, %v1651
      %v1654 = vshrl.u32 %v640, 16
      %v1656 = vrot.slane %v1654, 4
      %v1657 = vshll.u32 %v640, 16
      %v1659 = vrot.slane %v1657, 5
      %v1660 = vor.u32 %v1656, %v1659
      %v1662 = vshrl.u32 %v658, 16
      %v1664 = vrot.slane %v1662, 4
      %v1665 = vshll.u32 %v658, 16
      %v1667 = vrot.slane %v1665, 5
      %v1668 = vor.u32 %v1664, %v1667
      %v1669 = vsel %vm1448, %v1660, %v1668
      %v1671 = vshrl.u32 %v641, 16
      %v1673 = vrot.slane %v1671, 4
      %v1674 = vshll.u32 %v641, 16
      %v1676 = vrot.slane %v1674, 5
      %v1677 = vor.u32 %v1673, %v1676
      %v1679 = vshrl.u32 %v659, 16
      %v1681 = vrot.slane %v1679, 4
      %v1682 = vshll.u32 %v659, 16
      %v1684 = vrot.slane %v1682, 5
      %v1685 = vor.u32 %v1681, %v1684
      %v1686 = vsel %vm1448, %v1677, %v1685
      %v1688 = vshrl.u32 %v642, 16
      %v1690 = vrot.slane %v1688, 4
      %v1691 = vshll.u32 %v642, 16
      %v1693 = vrot.slane %v1691, 5
      %v1694 = vor.u32 %v1690, %v1693
      %v1696 = vshrl.u32 %v660, 16
      %v1698 = vrot.slane %v1696, 4
      %v1699 = vshll.u32 %v660, 16
      %v1701 = vrot.slane %v1699, 5
      %v1702 = vor.u32 %v1698, %v1701
      %v1703 = vsel %vm1448, %v1694, %v1702
      %v1705 = vshrl.u32 %v643, 16
      %v1707 = vrot.slane %v1705, 4
      %v1708 = vshll.u32 %v643, 16
      %v1710 = vrot.slane %v1708, 5
      %v1711 = vor.u32 %v1707, %v1710
      %v1713 = vshrl.u32 %v661, 16
      %v1715 = vrot.slane %v1713, 4
      %v1716 = vshll.u32 %v661, 16
      %v1718 = vrot.slane %v1716, 5
      %v1719 = vor.u32 %v1715, %v1718
      %v1720 = vsel %vm1448, %v1711, %v1719
      %v1722 = vsel %vm334, %v1465, 0
      %v1725 = vsel %vm334, %v1482, 0
      %v1728 = vsel %vm334, %v1499, 0
      %v1731 = vsel %vm334, %v1516, 0
      %v1734 = vsel %vm334, %v1533, 0
      %v1737 = vsel %vm334, %v1550, 0
      %v1740 = vsel %vm334, %v1567, 0
      %v1743 = vsel %vm334, %v1584, 0
      %v1746 = vsel %vm334, %v1601, 0
      %v1749 = vsel %vm334, %v1618, 0
      %v1752 = vsel %vm334, %v1635, 0
      %v1755 = vsel %vm334, %v1652, 0
      %v1758 = vsel %vm334, %v1669, 0
      %v1761 = vsel %vm334, %v1686, 0
      %v1764 = vsel %vm334, %v1703, 0
      %v1767 = vsel %vm334, %v1720, 0
      %v1770 = vsel %vm796, %v1447, 0
      %1772 = vmatprep.subr.bf16.mxu0 0
      %1773 = vmatpush1.bf16.msra.mxu0 %v1770
      %1774 = vmatprep.subr.bf16.mxu0 0
      %1775 = vmatpush1.bf16.msra.mxu0 0
      %1776 = vmatprep.subr.bf16.mxu0 0
      %1777 = vmatpush1.bf16.msra.mxu0 0
      %1778 = vmatprep.subr.bf16.mxu0 0
      %1779 = vmatpush1.bf16.msra.mxu0 0
      %1780 = vmatprep.subr.bf16.mxu0 0
      %1781 = vmatpush1.bf16.msra.mxu0 0
      %1782 = vmatprep.subr.bf16.mxu0 0
      %1783 = vmatpush1.bf16.msra.mxu0 0
      %1784 = vmatprep.subr.bf16.mxu0 0
      %1785 = vmatpush1.bf16.msra.mxu0 0
      %1786 = vmatprep.subr.bf16.mxu0 0
      %1787 = vmatpush1.bf16.msra.mxu0 0
      %1788 = vmatprep.subr.bf16.mxu0 0
      %1789 = vmatpush1.bf16.msra.mxu0 0
      %1790 = vmatprep.subr.bf16.mxu0 0
      %1791 = vmatpush1.bf16.msra.mxu0 0
      %1792 = vmatprep.subr.bf16.mxu0 0
      %1793 = vmatpush1.bf16.msra.mxu0 0
      %1794 = vmatprep.subr.bf16.mxu0 0
      %1795 = vmatpush1.bf16.msra.mxu0 0
      %1796 = vmatprep.subr.bf16.mxu0 0
      %1797 = vmatpush1.bf16.msra.mxu0 0
      %1798 = vmatprep.subr.bf16.mxu0 0
      %1799 = vmatpush1.bf16.msra.mxu0 0
      %1800 = vmatprep.subr.bf16.mxu0 0
      %1801 = vmatpush1.bf16.msra.mxu0 0
      %1802 = vmatprep.subr.bf16.mxu0 0
      %1803 = vmatpush1.bf16.msra.mxu0 0
      %1804 = vmatprep.mubr.bf16.mxu0 0
      %1805 = vmatmul.mubr.bf16.gmra.mrb[0].mxu0 %v1722
      %v1806 = vpop.f32.mrb[0].mxu0
      %v1807 = vadd.f32 0.0, %v1806
      %v1808 = vpop.f32.mrb[0].mxu0
      %v1809 = vpop.f32.mrb[0].mxu0
      %v1810 = vadd.f32 0.0, %v1809
      %v1811 = vpop.f32.mrb[0].mxu0
      %1812 = vmatprep.mubr.bf16.mxu0 0
      %1813 = vmatmul.mubr.bf16.gmra.mrb[0].mxu0 %v1725
      %v1814 = vpop.f32.mrb[0].mxu0
      %v1815 = vadd.f32 0.0, %v1814
      %v1816 = vpop.f32.mrb[0].mxu0
      %v1817 = vpop.f32.mrb[0].mxu0
      %v1818 = vadd.f32 0.0, %v1817
      %v1819 = vpop.f32.mrb[0].mxu0
      %1820 = vmatprep.mubr.bf16.mxu0 0
      %1821 = vmatmul.mubr.bf16.gmra.mrb[0].mxu0 %v1728
      %v1822 = vpop.f32.mrb[0].mxu0
      %v1823 = vadd.f32 0.0, %v1822
      %v1824 = vpop.f32.mrb[0].mxu0
      %v1825 = vpop.f32.mrb[0].mxu0
      %v1826 = vadd.f32 0.0, %v1825
      %v1827 = vpop.f32.mrb[0].mxu0
      %1828 = vmatprep.mubr.bf16.mxu0 0
      %1829 = vmatmul.mubr.bf16.gmra.mrb[0].mxu0 %v1731
      %v1830 = vpop.f32.mrb[0].mxu0
      %v1831 = vadd.f32 0.0, %v1830
      %v1832 = vpop.f32.mrb[0].mxu0
      %v1833 = vpop.f32.mrb[0].mxu0
      %v1834 = vadd.f32 0.0, %v1833
      %v1835 = vpop.f32.mrb[0].mxu0
      %1836 = vmatprep.mubr.bf16.mxu0 0
      %1837 = vmatmul.mubr.bf16.gmra.mrb[0].mxu0 %v1734
      %v1838 = vpop.f32.mrb[0].mxu0
      %v1839 = vadd.f32 0.0, %v1838
      %v1840 = vpop.f32.mrb[0].mxu0
      %v1841 = vpop.f32.mrb[0].mxu0
      %v1842 = vadd.f32 0.0, %v1841
      %v1843 = vpop.f32.mrb[0].mxu0
      %1844 = vmatprep.mubr.bf16.mxu0 0
      %1845 = vmatmul.mubr.bf16.gmra.mrb[0].mxu0 %v1737
      %v1846 = vpop.f32.mrb[0].mxu0
      %v1847 = vadd.f32 0.0, %v1846
      %v1848 = vpop.f32.mrb[0].mxu0
      %v1849 = vpop.f32.mrb[0].mxu0
      %v1850 = vadd.f32 0.0, %v1849
      %v1851 = vpop.f32.mrb[0].mxu0
      %1852 = vmatprep.mubr.bf16.mxu0 0
      %1853 = vmatmul.mubr.bf16.gmra.mrb[0].mxu0 %v1740
      %v1854 = vpop.f32.mrb[0].mxu0
      %v1855 = vadd.f32 0.0, %v1854
      %v1856 = vpop.f32.mrb[0].mxu0
      %v1857 = vpop.f32.mrb[0].mxu0
      %v1858 = vadd.f32 0.0, %v1857
      %v1859 = vpop.f32.mrb[0].mxu0
      %1860 = vmatprep.mubr.bf16.mxu0 0
      %1861 = vmatmul.mubr.bf16.gmra.mrb[0].mxu0 %v1743
      %v1862 = vpop.f32.mrb[0].mxu0
      %v1863 = vadd.f32 0.0, %v1862
      %v1864 = vpop.f32.mrb[0].mxu0
      %v1865 = vpop.f32.mrb[0].mxu0
      %v1866 = vadd.f32 0.0, %v1865
      %v1867 = vpop.f32.mrb[0].mxu0
      %1868 = vmatprep.mubr.bf16.mxu0 0
      %1869 = vmatmul.mubr.bf16.gmra.mrb[0].mxu0 %v1746
      %v1870 = vpop.f32.mrb[0].mxu0
      %v1871 = vadd.f32 0.0, %v1870
      %v1872 = vpop.f32.mrb[0].mxu0
      %v1873 = vpop.f32.mrb[0].mxu0
      %v1874 = vadd.f32 0.0, %v1873
      %v1875 = vpop.f32.mrb[0].mxu0
      %1876 = vmatprep.mubr.bf16.mxu0 0
      %1877 = vmatmul.mubr.bf16.gmra.mrb[0].mxu0 %v1749
      %v1878 = vpop.f32.mrb[0].mxu0
      %v1879 = vadd.f32 0.0, %v1878
      %v1880 = vpop.f32.mrb[0].mxu0
      %v1881 = vpop.f32.mrb[0].mxu0
      %v1882 = vadd.f32 0.0, %v1881
      %v1883 = vpop.f32.mrb[0].mxu0
      %1884 = vmatprep.mubr.bf16.mxu0 0
      %1885 = vmatmul.mubr.bf16.gmra.mrb[0].mxu0 %v1752
      %v1886 = vpop.f32.mrb[0].mxu0
      %v1887 = vadd.f32 0.0, %v1886
      %v1888 = vpop.f32.mrb[0].mxu0
      %v1889 = vpop.f32.mrb[0].mxu0
      %v1890 = vadd.f32 0.0, %v1889
      %v1891 = vpop.f32.mrb[0].mxu0
      %1892 = vmatprep.mubr.bf16.mxu0 0
      %1893 = vmatmul.mubr.bf16.gmra.mrb[0].mxu0 %v1755
      %v1894 = vpop.f32.mrb[0].mxu0
      %v1895 = vadd.f32 0.0, %v1894
      %v1896 = vpop.f32.mrb[0].mxu0
      %v1897 = vpop.f32.mrb[0].mxu0
      %v1898 = vadd.f32 0.0, %v1897
      %v1899 = vpop.f32.mrb[0].mxu0
      %1900 = vmatprep.mubr.bf16.mxu0 0
      %1901 = vmatmul.mubr.bf16.gmra.mrb[0].mxu0 %v1758
      %v1902 = vpop.f32.mrb[0].mxu0
      %v1903 = vadd.f32 0.0, %v1902
      %v1904 = vpop.f32.mrb[0].mxu0
      %v1905 = vpop.f32.mrb[0].mxu0
      %v1906 = vadd.f32 0.0, %v1905
      %v1907 = vpop.f32.mrb[0].mxu0
      %1908 = vmatprep.mubr.bf16.mxu0 0
      %1909 = vmatmul.mubr.bf16.gmra.mrb[0].mxu0 %v1761
      %v1910 = vpop.f32.mrb[0].mxu0
      %v1911 = vadd.f32 0.0, %v1910
      %v1912 = vpop.f32.mrb[0].mxu0
      %v1913 = vpop.f32.mrb[0].mxu0
      %v1914 = vadd.f32 0.0, %v1913
      %v1915 = vpop.f32.mrb[0].mxu0
      %1916 = vmatprep.mubr.bf16.mxu0 0
      %1917 = vmatmul.mubr.bf16.gmra.mrb[0].mxu0 %v1764
      %v1918 = vpop.f32.mrb[0].mxu0
      %v1919 = vadd.f32 0.0, %v1918
      %v1920 = vpop.f32.mrb[0].mxu0
      %v1921 = vpop.f32.mrb[0].mxu0
      %v1922 = vadd.f32 0.0, %v1921
      %v1923 = vpop.f32.mrb[0].mxu0
      %1924 = vmatprep.mubr.bf16.mxu0 0
      %1925 = vmatmul.mubr.bf16.gmra.mrb[0].mxu0 %v1767
      %v1926 = vpop.f32.mrb[0].mxu0
      %v1927 = vadd.f32 0.0, %v1926
      %v1928 = vpop.f32.mrb[0].mxu0
      %v1929 = vpop.f32.mrb[0].mxu0
      %v1930 = vadd.f32 0.0, %v1929
      %v1931 = vpop.f32.mrb[0].mxu0
      %1932 = vdwg.mxu0
      %v1933 = vadd.f32 %v1320, %v1807
      %v1934 = vadd.f32 %v1323, %v1810
      %v1935 = vadd.f32 %v1328, %v1815
      %v1936 = vadd.f32 %v1331, %v1818
      %v1937 = vadd.f32 %v1336, %v1823
      %v1938 = vadd.f32 %v1339, %v1826
      %v1939 = vadd.f32 %v1344, %v1831
      %v1940 = vadd.f32 %v1347, %v1834
      %v1941 = vadd.f32 %v1352, %v1839
      %v1942 = vadd.f32 %v1355, %v1842
      %v1943 = vadd.f32 %v1360, %v1847
      %v1944 = vadd.f32 %v1363, %v1850
      %v1945 = vadd.f32 %v1368, %v1855
      %v1946 = vadd.f32 %v1371, %v1858
      %v1947 = vadd.f32 %v1376, %v1863
      %v1948 = vadd.f32 %v1379, %v1866
      %v1949 = vadd.f32 %v1384, %v1871
      %v1950 = vadd.f32 %v1387, %v1874
      %v1951 = vadd.f32 %v1392, %v1879
      %v1952 = vadd.f32 %v1395, %v1882
      %v1953 = vadd.f32 %v1400, %v1887
      %v1954 = vadd.f32 %v1403, %v1890
      %v1955 = vadd.f32 %v1408, %v1895
      %v1956 = vadd.f32 %v1411, %v1898
      %v1957 = vadd.f32 %v1416, %v1903
      %v1958 = vadd.f32 %v1419, %v1906
      %v1959 = vadd.f32 %v1424, %v1911
      %v1960 = vadd.f32 %v1427, %v1914
      %v1961 = vadd.f32 %v1432, %v1919
      %v1962 = vadd.f32 %v1435, %v1922
      %v1963 = vadd.f32 %v1440, %v1927
      %v1964 = vadd.f32 %v1443, %v1930
      %s1965 = scalar_lea.vmem %s1, 12
      %v1966 = vld [vmem:[%s1965] sm:$0x7]
      %v1968 = vshrl.u32 %v624, 16
      %v1970 = vrot.slane %v1968, 3
      %v1971 = vshll.u32 %v624, 16
      %v1973 = vrot.slane %v1971, 4
      %v1974 = vor.u32 %v1970, %v1973
      %v1976 = vshrl.u32 %v625, 16
      %v1978 = vrot.slane %v1976, 3
      %v1979 = vshll.u32 %v625, 16
      %v1981 = vrot.slane %v1979, 4
      %v1982 = vor.u32 %v1978, %v1981
      %v1983 = vsel %vm961, %v1974, %v1982
      %v1985 = vsel %vm334, %v1983, 0
      %v1988 = vsel %vm796, %v1966, 0
      %1990 = vmatprep.subr.bf16.mxu0 0
      %1991 = vmatpush1.bf16.msra.mxu0 %v1988
      %1992 = vmatprep.subr.bf16.mxu0 0
      %1993 = vmatpush1.bf16.msra.mxu0 0
      %1994 = vmatprep.subr.bf16.mxu0 0
      %1995 = vmatpush1.bf16.msra.mxu0 0
      %1996 = vmatprep.subr.bf16.mxu0 0
      %1997 = vmatpush1.bf16.msra.mxu0 0
      %1998 = vmatprep.subr.bf16.mxu0 0
      %1999 = vmatpush1.bf16.msra.mxu0 0
      %2000 = vmatprep.subr.bf16.mxu0 0
      %2001 = vmatpush1.bf16.msra.mxu0 0
      %2002 = vmatprep.subr.bf16.mxu0 0
      %2003 = vmatpush1.bf16.msra.mxu0 0
      %2004 = vmatprep.subr.bf16.mxu0 0
      %2005 = vmatpush1.bf16.msra.mxu0 0
      %2006 = vmatprep.subr.bf16.mxu0 0
      %2007 = vmatpush1.bf16.msra.mxu0 0
      %2008 = vmatprep.subr.bf16.mxu0 0
      %2009 = vmatpush1.bf16.msra.mxu0 0
      %2010 = vmatprep.subr.bf16.mxu0 0
      %2011 = vmatpush1.bf16.msra.mxu0 0
      %2012 = vmatprep.subr.bf16.mxu0 0
      %2013 = vmatpush1.bf16.msra.mxu0 0
      %2014 = vmatprep.subr.bf16.mxu0 0
      %2015 = vmatpush1.bf16.msra.mxu0 0
      %2016 = vmatprep.subr.bf16.mxu0 0
      %2017 = vmatpush1.bf16.msra.mxu0 0
      %2018 = vmatprep.subr.bf16.mxu0 0
      %2019 = vmatpush1.bf16.msra.mxu0 0
      %2020 = vmatprep.subr.bf16.mxu0 0
      %2021 = vmatpush1.bf16.msra.mxu0 0
      %2022 = vmatprep.mubr.bf16.mxu0 0
      %2023 = vmatmul.mubr.bf16.gmra.mrb[0].mxu0 %v1238
      %v2024 = vpop.f32.mrb[0].mxu0
      %v2025 = vadd.f32 0.0, %v2024
      %v2026 = vpop.f32.mrb[0].mxu0
      %v2027 = vpop.f32.mrb[0].mxu0
      %v2028 = vadd.f32 0.0, %v2027
      %v2029 = vpop.f32.mrb[0].mxu0
      %2030 = vmatprep.mubr.bf16.mxu0 0
      %2031 = vmatmul.mubr.bf16.gmra.mrb[0].mxu0 %v1241
      %v2032 = vpop.f32.mrb[0].mxu0
      %v2033 = vadd.f32 0.0, %v2032
      %v2034 = vpop.f32.mrb[0].mxu0
      %v2035 = vpop.f32.mrb[0].mxu0
      %v2036 = vadd.f32 0.0, %v2035
      %v2037 = vpop.f32.mrb[0].mxu0
      %2038 = vmatprep.mubr.bf16.mxu0 0
      %2039 = vmatmul.mubr.bf16.gmra.mrb[0].mxu0 %v1244
      %v2040 = vpop.f32.mrb[0].mxu0
      %v2041 = vadd.f32 0.0, %v2040
      %v2042 = vpop.f32.mrb[0].mxu0
      %v2043 = vpop.f32.mrb[0].mxu0
      %v2044 = vadd.f32 0.0, %v2043
      %v2045 = vpop.f32.mrb[0].mxu0
      %2046 = vmatprep.mubr.bf16.mxu0 0
      %2047 = vmatmul.mubr.bf16.gmra.mrb[0].mxu0 %v1247
      %v2048 = vpop.f32.mrb[0].mxu0
      %v2049 = vadd.f32 0.0, %v2048
      %v2050 = vpop.f32.mrb[0].mxu0
      %v2051 = vpop.f32.mrb[0].mxu0
      %v2052 = vadd.f32 0.0, %v2051
      %v2053 = vpop.f32.mrb[0].mxu0
      %2054 = vmatprep.mubr.bf16.mxu0 0
      %2055 = vmatmul.mubr.bf16.gmra.mrb[0].mxu0 %v1250
      %v2056 = vpop.f32.mrb[0].mxu0
      %v2057 = vadd.f32 0.0, %v2056
      %v2058 = vpop.f32.mrb[0].mxu0
      %v2059 = vpop.f32.mrb[0].mxu0
      %v2060 = vadd.f32 0.0, %v2059
      %v2061 = vpop.f32.mrb[0].mxu0
      %2062 = vmatprep.mubr.bf16.mxu0 0
      %2063 = vmatmul.mubr.bf16.gmra.mrb[0].mxu0 %v1253
      %v2064 = vpop.f32.mrb[0].mxu0
      %v2065 = vadd.f32 0.0, %v2064
      %v2066 = vpop.f32.mrb[0].mxu0
      %v2067 = vpop.f32.mrb[0].mxu0
      %v2068 = vadd.f32 0.0, %v2067
      %v2069 = vpop.f32.mrb[0].mxu0
      %2070 = vmatprep.mubr.bf16.mxu0 0
      %2071 = vmatmul.mubr.bf16.gmra.mrb[0].mxu0 %v1256
      %v2072 = vpop.f32.mrb[0].mxu0
      %v2073 = vadd.f32 0.0, %v2072
      %v2074 = vpop.f32.mrb[0].mxu0
      %v2075 = vpop.f32.mrb[0].mxu0
      %v2076 = vadd.f32 0.0, %v2075
      %v2077 = vpop.f32.mrb[0].mxu0
      %2078 = vmatprep.mubr.bf16.mxu0 0
      %2079 = vmatmul.mubr.bf16.gmra.mrb[0].mxu0 %v1259
      %v2080 = vpop.f32.mrb[0].mxu0
      %v2081 = vadd.f32 0.0, %v2080
      %v2082 = vpop.f32.mrb[0].mxu0
      %v2083 = vpop.f32.mrb[0].mxu0
      %v2084 = vadd.f32 0.0, %v2083
      %v2085 = vpop.f32.mrb[0].mxu0
      %2086 = vmatprep.mubr.bf16.mxu0 0
      %2087 = vmatmul.mubr.bf16.gmra.mrb[0].mxu0 %v1262
      %v2088 = vpop.f32.mrb[0].mxu0
      %v2089 = vadd.f32 0.0, %v2088
      %v2090 = vpop.f32.mrb[0].mxu0
      %v2091 = vpop.f32.mrb[0].mxu0
      %v2092 = vadd.f32 0.0, %v2091
      %v2093 = vpop.f32.mrb[0].mxu0
      %2094 = vmatprep.mubr.bf16.mxu0 0
      %2095 = vmatmul.mubr.bf16.gmra.mrb[0].mxu0 %v1265
      %v2096 = vpop.f32.mrb[0].mxu0
      %v2097 = vadd.f32 0.0, %v2096
      %v2098 = vpop.f32.mrb[0].mxu0
      %v2099 = vpop.f32.mrb[0].mxu0
      %v2100 = vadd.f32 0.0, %v2099
      %v2101 = vpop.f32.mrb[0].mxu0
      %2102 = vmatprep.mubr.bf16.mxu0 0
      %2103 = vmatmul.mubr.bf16.gmra.mrb[0].mxu0 %v1268
      %v2104 = vpop.f32.mrb[0].mxu0
      %v2105 = vadd.f32 0.0, %v2104
      %v2106 = vpop.f32.mrb[0].mxu0
      %v2107 = vpop.f32.mrb[0].mxu0
      %v2108 = vadd.f32 0.0, %v2107
      %v2109 = vpop.f32.mrb[0].mxu0
      %2110 = vmatprep.mubr.bf16.mxu0 0
      %2111 = vmatmul.mubr.bf16.gmra.mrb[0].mxu0 %v1271
      %v2112 = vpop.f32.mrb[0].mxu0
      %v2113 = vadd.f32 0.0, %v2112
      %v2114 = vpop.f32.mrb[0].mxu0
      %v2115 = vpop.f32.mrb[0].mxu0
      %v2116 = vadd.f32 0.0, %v2115
      %v2117 = vpop.f32.mrb[0].mxu0
      %2118 = vmatprep.mubr.bf16.mxu0 0
      %2119 = vmatmul.mubr.bf16.gmra.mrb[0].mxu0 %v1274
      %v2120 = vpop.f32.mrb[0].mxu0
      %v2121 = vadd.f32 0.0, %v2120
      %v2122 = vpop.f32.mrb[0].mxu0
      %v2123 = vpop.f32.mrb[0].mxu0
      %v2124 = vadd.f32 0.0, %v2123
      %v2125 = vpop.f32.mrb[0].mxu0
      %2126 = vmatprep.mubr.bf16.mxu0 0
      %2127 = vmatmul.mubr.bf16.gmra.mrb[0].mxu0 %v1277
      %v2128 = vpop.f32.mrb[0].mxu0
      %v2129 = vadd.f32 0.0, %v2128
      %v2130 = vpop.f32.mrb[0].mxu0
      %v2131 = vpop.f32.mrb[0].mxu0
      %v2132 = vadd.f32 0.0, %v2131
      %v2133 = vpop.f32.mrb[0].mxu0
      %2134 = vmatprep.mubr.bf16.mxu0 0
      %2135 = vmatmul.mubr.bf16.gmra.mrb[0].mxu0 %v1280
      %v2136 = vpop.f32.mrb[0].mxu0
      %v2137 = vadd.f32 0.0, %v2136
      %v2138 = vpop.f32.mrb[0].mxu0
      %v2139 = vpop.f32.mrb[0].mxu0
      %v2140 = vadd.f32 0.0, %v2139
      %v2141 = vpop.f32.mrb[0].mxu0
      %2142 = vmatprep.mubr.bf16.mxu0 0
      %2143 = vmatmul.mubr.bf16.gmra.mrb[0].mxu0 %v1985
      %v2144 = vpop.f32.mrb[0].mxu0
      %v2145 = vadd.f32 0.0, %v2144
      %v2146 = vpop.f32.mrb[0].mxu0
      %v2147 = vpop.f32.mrb[0].mxu0
      %v2148 = vadd.f32 0.0, %v2147
      %v2149 = vpop.f32.mrb[0].mxu0
      %2150 = vdwg.mxu0
      %v2151 = vadd.f32 %v1933, %v2025
      %v2152 = vadd.f32 %v1934, %v2028
      %v2153 = vadd.f32 %v1935, %v2033
      %v2154 = vadd.f32 %v1936, %v2036
      %v2155 = vadd.f32 %v1937, %v2041
      %v2156 = vadd.f32 %v1938, %v2044
      %v2157 = vadd.f32 %v1939, %v2049
      %v2158 = vadd.f32 %v1940, %v2052
      %v2159 = vadd.f32 %v1941, %v2057
      %v2160 = vadd.f32 %v1942, %v2060
      %v2161 = vadd.f32 %v1943, %v2065
      %v2162 = vadd.f32 %v1944, %v2068
      %v2163 = vadd.f32 %v1945, %v2073
      %v2164 = vadd.f32 %v1946, %v2076
      %v2165 = vadd.f32 %v1947, %v2081
      %v2166 = vadd.f32 %v1948, %v2084
      %v2167 = vadd.f32 %v1949, %v2089
      %v2168 = vadd.f32 %v1950, %v2092
      %v2169 = vadd.f32 %v1951, %v2097
      %v2170 = vadd.f32 %v1952, %v2100
      %v2171 = vadd.f32 %v1953, %v2105
      %v2172 = vadd.f32 %v1954, %v2108
      %v2173 = vadd.f32 %v1955, %v2113
      %v2174 = vadd.f32 %v1956, %v2116
      %v2175 = vadd.f32 %v1957, %v2121
      %v2176 = vadd.f32 %v1958, %v2124
      %v2177 = vadd.f32 %v1959, %v2129
      %v2178 = vadd.f32 %v1960, %v2132
      %v2179 = vadd.f32 %v1961, %v2137
      %v2180 = vadd.f32 %v1962, %v2140
      %v2181 = vadd.f32 %v1963, %v2145
      %v2182 = vadd.f32 %v1964, %v2148
      %s2183 = scalar_lea.vmem %s1, 16
      %v2184 = vld [vmem:[%s2183] sm:$0x7]
      %v2187 = vrot.slane %v644, 4
      %v2188 = vrot.slane %v625, 4
      %v2189 = vsel %vm699, %v2187, %v2188
      %v2191 = vsel %vm334, %v2189, 0
      %v2194 = vsel %vm796, %v2184, 0
      %2196 = vmatprep.subr.bf16.mxu0 0
      %2197 = vmatpush1.bf16.msra.mxu0 %v2194
      %2198 = vmatprep.subr.bf16.mxu0 0
      %2199 = vmatpush1.bf16.msra.mxu0 0
      %2200 = vmatprep.subr.bf16.mxu0 0
      %2201 = vmatpush1.bf16.msra.mxu0 0
      %2202 = vmatprep.subr.bf16.mxu0 0
      %2203 = vmatpush1.bf16.msra.mxu0 0
      %2204 = vmatprep.subr.bf16.mxu0 0
      %2205 = vmatpush1.bf16.msra.mxu0 0
      %2206 = vmatprep.subr.bf16.mxu0 0
      %2207 = vmatpush1.bf16.msra.mxu0 0
      %2208 = vmatprep.subr.bf16.mxu0 0
      %2209 = vmatpush1.bf16.msra.mxu0 0
      %2210 = vmatprep.subr.bf16.mxu0 0
      %2211 = vmatpush1.bf16.msra.mxu0 0
      %2212 = vmatprep.subr.bf16.mxu0 0
      %2213 = vmatpush1.bf16.msra.mxu0 0
      %2214 = vmatprep.subr.bf16.mxu0 0
      %2215 = vmatpush1.bf16.msra.mxu0 0
      %2216 = vmatprep.subr.bf16.mxu0 0
      %2217 = vmatpush1.bf16.msra.mxu0 0
      %2218 = vmatprep.subr.bf16.mxu0 0
      %2219 = vmatpush1.bf16.msra.mxu0 0
      %2220 = vmatprep.subr.bf16.mxu0 0
      %2221 = vmatpush1.bf16.msra.mxu0 0
      %2222 = vmatprep.subr.bf16.mxu0 0
      %2223 = vmatpush1.bf16.msra.mxu0 0
      %2224 = vmatprep.subr.bf16.mxu0 0
      %2225 = vmatpush1.bf16.msra.mxu0 0
      %2226 = vmatprep.subr.bf16.mxu0 0
      %2227 = vmatpush1.bf16.msra.mxu0 0
      %2228 = vmatprep.mubr.bf16.mxu0 0
      %2229 = vmatmul.mubr.bf16.gmra.mrb[0].mxu0 %v752
      %v2230 = vpop.f32.mrb[0].mxu0
      %v2231 = vadd.f32 0.0, %v2230
      %v2232 = vpop.f32.mrb[0].mxu0
      %v2233 = vpop.f32.mrb[0].mxu0
      %v2234 = vadd.f32 0.0, %v2233
      %v2235 = vpop.f32.mrb[0].mxu0
      %2236 = vmatprep.mubr.bf16.mxu0 0
      %2237 = vmatmul.mubr.bf16.gmra.mrb[0].mxu0 %v755
      %v2238 = vpop.f32.mrb[0].mxu0
      %v2239 = vadd.f32 0.0, %v2238
      %v2240 = vpop.f32.mrb[0].mxu0
      %v2241 = vpop.f32.mrb[0].mxu0
      %v2242 = vadd.f32 0.0, %v2241
      %v2243 = vpop.f32.mrb[0].mxu0
      %2244 = vmatprep.mubr.bf16.mxu0 0
      %2245 = vmatmul.mubr.bf16.gmra.mrb[0].mxu0 %v758
      %v2246 = vpop.f32.mrb[0].mxu0
      %v2247 = vadd.f32 0.0, %v2246
      %v2248 = vpop.f32.mrb[0].mxu0
      %v2249 = vpop.f32.mrb[0].mxu0
      %v2250 = vadd.f32 0.0, %v2249
      %v2251 = vpop.f32.mrb[0].mxu0
      %2252 = vmatprep.mubr.bf16.mxu0 0
      %2253 = vmatmul.mubr.bf16.gmra.mrb[0].mxu0 %v761
      %v2254 = vpop.f32.mrb[0].mxu0
      %v2255 = vadd.f32 0.0, %v2254
      %v2256 = vpop.f32.mrb[0].mxu0
      %v2257 = vpop.f32.mrb[0].mxu0
      %v2258 = vadd.f32 0.0, %v2257
      %v2259 = vpop.f32.mrb[0].mxu0
      %2260 = vmatprep.mubr.bf16.mxu0 0
      %2261 = vmatmul.mubr.bf16.gmra.mrb[0].mxu0 %v764
      %v2262 = vpop.f32.mrb[0].mxu0
      %v2263 = vadd.f32 0.0, %v2262
      %v2264 = vpop.f32.mrb[0].mxu0
      %v2265 = vpop.f32.mrb[0].mxu0
      %v2266 = vadd.f32 0.0, %v2265
      %v2267 = vpop.f32.mrb[0].mxu0
      %2268 = vmatprep.mubr.bf16.mxu0 0
      %2269 = vmatmul.mubr.bf16.gmra.mrb[0].mxu0 %v767
      %v2270 = vpop.f32.mrb[0].mxu0
      %v2271 = vadd.f32 0.0, %v2270
      %v2272 = vpop.f32.mrb[0].mxu0
      %v2273 = vpop.f32.mrb[0].mxu0
      %v2274 = vadd.f32 0.0, %v2273
      %v2275 = vpop.f32.mrb[0].mxu0
      %2276 = vmatprep.mubr.bf16.mxu0 0
      %2277 = vmatmul.mubr.bf16.gmra.mrb[0].mxu0 %v770
      %v2278 = vpop.f32.mrb[0].mxu0
      %v2279 = vadd.f32 0.0, %v2278
      %v2280 = vpop.f32.mrb[0].mxu0
      %v2281 = vpop.f32.mrb[0].mxu0
      %v2282 = vadd.f32 0.0, %v2281
      %v2283 = vpop.f32.mrb[0].mxu0
      %2284 = vmatprep.mubr.bf16.mxu0 0
      %2285 = vmatmul.mubr.bf16.gmra.mrb[0].mxu0 %v773
      %v2286 = vpop.f32.mrb[0].mxu0
      %v2287 = vadd.f32 0.0, %v2286
      %v2288 = vpop.f32.mrb[0].mxu0
      %v2289 = vpop.f32.mrb[0].mxu0
      %v2290 = vadd.f32 0.0, %v2289
      %v2291 = vpop.f32.mrb[0].mxu0
      %2292 = vmatprep.mubr.bf16.mxu0 0
      %2293 = vmatmul.mubr.bf16.gmra.mrb[0].mxu0 %v776
      %v2294 = vpop.f32.mrb[0].mxu0
      %v2295 = vadd.f32 0.0, %v2294
      %v2296 = vpop.f32.mrb[0].mxu0
      %v2297 = vpop.f32.mrb[0].mxu0
      %v2298 = vadd.f32 0.0, %v2297
      %v2299 = vpop.f32.mrb[0].mxu0
      %2300 = vmatprep.mubr.bf16.mxu0 0
      %2301 = vmatmul.mubr.bf16.gmra.mrb[0].mxu0 %v779
      %v2302 = vpop.f32.mrb[0].mxu0
      %v2303 = vadd.f32 0.0, %v2302
      %v2304 = vpop.f32.mrb[0].mxu0
      %v2305 = vpop.f32.mrb[0].mxu0
      %v2306 = vadd.f32 0.0, %v2305
      %v2307 = vpop.f32.mrb[0].mxu0
      %2308 = vmatprep.mubr.bf16.mxu0 0
      %2309 = vmatmul.mubr.bf16.gmra.mrb[0].mxu0 %v782
      %v2310 = vpop.f32.mrb[0].mxu0
      %v2311 = vadd.f32 0.0, %v2310
      %v2312 = vpop.f32.mrb[0].mxu0
      %v2313 = vpop.f32.mrb[0].mxu0
      %v2314 = vadd.f32 0.0, %v2313
      %v2315 = vpop.f32.mrb[0].mxu0
      %2316 = vmatprep.mubr.bf16.mxu0 0
      %2317 = vmatmul.mubr.bf16.gmra.mrb[0].mxu0 %v785
      %v2318 = vpop.f32.mrb[0].mxu0
      %v2319 = vadd.f32 0.0, %v2318
      %v2320 = vpop.f32.mrb[0].mxu0
      %v2321 = vpop.f32.mrb[0].mxu0
      %v2322 = vadd.f32 0.0, %v2321
      %v2323 = vpop.f32.mrb[0].mxu0
      %2324 = vmatprep.mubr.bf16.mxu0 0
      %2325 = vmatmul.mubr.bf16.gmra.mrb[0].mxu0 %v788
      %v2326 = vpop.f32.mrb[0].mxu0
      %v2327 = vadd.f32 0.0, %v2326
      %v2328 = vpop.f32.mrb[0].mxu0
      %v2329 = vpop.f32.mrb[0].mxu0
      %v2330 = vadd.f32 0.0, %v2329
      %v2331 = vpop.f32.mrb[0].mxu0
      %2332 = vmatprep.mubr.bf16.mxu0 0
      %2333 = vmatmul.mubr.bf16.gmra.mrb[0].mxu0 %v791
      %v2334 = vpop.f32.mrb[0].mxu0
      %v2335 = vadd.f32 0.0, %v2334
      %v2336 = vpop.f32.mrb[0].mxu0
      %v2337 = vpop.f32.mrb[0].mxu0
      %v2338 = vadd.f32 0.0, %v2337
      %v2339 = vpop.f32.mrb[0].mxu0
      %2340 = vmatprep.mubr.bf16.mxu0 0
      %2341 = vmatmul.mubr.bf16.gmra.mrb[0].mxu0 %v794
      %v2342 = vpop.f32.mrb[0].mxu0
      %v2343 = vadd.f32 0.0, %v2342
      %v2344 = vpop.f32.mrb[0].mxu0
      %v2345 = vpop.f32.mrb[0].mxu0
      %v2346 = vadd.f32 0.0, %v2345
      %v2347 = vpop.f32.mrb[0].mxu0
      %2348 = vmatprep.mubr.bf16.mxu0 0
      %2349 = vmatmul.mubr.bf16.gmra.mrb[0].mxu0 %v2191
      %v2350 = vpop.f32.mrb[0].mxu0
      %v2351 = vadd.f32 0.0, %v2350
      %v2352 = vpop.f32.mrb[0].mxu0
      %v2353 = vpop.f32.mrb[0].mxu0
      %v2354 = vadd.f32 0.0, %v2353
      %v2355 = vpop.f32.mrb[0].mxu0
      %2356 = vdwg.mxu0
      %v2357 = vadd.f32 %v2151, %v2231
      %v2358 = vadd.f32 %v2152, %v2234
      %v2359 = vadd.f32 %v2153, %v2239
      %v2360 = vadd.f32 %v2154, %v2242
      %v2361 = vadd.f32 %v2155, %v2247
      %v2362 = vadd.f32 %v2156, %v2250
      %v2363 = vadd.f32 %v2157, %v2255
      %v2364 = vadd.f32 %v2158, %v2258
      %v2365 = vadd.f32 %v2159, %v2263
      %v2366 = vadd.f32 %v2160, %v2266
      %v2367 = vadd.f32 %v2161, %v2271
      %v2368 = vadd.f32 %v2162, %v2274
      %v2369 = vadd.f32 %v2163, %v2279
      %v2370 = vadd.f32 %v2164, %v2282
      %v2371 = vadd.f32 %v2165, %v2287
      %v2372 = vadd.f32 %v2166, %v2290
      %v2373 = vadd.f32 %v2167, %v2295
      %v2374 = vadd.f32 %v2168, %v2298
      %v2375 = vadd.f32 %v2169, %v2303
      %v2376 = vadd.f32 %v2170, %v2306
      %v2377 = vadd.f32 %v2171, %v2311
      %v2378 = vadd.f32 %v2172, %v2314
      %v2379 = vadd.f32 %v2173, %v2319
      %v2380 = vadd.f32 %v2174, %v2322
      %v2381 = vadd.f32 %v2175, %v2327
      %v2382 = vadd.f32 %v2176, %v2330
      %v2383 = vadd.f32 %v2177, %v2335
      %v2384 = vadd.f32 %v2178, %v2338
      %v2385 = vadd.f32 %v2179, %v2343
      %v2386 = vadd.f32 %v2180, %v2346
      %v2387 = vadd.f32 %v2181, %v2351
      %v2388 = vadd.f32 %v2182, %v2354
      %s2389 = scalar_lea.vmem %s1, 20
      %v2390 = vld [vmem:[%s2389] sm:$0x7]
      %v2392 = vshrl.u32 %v644, 16
      %v2394 = vrot.slane %v2392, 4
      %v2395 = vshll.u32 %v644, 16
      %v2397 = vrot.slane %v2395, 5
      %v2398 = vor.u32 %v2394, %v2397
      %v2400 = vshrl.u32 %v662, 16
      %v2402 = vrot.slane %v2400, 4
      %v2403 = vshll.u32 %v662, 16
      %v2405 = vrot.slane %v2403, 5
      %v2406 = vor.u32 %v2402, %v2405
      %v2407 = vsel %vm1448, %v2398, %v2406
      %v2409 = vsel %vm334, %v2407, 0
      %v2412 = vsel %vm796, %v2390, 0
      %2414 = vmatprep.subr.bf16.mxu0 0
      %2415 = vmatpush1.bf16.msra.mxu0 %v2412
      %2416 = vmatprep.subr.bf16.mxu0 0
      %2417 = vmatpush1.bf16.msra.mxu0 0
      %2418 = vmatprep.subr.bf16.mxu0 0
      %2419 = vmatpush1.bf16.msra.mxu0 0
      %2420 = vmatprep.subr.bf16.mxu0 0
      %2421 = vmatpush1.bf16.msra.mxu0 0
      %2422 = vmatprep.subr.bf16.mxu0 0
      %2423 = vmatpush1.bf16.msra.mxu0 0
      %2424 = vmatprep.subr.bf16.mxu0 0
      %2425 = vmatpush1.bf16.msra.mxu0 0
      %2426 = vmatprep.subr.bf16.mxu0 0
      %2427 = vmatpush1.bf16.msra.mxu0 0
      %2428 = vmatprep.subr.bf16.mxu0 0
      %2429 = vmatpush1.bf16.msra.mxu0 0
      %2430 = vmatprep.subr.bf16.mxu0 0
      %2431 = vmatpush1.bf16.msra.mxu0 0
      %2432 = vmatprep.subr.bf16.mxu0 0
      %2433 = vmatpush1.bf16.msra.mxu0 0
      %2434 = vmatprep.subr.bf16.mxu0 0
      %2435 = vmatpush1.bf16.msra.mxu0 0
      %2436 = vmatprep.subr.bf16.mxu0 0
      %2437 = vmatpush1.bf16.msra.mxu0 0
      %2438 = vmatprep.subr.bf16.mxu0 0
      %2439 = vmatpush1.bf16.msra.mxu0 0
      %2440 = vmatprep.subr.bf16.mxu0 0
      %2441 = vmatpush1.bf16.msra.mxu0 0
      %2442 = vmatprep.subr.bf16.mxu0 0
      %2443 = vmatpush1.bf16.msra.mxu0 0
      %2444 = vmatprep.subr.bf16.mxu0 0
      %2445 = vmatpush1.bf16.msra.mxu0 0
      %2446 = vmatprep.mubr.bf16.mxu0 0
      %2447 = vmatmul.mubr.bf16.gmra.mrb[0].mxu0 %v1725
      %v2448 = vpop.f32.mrb[0].mxu0
      %v2449 = vadd.f32 0.0, %v2448
      %v2450 = vpop.f32.mrb[0].mxu0
      %v2451 = vpop.f32.mrb[0].mxu0
      %v2452 = vadd.f32 0.0, %v2451
      %v2453 = vpop.f32.mrb[0].mxu0
      %2454 = vmatprep.mubr.bf16.mxu0 0
      %2455 = vmatmul.mubr.bf16.gmra.mrb[0].mxu0 %v1728
      %v2456 = vpop.f32.mrb[0].mxu0
      %v2457 = vadd.f32 0.0, %v2456
      %v2458 = vpop.f32.mrb[0].mxu0
      %v2459 = vpop.f32.mrb[0].mxu0
      %v2460 = vadd.f32 0.0, %v2459
      %v2461 = vpop.f32.mrb[0].mxu0
      %2462 = vmatprep.mubr.bf16.mxu0 0
      %2463 = vmatmul.mubr.bf16.gmra.mrb[0].mxu0 %v1731
      %v2464 = vpop.f32.mrb[0].mxu0
      %v2465 = vadd.f32 0.0, %v2464
      %v2466 = vpop.f32.mrb[0].mxu0
      %v2467 = vpop.f32.mrb[0].mxu0
      %v2468 = vadd.f32 0.0, %v2467
      %v2469 = vpop.f32.mrb[0].mxu0
      %2470 = vmatprep.mubr.bf16.mxu0 0
      %2471 = vmatmul.mubr.bf16.gmra.mrb[0].mxu0 %v1734
      %v2472 = vpop.f32.mrb[0].mxu0
      %v2473 = vadd.f32 0.0, %v2472
      %v2474 = vpop.f32.mrb[0].mxu0
      %v2475 = vpop.f32.mrb[0].mxu0
      %v2476 = vadd.f32 0.0, %v2475
      %v2477 = vpop.f32.mrb[0].mxu0
      %2478 = vmatprep.mubr.bf16.mxu0 0
      %2479 = vmatmul.mubr.bf16.gmra.mrb[0].mxu0 %v1737
      %v2480 = vpop.f32.mrb[0].mxu0
      %v2481 = vadd.f32 0.0, %v2480
      %v2482 = vpop.f32.mrb[0].mxu0
      %v2483 = vpop.f32.mrb[0].mxu0
      %v2484 = vadd.f32 0.0, %v2483
      %v2485 = vpop.f32.mrb[0].mxu0
      %2486 = vmatprep.mubr.bf16.mxu0 0
      %2487 = vmatmul.mubr.bf16.gmra.mrb[0].mxu0 %v1740
      %v2488 = vpop.f32.mrb[0].mxu0
      %v2489 = vadd.f32 0.0, %v2488
      %v2490 = vpop.f32.mrb[0].mxu0
      %v2491 = vpop.f32.mrb[0].mxu0
      %v2492 = vadd.f32 0.0, %v2491
      %v2493 = vpop.f32.mrb[0].mxu0
      %2494 = vmatprep.mubr.bf16.mxu0 0
      %2495 = vmatmul.mubr.bf16.gmra.mrb[0].mxu0 %v1743
      %v2496 = vpop.f32.mrb[0].mxu0
      %v2497 = vadd.f32 0.0, %v2496
      %v2498 = vpop.f32.mrb[0].mxu0
      %v2499 = vpop.f32.mrb[0].mxu0
      %v2500 = vadd.f32 0.0, %v2499
      %v2501 = vpop.f32.mrb[0].mxu0
      %2502 = vmatprep.mubr.bf16.mxu0 0
      %2503 = vmatmul.mubr.bf16.gmra.mrb[0].mxu0 %v1746
      %v2504 = vpop.f32.mrb[0].mxu0
      %v2505 = vadd.f32 0.0, %v2504
      %v2506 = vpop.f32.mrb[0].mxu0
      %v2507 = vpop.f32.mrb[0].mxu0
      %v2508 = vadd.f32 0.0, %v2507
      %v2509 = vpop.f32.mrb[0].mxu0
      %2510 = vmatprep.mubr.bf16.mxu0 0
      %2511 = vmatmul.mubr.bf16.gmra.mrb[0].mxu0 %v1749
      %v2512 = vpop.f32.mrb[0].mxu0
      %v2513 = vadd.f32 0.0, %v2512
      %v2514 = vpop.f32.mrb[0].mxu0
      %v2515 = vpop.f32.mrb[0].mxu0
      %v2516 = vadd.f32 0.0, %v2515
      %v2517 = vpop.f32.mrb[0].mxu0
      %2518 = vmatprep.mubr.bf16.mxu0 0
      %2519 = vmatmul.mubr.bf16.gmra.mrb[0].mxu0 %v1752
      %v2520 = vpop.f32.mrb[0].mxu0
      %v2521 = vadd.f32 0.0, %v2520
      %v2522 = vpop.f32.mrb[0].mxu0
      %v2523 = vpop.f32.mrb[0].mxu0
      %v2524 = vadd.f32 0.0, %v2523
      %v2525 = vpop.f32.mrb[0].mxu0
      %2526 = vmatprep.mubr.bf16.mxu0 0
      %2527 = vmatmul.mubr.bf16.gmra.mrb[0].mxu0 %v1755
      %v2528 = vpop.f32.mrb[0].mxu0
      %v2529 = vadd.f32 0.0, %v2528
      %v2530 = vpop.f32.mrb[0].mxu0
      %v2531 = vpop.f32.mrb[0].mxu0
      %v2532 = vadd.f32 0.0, %v2531
      %v2533 = vpop.f32.mrb[0].mxu0
      %2534 = vmatprep.mubr.bf16.mxu0 0
      %2535 = vmatmul.mubr.bf16.gmra.mrb[0].mxu0 %v1758
      %v2536 = vpop.f32.mrb[0].mxu0
      %v2537 = vadd.f32 0.0, %v2536
      %v2538 = vpop.f32.mrb[0].mxu0
      %v2539 = vpop.f32.mrb[0].mxu0
      %v2540 = vadd.f32 0.0, %v2539
      %v2541 = vpop.f32.mrb[0].mxu0
      %2542 = vmatprep.mubr.bf16.mxu0 0
      %2543 = vmatmul.mubr.bf16.gmra.mrb[0].mxu0 %v1761
      %v2544 = vpop.f32.mrb[0].mxu0
      %v2545 = vadd.f32 0.0, %v2544
      %v2546 = vpop.f32.mrb[0].mxu0
      %v2547 = vpop.f32.mrb[0].mxu0
      %v2548 = vadd.f32 0.0, %v2547
      %v2549 = vpop.f32.mrb[0].mxu0
      %2550 = vmatprep.mubr.bf16.mxu0 0
      %2551 = vmatmul.mubr.bf16.gmra.mrb[0].mxu0 %v1764
      %v2552 = vpop.f32.mrb[0].mxu0
      %v2553 = vadd.f32 0.0, %v2552
      %v2554 = vpop.f32.mrb[0].mxu0
      %v2555 = vpop.f32.mrb[0].mxu0
      %v2556 = vadd.f32 0.0, %v2555
      %v2557 = vpop.f32.mrb[0].mxu0
      %2558 = vmatprep.mubr.bf16.mxu0 0
      %2559 = vmatmul.mubr.bf16.gmra.mrb[0].mxu0 %v1767
      %v2560 = vpop.f32.mrb[0].mxu0
      %v2561 = vadd.f32 0.0, %v2560
      %v2562 = vpop.f32.mrb[0].mxu0
      %v2563 = vpop.f32.mrb[0].mxu0
      %v2564 = vadd.f32 0.0, %v2563
      %v2565 = vpop.f32.mrb[0].mxu0
      %2566 = vmatprep.mubr.bf16.mxu0 0
      %2567 = vmatmul.mubr.bf16.gmra.mrb[0].mxu0 %v2409
      %v2568 = vpop.f32.mrb[0].mxu0
      %v2569 = vadd.f32 0.0, %v2568
      %v2570 = vpop.f32.mrb[0].mxu0
      %v2571 = vpop.f32.mrb[0].mxu0
      %v2572 = vadd.f32 0.0, %v2571
      %v2573 = vpop.f32.mrb[0].mxu0
      %2574 = vdwg.mxu0
      %v2575 = vadd.f32 %v2357, %v2449
      %v2576 = vadd.f32 %v2358, %v2452
      %v2577 = vadd.f32 %v2359, %v2457
      %v2578 = vadd.f32 %v2360, %v2460
      %v2579 = vadd.f32 %v2361, %v2465
      %v2580 = vadd.f32 %v2362, %v2468
      %v2581 = vadd.f32 %v2363, %v2473
      %v2582 = vadd.f32 %v2364, %v2476
      %v2583 = vadd.f32 %v2365, %v2481
      %v2584 = vadd.f32 %v2366, %v2484
      %v2585 = vadd.f32 %v2367, %v2489
      %v2586 = vadd.f32 %v2368, %v2492
      %v2587 = vadd.f32 %v2369, %v2497
      %v2588 = vadd.f32 %v2370, %v2500
      %v2589 = vadd.f32 %v2371, %v2505
      %v2590 = vadd.f32 %v2372, %v2508
      %v2591 = vadd.f32 %v2373, %v2513
      %v2592 = vadd.f32 %v2374, %v2516
      %v2593 = vadd.f32 %v2375, %v2521
      %v2594 = vadd.f32 %v2376, %v2524
      %v2595 = vadd.f32 %v2377, %v2529
      %v2596 = vadd.f32 %v2378, %v2532
      %v2597 = vadd.f32 %v2379, %v2537
      %v2598 = vadd.f32 %v2380, %v2540
      %v2599 = vadd.f32 %v2381, %v2545
      %v2600 = vadd.f32 %v2382, %v2548
      %v2601 = vadd.f32 %v2383, %v2553
      %v2602 = vadd.f32 %v2384, %v2556
      %v2603 = vadd.f32 %v2385, %v2561
      %v2604 = vadd.f32 %v2386, %v2564
      %v2605 = vadd.f32 %v2387, %v2569
      %v2606 = vadd.f32 %v2388, %v2572
      %s2607 = scalar_lea.vmem %s1, 24
      %v2608 = vld [vmem:[%s2607] sm:$0x7]
      %v2610 = vshrl.u32 %v626, 16
      %v2612 = vrot.slane %v2610, 3
      %v2613 = vshll.u32 %v626, 16
      %v2615 = vrot.slane %v2613, 4
      %v2616 = vor.u32 %v2612, %v2615
      %v2618 = vshrl.u32 %v627, 16
      %v2620 = vrot.slane %v2618, 3
      %v2621 = vshll.u32 %v627, 16
      %v2623 = vrot.slane %v2621, 4
      %v2624 = vor.u32 %v2620, %v2623
      %v2625 = vsel %vm961, %v2616, %v2624
      %v2627 = vsel %vm334, %v2625, 0
      %v2630 = vsel %vm796, %v2608, 0
      %2632 = vmatprep.subr.bf16.mxu0 0
      %2633 = vmatpush1.bf16.msra.mxu0 %v2630
      %2634 = vmatprep.subr.bf16.mxu0 0
      %2635 = vmatpush1.bf16.msra.mxu0 0
      %2636 = vmatprep.subr.bf16.mxu0 0
      %2637 = vmatpush1.bf16.msra.mxu0 0
      %2638 = vmatprep.subr.bf16.mxu0 0
      %2639 = vmatpush1.bf16.msra.mxu0 0
      %2640 = vmatprep.subr.bf16.mxu0 0
      %2641 = vmatpush1.bf16.msra.mxu0 0
      %2642 = vmatprep.subr.bf16.mxu0 0
      %2643 = vmatpush1.bf16.msra.mxu0 0
      %2644 = vmatprep.subr.bf16.mxu0 0
      %2645 = vmatpush1.bf16.msra.mxu0 0
      %2646 = vmatprep.subr.bf16.mxu0 0
      %2647 = vmatpush1.bf16.msra.mxu0 0
      %2648 = vmatprep.subr.bf16.mxu0 0
      %2649 = vmatpush1.bf16.msra.mxu0 0
      %2650 = vmatprep.subr.bf16.mxu0 0
      %2651 = vmatpush1.bf16.msra.mxu0 0
      %2652 = vmatprep.subr.bf16.mxu0 0
      %2653 = vmatpush1.bf16.msra.mxu0 0
      %2654 = vmatprep.subr.bf16.mxu0 0
      %2655 = vmatpush1.bf16.msra.mxu0 0
      %2656 = vmatprep.subr.bf16.mxu0 0
      %2657 = vmatpush1.bf16.msra.mxu0 0
      %2658 = vmatprep.subr.bf16.mxu0 0
      %2659 = vmatpush1.bf16.msra.mxu0 0
      %2660 = vmatprep.subr.bf16.mxu0 0
      %2661 = vmatpush1.bf16.msra.mxu0 0
      %2662 = vmatprep.subr.bf16.mxu0 0
      %2663 = vmatpush1.bf16.msra.mxu0 0
      %2664 = vmatprep.mubr.bf16.mxu0 0
      %2665 = vmatmul.mubr.bf16.gmra.mrb[0].mxu0 %v1241
      %v2666 = vpop.f32.mrb[0].mxu0
      %v2667 = vadd.f32 0.0, %v2666
      %v2668 = vpop.f32.mrb[0].mxu0
      %v2669 = vpop.f32.mrb[0].mxu0
      %v2670 = vadd.f32 0.0, %v2669
      %v2671 = vpop.f32.mrb[0].mxu0
      %2672 = vmatprep.mubr.bf16.mxu0 0
      %2673 = vmatmul.mubr.bf16.gmra.mrb[0].mxu0 %v1244
      %v2674 = vpop.f32.mrb[0].mxu0
      %v2675 = vadd.f32 0.0, %v2674
      %v2676 = vpop.f32.mrb[0].mxu0
      %v2677 = vpop.f32.mrb[0].mxu0
      %v2678 = vadd.f32 0.0, %v2677
      %v2679 = vpop.f32.mrb[0].mxu0
      %2680 = vmatprep.mubr.bf16.mxu0 0
      %2681 = vmatmul.mubr.bf16.gmra.mrb[0].mxu0 %v1247
      %v2682 = vpop.f32.mrb[0].mxu0
      %v2683 = vadd.f32 0.0, %v2682
      %v2684 = vpop.f32.mrb[0].mxu0
      %v2685 = vpop.f32.mrb[0].mxu0
      %v2686 = vadd.f32 0.0, %v2685
      %v2687 = vpop.f32.mrb[0].mxu0
      %2688 = vmatprep.mubr.bf16.mxu0 0
      %2689 = vmatmul.mubr.bf16.gmra.mrb[0].mxu0 %v1250
      %v2690 = vpop.f32.mrb[0].mxu0
      %v2691 = vadd.f32 0.0, %v2690
      %v2692 = vpop.f32.mrb[0].mxu0
      %v2693 = vpop.f32.mrb[0].mxu0
      %v2694 = vadd.f32 0.0, %v2693
      %v2695 = vpop.f32.mrb[0].mxu0
      %2696 = vmatprep.mubr.bf16.mxu0 0
      %2697 = vmatmul.mubr.bf16.gmra.mrb[0].mxu0 %v1253
      %v2698 = vpop.f32.mrb[0].mxu0
      %v2699 = vadd.f32 0.0, %v2698
      %v2700 = vpop.f32.mrb[0].mxu0
      %v2701 = vpop.f32.mrb[0].mxu0
      %v2702 = vadd.f32 0.0, %v2701
      %v2703 = vpop.f32.mrb[0].mxu0
      %2704 = vmatprep.mubr.bf16.mxu0 0
      %2705 = vmatmul.mubr.bf16.gmra.mrb[0].mxu0 %v1256
      %v2706 = vpop.f32.mrb[0].mxu0
      %v2707 = vadd.f32 0.0, %v2706
      %v2708 = vpop.f32.mrb[0].mxu0
      %v2709 = vpop.f32.mrb[0].mxu0
      %v2710 = vadd.f32 0.0, %v2709
      %v2711 = vpop.f32.mrb[0].mxu0
      %2712 = vmatprep.mubr.bf16.mxu0 0
      %2713 = vmatmul.mubr.bf16.gmra.mrb[0].mxu0 %v1259
      %v2714 = vpop.f32.mrb[0].mxu0
      %v2715 = vadd.f32 0.0, %v2714
      %v2716 = vpop.f32.mrb[0].mxu0
      %v2717 = vpop.f32.mrb[0].mxu0
      %v2718 = vadd.f32 0.0, %v2717
      %v2719 = vpop.f32.mrb[0].mxu0
      %2720 = vmatprep.mubr.bf16.mxu0 0
      %2721 = vmatmul.mubr.bf16.gmra.mrb[0].mxu0 %v1262
      %v2722 = vpop.f32.mrb[0].mxu0
      %v2723 = vadd.f32 0.0, %v2722
      %v2724 = vpop.f32.mrb[0].mxu0
      %v2725 = vpop.f32.mrb[0].mxu0
      %v2726 = vadd.f32 0.0, %v2725
      %v2727 = vpop.f32.mrb[0].mxu0
      %2728 = vmatprep.mubr.bf16.mxu0 0
      %2729 = vmatmul.mubr.bf16.gmra.mrb[0].mxu0 %v1265
      %v2730 = vpop.f32.mrb[0].mxu0
      %v2731 = vadd.f32 0.0, %v2730
      %v2732 = vpop.f32.mrb[0].mxu0
      %v2733 = vpop.f32.mrb[0].mxu0
      %v2734 = vadd.f32 0.0, %v2733
      %v2735 = vpop.f32.mrb[0].mxu0
      %2736 = vmatprep.mubr.bf16.mxu0 0
      %2737 = vmatmul.mubr.bf16.gmra.mrb[0].mxu0 %v1268
      %v2738 = vpop.f32.mrb[0].mxu0
      %v2739 = vadd.f32 0.0, %v2738
      %v2740 = vpop.f32.mrb[0].mxu0
      %v2741 = vpop.f32.mrb[0].mxu0
      %v2742 = vadd.f32 0.0, %v2741
      %v2743 = vpop.f32.mrb[0].mxu0
      %2744 = vmatprep.mubr.bf16.mxu0 0
      %2745 = vmatmul.mubr.bf16.gmra.mrb[0].mxu0 %v1271
      %v2746 = vpop.f32.mrb[0].mxu0
      %v2747 = vadd.f32 0.0, %v2746
      %v2748 = vpop.f32.mrb[0].mxu0
      %v2749 = vpop.f32.mrb[0].mxu0
      %v2750 = vadd.f32 0.0, %v2749
      %v2751 = vpop.f32.mrb[0].mxu0
      %2752 = vmatprep.mubr.bf16.mxu0 0
      %2753 = vmatmul.mubr.bf16.gmra.mrb[0].mxu0 %v1274
      %v2754 = vpop.f32.mrb[0].mxu0
      %v2755 = vadd.f32 0.0, %v2754
      %v2756 = vpop.f32.mrb[0].mxu0
      %v2757 = vpop.f32.mrb[0].mxu0
      %v2758 = vadd.f32 0.0, %v2757
      %v2759 = vpop.f32.mrb[0].mxu0
      %2760 = vmatprep.mubr.bf16.mxu0 0
      %2761 = vmatmul.mubr.bf16.gmra.mrb[0].mxu0 %v1277
      %v2762 = vpop.f32.mrb[0].mxu0
      %v2763 = vadd.f32 0.0, %v2762
      %v2764 = vpop.f32.mrb[0].mxu0
      %v2765 = vpop.f32.mrb[0].mxu0
      %v2766 = vadd.f32 0.0, %v2765
      %v2767 = vpop.f32.mrb[0].mxu0
      %2768 = vmatprep.mubr.bf16.mxu0 0
      %2769 = vmatmul.mubr.bf16.gmra.mrb[0].mxu0 %v1280
      %v2770 = vpop.f32.mrb[0].mxu0
      %v2771 = vadd.f32 0.0, %v2770
      %v2772 = vpop.f32.mrb[0].mxu0
      %v2773 = vpop.f32.mrb[0].mxu0
      %v2774 = vadd.f32 0.0, %v2773
      %v2775 = vpop.f32.mrb[0].mxu0
      %2776 = vmatprep.mubr.bf16.mxu0 0
      %2777 = vmatmul.mubr.bf16.gmra.mrb[0].mxu0 %v1985
      %v2778 = vpop.f32.mrb[0].mxu0
      %v2779 = vadd.f32 0.0, %v2778
      %v2780 = vpop.f32.mrb[0].mxu0
      %v2781 = vpop.f32.mrb[0].mxu0
      %v2782 = vadd.f32 0.0, %v2781
      %v2783 = vpop.f32.mrb[0].mxu0
      %2784 = vmatprep.mubr.bf16.mxu0 0
      %2785 = vmatmul.mubr.bf16.gmra.mrb[0].mxu0 %v2627
      %v2786 = vpop.f32.mrb[0].mxu0
      %v2787 = vadd.f32 0.0, %v2786
      %v2788 = vpop.f32.mrb[0].mxu0
      %v2789 = vpop.f32.mrb[0].mxu0
      %v2790 = vadd.f32 0.0, %v2789
      %v2791 = vpop.f32.mrb[0].mxu0
      %2792 = vdwg.mxu0
      %v2793 = vadd.f32 %v2575, %v2667
      %v2794 = vadd.f32 %v2576, %v2670
      %v2795 = vadd.f32 %v2577, %v2675
      %v2796 = vadd.f32 %v2578, %v2678
      %v2797 = vadd.f32 %v2579, %v2683
      %v2798 = vadd.f32 %v2580, %v2686
      %v2799 = vadd.f32 %v2581, %v2691
      %v2800 = vadd.f32 %v2582, %v2694
      %v2801 = vadd.f32 %v2583, %v2699
      %v2802 = vadd.f32 %v2584, %v2702
      %v2803 = vadd.f32 %v2585, %v2707
      %v2804 = vadd.f32 %v2586, %v2710
      %v2805 = vadd.f32 %v2587, %v2715
      %v2806 = vadd.f32 %v2588, %v2718
      %v2807 = vadd.f32 %v2589, %v2723
      %v2808 = vadd.f32 %v2590, %v2726
      %v2809 = vadd.f32 %v2591, %v2731
      %v2810 = vadd.f32 %v2592, %v2734
      %v2811 = vadd.f32 %v2593, %v2739
      %v2812 = vadd.f32 %v2594, %v2742
      %v2813 = vadd.f32 %v2595, %v2747
      %v2814 = vadd.f32 %v2596, %v2750
      %v2815 = vadd.f32 %v2597, %v2755
      %v2816 = vadd.f32 %v2598, %v2758
      %v2817 = vadd.f32 %v2599, %v2763
      %v2818 = vadd.f32 %v2600, %v2766
      %v2819 = vadd.f32 %v2601, %v2771
      %v2820 = vadd.f32 %v2602, %v2774
      %v2821 = vadd.f32 %v2603, %v2779
      %v2822 = vadd.f32 %v2604, %v2782
      %v2823 = vadd.f32 %v2605, %v2787
      %v2824 = vadd.f32 %v2606, %v2790
      %s2825 = scalar_lea.vmem %s1, 28
      %v2826 = vld [vmem:[%s2825] sm:$0x7]
      %v2829 = vrot.slane %v645, 4
      %v2830 = vrot.slane %v627, 4
      %v2831 = vsel %vm699, %v2829, %v2830
      %v2833 = vsel %vm334, %v2831, 0
      %v2836 = vsel %vm796, %v2826, 0
      %2838 = vmatprep.subr.bf16.mxu0 0
      %2839 = vmatpush1.bf16.msra.mxu0 %v2836
      %2840 = vmatprep.subr.bf16.mxu0 0
      %2841 = vmatpush1.bf16.msra.mxu0 0
      %2842 = vmatprep.subr.bf16.mxu0 0
      %2843 = vmatpush1.bf16.msra.mxu0 0
      %2844 = vmatprep.subr.bf16.mxu0 0
      %2845 = vmatpush1.bf16.msra.mxu0 0
      %2846 = vmatprep.subr.bf16.mxu0 0
      %2847 = vmatpush1.bf16.msra.mxu0 0
      %2848 = vmatprep.subr.bf16.mxu0 0
      %2849 = vmatpush1.bf16.msra.mxu0 0
      %2850 = vmatprep.subr.bf16.mxu0 0
      %2851 = vmatpush1.bf16.msra.mxu0 0
      %2852 = vmatprep.subr.bf16.mxu0 0
      %2853 = vmatpush1.bf16.msra.mxu0 0
      %2854 = vmatprep.subr.bf16.mxu0 0
      %2855 = vmatpush1.bf16.msra.mxu0 0
      %2856 = vmatprep.subr.bf16.mxu0 0
      %2857 = vmatpush1.bf16.msra.mxu0 0
      %2858 = vmatprep.subr.bf16.mxu0 0
      %2859 = vmatpush1.bf16.msra.mxu0 0
      %2860 = vmatprep.subr.bf16.mxu0 0
      %2861 = vmatpush1.bf16.msra.mxu0 0
      %2862 = vmatprep.subr.bf16.mxu0 0
      %2863 = vmatpush1.bf16.msra.mxu0 0
      %2864 = vmatprep.subr.bf16.mxu0 0
      %2865 = vmatpush1.bf16.msra.mxu0 0
      %2866 = vmatprep.subr.bf16.mxu0 0
      %2867 = vmatpush1.bf16.msra.mxu0 0
      %2868 = vmatprep.subr.bf16.mxu0 0
      %2869 = vmatpush1.bf16.msra.mxu0 0
      %2870 = vmatprep.mubr.bf16.mxu0 0
      %2871 = vmatmul.mubr.bf16.gmra.mrb[0].mxu0 %v755
      %v2872 = vpop.f32.mrb[0].mxu0
      %v2873 = vadd.f32 0.0, %v2872
      %v2874 = vpop.f32.mrb[0].mxu0
      %v2875 = vpop.f32.mrb[0].mxu0
      %v2876 = vadd.f32 0.0, %v2875
      %v2877 = vpop.f32.mrb[0].mxu0
      %2878 = vmatprep.mubr.bf16.mxu0 0
      %2879 = vmatmul.mubr.bf16.gmra.mrb[0].mxu0 %v758
      %v2880 = vpop.f32.mrb[0].mxu0
      %v2881 = vadd.f32 0.0, %v2880
      %v2882 = vpop.f32.mrb[0].mxu0
      %v2883 = vpop.f32.mrb[0].mxu0
      %v2884 = vadd.f32 0.0, %v2883
      %v2885 = vpop.f32.mrb[0].mxu0
      %2886 = vmatprep.mubr.bf16.mxu0 0
      %2887 = vmatmul.mubr.bf16.gmra.mrb[0].mxu0 %v761
      %v2888 = vpop.f32.mrb[0].mxu0
      %v2889 = vadd.f32 0.0, %v2888
      %v2890 = vpop.f32.mrb[0].mxu0
      %v2891 = vpop.f32.mrb[0].mxu0
      %v2892 = vadd.f32 0.0, %v2891
      %v2893 = vpop.f32.mrb[0].mxu0
      %2894 = vmatprep.mubr.bf16.mxu0 0
      %2895 = vmatmul.mubr.bf16.gmra.mrb[0].mxu0 %v764
      %v2896 = vpop.f32.mrb[0].mxu0
      %v2897 = vadd.f32 0.0, %v2896
      %v2898 = vpop.f32.mrb[0].mxu0
      %v2899 = vpop.f32.mrb[0].mxu0
      %v2900 = vadd.f32 0.0, %v2899
      %v2901 = vpop.f32.mrb[0].mxu0
      %2902 = vmatprep.mubr.bf16.mxu0 0
      %2903 = vmatmul.mubr.bf16.gmra.mrb[0].mxu0 %v767
      %v2904 = vpop.f32.mrb[0].mxu0
      %v2905 = vadd.f32 0.0, %v2904
      %v2906 = vpop.f32.mrb[0].mxu0
      %v2907 = vpop.f32.mrb[0].mxu0
      %v2908 = vadd.f32 0.0, %v2907
      %v2909 = vpop.f32.mrb[0].mxu0
      %2910 = vmatprep.mubr.bf16.mxu0 0
      %2911 = vmatmul.mubr.bf16.gmra.mrb[0].mxu0 %v770
      %v2912 = vpop.f32.mrb[0].mxu0
      %v2913 = vadd.f32 0.0, %v2912
      %v2914 = vpop.f32.mrb[0].mxu0
      %v2915 = vpop.f32.mrb[0].mxu0
      %v2916 = vadd.f32 0.0, %v2915
      %v2917 = vpop.f32.mrb[0].mxu0
      %2918 = vmatprep.mubr.bf16.mxu0 0
      %2919 = vmatmul.mubr.bf16.gmra.mrb[0].mxu0 %v773
      %v2920 = vpop.f32.mrb[0].mxu0
      %v2921 = vadd.f32 0.0, %v2920
      %v2922 = vpop.f32.mrb[0].mxu0
      %v2923 = vpop.f32.mrb[0].mxu0
      %v2924 = vadd.f32 0.0, %v2923
      %v2925 = vpop.f32.mrb[0].mxu0
      %2926 = vmatprep.mubr.bf16.mxu0 0
      %2927 = vmatmul.mubr.bf16.gmra.mrb[0].mxu0 %v776
      %v2928 = vpop.f32.mrb[0].mxu0
      %v2929 = vadd.f32 0.0, %v2928
      %v2930 = vpop.f32.mrb[0].mxu0
      %v2931 = vpop.f32.mrb[0].mxu0
      %v2932 = vadd.f32 0.0, %v2931
      %v2933 = vpop.f32.mrb[0].mxu0
      %2934 = vmatprep.mubr.bf16.mxu0 0
      %2935 = vmatmul.mubr.bf16.gmra.mrb[0].mxu0 %v779
      %v2936 = vpop.f32.mrb[0].mxu0
      %v2937 = vadd.f32 0.0, %v2936
      %v2938 = vpop.f32.mrb[0].mxu0
      %v2939 = vpop.f32.mrb[0].mxu0
      %v2940 = vadd.f32 0.0, %v2939
      %v2941 = vpop.f32.mrb[0].mxu0
      %2942 = vmatprep.mubr.bf16.mxu0 0
      %2943 = vmatmul.mubr.bf16.gmra.mrb[0].mxu0 %v782
      %v2944 = vpop.f32.mrb[0].mxu0
      %v2945 = vadd.f32 0.0, %v2944
      %v2946 = vpop.f32.mrb[0].mxu0
      %v2947 = vpop.f32.mrb[0].mxu0
      %v2948 = vadd.f32 0.0, %v2947
      %v2949 = vpop.f32.mrb[0].mxu0
      %2950 = vmatprep.mubr.bf16.mxu0 0
      %2951 = vmatmul.mubr.bf16.gmra.mrb[0].mxu0 %v785
      %v2952 = vpop.f32.mrb[0].mxu0
      %v2953 = vadd.f32 0.0, %v2952
      %v2954 = vpop.f32.mrb[0].mxu0
      %v2955 = vpop.f32.mrb[0].mxu0
      %v2956 = vadd.f32 0.0, %v2955
      %v2957 = vpop.f32.mrb[0].mxu0
      %2958 = vmatprep.mubr.bf16.mxu0 0
      %2959 = vmatmul.mubr.bf16.gmra.mrb[0].mxu0 %v788
      %v2960 = vpop.f32.mrb[0].mxu0
      %v2961 = vadd.f32 0.0, %v2960
      %v2962 = vpop.f32.mrb[0].mxu0
      %v2963 = vpop.f32.mrb[0].mxu0
      %v2964 = vadd.f32 0.0, %v2963
      %v2965 = vpop.f32.mrb[0].mxu0
      %2966 = vmatprep.mubr.bf16.mxu0 0
      %2967 = vmatmul.mubr.bf16.gmra.mrb[0].mxu0 %v791
      %v2968 = vpop.f32.mrb[0].mxu0
      %v2969 = vadd.f32 0.0, %v2968
      %v2970 = vpop.f32.mrb[0].mxu0
      %v2971 = vpop.f32.mrb[0].mxu0
      %v2972 = vadd.f32 0.0, %v2971
      %v2973 = vpop.f32.mrb[0].mxu0
      %2974 = vmatprep.mubr.bf16.mxu0 0
      %2975 = vmatmul.mubr.bf16.gmra.mrb[0].mxu0 %v794
      %v2976 = vpop.f32.mrb[0].mxu0
      %v2977 = vadd.f32 0.0, %v2976
      %v2978 = vpop.f32.mrb[0].mxu0
      %v2979 = vpop.f32.mrb[0].mxu0
      %v2980 = vadd.f32 0.0, %v2979
      %v2981 = vpop.f32.mrb[0].mxu0
      %2982 = vmatprep.mubr.bf16.mxu0 0
      %2983 = vmatmul.mubr.bf16.gmra.mrb[0].mxu0 %v2191
      %v2984 = vpop.f32.mrb[0].mxu0
      %v2985 = vadd.f32 0.0, %v2984
      %v2986 = vpop.f32.mrb[0].mxu0
      %v2987 = vpop.f32.mrb[0].mxu0
      %v2988 = vadd.f32 0.0, %v2987
      %v2989 = vpop.f32.mrb[0].mxu0
      %2990 = vmatprep.mubr.bf16.mxu0 0
      %2991 = vmatmul.mubr.bf16.gmra.mrb[0].mxu0 %v2833
      %v2992 = vpop.f32.mrb[0].mxu0
      %v2993 = vadd.f32 0.0, %v2992
      %v2994 = vpop.f32.mrb[0].mxu0
      %v2995 = vpop.f32.mrb[0].mxu0
      %v2996 = vadd.f32 0.0, %v2995
      %v2997 = vpop.f32.mrb[0].mxu0
      %2998 = vdwg.mxu0
      %v2999 = vadd.f32 %v2793, %v2873
      %v3000 = vadd.f32 %v2794, %v2876
      %v3001 = vadd.f32 %v2795, %v2881
      %v3002 = vadd.f32 %v2796, %v2884
      %v3003 = vadd.f32 %v2797, %v2889
      %v3004 = vadd.f32 %v2798, %v2892
      %v3005 = vadd.f32 %v2799, %v2897
      %v3006 = vadd.f32 %v2800, %v2900
      %v3007 = vadd.f32 %v2801, %v2905
      %v3008 = vadd.f32 %v2802, %v2908
      %v3009 = vadd.f32 %v2803, %v2913
      %v3010 = vadd.f32 %v2804, %v2916
      %v3011 = vadd.f32 %v2805, %v2921
      %v3012 = vadd.f32 %v2806, %v2924
      %v3013 = vadd.f32 %v2807, %v2929
      %v3014 = vadd.f32 %v2808, %v2932
      %v3015 = vadd.f32 %v2809, %v2937
      %v3016 = vadd.f32 %v2810, %v2940
      %v3017 = vadd.f32 %v2811, %v2945
      %v3018 = vadd.f32 %v2812, %v2948
      %v3019 = vadd.f32 %v2813, %v2953
      %v3020 = vadd.f32 %v2814, %v2956
      %v3021 = vadd.f32 %v2815, %v2961
      %v3022 = vadd.f32 %v2816, %v2964
      %v3023 = vadd.f32 %v2817, %v2969
      %v3024 = vadd.f32 %v2818, %v2972
      %v3025 = vadd.f32 %v2819, %v2977
      %v3026 = vadd.f32 %v2820, %v2980
      %v3027 = vadd.f32 %v2821, %v2985
      %v3028 = vadd.f32 %v2822, %v2988
      %v3029 = vadd.f32 %v2823, %v2993
      %v3030 = vadd.f32 %v2824, %v2996
      %s3031 = scalar_lea.vmem %s1, 32
      %v3032 = vld [vmem:[%s3031] sm:$0x7]
      %v3034 = vshrl.u32 %v645, 16
      %v3036 = vrot.slane %v3034, 4
      %v3037 = vshll.u32 %v645, 16
      %v3039 = vrot.slane %v3037, 5
      %v3040 = vor.u32 %v3036, %v3039
      %v3042 = vshrl.u32 %v663, 16
      %v3044 = vrot.slane %v3042, 4
      %v3045 = vshll.u32 %v663, 16
      %v3047 = vrot.slane %v3045, 5
      %v3048 = vor.u32 %v3044, %v3047
      %v3049 = vsel %vm1448, %v3040, %v3048
      %v3051 = vsel %vm334, %v3049, 0
      %v3054 = vsel %vm796, %v3032, 0
      %3056 = vmatprep.subr.bf16.mxu0 0
      %3057 = vmatpush1.bf16.msra.mxu0 %v3054
      %3058 = vmatprep.subr.bf16.mxu0 0
      %3059 = vmatpush1.bf16.msra.mxu0 0
      %3060 = vmatprep.subr.bf16.mxu0 0
      %3061 = vmatpush1.bf16.msra.mxu0 0
      %3062 = vmatprep.subr.bf16.mxu0 0
      %3063 = vmatpush1.bf16.msra.mxu0 0
      %3064 = vmatprep.subr.bf16.mxu0 0
      %3065 = vmatpush1.bf16.msra.mxu0 0
      %3066 = vmatprep.subr.bf16.mxu0 0
      %3067 = vmatpush1.bf16.msra.mxu0 0
      %3068 = vmatprep.subr.bf16.mxu0 0
      %3069 = vmatpush1.bf16.msra.mxu0 0
      %3070 = vmatprep.subr.bf16.mxu0 0
      %3071 = vmatpush1.bf16.msra.mxu0 0
      %3072 = vmatprep.subr.bf16.mxu0 0
      %3073 = vmatpush1.bf16.msra.mxu0 0
      %3074 = vmatprep.subr.bf16.mxu0 0
      %3075 = vmatpush1.bf16.msra.mxu0 0
      %3076 = vmatprep.subr.bf16.mxu0 0
      %3077 = vmatpush1.bf16.msra.mxu0 0
      %3078 = vmatprep.subr.bf16.mxu0 0
      %3079 = vmatpush1.bf16.msra.mxu0 0
      %3080 = vmatprep.subr.bf16.mxu0 0
      %3081 = vmatpush1.bf16.msra.mxu0 0
      %3082 = vmatprep.subr.bf16.mxu0 0
      %3083 = vmatpush1.bf16.msra.mxu0 0
      %3084 = vmatprep.subr.bf16.mxu0 0
      %3085 = vmatpush1.bf16.msra.mxu0 0
      %3086 = vmatprep.subr.bf16.mxu0 0
      %3087 = vmatpush1.bf16.msra.mxu0 0
      %3088 = vmatprep.mubr.bf16.mxu0 0
      %3089 = vmatmul.mubr.bf16.gmra.mrb[0].mxu0 %v1728
      %v3090 = vpop.f32.mrb[0].mxu0
      %v3091 = vadd.f32 0.0, %v3090
      %v3092 = vpop.f32.mrb[0].mxu0
      %v3093 = vpop.f32.mrb[0].mxu0
      %v3094 = vadd.f32 0.0, %v3093
      %v3095 = vpop.f32.mrb[0].mxu0
      %3096 = vmatprep.mubr.bf16.mxu0 0
      %3097 = vmatmul.mubr.bf16.gmra.mrb[0].mxu0 %v1731
      %v3098 = vpop.f32.mrb[0].mxu0
      %v3099 = vadd.f32 0.0, %v3098
      %v3100 = vpop.f32.mrb[0].mxu0
      %v3101 = vpop.f32.mrb[0].mxu0
      %v3102 = vadd.f32 0.0, %v3101
      %v3103 = vpop.f32.mrb[0].mxu0
      %3104 = vmatprep.mubr.bf16.mxu0 0
      %3105 = vmatmul.mubr.bf16.gmra.mrb[0].mxu0 %v1734
      %v3106 = vpop.f32.mrb[0].mxu0
      %v3107 = vadd.f32 0.0, %v3106
      %v3108 = vpop.f32.mrb[0].mxu0
      %v3109 = vpop.f32.mrb[0].mxu0
      %v3110 = vadd.f32 0.0, %v3109
      %v3111 = vpop.f32.mrb[0].mxu0
      %3112 = vmatprep.mubr.bf16.mxu0 0
      %3113 = vmatmul.mubr.bf16.gmra.mrb[0].mxu0 %v1737
      %v3114 = vpop.f32.mrb[0].mxu0
      %v3115 = vadd.f32 0.0, %v3114
      %v3116 = vpop.f32.mrb[0].mxu0
      %v3117 = vpop.f32.mrb[0].mxu0
      %v3118 = vadd.f32 0.0, %v3117
      %v3119 = vpop.f32.mrb[0].mxu0
      %3120 = vmatprep.mubr.bf16.mxu0 0
      %3121 = vmatmul.mubr.bf16.gmra.mrb[0].mxu0 %v1740
      %v3122 = vpop.f32.mrb[0].mxu0
      %v3123 = vadd.f32 0.0, %v3122
      %v3124 = vpop.f32.mrb[0].mxu0
      %v3125 = vpop.f32.mrb[0].mxu0
      %v3126 = vadd.f32 0.0, %v3125
      %v3127 = vpop.f32.mrb[0].mxu0
      %3128 = vmatprep.mubr.bf16.mxu0 0
      %3129 = vmatmul.mubr.bf16.gmra.mrb[0].mxu0 %v1743
      %v3130 = vpop.f32.mrb[0].mxu0
      %v3131 = vadd.f32 0.0, %v3130
      %v3132 = vpop.f32.mrb[0].mxu0
      %v3133 = vpop.f32.mrb[0].mxu0
      %v3134 = vadd.f32 0.0, %v3133
      %v3135 = vpop.f32.mrb[0].mxu0
      %3136 = vmatprep.mubr.bf16.mxu0 0
      %3137 = vmatmul.mubr.bf16.gmra.mrb[0].mxu0 %v1746
      %v3138 = vpop.f32.mrb[0].mxu0
      %v3139 = vadd.f32 0.0, %v3138
      %v3140 = vpop.f32.mrb[0].mxu0
      %v3141 = vpop.f32.mrb[0].mxu0
      %v3142 = vadd.f32 0.0, %v3141
      %v3143 = vpop.f32.mrb[0].mxu0
      %3144 = vmatprep.mubr.bf16.mxu0 0
      %3145 = vmatmul.mubr.bf16.gmra.mrb[0].mxu0 %v1749
      %v3146 = vpop.f32.mrb[0].mxu0
      %v3147 = vadd.f32 0.0, %v3146
      %v3148 = vpop.f32.mrb[0].mxu0
      %v3149 = vpop.f32.mrb[0].mxu0
      %v3150 = vadd.f32 0.0, %v3149
      %v3151 = vpop.f32.mrb[0].mxu0
      %3152 = vmatprep.mubr.bf16.mxu0 0
      %3153 = vmatmul.mubr.bf16.gmra.mrb[0].mxu0 %v1752
      %v3154 = vpop.f32.mrb[0].mxu0
      %v3155 = vadd.f32 0.0, %v3154
      %v3156 = vpop.f32.mrb[0].mxu0
      %v3157 = vpop.f32.mrb[0].mxu0
      %v3158 = vadd.f32 0.0, %v3157
      %v3159 = vpop.f32.mrb[0].mxu0
      %3160 = vmatprep.mubr.bf16.mxu0 0
      %3161 = vmatmul.mubr.bf16.gmra.mrb[0].mxu0 %v1755
      %v3162 = vpop.f32.mrb[0].mxu0
      %v3163 = vadd.f32 0.0, %v3162
      %v3164 = vpop.f32.mrb[0].mxu0
      %v3165 = vpop.f32.mrb[0].mxu0
      %v3166 = vadd.f32 0.0, %v3165
      %v3167 = vpop.f32.mrb[0].mxu0
      %3168 = vmatprep.mubr.bf16.mxu0 0
      %3169 = vmatmul.mubr.bf16.gmra.mrb[0].mxu0 %v1758
      %v3170 = vpop.f32.mrb[0].mxu0
      %v3171 = vadd.f32 0.0, %v3170
      %v3172 = vpop.f32.mrb[0].mxu0
      %v3173 = vpop.f32.mrb[0].mxu0
      %v3174 = vadd.f32 0.0, %v3173
      %v3175 = vpop.f32.mrb[0].mxu0
      %3176 = vmatprep.mubr.bf16.mxu0 0
      %3177 = vmatmul.mubr.bf16.gmra.mrb[0].mxu0 %v1761
      %v3178 = vpop.f32.mrb[0].mxu0
      %v3179 = vadd.f32 0.0, %v3178
      %v3180 = vpop.f32.mrb[0].mxu0
      %v3181 = vpop.f32.mrb[0].mxu0
      %v3182 = vadd.f32 0.0, %v3181
      %v3183 = vpop.f32.mrb[0].mxu0
      %3184 = vmatprep.mubr.bf16.mxu0 0
      %3185 = vmatmul.mubr.bf16.gmra.mrb[0].mxu0 %v1764
      %v3186 = vpop.f32.mrb[0].mxu0
      %v3187 = vadd.f32 0.0, %v3186
      %v3188 = vpop.f32.mrb[0].mxu0
      %v3189 = vpop.f32.mrb[0].mxu0
      %v3190 = vadd.f32 0.0, %v3189
      %v3191 = vpop.f32.mrb[0].mxu0
      %3192 = vmatprep.mubr.bf16.mxu0 0
      %3193 = vmatmul.mubr.bf16.gmra.mrb[0].mxu0 %v1767
      %v3194 = vpop.f32.mrb[0].mxu0
      %v3195 = vadd.f32 0.0, %v3194
      %v3196 = vpop.f32.mrb[0].mxu0
      %v3197 = vpop.f32.mrb[0].mxu0
      %v3198 = vadd.f32 0.0, %v3197
      %v3199 = vpop.f32.mrb[0].mxu0
      %3200 = vmatprep.mubr.bf16.mxu0 0
      %3201 = vmatmul.mubr.bf16.gmra.mrb[0].mxu0 %v2409
      %v3202 = vpop.f32.mrb[0].mxu0
      %v3203 = vadd.f32 0.0, %v3202
      %v3204 = vpop.f32.mrb[0].mxu0
      %v3205 = vpop.f32.mrb[0].mxu0
      %v3206 = vadd.f32 0.0, %v3205
      %v3207 = vpop.f32.mrb[0].mxu0
      %3208 = vmatprep.mubr.bf16.mxu0 0
      %3209 = vmatmul.mubr.bf16.gmra.mrb[0].mxu0 %v3051
      %v3210 = vpop.f32.mrb[0].mxu0
      %v3211 = vadd.f32 0.0, %v3210
      %v3212 = vpop.f32.mrb[0].mxu0
      %v3213 = vpop.f32.mrb[0].mxu0
      %v3214 = vadd.f32 0.0, %v3213
      %v3215 = vpop.f32.mrb[0].mxu0
      %3216 = vdwg.mxu0
      %v3217 = vadd.f32 %v2999, %v3091
      %v3218 = vadd.f32 %v3000, %v3094
      %v3219 = vadd.f32 %v3001, %v3099
      %v3220 = vadd.f32 %v3002, %v3102
      %v3221 = vadd.f32 %v3003, %v3107
      %v3222 = vadd.f32 %v3004, %v3110
      %v3223 = vadd.f32 %v3005, %v3115
      %v3224 = vadd.f32 %v3006, %v3118
      %v3225 = vadd.f32 %v3007, %v3123
      %v3226 = vadd.f32 %v3008, %v3126
      %v3227 = vadd.f32 %v3009, %v3131
      %v3228 = vadd.f32 %v3010, %v3134
      %v3229 = vadd.f32 %v3011, %v3139
      %v3230 = vadd.f32 %v3012, %v3142
      %v3231 = vadd.f32 %v3013, %v3147
      %v3232 = vadd.f32 %v3014, %v3150
      %v3233 = vadd.f32 %v3015, %v3155
      %v3234 = vadd.f32 %v3016, %v3158
      %v3235 = vadd.f32 %v3017, %v3163
      %v3236 = vadd.f32 %v3018, %v3166
      %v3237 = vadd.f32 %v3019, %v3171
      %v3238 = vadd.f32 %v3020, %v3174
      %v3239 = vadd.f32 %v3021, %v3179
      %v3240 = vadd.f32 %v3022, %v3182
      %v3241 = vadd.f32 %v3023, %v3187
      %v3242 = vadd.f32 %v3024, %v3190
      %v3243 = vadd.f32 %v3025, %v3195
      %v3244 = vadd.f32 %v3026, %v3198
      %v3245 = vadd.f32 %v3027, %v3203
      %v3246 = vadd.f32 %v3028, %v3206
      %v3247 = vadd.f32 %v3029, %v3211
      %v3248 = vadd.f32 %v3030, %v3214
      %v3249 = vld [vmem:[%s2] sm:$0x1]
      %v3251 = vlaneseq
      %v3252 = vshrl.u32 %v3251, 7
      %v3253 = vsub.s32 0, %v3252
      %v3254 = vrot.slane %v3249, %v3253
      %v3256 = vadd.f32 %v3217, %v3254
      %v3257 = vadd.f32 %v3218, %v3254
      %v3258 = vadd.f32 %v3219, %v3254
      %v3259 = vadd.f32 %v3220, %v3254
      %v3260 = vadd.f32 %v3221, %v3254
      %v3261 = vadd.f32 %v3222, %v3254
      %v3262 = vadd.f32 %v3223, %v3254
      %v3263 = vadd.f32 %v3224, %v3254
      %v3264 = vadd.f32 %v3225, %v3254
      %v3265 = vadd.f32 %v3226, %v3254
      %v3266 = vadd.f32 %v3227, %v3254
      %v3267 = vadd.f32 %v3228, %v3254
      %v3268 = vadd.f32 %v3229, %v3254
      %v3269 = vadd.f32 %v3230, %v3254
      %v3270 = vadd.f32 %v3231, %v3254
      %v3271 = vadd.f32 %v3232, %v3254
      %v3272 = vadd.f32 %v3233, %v3254
      %v3273 = vadd.f32 %v3234, %v3254
      %v3274 = vadd.f32 %v3235, %v3254
      %v3275 = vadd.f32 %v3236, %v3254
      %v3276 = vadd.f32 %v3237, %v3254
      %v3277 = vadd.f32 %v3238, %v3254
      %v3278 = vadd.f32 %v3239, %v3254
      %v3279 = vadd.f32 %v3240, %v3254
      %v3280 = vadd.f32 %v3241, %v3254
      %v3281 = vadd.f32 %v3242, %v3254
      %v3282 = vadd.f32 %v3243, %v3254
      %v3283 = vadd.f32 %v3244, %v3254
      %v3284 = vadd.f32 %v3245, %v3254
      %v3285 = vadd.f32 %v3246, %v3254
      %v3286 = vadd.f32 %v3247, %v3254
      %v3287 = vadd.f32 %v3248, %v3254
      %v3288 = vmax.f32 %v3256, 0.0
      %v3289 = vmax.f32 %v3257, 0.0
      %v3290 = vmax.f32 %v3258, 0.0
      %v3291 = vmax.f32 %v3259, 0.0
      %v3292 = vmax.f32 %v3260, 0.0
      %v3293 = vmax.f32 %v3261, 0.0
      %v3294 = vmax.f32 %v3262, 0.0
      %v3295 = vmax.f32 %v3263, 0.0
      %v3296 = vmax.f32 %v3264, 0.0
      %v3297 = vmax.f32 %v3265, 0.0
      %v3298 = vmax.f32 %v3266, 0.0
      %v3299 = vmax.f32 %v3267, 0.0
      %v3300 = vmax.f32 %v3268, 0.0
      %v3301 = vmax.f32 %v3269, 0.0
      %v3302 = vmax.f32 %v3270, 0.0
      %v3303 = vmax.f32 %v3271, 0.0
      %v3304 = vmax.f32 %v3272, 0.0
      %v3305 = vmax.f32 %v3273, 0.0
      %v3306 = vmax.f32 %v3274, 0.0
      %v3307 = vmax.f32 %v3275, 0.0
      %v3308 = vmax.f32 %v3276, 0.0
      %v3309 = vmax.f32 %v3277, 0.0
      %v3310 = vmax.f32 %v3278, 0.0
      %v3311 = vmax.f32 %v3279, 0.0
      %v3312 = vmax.f32 %v3280, 0.0
      %v3313 = vmax.f32 %v3281, 0.0
      %v3314 = vmax.f32 %v3282, 0.0
      %v3315 = vmax.f32 %v3283, 0.0
      %v3316 = vmax.f32 %v3284, 0.0
      %v3317 = vmax.f32 %v3285, 0.0
      %v3318 = vmax.f32 %v3286, 0.0
      %v3319 = vmax.f32 %v3287, 0.0
      %v3320 = vpack.c.bf16 %v3289, %v3288
      %v3321 = vpack.c.bf16 %v3291, %v3290
      %v3322 = vpack.c.bf16 %v3293, %v3292
      %v3323 = vpack.c.bf16 %v3295, %v3294
      %v3324 = vpack.c.bf16 %v3297, %v3296
      %v3325 = vpack.c.bf16 %v3299, %v3298
      %v3326 = vpack.c.bf16 %v3301, %v3300
      %v3327 = vpack.c.bf16 %v3303, %v3302
      %v3328 = vpack.c.bf16 %v3305, %v3304
      %v3329 = vpack.c.bf16 %v3307, %v3306
      %v3330 = vpack.c.bf16 %v3309, %v3308
      %v3331 = vpack.c.bf16 %v3311, %v3310
      %v3332 = vpack.c.bf16 %v3313, %v3312
      %v3333 = vpack.c.bf16 %v3315, %v3314
      %v3334 = vpack.c.bf16 %v3317, %v3316
      %v3335 = vpack.c.bf16 %v3319, %v3318
      %v3352 = vrot.slane %v3320, 4
      %v3353 = vrot.slane %v3321, 4
      %v3354 = vrot.slane %v3322, 4
      %v3355 = vrot.slane %v3323, 4
      %v3356 = vrot.slane %v3324, 4
      %v3357 = vrot.slane %v3325, 4
      %v3358 = vrot.slane %v3326, 4
      %v3359 = vrot.slane %v3327, 4
      %v3360 = vrot.slane %v3328, 4
      %v3361 = vrot.slane %v3329, 4
      %v3362 = vrot.slane %v3330, 4
      %v3363 = vrot.slane %v3331, 4
      %v3364 = vrot.slane %v3332, 4
      %v3365 = vrot.slane %v3333, 4
      %v3366 = vrot.slane %v3334, 4
      %v3367 = vrot.slane %v3335, 4
      %s3384 = scalar_lea.vmem [#allocation3], 16
      %3385 = vst.msk [vmem:[%s3384] sm:$0xf0] %vm403, %v3352
      %3386 = vst.msk [vmem:[%s3384 + $0x8] sm:$0xf] %vm384, %v3352
      %3387 = vst.msk [vmem:[%s3384 + $0x10] sm:$0xf0] %vm403, %v3353
      %3388 = vst.msk [vmem:[%s3384 + $0x18] sm:$0xf] %vm384, %v3353
      %3389 = vst.msk [vmem:[%s3384 + $0x20] sm:$0xf0] %vm403, %v3354
      %3390 = vst.msk [vmem:[%s3384 + $0x28] sm:$0xf] %vm384, %v3354
      %3391 = vst.msk [vmem:[%s3384 + $0x30] sm:$0xf0] %vm403, %v3355
      %3392 = vst.msk [vmem:[%s3384 + $0x38] sm:$0xf] %vm384, %v3355
      %3393 = vst.msk [vmem:[%s3384 + $0x40] sm:$0xf0] %vm403, %v3356
      %3394 = vst.msk [vmem:[%s3384 + $0x48] sm:$0xf] %vm384, %v3356
      %3395 = vst.msk [vmem:[%s3384 + $0x50] sm:$0xf0] %vm403, %v3357
      %3396 = vst.msk [vmem:[%s3384 + $0x58] sm:$0xf] %vm384, %v3357
      %3397 = vst.msk [vmem:[%s3384 + $0x60] sm:$0xf0] %vm403, %v3358
      %3398 = vst.msk [vmem:[%s3384 + $0x68] sm:$0xf] %vm384, %v3358
      %3399 = vst.msk [vmem:[%s3384 + $0x70] sm:$0xf0] %vm403, %v3359
      %3400 = vst.msk [vmem:[%s3384 + $0x78] sm:$0xf] %vm384, %v3359
      %3401 = vst.msk [vmem:[%s3384 + $0x80] sm:$0xf0] %vm403, %v3360
      %3402 = vst.msk [vmem:[%s3384 + $0x88] sm:$0xf] %vm384, %v3360
      %3403 = vst.msk [vmem:[%s3384 + $0x90] sm:$0xf0] %vm403, %v3361
      %3404 = vst.msk [vmem:[%s3384 + $0x98] sm:$0xf] %vm384, %v3361
      %3405 = vst.msk [vmem:[%s3384 + $0xa0] sm:$0xf0] %vm403, %v3362
      %3406 = vst.msk [vmem:[%s3384 + $0xa8] sm:$0xf] %vm384, %v3362
      %3407 = vst.msk [vmem:[%s3384 + $0xb0] sm:$0xf0] %vm403, %v3363
      %3408 = vst.msk [vmem:[%s3384 + $0xb8] sm:$0xf] %vm384, %v3363
      %3409 = vst.msk [vmem:[%s3384 + $0xc0] sm:$0xf0] %vm403, %v3364
      %3410 = vst.msk [vmem:[%s3384 + $0xc8] sm:$0xf] %vm384, %v3364
      %3411 = vst.msk [vmem:[%s3384 + $0xd0] sm:$0xf0] %vm403, %v3365
      %3412 = vst.msk [vmem:[%s3384 + $0xd8] sm:$0xf] %vm384, %v3365
      %3413 = vst.msk [vmem:[%s3384 + $0xe0] sm:$0xf0] %vm403, %v3366
      %3414 = vst.msk [vmem:[%s3384 + $0xe8] sm:$0xf] %vm384, %v3366
      %3415 = vst.msk [vmem:[%s3384 + $0xf0] sm:$0xf0] %vm403, %v3367
      %3416 = vst.msk [vmem:[%s3384 + $0xf8] sm:$0xf] %vm384, %v3367
      %v3417 = vld [vmem:[#allocation3] sm:$0xf8]
      %v3418 = vld [vmem:[#allocation3 + $0x8] sm:$0xf]
      %v3419 = vld [vmem:[#allocation3 + $0x10] sm:$0xf8]
      %v3420 = vld [vmem:[#allocation3 + $0x18] sm:$0xf]
      %v3421 = vld [vmem:[#allocation3 + $0x20] sm:$0xf8]
      %v3422 = vld [vmem:[#allocation3 + $0x28] sm:$0xf]
      %v3423 = vld [vmem:[#allocation3 + $0x30] sm:$0xf8]
      %v3424 = vld [vmem:[#allocation3 + $0x38] sm:$0xf]
      %v3425 = vld [vmem:[#allocation3 + $0x40] sm:$0xf8]
      %v3426 = vld [vmem:[#allocation3 + $0x48] sm:$0xf]
      %v3427 = vld [vmem:[#allocation3 + $0x50] sm:$0xf8]
      %v3428 = vld [vmem:[#allocation3 + $0x58] sm:$0xf]
      %v3429 = vld [vmem:[#allocation3 + $0x60] sm:$0xf8]
      %v3430 = vld [vmem:[#allocation3 + $0x68] sm:$0xf]
      %v3431 = vld [vmem:[#allocation3 + $0x70] sm:$0xf8]
      %v3432 = vld [vmem:[#allocation3 + $0x78] sm:$0xf]
      %v3433 = vld [vmem:[#allocation3 + $0x80] sm:$0xf8]
      %v3434 = vld [vmem:[#allocation3 + $0x88] sm:$0xf]
      %v3435 = vld [vmem:[#allocation3 + $0x90] sm:$0xf8]
      %v3436 = vld [vmem:[#allocation3 + $0x98] sm:$0xf]
      %v3437 = vld [vmem:[#allocation3 + $0xa0] sm:$0xf8]
      %v3438 = vld [vmem:[#allocation3 + $0xa8] sm:$0xf]
      %v3439 = vld [vmem:[#allocation3 + $0xb0] sm:$0xf8]
      %v3440 = vld [vmem:[#allocation3 + $0xb8] sm:$0xf]
      %v3441 = vld [vmem:[#allocation3 + $0xc0] sm:$0xf8]
      %v3442 = vld [vmem:[#allocation3 + $0xc8] sm:$0xf]
      %v3443 = vld [vmem:[#allocation3 + $0xd0] sm:$0xf8]
      %v3444 = vld [vmem:[#allocation3 + $0xd8] sm:$0xf]
      %v3445 = vld [vmem:[#allocation3 + $0xe0] sm:$0xf8]
      %v3446 = vld [vmem:[#allocation3 + $0xe8] sm:$0xf]
      %v3447 = vld [vmem:[#allocation3 + $0xf0] sm:$0xf8]
      %v3448 = vld [vmem:[#allocation3 + $0xf8] sm:$0xf]
      %v3449 = vld [vmem:[#allocation3 + $0x100] sm:$0xf8]
      %v3450 = vld [vmem:[#allocation3 + $0x108] sm:$0xf]
      %v3451 = vld [vmem:[#allocation3 + $0x110] sm:$0xf8]
      %v3452 = vld [vmem:[#allocation3 + $0x118] sm:$0xf]
      %v3453 = vld [vmem:[#allocation3] sm:$0xf0]
      %v3454 = vld [vmem:[#allocation3 + $0x10] sm:$0xf0]
      %v3455 = vld [vmem:[#allocation3 + $0x20] sm:$0xf0]
      %v3456 = vld [vmem:[#allocation3 + $0x30] sm:$0xf0]
      %v3457 = vld [vmem:[#allocation3 + $0x40] sm:$0xf0]
      %v3458 = vld [vmem:[#allocation3 + $0x50] sm:$0xf0]
      %v3459 = vld [vmem:[#allocation3 + $0x60] sm:$0xf0]
      %v3460 = vld [vmem:[#allocation3 + $0x70] sm:$0xf0]
      %v3461 = vld [vmem:[#allocation3 + $0x80] sm:$0xf0]
      %v3462 = vld [vmem:[#allocation3 + $0x90] sm:$0xf0]
      %v3463 = vld [vmem:[#allocation3 + $0xa0] sm:$0xf0]
      %v3464 = vld [vmem:[#allocation3 + $0xb0] sm:$0xf0]
      %v3465 = vld [vmem:[#allocation3 + $0xc0] sm:$0xf0]
      %v3466 = vld [vmem:[#allocation3 + $0xd0] sm:$0xf0]
      %v3467 = vld [vmem:[#allocation3 + $0xe0] sm:$0xf0]
      %v3468 = vld [vmem:[#allocation3 + $0xf0] sm:$0xf0]
      %v3469 = vld [vmem:[#allocation3 + $0x100] sm:$0xf0]
      %v3470 = vld [vmem:[#allocation3 + $0x110] sm:$0xf0]
      %v3471 = vld [vmem:[#allocation3 + $0x8] sm:$0x1f]
      %v3472 = vld [vmem:[#allocation3 + $0x18] sm:$0x1f]
      %v3473 = vld [vmem:[#allocation3 + $0x28] sm:$0x1f]
      %v3474 = vld [vmem:[#allocation3 + $0x38] sm:$0x1f]
      %v3475 = vld [vmem:[#allocation3 + $0x48] sm:$0x1f]
      %v3476 = vld [vmem:[#allocation3 + $0x58] sm:$0x1f]
      %v3477 = vld [vmem:[#allocation3 + $0x68] sm:$0x1f]
      %v3478 = vld [vmem:[#allocation3 + $0x78] sm:$0x1f]
      %v3479 = vld [vmem:[#allocation3 + $0x88] sm:$0x1f]
      %v3480 = vld [vmem:[#allocation3 + $0x98] sm:$0x1f]
      %v3481 = vld [vmem:[#allocation3 + $0xa8] sm:$0x1f]
      %v3482 = vld [vmem:[#allocation3 + $0xb8] sm:$0x1f]
      %v3483 = vld [vmem:[#allocation3 + $0xc8] sm:$0x1f]
      %v3484 = vld [vmem:[#allocation3 + $0xd8] sm:$0x1f]
      %v3485 = vld [vmem:[#allocation3 + $0xe8] sm:$0x1f]
      %v3486 = vld [vmem:[#allocation3 + $0xf8] sm:$0x1f]
      %v3487 = vld [vmem:[#allocation3 + $0x108] sm:$0x1f]
      %v3488 = vld [vmem:[#allocation3 + $0x118] sm:$0x1f]
      %vm3489 = vsmask.f32 7424
      %v3491 = vshrl.u32 %v3453, 16
      %v3493 = vshll.u32 %v3453, 16
      %v3495 = vrot.slane %v3493, 1
      %v3496 = vor.u32 %v3491, %v3495
      %v3498 = vshll.u32 %v3418, 16
      %v3500 = vrot.slane %v3498, 1
      %v3501 = vsel %vm3489, %v3496, %v3500
      %v3502 = vshrl.u32 %v3418, 16
      %v3504 = vor.u32 %v3502, %v3500
      %v3506 = vshrl.u32 %v3454, 16
      %v3508 = vshll.u32 %v3454, 16
      %v3510 = vrot.slane %v3508, 1
      %v3511 = vor.u32 %v3506, %v3510
      %v3513 = vshll.u32 %v3420, 16
      %v3515 = vrot.slane %v3513, 1
      %v3516 = vsel %vm3489, %v3511, %v3515
      %v3517 = vshrl.u32 %v3420, 16
      %v3519 = vor.u32 %v3517, %v3515
      %v3521 = vshrl.u32 %v3455, 16
      %v3523 = vshll.u32 %v3455, 16
      %v3525 = vrot.slane %v3523, 1
      %v3526 = vor.u32 %v3521, %v3525
      %v3528 = vshll.u32 %v3422, 16
      %v3530 = vrot.slane %v3528, 1
      %v3531 = vsel %vm3489, %v3526, %v3530
      %v3532 = vshrl.u32 %v3422, 16
      %v3534 = vor.u32 %v3532, %v3530
      %v3536 = vshrl.u32 %v3456, 16
      %v3538 = vshll.u32 %v3456, 16
      %v3540 = vrot.slane %v3538, 1
      %v3541 = vor.u32 %v3536, %v3540
      %v3543 = vshll.u32 %v3424, 16
      %v3545 = vrot.slane %v3543, 1
      %v3546 = vsel %vm3489, %v3541, %v3545
      %v3547 = vshrl.u32 %v3424, 16
      %v3549 = vor.u32 %v3547, %v3545
      %v3551 = vshrl.u32 %v3457, 16
      %v3553 = vshll.u32 %v3457, 16
      %v3555 = vrot.slane %v3553, 1
      %v3556 = vor.u32 %v3551, %v3555
      %v3558 = vshll.u32 %v3426, 16
      %v3560 = vrot.slane %v3558, 1
      %v3561 = vsel %vm3489, %v3556, %v3560
      %v3562 = vshrl.u32 %v3426, 16
      %v3564 = vor.u32 %v3562, %v3560
      %v3566 = vshrl.u32 %v3458, 16
      %v3568 = vshll.u32 %v3458, 16
      %v3570 = vrot.slane %v3568, 1
      %v3571 = vor.u32 %v3566, %v3570
      %v3573 = vshll.u32 %v3428, 16
      %v3575 = vrot.slane %v3573, 1
      %v3576 = vsel %vm3489, %v3571, %v3575
      %v3577 = vshrl.u32 %v3428, 16
      %v3579 = vor.u32 %v3577, %v3575
      %v3581 = vshrl.u32 %v3459, 16
      %v3583 = vshll.u32 %v3459, 16
      %v3585 = vrot.slane %v3583, 1
      %v3586 = vor.u32 %v3581, %v3585
      %v3588 = vshll.u32 %v3430, 16
      %v3590 = vrot.slane %v3588, 1
      %v3591 = vsel %vm3489, %v3586, %v3590
      %v3592 = vshrl.u32 %v3430, 16
      %v3594 = vor.u32 %v3592, %v3590
      %v3596 = vshrl.u32 %v3460, 16
      %v3598 = vshll.u32 %v3460, 16
      %v3600 = vrot.slane %v3598, 1
      %v3601 = vor.u32 %v3596, %v3600
      %v3603 = vshll.u32 %v3432, 16
      %v3605 = vrot.slane %v3603, 1
      %v3606 = vsel %vm3489, %v3601, %v3605
      %v3607 = vshrl.u32 %v3432, 16
      %v3609 = vor.u32 %v3607, %v3605
      %v3611 = vshrl.u32 %v3461, 16
      %v3613 = vshll.u32 %v3461, 16
      %v3615 = vrot.slane %v3613, 1
      %v3616 = vor.u32 %v3611, %v3615
      %v3618 = vshll.u32 %v3434, 16
      %v3620 = vrot.slane %v3618, 1
      %v3621 = vsel %vm3489, %v3616, %v3620
      %v3622 = vshrl.u32 %v3434, 16
      %v3624 = vor.u32 %v3622, %v3620
      %v3626 = vshrl.u32 %v3462, 16
      %v3628 = vshll.u32 %v3462, 16
      %v3630 = vrot.slane %v3628, 1
      %v3631 = vor.u32 %v3626, %v3630
      %v3633 = vshll.u32 %v3436, 16
      %v3635 = vrot.slane %v3633, 1
      %v3636 = vsel %vm3489, %v3631, %v3635
      %v3637 = vshrl.u32 %v3436, 16
      %v3639 = vor.u32 %v3637, %v3635
      %v3641 = vshrl.u32 %v3463, 16
      %v3643 = vshll.u32 %v3463, 16
      %v3645 = vrot.slane %v3643, 1
      %v3646 = vor.u32 %v3641, %v3645
      %v3648 = vshll.u32 %v3438, 16
      %v3650 = vrot.slane %v3648, 1
      %v3651 = vsel %vm3489, %v3646, %v3650
      %v3652 = vshrl.u32 %v3438, 16
      %v3654 = vor.u32 %v3652, %v3650
      %v3656 = vshrl.u32 %v3464, 16
      %v3658 = vshll.u32 %v3464, 16
      %v3660 = vrot.slane %v3658, 1
      %v3661 = vor.u32 %v3656, %v3660
      %v3663 = vshll.u32 %v3440, 16
      %v3665 = vrot.slane %v3663, 1
      %v3666 = vsel %vm3489, %v3661, %v3665
      %v3667 = vshrl.u32 %v3440, 16
      %v3669 = vor.u32 %v3667, %v3665
      %v3671 = vshrl.u32 %v3465, 16
      %v3673 = vshll.u32 %v3465, 16
      %v3675 = vrot.slane %v3673, 1
      %v3676 = vor.u32 %v3671, %v3675
      %v3678 = vshll.u32 %v3442, 16
      %v3680 = vrot.slane %v3678, 1
      %v3681 = vsel %vm3489, %v3676, %v3680
      %v3682 = vshrl.u32 %v3442, 16
      %v3684 = vor.u32 %v3682, %v3680
      %v3686 = vshrl.u32 %v3466, 16
      %v3688 = vshll.u32 %v3466, 16
      %v3690 = vrot.slane %v3688, 1
      %v3691 = vor.u32 %v3686, %v3690
      %v3693 = vshll.u32 %v3444, 16
      %v3695 = vrot.slane %v3693, 1
      %v3696 = vsel %vm3489, %v3691, %v3695
      %v3697 = vshrl.u32 %v3444, 16
      %v3699 = vor.u32 %v3697, %v3695
      %v3701 = vshrl.u32 %v3467, 16
      %v3703 = vshll.u32 %v3467, 16
      %v3705 = vrot.slane %v3703, 1
      %v3706 = vor.u32 %v3701, %v3705
      %v3708 = vshll.u32 %v3446, 16
      %v3710 = vrot.slane %v3708, 1
      %v3711 = vsel %vm3489, %v3706, %v3710
      %v3712 = vshrl.u32 %v3446, 16
      %v3714 = vor.u32 %v3712, %v3710
      %v3716 = vshrl.u32 %v3468, 16
      %v3718 = vshll.u32 %v3468, 16
      %v3720 = vrot.slane %v3718, 1
      %v3721 = vor.u32 %v3716, %v3720
      %v3723 = vshll.u32 %v3448, 16
      %v3725 = vrot.slane %v3723, 1
      %v3726 = vsel %vm3489, %v3721, %v3725
      %v3727 = vshrl.u32 %v3448, 16
      %v3729 = vor.u32 %v3727, %v3725
      %v3731 = vshrl.u32 %v3469, 16
      %v3733 = vshll.u32 %v3469, 16
      %v3735 = vrot.slane %v3733, 1
      %v3736 = vor.u32 %v3731, %v3735
      %v3738 = vshll.u32 %v3450, 16
      %v3740 = vrot.slane %v3738, 1
      %v3741 = vsel %vm3489, %v3736, %v3740
      %v3742 = vshrl.u32 %v3450, 16
      %v3744 = vor.u32 %v3742, %v3740
      %v3746 = vshrl.u32 %v3470, 16
      %v3748 = vshll.u32 %v3470, 16
      %v3750 = vrot.slane %v3748, 1
      %v3751 = vor.u32 %v3746, %v3750
      %v3753 = vshll.u32 %v3452, 16
      %v3755 = vrot.slane %v3753, 1
      %v3756 = vsel %vm3489, %v3751, %v3755
      %v3757 = vshrl.u32 %v3452, 16
      %v3759 = vor.u32 %v3757, %v3755
      %3760 = vrot.lane.b32.xlu0 %v3501, 64
      %v3761 = vpop.permute.xlu0 %3760
      %3762 = vrot.lane.b32.xlu0 %v3504, 64
      %v3763 = vpop.permute.xlu0 %3762
      %3764 = vrot.lane.b32.xlu0 %v3516, 64
      %v3765 = vpop.permute.xlu0 %3764
      %3766 = vrot.lane.b32.xlu0 %v3519, 64
      %v3767 = vpop.permute.xlu0 %3766
      %3768 = vrot.lane.b32.xlu0 %v3531, 64
      %v3769 = vpop.permute.xlu0 %3768
      %3770 = vrot.lane.b32.xlu0 %v3534, 64
      %v3771 = vpop.permute.xlu0 %3770
      %3772 = vrot.lane.b32.xlu0 %v3546, 64
      %v3773 = vpop.permute.xlu0 %3772
      %3774 = vrot.lane.b32.xlu0 %v3549, 64
      %v3775 = vpop.permute.xlu0 %3774
      %3776 = vrot.lane.b32.xlu0 %v3561, 64
      %v3777 = vpop.permute.xlu0 %3776
      %3778 = vrot.lane.b32.xlu0 %v3564, 64
      %v3779 = vpop.permute.xlu0 %3778
      %3780 = vrot.lane.b32.xlu0 %v3576, 64
      %v3781 = vpop.permute.xlu0 %3780
      %3782 = vrot.lane.b32.xlu0 %v3579, 64
      %v3783 = vpop.permute.xlu0 %3782
      %3784 = vrot.lane.b32.xlu0 %v3591, 64
      %v3785 = vpop.permute.xlu0 %3784
      %3786 = vrot.lane.b32.xlu0 %v3594, 64
      %v3787 = vpop.permute.xlu0 %3786
      %3788 = vrot.lane.b32.xlu0 %v3606, 64
      %v3789 = vpop.permute.xlu0 %3788
      %3790 = vrot.lane.b32.xlu0 %v3609, 64
      %v3791 = vpop.permute.xlu0 %3790
      %3792 = vrot.lane.b32.xlu0 %v3621, 64
      %v3793 = vpop.permute.xlu0 %3792
      %3794 = vrot.lane.b32.xlu0 %v3624, 64
      %v3795 = vpop.permute.xlu0 %3794
      %3796 = vrot.lane.b32.xlu0 %v3636, 64
      %v3797 = vpop.permute.xlu0 %3796
      %3798 = vrot.lane.b32.xlu0 %v3639, 64
      %v3799 = vpop.permute.xlu0 %3798
      %3800 = vrot.lane.b32.xlu0 %v3651, 64
      %v3801 = vpop.permute.xlu0 %3800
      %3802 = vrot.lane.b32.xlu0 %v3654, 64
      %v3803 = vpop.permute.xlu0 %3802
      %3804 = vrot.lane.b32.xlu0 %v3666, 64
      %v3805 = vpop.permute.xlu0 %3804
      %3806 = vrot.lane.b32.xlu0 %v3669, 64
      %v3807 = vpop.permute.xlu0 %3806
      %3808 = vrot.lane.b32.xlu0 %v3681, 64
      %v3809 = vpop.permute.xlu0 %3808
      %3810 = vrot.lane.b32.xlu0 %v3684, 64
      %v3811 = vpop.permute.xlu0 %3810
      %3812 = vrot.lane.b32.xlu0 %v3696, 64
      %v3813 = vpop.permute.xlu0 %3812
      %3814 = vrot.lane.b32.xlu0 %v3699, 64
      %v3815 = vpop.permute.xlu0 %3814
      %3816 = vrot.lane.b32.xlu0 %v3711, 64
      %v3817 = vpop.permute.xlu0 %3816
      %3818 = vrot.lane.b32.xlu0 %v3714, 64
      %v3819 = vpop.permute.xlu0 %3818
      %3820 = vrot.lane.b32.xlu0 %v3726, 64
      %v3821 = vpop.permute.xlu0 %3820
      %3822 = vrot.lane.b32.xlu0 %v3729, 64
      %v3823 = vpop.permute.xlu0 %3822
      %3824 = vrot.lane.b32.xlu0 %v3741, 64
      %v3825 = vpop.permute.xlu0 %3824
      %3826 = vrot.lane.b32.xlu0 %v3744, 64
      %v3827 = vpop.permute.xlu0 %3826
      %3828 = vrot.lane.b32.xlu0 %v3756, 64
      %v3829 = vpop.permute.xlu0 %3828
      %3830 = vrot.lane.b32.xlu0 %v3759, 64
      %v3831 = vpop.permute.xlu0 %3830
      %vm3868 = vcmask 1046528
      %v3869 = vrot.slane %v3453, 1
      %v3870 = vrot.slane %v3471, 1
      %v3871 = vsel %vm3868, %v3869, %v3870
      %v3872 = vrot.slane %v3454, 1
      %v3873 = vrot.slane %v3472, 1
      %v3874 = vsel %vm3868, %v3872, %v3873
      %v3875 = vrot.slane %v3455, 1
      %v3876 = vrot.slane %v3473, 1
      %v3877 = vsel %vm3868, %v3875, %v3876
      %v3878 = vrot.slane %v3456, 1
      %v3879 = vrot.slane %v3474, 1
      %v3880 = vsel %vm3868, %v3878, %v3879
      %v3881 = vrot.slane %v3457, 1
      %v3882 = vrot.slane %v3475, 1
      %v3883 = vsel %vm3868, %v3881, %v3882
      %v3884 = vrot.slane %v3458, 1
      %v3885 = vrot.slane %v3476, 1
      %v3886 = vsel %vm3868, %v3884, %v3885
      %v3887 = vrot.slane %v3459, 1
      %v3888 = vrot.slane %v3477, 1
      %v3889 = vsel %vm3868, %v3887, %v3888
      %v3890 = vrot.slane %v3460, 1
      %v3891 = vrot.slane %v3478, 1
      %v3892 = vsel %vm3868, %v3890, %v3891
      %v3893 = vrot.slane %v3461, 1
      %v3894 = vrot.slane %v3479, 1
      %v3895 = vsel %vm3868, %v3893, %v3894
      %v3896 = vrot.slane %v3462, 1
      %v3897 = vrot.slane %v3480, 1
      %v3898 = vsel %vm3868, %v3896, %v3897
      %v3899 = vrot.slane %v3463, 1
      %v3900 = vrot.slane %v3481, 1
      %v3901 = vsel %vm3868, %v3899, %v3900
      %v3902 = vrot.slane %v3464, 1
      %v3903 = vrot.slane %v3482, 1
      %v3904 = vsel %vm3868, %v3902, %v3903
      %v3905 = vrot.slane %v3465, 1
      %v3906 = vrot.slane %v3483, 1
      %v3907 = vsel %vm3868, %v3905, %v3906
      %v3908 = vrot.slane %v3466, 1
      %v3909 = vrot.slane %v3484, 1
      %v3910 = vsel %vm3868, %v3908, %v3909
      %v3911 = vrot.slane %v3467, 1
      %v3912 = vrot.slane %v3485, 1
      %v3913 = vsel %vm3868, %v3911, %v3912
      %v3914 = vrot.slane %v3468, 1
      %v3915 = vrot.slane %v3486, 1
      %v3916 = vsel %vm3868, %v3914, %v3915
      %v3917 = vrot.slane %v3469, 1
      %v3918 = vrot.slane %v3487, 1
      %v3919 = vsel %vm3868, %v3917, %v3918
      %v3920 = vrot.slane %v3470, 1
      %v3921 = vrot.slane %v3488, 1
      %v3922 = vsel %vm3868, %v3920, %v3921
      %v3925 = vsel %vm378, %v3417, %v3761
      %v3927 = vsel %vm378, %v3418, %v3763
      %v3930 = vsel %vm378, %v3419, %v3765
      %v3932 = vsel %vm378, %v3420, %v3767
      %v3935 = vsel %vm378, %v3421, %v3769
      %v3937 = vsel %vm378, %v3422, %v3771
      %v3940 = vsel %vm378, %v3423, %v3773
      %v3942 = vsel %vm378, %v3424, %v3775
      %v3945 = vsel %vm378, %v3425, %v3777
      %v3947 = vsel %vm378, %v3426, %v3779
      %v3950 = vsel %vm378, %v3427, %v3781
      %v3952 = vsel %vm378, %v3428, %v3783
      %v3955 = vsel %vm378, %v3429, %v3785
      %v3957 = vsel %vm378, %v3430, %v3787
      %v3960 = vsel %vm378, %v3431, %v3789
      %v3962 = vsel %vm378, %v3432, %v3791
      %v3965 = vsel %vm378, %v3433, %v3793
      %v3967 = vsel %vm378, %v3434, %v3795
      %v3970 = vsel %vm378, %v3435, %v3797
      %v3972 = vsel %vm378, %v3436, %v3799
      %v3975 = vsel %vm378, %v3437, %v3801
      %v3977 = vsel %vm378, %v3438, %v3803
      %v3980 = vsel %vm378, %v3439, %v3805
      %v3982 = vsel %vm378, %v3440, %v3807
      %v3985 = vsel %vm378, %v3441, %v3809
      %v3987 = vsel %vm378, %v3442, %v3811
      %v3990 = vsel %vm378, %v3443, %v3813
      %v3992 = vsel %vm378, %v3444, %v3815
      %v3995 = vsel %vm378, %v3445, %v3817
      %v3997 = vsel %vm378, %v3446, %v3819
      %v4000 = vsel %vm378, %v3447, %v3821
      %v4002 = vsel %vm378, %v3448, %v3823
      %v4005 = vsel %vm378, %v3449, %v3825
      %v4007 = vsel %vm378, %v3450, %v3827
      %v4010 = vsel %vm378, %v3451, %v3829
      %v4012 = vsel %vm378, %v3452, %v3831
      %v4013 = vld [vmem:[%s3] sm:$0xf]
      %v4014 = vld [vmem:[%s3 + $0x4] sm:$0xf]
      %v4015 = vld [vmem:[%s3 + $0x8] sm:$0xf]
      %v4016 = vld [vmem:[%s3 + $0xc] sm:$0xf]
      %v4017 = vld [vmem:[%s3 + $0x10] sm:$0xf]
      %v4018 = vld [vmem:[%s3 + $0x14] sm:$0xf]
      %v4019 = vld [vmem:[%s3 + $0x18] sm:$0xf]
      %v4020 = vld [vmem:[%s3 + $0x1c] sm:$0xf]
      %v4021 = vld [vmem:[%s3 + $0x20] sm:$0xf]
      %v4022 = vld [vmem:[%s3 + $0x24] sm:$0xf]
      %v4023 = vld [vmem:[%s3 + $0x28] sm:$0xf]
      %v4024 = vld [vmem:[%s3 + $0x2c] sm:$0xf]
      %v4025 = vld [vmem:[%s3 + $0x30] sm:$0xf]
      %v4026 = vld [vmem:[%s3 + $0x34] sm:$0xf]
      %v4027 = vld [vmem:[%s3 + $0x38] sm:$0xf]
      %v4028 = vld [vmem:[%s3 + $0x3c] sm:$0xf]
      %v4029 = vld [vmem:[%s3 + $0x40] sm:$0xf]
      %v4030 = vld [vmem:[%s3 + $0x44] sm:$0xf]
      %v4031 = vld [vmem:[%s3 + $0x48] sm:$0xf]
      %v4032 = vld [vmem:[%s3 + $0x4c] sm:$0xf]
      %v4033 = vld [vmem:[%s3 + $0x50] sm:$0xf]
      %v4034 = vld [vmem:[%s3 + $0x54] sm:$0xf]
      %v4035 = vld [vmem:[%s3 + $0x58] sm:$0xf]
      %v4036 = vld [vmem:[%s3 + $0x5c] sm:$0xf]
      %s4037 = scalar_lea.vmem %s3, 96
      %v4038 = vld [vmem:[%s4037] sm:$0xf]
      %v4039 = vld [vmem:[%s4037 + $0x4] sm:$0xf]
      %v4040 = vld [vmem:[%s4037 + $0x8] sm:$0xf]
      %v4041 = vld [vmem:[%s4037 + $0xc] sm:$0xf]
      %v4042 = vld [vmem:[%s4037 + $0x10] sm:$0xf]
      %v4043 = vld [vmem:[%s4037 + $0x14] sm:$0xf]
      %v4044 = vld [vmem:[%s4037 + $0x18] sm:$0xf]
      %v4045 = vld [vmem:[%s4037 + $0x1c] sm:$0xf]
      %v4046 = vld [vmem:[%s4037 + $0x20] sm:$0xf]
      %v4047 = vld [vmem:[%s4037 + $0x24] sm:$0xf]
      %v4048 = vld [vmem:[%s4037 + $0x28] sm:$0xf]
      %v4049 = vld [vmem:[%s4037 + $0x2c] sm:$0xf]
      %v4050 = vld [vmem:[%s4037 + $0x30] sm:$0xf]
      %v4051 = vld [vmem:[%s4037 + $0x34] sm:$0xf]
      %v4052 = vld [vmem:[%s4037 + $0x38] sm:$0xf]
      %v4053 = vld [vmem:[%s4037 + $0x3c] sm:$0xf]
      %v4054 = vld [vmem:[%s4037 + $0x40] sm:$0xf]
      %v4055 = vld [vmem:[%s4037 + $0x44] sm:$0xf]
      %v4056 = vld [vmem:[%s4037 + $0x48] sm:$0xf]
      %v4057 = vld [vmem:[%s4037 + $0x4c] sm:$0xf]
      %v4058 = vld [vmem:[%s4037 + $0x50] sm:$0xf]
      %v4059 = vld [vmem:[%s4037 + $0x54] sm:$0xf]
      %v4060 = vld [vmem:[%s4037 + $0x58] sm:$0xf]
      %v4061 = vld [vmem:[%s4037 + $0x5c] sm:$0xf]
      %v4062 = vshrl.u32 %v3930, 16
      %v4064 = vrot.slane %v4062, 3
      %v4065 = vshll.u32 %v3930, 16
      %v4067 = vrot.slane %v4065, 4
      %v4068 = vor.u32 %v4064, %v4067
      %v4069 = vshrl.u32 %v3932, 16
      %v4071 = vrot.slane %v4069, 3
      %v4072 = vshll.u32 %v3932, 16
      %v4074 = vrot.slane %v4072, 4
      %v4075 = vor.u32 %v4071, %v4074
      %v4076 = vsel %vm961, %v4068, %v4075
      %v4078 = vshrl.u32 %v3874, 16
      %v4080 = vrot.slane %v4078, 3
      %v4081 = vshll.u32 %v3874, 16
      %v4083 = vrot.slane %v4081, 4
      %v4084 = vor.u32 %v4080, %v4083
      %v4086 = vshrl.u32 %v3873, 16
      %v4088 = vrot.slane %v4086, 3
      %v4089 = vshll.u32 %v3873, 16
      %v4091 = vrot.slane %v4089, 4
      %v4092 = vor.u32 %v4088, %v4091
      %v4093 = vsel %vm961, %v4084, %v4092
      %v4094 = vshrl.u32 %v3935, 16
      %v4096 = vrot.slane %v4094, 3
      %v4097 = vshll.u32 %v3935, 16
      %v4099 = vrot.slane %v4097, 4
      %v4100 = vor.u32 %v4096, %v4099
      %v4101 = vshrl.u32 %v3937, 16
      %v4103 = vrot.slane %v4101, 3
      %v4104 = vshll.u32 %v3937, 16
      %v4106 = vrot.slane %v4104, 4
      %v4107 = vor.u32 %v4103, %v4106
      %v4108 = vsel %vm961, %v4100, %v4107
      %v4110 = vshrl.u32 %v3877, 16
      %v4112 = vrot.slane %v4110, 3
      %v4113 = vshll.u32 %v3877, 16
      %v4115 = vrot.slane %v4113, 4
      %v4116 = vor.u32 %v4112, %v4115
      %v4118 = vshrl.u32 %v3876, 16
      %v4120 = vrot.slane %v4118, 3
      %v4121 = vshll.u32 %v3876, 16
      %v4123 = vrot.slane %v4121, 4
      %v4124 = vor.u32 %v4120, %v4123
      %v4125 = vsel %vm961, %v4116, %v4124
      %v4126 = vshrl.u32 %v3940, 16
      %v4128 = vrot.slane %v4126, 3
      %v4129 = vshll.u32 %v3940, 16
      %v4131 = vrot.slane %v4129, 4
      %v4132 = vor.u32 %v4128, %v4131
      %v4133 = vshrl.u32 %v3942, 16
      %v4135 = vrot.slane %v4133, 3
      %v4136 = vshll.u32 %v3942, 16
      %v4138 = vrot.slane %v4136, 4
      %v4139 = vor.u32 %v4135, %v4138
      %v4140 = vsel %vm961, %v4132, %v4139
      %v4142 = vshrl.u32 %v3880, 16
      %v4144 = vrot.slane %v4142, 3
      %v4145 = vshll.u32 %v3880, 16
      %v4147 = vrot.slane %v4145, 4
      %v4148 = vor.u32 %v4144, %v4147
      %v4150 = vshrl.u32 %v3879, 16
      %v4152 = vrot.slane %v4150, 3
      %v4153 = vshll.u32 %v3879, 16
      %v4155 = vrot.slane %v4153, 4
      %v4156 = vor.u32 %v4152, %v4155
      %v4157 = vsel %vm961, %v4148, %v4156
      %v4158 = vshrl.u32 %v3945, 16
      %v4160 = vrot.slane %v4158, 3
      %v4161 = vshll.u32 %v3945, 16
      %v4163 = vrot.slane %v4161, 4
      %v4164 = vor.u32 %v4160, %v4163
      %v4165 = vshrl.u32 %v3947, 16
      %v4167 = vrot.slane %v4165, 3
      %v4168 = vshll.u32 %v3947, 16
      %v4170 = vrot.slane %v4168, 4
      %v4171 = vor.u32 %v4167, %v4170
      %v4172 = vsel %vm961, %v4164, %v4171
      %v4174 = vshrl.u32 %v3883, 16
      %v4176 = vrot.slane %v4174, 3
      %v4177 = vshll.u32 %v3883, 16
      %v4179 = vrot.slane %v4177, 4
      %v4180 = vor.u32 %v4176, %v4179
      %v4182 = vshrl.u32 %v3882, 16
      %v4184 = vrot.slane %v4182, 3
      %v4185 = vshll.u32 %v3882, 16
      %v4187 = vrot.slane %v4185, 4
      %v4188 = vor.u32 %v4184, %v4187
      %v4189 = vsel %vm961, %v4180, %v4188
      %v4190 = vshrl.u32 %v3950, 16
      %v4192 = vrot.slane %v4190, 3
      %v4193 = vshll.u32 %v3950, 16
      %v4195 = vrot.slane %v4193, 4
      %v4196 = vor.u32 %v4192, %v4195
      %v4197 = vshrl.u32 %v3952, 16
      %v4199 = vrot.slane %v4197, 3
      %v4200 = vshll.u32 %v3952, 16
      %v4202 = vrot.slane %v4200, 4
      %v4203 = vor.u32 %v4199, %v4202
      %v4204 = vsel %vm961, %v4196, %v4203
      %v4206 = vshrl.u32 %v3886, 16
      %v4208 = vrot.slane %v4206, 3
      %v4209 = vshll.u32 %v3886, 16
      %v4211 = vrot.slane %v4209, 4
      %v4212 = vor.u32 %v4208, %v4211
      %v4214 = vshrl.u32 %v3885, 16
      %v4216 = vrot.slane %v4214, 3
      %v4217 = vshll.u32 %v3885, 16
      %v4219 = vrot.slane %v4217, 4
      %v4220 = vor.u32 %v4216, %v4219
      %v4221 = vsel %vm961, %v4212, %v4220
      %v4222 = vshrl.u32 %v3955, 16
      %v4224 = vrot.slane %v4222, 3
      %v4225 = vshll.u32 %v3955, 16
      %v4227 = vrot.slane %v4225, 4
      %v4228 = vor.u32 %v4224, %v4227
      %v4229 = vshrl.u32 %v3957, 16
      %v4231 = vrot.slane %v4229, 3
      %v4232 = vshll.u32 %v3957, 16
      %v4234 = vrot.slane %v4232, 4
      %v4235 = vor.u32 %v4231, %v4234
      %v4236 = vsel %vm961, %v4228, %v4235
      %v4238 = vshrl.u32 %v3889, 16
      %v4240 = vrot.slane %v4238, 3
      %v4241 = vshll.u32 %v3889, 16
      %v4243 = vrot.slane %v4241, 4
      %v4244 = vor.u32 %v4240, %v4243
      %v4246 = vshrl.u32 %v3888, 16
      %v4248 = vrot.slane %v4246, 3
      %v4249 = vshll.u32 %v3888, 16
      %v4251 = vrot.slane %v4249, 4
      %v4252 = vor.u32 %v4248, %v4251
      %v4253 = vsel %vm961, %v4244, %v4252
      %v4254 = vshrl.u32 %v3960, 16
      %v4256 = vrot.slane %v4254, 3
      %v4257 = vshll.u32 %v3960, 16
      %v4259 = vrot.slane %v4257, 4
      %v4260 = vor.u32 %v4256, %v4259
      %v4261 = vshrl.u32 %v3962, 16
      %v4263 = vrot.slane %v4261, 3
      %v4264 = vshll.u32 %v3962, 16
      %v4266 = vrot.slane %v4264, 4
      %v4267 = vor.u32 %v4263, %v4266
      %v4268 = vsel %vm961, %v4260, %v4267
      %v4270 = vshrl.u32 %v3892, 16
      %v4272 = vrot.slane %v4270, 3
      %v4273 = vshll.u32 %v3892, 16
      %v4275 = vrot.slane %v4273, 4
      %v4276 = vor.u32 %v4272, %v4275
      %v4278 = vshrl.u32 %v3891, 16
      %v4280 = vrot.slane %v4278, 3
      %v4281 = vshll.u32 %v3891, 16
      %v4283 = vrot.slane %v4281, 4
      %v4284 = vor.u32 %v4280, %v4283
      %v4285 = vsel %vm961, %v4276, %v4284
      %v4286 = vshrl.u32 %v3965, 16
      %v4288 = vrot.slane %v4286, 3
      %v4289 = vshll.u32 %v3965, 16
      %v4291 = vrot.slane %v4289, 4
      %v4292 = vor.u32 %v4288, %v4291
      %v4293 = vshrl.u32 %v3967, 16
      %v4295 = vrot.slane %v4293, 3
      %v4296 = vshll.u32 %v3967, 16
      %v4298 = vrot.slane %v4296, 4
      %v4299 = vor.u32 %v4295, %v4298
      %v4300 = vsel %vm961, %v4292, %v4299
      %v4302 = vshrl.u32 %v3895, 16
      %v4304 = vrot.slane %v4302, 3
      %v4305 = vshll.u32 %v3895, 16
      %v4307 = vrot.slane %v4305, 4
      %v4308 = vor.u32 %v4304, %v4307
      %v4310 = vshrl.u32 %v3894, 16
      %v4312 = vrot.slane %v4310, 3
      %v4313 = vshll.u32 %v3894, 16
      %v4315 = vrot.slane %v4313, 4
      %v4316 = vor.u32 %v4312, %v4315
      %v4317 = vsel %vm961, %v4308, %v4316
      %v4318 = vshrl.u32 %v3970, 16
      %v4320 = vrot.slane %v4318, 3
      %v4321 = vshll.u32 %v3970, 16
      %v4323 = vrot.slane %v4321, 4
      %v4324 = vor.u32 %v4320, %v4323
      %v4325 = vshrl.u32 %v3972, 16
      %v4327 = vrot.slane %v4325, 3
      %v4328 = vshll.u32 %v3972, 16
      %v4330 = vrot.slane %v4328, 4
      %v4331 = vor.u32 %v4327, %v4330
      %v4332 = vsel %vm961, %v4324, %v4331
      %v4334 = vshrl.u32 %v3898, 16
      %v4336 = vrot.slane %v4334, 3
      %v4337 = vshll.u32 %v3898, 16
      %v4339 = vrot.slane %v4337, 4
      %v4340 = vor.u32 %v4336, %v4339
      %v4342 = vshrl.u32 %v3897, 16
      %v4344 = vrot.slane %v4342, 3
      %v4345 = vshll.u32 %v3897, 16
      %v4347 = vrot.slane %v4345, 4
      %v4348 = vor.u32 %v4344, %v4347
      %v4349 = vsel %vm961, %v4340, %v4348
      %v4350 = vshrl.u32 %v3975, 16
      %v4352 = vrot.slane %v4350, 3
      %v4353 = vshll.u32 %v3975, 16
      %v4355 = vrot.slane %v4353, 4
      %v4356 = vor.u32 %v4352, %v4355
      %v4357 = vshrl.u32 %v3977, 16
      %v4359 = vrot.slane %v4357, 3
      %v4360 = vshll.u32 %v3977, 16
      %v4362 = vrot.slane %v4360, 4
      %v4363 = vor.u32 %v4359, %v4362
      %v4364 = vsel %vm961, %v4356, %v4363
      %v4366 = vshrl.u32 %v3901, 16
      %v4368 = vrot.slane %v4366, 3
      %v4369 = vshll.u32 %v3901, 16
      %v4371 = vrot.slane %v4369, 4
      %v4372 = vor.u32 %v4368, %v4371
      %v4374 = vshrl.u32 %v3900, 16
      %v4376 = vrot.slane %v4374, 3
      %v4377 = vshll.u32 %v3900, 16
      %v4379 = vrot.slane %v4377, 4
      %v4380 = vor.u32 %v4376, %v4379
      %v4381 = vsel %vm961, %v4372, %v4380
      %v4382 = vshrl.u32 %v3980, 16
      %v4384 = vrot.slane %v4382, 3
      %v4385 = vshll.u32 %v3980, 16
      %v4387 = vrot.slane %v4385, 4
      %v4388 = vor.u32 %v4384, %v4387
      %v4389 = vshrl.u32 %v3982, 16
      %v4391 = vrot.slane %v4389, 3
      %v4392 = vshll.u32 %v3982, 16
      %v4394 = vrot.slane %v4392, 4
      %v4395 = vor.u32 %v4391, %v4394
      %v4396 = vsel %vm961, %v4388, %v4395
      %v4398 = vshrl.u32 %v3904, 16
      %v4400 = vrot.slane %v4398, 3
      %v4401 = vshll.u32 %v3904, 16
      %v4403 = vrot.slane %v4401, 4
      %v4404 = vor.u32 %v4400, %v4403
      %v4406 = vshrl.u32 %v3903, 16
      %v4408 = vrot.slane %v4406, 3
      %v4409 = vshll.u32 %v3903, 16
      %v4411 = vrot.slane %v4409, 4
      %v4412 = vor.u32 %v4408, %v4411
      %v4413 = vsel %vm961, %v4404, %v4412
      %v4414 = vshrl.u32 %v3985, 16
      %v4416 = vrot.slane %v4414, 3
      %v4417 = vshll.u32 %v3985, 16
      %v4419 = vrot.slane %v4417, 4
      %v4420 = vor.u32 %v4416, %v4419
      %v4421 = vshrl.u32 %v3987, 16
      %v4423 = vrot.slane %v4421, 3
      %v4424 = vshll.u32 %v3987, 16
      %v4426 = vrot.slane %v4424, 4
      %v4427 = vor.u32 %v4423, %v4426
      %v4428 = vsel %vm961, %v4420, %v4427
      %v4430 = vshrl.u32 %v3907, 16
      %v4432 = vrot.slane %v4430, 3
      %v4433 = vshll.u32 %v3907, 16
      %v4435 = vrot.slane %v4433, 4
      %v4436 = vor.u32 %v4432, %v4435
      %v4438 = vshrl.u32 %v3906, 16
      %v4440 = vrot.slane %v4438, 3
      %v4441 = vshll.u32 %v3906, 16
      %v4443 = vrot.slane %v4441, 4
      %v4444 = vor.u32 %v4440, %v4443
      %v4445 = vsel %vm961, %v4436, %v4444
      %v4446 = vshrl.u32 %v3990, 16
      %v4448 = vrot.slane %v4446, 3
      %v4449 = vshll.u32 %v3990, 16
      %v4451 = vrot.slane %v4449, 4
      %v4452 = vor.u32 %v4448, %v4451
      %v4453 = vshrl.u32 %v3992, 16
      %v4455 = vrot.slane %v4453, 3
      %v4456 = vshll.u32 %v3992, 16
      %v4458 = vrot.slane %v4456, 4
      %v4459 = vor.u32 %v4455, %v4458
      %v4460 = vsel %vm961, %v4452, %v4459
      %v4462 = vshrl.u32 %v3910, 16
      %v4464 = vrot.slane %v4462, 3
      %v4465 = vshll.u32 %v3910, 16
      %v4467 = vrot.slane %v4465, 4
      %v4468 = vor.u32 %v4464, %v4467
      %v4470 = vshrl.u32 %v3909, 16
      %v4472 = vrot.slane %v4470, 3
      %v4473 = vshll.u32 %v3909, 16
      %v4475 = vrot.slane %v4473, 4
      %v4476 = vor.u32 %v4472, %v4475
      %v4477 = vsel %vm961, %v4468, %v4476
      %v4478 = vshrl.u32 %v3995, 16
      %v4480 = vrot.slane %v4478, 3
      %v4481 = vshll.u32 %v3995, 16
      %v4483 = vrot.slane %v4481, 4
      %v4484 = vor.u32 %v4480, %v4483
      %v4485 = vshrl.u32 %v3997, 16
      %v4487 = vrot.slane %v4485, 3
      %v4488 = vshll.u32 %v3997, 16
      %v4490 = vrot.slane %v4488, 4
      %v4491 = vor.u32 %v4487, %v4490
      %v4492 = vsel %vm961, %v4484, %v4491
      %v4494 = vshrl.u32 %v3913, 16
      %v4496 = vrot.slane %v4494, 3
      %v4497 = vshll.u32 %v3913, 16
      %v4499 = vrot.slane %v4497, 4
      %v4500 = vor.u32 %v4496, %v4499
      %v4502 = vshrl.u32 %v3912, 16
      %v4504 = vrot.slane %v4502, 3
      %v4505 = vshll.u32 %v3912, 16
      %v4507 = vrot.slane %v4505, 4
      %v4508 = vor.u32 %v4504, %v4507
      %v4509 = vsel %vm961, %v4500, %v4508
      %v4510 = vshrl.u32 %v4000, 16
      %v4512 = vrot.slane %v4510, 3
      %v4513 = vshll.u32 %v4000, 16
      %v4515 = vrot.slane %v4513, 4
      %v4516 = vor.u32 %v4512, %v4515
      %v4517 = vshrl.u32 %v4002, 16
      %v4519 = vrot.slane %v4517, 3
      %v4520 = vshll.u32 %v4002, 16
      %v4522 = vrot.slane %v4520, 4
      %v4523 = vor.u32 %v4519, %v4522
      %v4524 = vsel %vm961, %v4516, %v4523
      %v4526 = vshrl.u32 %v3916, 16
      %v4528 = vrot.slane %v4526, 3
      %v4529 = vshll.u32 %v3916, 16
      %v4531 = vrot.slane %v4529, 4
      %v4532 = vor.u32 %v4528, %v4531
      %v4534 = vshrl.u32 %v3915, 16
      %v4536 = vrot.slane %v4534, 3
      %v4537 = vshll.u32 %v3915, 16
      %v4539 = vrot.slane %v4537, 4
      %v4540 = vor.u32 %v4536, %v4539
      %v4541 = vsel %vm961, %v4532, %v4540
      %v4542 = vshrl.u32 %v4005, 16
      %v4544 = vrot.slane %v4542, 3
      %v4545 = vshll.u32 %v4005, 16
      %v4547 = vrot.slane %v4545, 4
      %v4548 = vor.u32 %v4544, %v4547
      %v4549 = vshrl.u32 %v4007, 16
      %v4551 = vrot.slane %v4549, 3
      %v4552 = vshll.u32 %v4007, 16
      %v4554 = vrot.slane %v4552, 4
      %v4555 = vor.u32 %v4551, %v4554
      %v4556 = vsel %vm961, %v4548, %v4555
      %v4558 = vshrl.u32 %v3919, 16
      %v4560 = vrot.slane %v4558, 3
      %v4561 = vshll.u32 %v3919, 16
      %v4563 = vrot.slane %v4561, 4
      %v4564 = vor.u32 %v4560, %v4563
      %v4566 = vshrl.u32 %v3918, 16
      %v4568 = vrot.slane %v4566, 3
      %v4569 = vshll.u32 %v3918, 16
      %v4571 = vrot.slane %v4569, 4
      %v4572 = vor.u32 %v4568, %v4571
      %v4573 = vsel %vm961, %v4564, %v4572
      %v4614 = vunpack.c.l.b16 %v4038
      %v4615 = vunpack.c.l.b16 %v4039
      %v4616 = vunpack.c.l.b16 %v4040
      %v4617 = vunpack.c.l.b16 %v4041
      %v4618 = vunpack.c.l.b16 %v4042
      %v4619 = vunpack.c.l.b16 %v4043
      %v4620 = vunpack.c.l.b16 %v4044
      %v4621 = vunpack.c.l.b16 %v4045
      %v4622 = vunpack.c.l.b16 %v4046
      %v4623 = vunpack.c.l.b16 %v4047
      %v4624 = vunpack.c.l.b16 %v4048
      %v4625 = vunpack.c.l.b16 %v4049
      %v4626 = vunpack.c.l.b16 %v4050
      %v4627 = vunpack.c.l.b16 %v4051
      %v4628 = vunpack.c.l.b16 %v4052
      %v4629 = vunpack.c.l.b16 %v4053
      %v4630 = vunpack.c.l.b16 %v4054
      %v4631 = vunpack.c.l.b16 %v4055
      %v4632 = vunpack.c.l.b16 %v4056
      %v4633 = vunpack.c.l.b16 %v4057
      %v4634 = vunpack.c.l.b16 %v4058
      %v4635 = vunpack.c.l.b16 %v4059
      %v4636 = vunpack.c.l.b16 %v4060
      %v4637 = vunpack.c.l.b16 %v4061
      %v4638 = vpack.c.b16 %v4615, %v4614
      %v4639 = vpack.c.b16 %v4617, %v4616
      %v4640 = vpack.c.b16 %v4619, %v4618
      %v4641 = vpack.c.b16 %v4621, %v4620
      %v4642 = vpack.c.b16 %v4623, %v4622
      %v4643 = vpack.c.b16 %v4625, %v4624
      %v4644 = vpack.c.b16 %v4627, %v4626
      %v4645 = vpack.c.b16 %v4629, %v4628
      %v4646 = vpack.c.b16 %v4631, %v4630
      %v4647 = vpack.c.b16 %v4633, %v4632
      %v4648 = vpack.c.b16 %v4635, %v4634
      %v4649 = vpack.c.b16 %v4637, %v4636
      %v4663 = vsel %vm378, %v4093, 0
      %v4666 = vsel %vm378, %v4125, 0
      %v4669 = vsel %vm378, %v4157, 0
      %v4672 = vsel %vm378, %v4189, 0
      %v4675 = vsel %vm378, %v4221, 0
      %v4678 = vsel %vm378, %v4253, 0
      %v4681 = vsel %vm378, %v4285, 0
      %v4684 = vsel %vm378, %v4317, 0
      %v4687 = vsel %vm378, %v4349, 0
      %v4690 = vsel %vm378, %v4381, 0
      %v4693 = vsel %vm378, %v4413, 0
      %v4696 = vsel %vm378, %v4445, 0
      %v4699 = vsel %vm378, %v4477, 0
      %v4702 = vsel %vm378, %v4509, 0
      %v4705 = vsel %vm378, %v4541, 0
      %v4708 = vsel %vm378, %v4573, 0
      %4710 = vmatprep.subr.bf16.mxu0 0
      %4711 = vmatpush1.bf16.msra.mxu0 %v4638
      %4712 = vmatprep.subr.bf16.mxu0 0
      %4713 = vmatpush1.bf16.msra.mxu0 %v4639
      %4714 = vmatprep.subr.bf16.mxu0 0
      %4715 = vmatpush1.bf16.msra.mxu0 %v4640
      %4716 = vmatprep.subr.bf16.mxu0 0
      %4717 = vmatpush1.bf16.msra.mxu0 %v4641
      %4718 = vmatprep.subr.bf16.mxu0 0
      %4719 = vmatpush1.bf16.msra.mxu0 %v4642
      %4720 = vmatprep.subr.bf16.mxu0 0
      %4721 = vmatpush1.bf16.msra.mxu0 %v4643
      %4722 = vmatprep.subr.bf16.mxu0 0
      %4723 = vmatpush1.bf16.msra.mxu0 %v4644
      %4724 = vmatprep.subr.bf16.mxu0 0
      %4725 = vmatpush1.bf16.msra.mxu0 %v4645
      %4726 = vmatprep.subr.bf16.mxu0 0
      %4727 = vmatpush1.bf16.msra.mxu0 %v4646
      %4728 = vmatprep.subr.bf16.mxu0 0
      %4729 = vmatpush1.bf16.msra.mxu0 %v4647
      %4730 = vmatprep.subr.bf16.mxu0 0
      %4731 = vmatpush1.bf16.msra.mxu0 %v4648
      %4732 = vmatprep.subr.bf16.mxu0 0
      %4733 = vmatpush1.bf16.msra.mxu0 %v4649
      %4734 = vmatprep.subr.bf16.mxu0 0
      %4735 = vmatpush1.bf16.msra.mxu0 0
      %4736 = vmatprep.subr.bf16.mxu0 0
      %4737 = vmatpush1.bf16.msra.mxu0 0
      %4738 = vmatprep.subr.bf16.mxu0 0
      %4739 = vmatpush1.bf16.msra.mxu0 0
      %4740 = vmatprep.subr.bf16.mxu0 0
      %4741 = vmatpush1.bf16.msra.mxu0 0
      %4742 = vmatprep.mubr.bf16.mxu0 %v4663
      %4743 = vmatmul.mubr.bf16.gmra.mrb[0].mxu0 %v4076
      %v4744 = vpop.f32.mrb[0].mxu0
      %v4745 = vadd.f32 0.0, %v4744
      %v4746 = vpop.f32.mrb[0].mxu0
      %v4747 = vpop.f32.mrb[0].mxu0
      %v4748 = vadd.f32 0.0, %v4747
      %v4749 = vpop.f32.mrb[0].mxu0
      %4750 = vmatprep.mubr.bf16.mxu0 %v4666
      %4751 = vmatmul.mubr.bf16.gmra.mrb[0].mxu0 %v4108
      %v4752 = vpop.f32.mrb[0].mxu0
      %v4753 = vadd.f32 0.0, %v4752
      %v4754 = vpop.f32.mrb[0].mxu0
      %v4755 = vpop.f32.mrb[0].mxu0
      %v4756 = vadd.f32 0.0, %v4755
      %v4757 = vpop.f32.mrb[0].mxu0
      %4758 = vmatprep.mubr.bf16.mxu0 %v4669
      %4759 = vmatmul.mubr.bf16.gmra.mrb[0].mxu0 %v4140
      %v4760 = vpop.f32.mrb[0].mxu0
      %v4761 = vadd.f32 0.0, %v4760
      %v4762 = vpop.f32.mrb[0].mxu0
      %v4763 = vpop.f32.mrb[0].mxu0
      %v4764 = vadd.f32 0.0, %v4763
      %v4765 = vpop.f32.mrb[0].mxu0
      %4766 = vmatprep.mubr.bf16.mxu0 %v4672
      %4767 = vmatmul.mubr.bf16.gmra.mrb[0].mxu0 %v4172
      %v4768 = vpop.f32.mrb[0].mxu0
      %v4769 = vadd.f32 0.0, %v4768
      %v4770 = vpop.f32.mrb[0].mxu0
      %v4771 = vpop.f32.mrb[0].mxu0
      %v4772 = vadd.f32 0.0, %v4771
      %v4773 = vpop.f32.mrb[0].mxu0
      %4774 = vmatprep.mubr.bf16.mxu0 %v4675
      %4775 = vmatmul.mubr.bf16.gmra.mrb[0].mxu0 %v4204
      %v4776 = vpop.f32.mrb[0].mxu0
      %v4777 = vadd.f32 0.0, %v4776
      %v4778 = vpop.f32.mrb[0].mxu0
      %v4779 = vpop.f32.mrb[0].mxu0
      %v4780 = vadd.f32 0.0, %v4779
      %v4781 = vpop.f32.mrb[0].mxu0
      %4782 = vmatprep.mubr.bf16.mxu0 %v4678
      %4783 = vmatmul.mubr.bf16.gmra.mrb[0].mxu0 %v4236
      %v4784 = vpop.f32.mrb[0].mxu0
      %v4785 = vadd.f32 0.0, %v4784
      %v4786 = vpop.f32.mrb[0].mxu0
      %v4787 = vpop.f32.mrb[0].mxu0
      %v4788 = vadd.f32 0.0, %v4787
      %v4789 = vpop.f32.mrb[0].mxu0
      %4790 = vmatprep.mubr.bf16.mxu0 %v4681
      %4791 = vmatmul.mubr.bf16.gmra.mrb[0].mxu0 %v4268
      %v4792 = vpop.f32.mrb[0].mxu0
      %v4793 = vadd.f32 0.0, %v4792
      %v4794 = vpop.f32.mrb[0].mxu0
      %v4795 = vpop.f32.mrb[0].mxu0
      %v4796 = vadd.f32 0.0, %v4795
      %v4797 = vpop.f32.mrb[0].mxu0
      %4798 = vmatprep.mubr.bf16.mxu0 %v4684
      %4799 = vmatmul.mubr.bf16.gmra.mrb[0].mxu0 %v4300
      %v4800 = vpop.f32.mrb[0].mxu0
      %v4801 = vadd.f32 0.0, %v4800
      %v4802 = vpop.f32.mrb[0].mxu0
      %v4803 = vpop.f32.mrb[0].mxu0
      %v4804 = vadd.f32 0.0, %v4803
      %v4805 = vpop.f32.mrb[0].mxu0
      %4806 = vmatprep.mubr.bf16.mxu0 %v4687
      %4807 = vmatmul.mubr.bf16.gmra.mrb[0].mxu0 %v4332
      %v4808 = vpop.f32.mrb[0].mxu0
      %v4809 = vadd.f32 0.0, %v4808
      %v4810 = vpop.f32.mrb[0].mxu0
      %v4811 = vpop.f32.mrb[0].mxu0
      %v4812 = vadd.f32 0.0, %v4811
      %v4813 = vpop.f32.mrb[0].mxu0
      %4814 = vmatprep.mubr.bf16.mxu0 %v4690
      %4815 = vmatmul.mubr.bf16.gmra.mrb[0].mxu0 %v4364
      %v4816 = vpop.f32.mrb[0].mxu0
      %v4817 = vadd.f32 0.0, %v4816
      %v4818 = vpop.f32.mrb[0].mxu0
      %v4819 = vpop.f32.mrb[0].mxu0
      %v4820 = vadd.f32 0.0, %v4819
      %v4821 = vpop.f32.mrb[0].mxu0
      %4822 = vmatprep.mubr.bf16.mxu0 %v4693
      %4823 = vmatmul.mubr.bf16.gmra.mrb[0].mxu0 %v4396
      %v4824 = vpop.f32.mrb[0].mxu0
      %v4825 = vadd.f32 0.0, %v4824
      %v4826 = vpop.f32.mrb[0].mxu0
      %v4827 = vpop.f32.mrb[0].mxu0
      %v4828 = vadd.f32 0.0, %v4827
      %v4829 = vpop.f32.mrb[0].mxu0
      %4830 = vmatprep.mubr.bf16.mxu0 %v4696
      %4831 = vmatmul.mubr.bf16.gmra.mrb[0].mxu0 %v4428
      %v4832 = vpop.f32.mrb[0].mxu0
      %v4833 = vadd.f32 0.0, %v4832
      %v4834 = vpop.f32.mrb[0].mxu0
      %v4835 = vpop.f32.mrb[0].mxu0
      %v4836 = vadd.f32 0.0, %v4835
      %v4837 = vpop.f32.mrb[0].mxu0
      %4838 = vmatprep.mubr.bf16.mxu0 %v4699
      %4839 = vmatmul.mubr.bf16.gmra.mrb[0].mxu0 %v4460
      %v4840 = vpop.f32.mrb[0].mxu0
      %v4841 = vadd.f32 0.0, %v4840
      %v4842 = vpop.f32.mrb[0].mxu0
      %v4843 = vpop.f32.mrb[0].mxu0
      %v4844 = vadd.f32 0.0, %v4843
      %v4845 = vpop.f32.mrb[0].mxu0
      %4846 = vmatprep.mubr.bf16.mxu0 %v4702
      %4847 = vmatmul.mubr.bf16.gmra.mrb[0].mxu0 %v4492
      %v4848 = vpop.f32.mrb[0].mxu0
      %v4849 = vadd.f32 0.0, %v4848
      %v4850 = vpop.f32.mrb[0].mxu0
      %v4851 = vpop.f32.mrb[0].mxu0
      %v4852 = vadd.f32 0.0, %v4851
      %v4853 = vpop.f32.mrb[0].mxu0
      %4854 = vmatprep.mubr.bf16.mxu0 %v4705
      %4855 = vmatmul.mubr.bf16.gmra.mrb[0].mxu0 %v4524
      %v4856 = vpop.f32.mrb[0].mxu0
      %v4857 = vadd.f32 0.0, %v4856
      %v4858 = vpop.f32.mrb[0].mxu0
      %v4859 = vpop.f32.mrb[0].mxu0
      %v4860 = vadd.f32 0.0, %v4859
      %v4861 = vpop.f32.mrb[0].mxu0
      %4862 = vmatprep.mubr.bf16.mxu0 %v4708
      %4863 = vmatmul.mubr.bf16.gmra.mrb[0].mxu0 %v4556
      %v4864 = vpop.f32.mrb[0].mxu0
      %v4865 = vadd.f32 0.0, %v4864
      %v4866 = vpop.f32.mrb[0].mxu0
      %v4867 = vpop.f32.mrb[0].mxu0
      %v4868 = vadd.f32 0.0, %v4867
      %v4869 = vpop.f32.mrb[0].mxu0
      %4870 = vdwg.mxu0
      %v4871 = vshrl.u32 %v3925, 16
      %v4873 = vrot.slane %v4871, 3
      %v4874 = vshll.u32 %v3925, 16
      %v4876 = vrot.slane %v4874, 4
      %v4877 = vor.u32 %v4873, %v4876
      %v4878 = vshrl.u32 %v3927, 16
      %v4880 = vrot.slane %v4878, 3
      %v4881 = vshll.u32 %v3927, 16
      %v4883 = vrot.slane %v4881, 4
      %v4884 = vor.u32 %v4880, %v4883
      %v4885 = vsel %vm961, %v4877, %v4884
      %v4887 = vshrl.u32 %v3871, 16
      %v4889 = vrot.slane %v4887, 3
      %v4890 = vshll.u32 %v3871, 16
      %v4892 = vrot.slane %v4890, 4
      %v4893 = vor.u32 %v4889, %v4892
      %v4895 = vshrl.u32 %v3870, 16
      %v4897 = vrot.slane %v4895, 3
      %v4898 = vshll.u32 %v3870, 16
      %v4900 = vrot.slane %v4898, 4
      %v4901 = vor.u32 %v4897, %v4900
      %v4902 = vsel %vm961, %v4893, %v4901
      %v4928 = vunpack.c.l.b16 %v4013
      %v4929 = vunpack.c.l.b16 %v4014
      %v4930 = vunpack.c.l.b16 %v4015
      %v4931 = vunpack.c.l.b16 %v4016
      %v4932 = vunpack.c.l.b16 %v4017
      %v4933 = vunpack.c.l.b16 %v4018
      %v4934 = vunpack.c.l.b16 %v4019
      %v4935 = vunpack.c.l.b16 %v4020
      %v4936 = vunpack.c.l.b16 %v4021
      %v4937 = vunpack.c.l.b16 %v4022
      %v4938 = vunpack.c.l.b16 %v4023
      %v4939 = vunpack.c.l.b16 %v4024
      %v4940 = vunpack.c.l.b16 %v4025
      %v4941 = vunpack.c.l.b16 %v4026
      %v4942 = vunpack.c.l.b16 %v4027
      %v4943 = vunpack.c.l.b16 %v4028
      %v4944 = vunpack.c.l.b16 %v4029
      %v4945 = vunpack.c.l.b16 %v4030
      %v4946 = vunpack.c.l.b16 %v4031
      %v4947 = vunpack.c.l.b16 %v4032
      %v4948 = vunpack.c.l.b16 %v4033
      %v4949 = vunpack.c.l.b16 %v4034
      %v4950 = vunpack.c.l.b16 %v4035
      %v4951 = vunpack.c.l.b16 %v4036
      %v4952 = vpack.c.b16 %v4929, %v4928
      %v4953 = vpack.c.b16 %v4931, %v4930
      %v4954 = vpack.c.b16 %v4933, %v4932
      %v4955 = vpack.c.b16 %v4935, %v4934
      %v4956 = vpack.c.b16 %v4937, %v4936
      %v4957 = vpack.c.b16 %v4939, %v4938
      %v4958 = vpack.c.b16 %v4941, %v4940
      %v4959 = vpack.c.b16 %v4943, %v4942
      %v4960 = vpack.c.b16 %v4945, %v4944
      %v4961 = vpack.c.b16 %v4947, %v4946
      %v4962 = vpack.c.b16 %v4949, %v4948
      %v4963 = vpack.c.b16 %v4951, %v4950
      %v4977 = vsel %vm378, %v4902, 0
      %4979 = vmatprep.subr.bf16.mxu0 0
      %4980 = vmatpush1.bf16.msra.mxu0 %v4952
      %4981 = vmatprep.subr.bf16.mxu0 0
      %4982 = vmatpush1.bf16.msra.mxu0 %v4953
      %4983 = vmatprep.subr.bf16.mxu0 0
      %4984 = vmatpush1.bf16.msra.mxu0 %v4954
      %4985 = vmatprep.subr.bf16.mxu0 0
      %4986 = vmatpush1.bf16.msra.mxu0 %v4955
      %4987 = vmatprep.subr.bf16.mxu0 0
      %4988 = vmatpush1.bf16.msra.mxu0 %v4956
      %4989 = vmatprep.subr.bf16.mxu0 0
      %4990 = vmatpush1.bf16.msra.mxu0 %v4957
      %4991 = vmatprep.subr.bf16.mxu0 0
      %4992 = vmatpush1.bf16.msra.mxu0 %v4958
      %4993 = vmatprep.subr.bf16.mxu0 0
      %4994 = vmatpush1.bf16.msra.mxu0 %v4959
      %4995 = vmatprep.subr.bf16.mxu0 0
      %4996 = vmatpush1.bf16.msra.mxu0 %v4960
      %4997 = vmatprep.subr.bf16.mxu0 0
      %4998 = vmatpush1.bf16.msra.mxu0 %v4961
      %4999 = vmatprep.subr.bf16.mxu0 0
      %5000 = vmatpush1.bf16.msra.mxu0 %v4962
      %5001 = vmatprep.subr.bf16.mxu0 0
      %5002 = vmatpush1.bf16.msra.mxu0 %v4963
      %5003 = vmatprep.subr.bf16.mxu0 0
      %5004 = vmatpush1.bf16.msra.mxu0 0
      %5005 = vmatprep.subr.bf16.mxu0 0
      %5006 = vmatpush1.bf16.msra.mxu0 0
      %5007 = vmatprep.subr.bf16.mxu0 0
      %5008 = vmatpush1.bf16.msra.mxu0 0
      %5009 = vmatprep.subr.bf16.mxu0 0
      %5010 = vmatpush1.bf16.msra.mxu0 0
      %5011 = vmatprep.mubr.bf16.mxu0 %v4977
      %5012 = vmatmul.mubr.bf16.gmra.mrb[0].mxu0 %v4885
      %v5013 = vpop.f32.mrb[0].mxu0
      %v5014 = vadd.f32 %v4745, %v5013
      %v5015 = vpop.f32.mrb[0].mxu0
      %v5016 = vpop.f32.mrb[0].mxu0
      %v5017 = vadd.f32 %v4748, %v5016
      %v5018 = vpop.f32.mrb[0].mxu0
      %5019 = vmatprep.mubr.bf16.mxu0 %v4663
      %5020 = vmatmul.mubr.bf16.gmra.mrb[0].mxu0 %v4076
      %v5021 = vpop.f32.mrb[0].mxu0
      %v5022 = vadd.f32 %v4753, %v5021
      %v5023 = vpop.f32.mrb[0].mxu0
      %v5024 = vpop.f32.mrb[0].mxu0
      %v5025 = vadd.f32 %v4756, %v5024
      %v5026 = vpop.f32.mrb[0].mxu0
      %5027 = vmatprep.mubr.bf16.mxu0 %v4666
      %5028 = vmatmul.mubr.bf16.gmra.mrb[0].mxu0 %v4108
      %v5029 = vpop.f32.mrb[0].mxu0
      %v5030 = vadd.f32 %v4761, %v5029
      %v5031 = vpop.f32.mrb[0].mxu0
      %v5032 = vpop.f32.mrb[0].mxu0
      %v5033 = vadd.f32 %v4764, %v5032
      %v5034 = vpop.f32.mrb[0].mxu0
      %5035 = vmatprep.mubr.bf16.mxu0 %v4669
      %5036 = vmatmul.mubr.bf16.gmra.mrb[0].mxu0 %v4140
      %v5037 = vpop.f32.mrb[0].mxu0
      %v5038 = vadd.f32 %v4769, %v5037
      %v5039 = vpop.f32.mrb[0].mxu0
      %v5040 = vpop.f32.mrb[0].mxu0
      %v5041 = vadd.f32 %v4772, %v5040
      %v5042 = vpop.f32.mrb[0].mxu0
      %5043 = vmatprep.mubr.bf16.mxu0 %v4672
      %5044 = vmatmul.mubr.bf16.gmra.mrb[0].mxu0 %v4172
      %v5045 = vpop.f32.mrb[0].mxu0
      %v5046 = vadd.f32 %v4777, %v5045
      %v5047 = vpop.f32.mrb[0].mxu0
      %v5048 = vpop.f32.mrb[0].mxu0
      %v5049 = vadd.f32 %v4780, %v5048
      %v5050 = vpop.f32.mrb[0].mxu0
      %5051 = vmatprep.mubr.bf16.mxu0 %v4675
      %5052 = vmatmul.mubr.bf16.gmra.mrb[0].mxu0 %v4204
      %v5053 = vpop.f32.mrb[0].mxu0
      %v5054 = vadd.f32 %v4785, %v5053
      %v5055 = vpop.f32.mrb[0].mxu0
      %v5056 = vpop.f32.mrb[0].mxu0
      %v5057 = vadd.f32 %v4788, %v5056
      %v5058 = vpop.f32.mrb[0].mxu0
      %5059 = vmatprep.mubr.bf16.mxu0 %v4678
      %5060 = vmatmul.mubr.bf16.gmra.mrb[0].mxu0 %v4236
      %v5061 = vpop.f32.mrb[0].mxu0
      %v5062 = vadd.f32 %v4793, %v5061
      %v5063 = vpop.f32.mrb[0].mxu0
      %v5064 = vpop.f32.mrb[0].mxu0
      %v5065 = vadd.f32 %v4796, %v5064
      %v5066 = vpop.f32.mrb[0].mxu0
      %5067 = vmatprep.mubr.bf16.mxu0 %v4681
      %5068 = vmatmul.mubr.bf16.gmra.mrb[0].mxu0 %v4268
      %v5069 = vpop.f32.mrb[0].mxu0
      %v5070 = vadd.f32 %v4801, %v5069
      %v5071 = vpop.f32.mrb[0].mxu0
      %v5072 = vpop.f32.mrb[0].mxu0
      %v5073 = vadd.f32 %v4804, %v5072
      %v5074 = vpop.f32.mrb[0].mxu0
      %5075 = vmatprep.mubr.bf16.mxu0 %v4684
      %5076 = vmatmul.mubr.bf16.gmra.mrb[0].mxu0 %v4300
      %v5077 = vpop.f32.mrb[0].mxu0
      %v5078 = vadd.f32 %v4809, %v5077
      %v5079 = vpop.f32.mrb[0].mxu0
      %v5080 = vpop.f32.mrb[0].mxu0
      %v5081 = vadd.f32 %v4812, %v5080
      %v5082 = vpop.f32.mrb[0].mxu0
      %5083 = vmatprep.mubr.bf16.mxu0 %v4687
      %5084 = vmatmul.mubr.bf16.gmra.mrb[0].mxu0 %v4332
      %v5085 = vpop.f32.mrb[0].mxu0
      %v5086 = vadd.f32 %v4817, %v5085
      %v5087 = vpop.f32.mrb[0].mxu0
      %v5088 = vpop.f32.mrb[0].mxu0
      %v5089 = vadd.f32 %v4820, %v5088
      %v5090 = vpop.f32.mrb[0].mxu0
      %5091 = vmatprep.mubr.bf16.mxu0 %v4690
      %5092 = vmatmul.mubr.bf16.gmra.mrb[0].mxu0 %v4364
      %v5093 = vpop.f32.mrb[0].mxu0
      %v5094 = vadd.f32 %v4825, %v5093
      %v5095 = vpop.f32.mrb[0].mxu0
      %v5096 = vpop.f32.mrb[0].mxu0
      %v5097 = vadd.f32 %v4828, %v5096
      %v5098 = vpop.f32.mrb[0].mxu0
      %5099 = vmatprep.mubr.bf16.mxu0 %v4693
      %5100 = vmatmul.mubr.bf16.gmra.mrb[0].mxu0 %v4396
      %v5101 = vpop.f32.mrb[0].mxu0
      %v5102 = vadd.f32 %v4833, %v5101
      %v5103 = vpop.f32.mrb[0].mxu0
      %v5104 = vpop.f32.mrb[0].mxu0
      %v5105 = vadd.f32 %v4836, %v5104
      %v5106 = vpop.f32.mrb[0].mxu0
      %5107 = vmatprep.mubr.bf16.mxu0 %v4696
      %5108 = vmatmul.mubr.bf16.gmra.mrb[0].mxu0 %v4428
      %v5109 = vpop.f32.mrb[0].mxu0
      %v5110 = vadd.f32 %v4841, %v5109
      %v5111 = vpop.f32.mrb[0].mxu0
      %v5112 = vpop.f32.mrb[0].mxu0
      %v5113 = vadd.f32 %v4844, %v5112
      %v5114 = vpop.f32.mrb[0].mxu0
      %5115 = vmatprep.mubr.bf16.mxu0 %v4699
      %5116 = vmatmul.mubr.bf16.gmra.mrb[0].mxu0 %v4460
      %v5117 = vpop.f32.mrb[0].mxu0
      %v5118 = vadd.f32 %v4849, %v5117
      %v5119 = vpop.f32.mrb[0].mxu0
      %v5120 = vpop.f32.mrb[0].mxu0
      %v5121 = vadd.f32 %v4852, %v5120
      %v5122 = vpop.f32.mrb[0].mxu0
      %5123 = vmatprep.mubr.bf16.mxu0 %v4702
      %5124 = vmatmul.mubr.bf16.gmra.mrb[0].mxu0 %v4492
      %v5125 = vpop.f32.mrb[0].mxu0
      %v5126 = vadd.f32 %v4857, %v5125
      %v5127 = vpop.f32.mrb[0].mxu0
      %v5128 = vpop.f32.mrb[0].mxu0
      %v5129 = vadd.f32 %v4860, %v5128
      %v5130 = vpop.f32.mrb[0].mxu0
      %5131 = vmatprep.mubr.bf16.mxu0 %v4705
      %5132 = vmatmul.mubr.bf16.gmra.mrb[0].mxu0 %v4524
      %v5133 = vpop.f32.mrb[0].mxu0
      %v5134 = vadd.f32 %v4865, %v5133
      %v5135 = vpop.f32.mrb[0].mxu0
      %v5136 = vpop.f32.mrb[0].mxu0
      %v5137 = vadd.f32 %v4868, %v5136
      %v5138 = vpop.f32.mrb[0].mxu0
      %5139 = vdwg.mxu0
      %s5140 = scalar_lea.vmem %s3, 192
      %v5141 = vld [vmem:[%s5140] sm:$0xf]
      %v5142 = vld [vmem:[%s5140 + $0x4] sm:$0xf]
      %v5143 = vld [vmem:[%s5140 + $0x8] sm:$0xf]
      %v5144 = vld [vmem:[%s5140 + $0xc] sm:$0xf]
      %v5145 = vld [vmem:[%s5140 + $0x10] sm:$0xf]
      %v5146 = vld [vmem:[%s5140 + $0x14] sm:$0xf]
      %v5147 = vld [vmem:[%s5140 + $0x18] sm:$0xf]
      %v5148 = vld [vmem:[%s5140 + $0x1c] sm:$0xf]
      %v5149 = vld [vmem:[%s5140 + $0x20] sm:$0xf]
      %v5150 = vld [vmem:[%s5140 + $0x24] sm:$0xf]
      %v5151 = vld [vmem:[%s5140 + $0x28] sm:$0xf]
      %v5152 = vld [vmem:[%s5140 + $0x2c] sm:$0xf]
      %v5153 = vld [vmem:[%s5140 + $0x30] sm:$0xf]
      %v5154 = vld [vmem:[%s5140 + $0x34] sm:$0xf]
      %v5155 = vld [vmem:[%s5140 + $0x38] sm:$0xf]
      %v5156 = vld [vmem:[%s5140 + $0x3c] sm:$0xf]
      %v5157 = vld [vmem:[%s5140 + $0x40] sm:$0xf]
      %v5158 = vld [vmem:[%s5140 + $0x44] sm:$0xf]
      %v5159 = vld [vmem:[%s5140 + $0x48] sm:$0xf]
      %v5160 = vld [vmem:[%s5140 + $0x4c] sm:$0xf]
      %v5161 = vld [vmem:[%s5140 + $0x50] sm:$0xf]
      %v5162 = vld [vmem:[%s5140 + $0x54] sm:$0xf]
      %v5163 = vld [vmem:[%s5140 + $0x58] sm:$0xf]
      %v5164 = vld [vmem:[%s5140 + $0x5c] sm:$0xf]
      %v5165 = vshrl.u32 %v4010, 16
      %v5167 = vrot.slane %v5165, 3
      %v5168 = vshll.u32 %v4010, 16
      %v5170 = vrot.slane %v5168, 4
      %v5171 = vor.u32 %v5167, %v5170
      %v5172 = vshrl.u32 %v4012, 16
      %v5174 = vrot.slane %v5172, 3
      %v5175 = vshll.u32 %v4012, 16
      %v5177 = vrot.slane %v5175, 4
      %v5178 = vor.u32 %v5174, %v5177
      %v5179 = vsel %vm961, %v5171, %v5178
      %v5181 = vshrl.u32 %v3922, 16
      %v5183 = vrot.slane %v5181, 3
      %v5184 = vshll.u32 %v3922, 16
      %v5186 = vrot.slane %v5184, 4
      %v5187 = vor.u32 %v5183, %v5186
      %v5189 = vshrl.u32 %v3921, 16
      %v5191 = vrot.slane %v5189, 3
      %v5192 = vshll.u32 %v3921, 16
      %v5194 = vrot.slane %v5192, 4
      %v5195 = vor.u32 %v5191, %v5194
      %v5196 = vsel %vm961, %v5187, %v5195
      %v5222 = vunpack.c.l.b16 %v5141
      %v5223 = vunpack.c.l.b16 %v5142
      %v5224 = vunpack.c.l.b16 %v5143
      %v5225 = vunpack.c.l.b16 %v5144
      %v5226 = vunpack.c.l.b16 %v5145
      %v5227 = vunpack.c.l.b16 %v5146
      %v5228 = vunpack.c.l.b16 %v5147
      %v5229 = vunpack.c.l.b16 %v5148
      %v5230 = vunpack.c.l.b16 %v5149
      %v5231 = vunpack.c.l.b16 %v5150
      %v5232 = vunpack.c.l.b16 %v5151
      %v5233 = vunpack.c.l.b16 %v5152
      %v5234 = vunpack.c.l.b16 %v5153
      %v5235 = vunpack.c.l.b16 %v5154
      %v5236 = vunpack.c.l.b16 %v5155
      %v5237 = vunpack.c.l.b16 %v5156
      %v5238 = vunpack.c.l.b16 %v5157
      %v5239 = vunpack.c.l.b16 %v5158
      %v5240 = vunpack.c.l.b16 %v5159
      %v5241 = vunpack.c.l.b16 %v5160
      %v5242 = vunpack.c.l.b16 %v5161
      %v5243 = vunpack.c.l.b16 %v5162
      %v5244 = vunpack.c.l.b16 %v5163
      %v5245 = vunpack.c.l.b16 %v5164
      %v5246 = vpack.c.b16 %v5223, %v5222
      %v5247 = vpack.c.b16 %v5225, %v5224
      %v5248 = vpack.c.b16 %v5227, %v5226
      %v5249 = vpack.c.b16 %v5229, %v5228
      %v5250 = vpack.c.b16 %v5231, %v5230
      %v5251 = vpack.c.b16 %v5233, %v5232
      %v5252 = vpack.c.b16 %v5235, %v5234
      %v5253 = vpack.c.b16 %v5237, %v5236
      %v5254 = vpack.c.b16 %v5239, %v5238
      %v5255 = vpack.c.b16 %v5241, %v5240
      %v5256 = vpack.c.b16 %v5243, %v5242
      %v5257 = vpack.c.b16 %v5245, %v5244
      %v5271 = vsel %vm378, %v5196, 0
      %5273 = vmatprep.subr.bf16.mxu0 0
      %5274 = vmatpush1.bf16.msra.mxu0 %v5246
      %5275 = vmatprep.subr.bf16.mxu0 0
      %5276 = vmatpush1.bf16.msra.mxu0 %v5247
      %5277 = vmatprep.subr.bf16.mxu0 0
      %5278 = vmatpush1.bf16.msra.mxu0 %v5248
      %5279 = vmatprep.subr.bf16.mxu0 0
      %5280 = vmatpush1.bf16.msra.mxu0 %v5249
      %5281 = vmatprep.subr.bf16.mxu0 0
      %5282 = vmatpush1.bf16.msra.mxu0 %v5250
      %5283 = vmatprep.subr.bf16.mxu0 0
      %5284 = vmatpush1.bf16.msra.mxu0 %v5251
      %5285 = vmatprep.subr.bf16.mxu0 0
      %5286 = vmatpush1.bf16.msra.mxu0 %v5252
      %5287 = vmatprep.subr.bf16.mxu0 0
      %5288 = vmatpush1.bf16.msra.mxu0 %v5253
      %5289 = vmatprep.subr.bf16.mxu0 0
      %5290 = vmatpush1.bf16.msra.mxu0 %v5254
      %5291 = vmatprep.subr.bf16.mxu0 0
      %5292 = vmatpush1.bf16.msra.mxu0 %v5255
      %5293 = vmatprep.subr.bf16.mxu0 0
      %5294 = vmatpush1.bf16.msra.mxu0 %v5256
      %5295 = vmatprep.subr.bf16.mxu0 0
      %5296 = vmatpush1.bf16.msra.mxu0 %v5257
      %5297 = vmatprep.subr.bf16.mxu0 0
      %5298 = vmatpush1.bf16.msra.mxu0 0
      %5299 = vmatprep.subr.bf16.mxu0 0
      %5300 = vmatpush1.bf16.msra.mxu0 0
      %5301 = vmatprep.subr.bf16.mxu0 0
      %5302 = vmatpush1.bf16.msra.mxu0 0
      %5303 = vmatprep.subr.bf16.mxu0 0
      %5304 = vmatpush1.bf16.msra.mxu0 0
      %5305 = vmatprep.mubr.bf16.mxu0 %v4666
      %5306 = vmatmul.mubr.bf16.gmra.mrb[0].mxu0 %v4108
      %v5307 = vpop.f32.mrb[0].mxu0
      %v5308 = vadd.f32 0.0, %v5307
      %v5309 = vpop.f32.mrb[0].mxu0
      %v5310 = vpop.f32.mrb[0].mxu0
      %v5311 = vadd.f32 0.0, %v5310
      %v5312 = vpop.f32.mrb[0].mxu0
      %5313 = vmatprep.mubr.bf16.mxu0 %v4669
      %5314 = vmatmul.mubr.bf16.gmra.mrb[0].mxu0 %v4140
      %v5315 = vpop.f32.mrb[0].mxu0
      %v5316 = vadd.f32 0.0, %v5315
      %v5317 = vpop.f32.mrb[0].mxu0
      %v5318 = vpop.f32.mrb[0].mxu0
      %v5319 = vadd.f32 0.0, %v5318
      %v5320 = vpop.f32.mrb[0].mxu0
      %5321 = vmatprep.mubr.bf16.mxu0 %v4672
      %5322 = vmatmul.mubr.bf16.gmra.mrb[0].mxu0 %v4172
      %v5323 = vpop.f32.mrb[0].mxu0
      %v5324 = vadd.f32 0.0, %v5323
      %v5325 = vpop.f32.mrb[0].mxu0
      %v5326 = vpop.f32.mrb[0].mxu0
      %v5327 = vadd.f32 0.0, %v5326
      %v5328 = vpop.f32.mrb[0].mxu0
      %5329 = vmatprep.mubr.bf16.mxu0 %v4675
      %5330 = vmatmul.mubr.bf16.gmra.mrb[0].mxu0 %v4204
      %v5331 = vpop.f32.mrb[0].mxu0
      %v5332 = vadd.f32 0.0, %v5331
      %v5333 = vpop.f32.mrb[0].mxu0
      %v5334 = vpop.f32.mrb[0].mxu0
      %v5335 = vadd.f32 0.0, %v5334
      %v5336 = vpop.f32.mrb[0].mxu0
      %5337 = vmatprep.mubr.bf16.mxu0 %v4678
      %5338 = vmatmul.mubr.bf16.gmra.mrb[0].mxu0 %v4236
      %v5339 = vpop.f32.mrb[0].mxu0
      %v5340 = vadd.f32 0.0, %v5339
      %v5341 = vpop.f32.mrb[0].mxu0
      %v5342 = vpop.f32.mrb[0].mxu0
      %v5343 = vadd.f32 0.0, %v5342
      %v5344 = vpop.f32.mrb[0].mxu0
      %5345 = vmatprep.mubr.bf16.mxu0 %v4681
      %5346 = vmatmul.mubr.bf16.gmra.mrb[0].mxu0 %v4268
      %v5347 = vpop.f32.mrb[0].mxu0
      %v5348 = vadd.f32 0.0, %v5347
      %v5349 = vpop.f32.mrb[0].mxu0
      %v5350 = vpop.f32.mrb[0].mxu0
      %v5351 = vadd.f32 0.0, %v5350
      %v5352 = vpop.f32.mrb[0].mxu0
      %5353 = vmatprep.mubr.bf16.mxu0 %v4684
      %5354 = vmatmul.mubr.bf16.gmra.mrb[0].mxu0 %v4300
      %v5355 = vpop.f32.mrb[0].mxu0
      %v5356 = vadd.f32 0.0, %v5355
      %v5357 = vpop.f32.mrb[0].mxu0
      %v5358 = vpop.f32.mrb[0].mxu0
      %v5359 = vadd.f32 0.0, %v5358
      %v5360 = vpop.f32.mrb[0].mxu0
      %5361 = vmatprep.mubr.bf16.mxu0 %v4687
      %5362 = vmatmul.mubr.bf16.gmra.mrb[0].mxu0 %v4332
      %v5363 = vpop.f32.mrb[0].mxu0
      %v5364 = vadd.f32 0.0, %v5363
      %v5365 = vpop.f32.mrb[0].mxu0
      %v5366 = vpop.f32.mrb[0].mxu0
      %v5367 = vadd.f32 0.0, %v5366
      %v5368 = vpop.f32.mrb[0].mxu0
      %5369 = vmatprep.mubr.bf16.mxu0 %v4690
      %5370 = vmatmul.mubr.bf16.gmra.mrb[0].mxu0 %v4364
      %v5371 = vpop.f32.mrb[0].mxu0
      %v5372 = vadd.f32 0.0, %v5371
      %v5373 = vpop.f32.mrb[0].mxu0
      %v5374 = vpop.f32.mrb[0].mxu0
      %v5375 = vadd.f32 0.0, %v5374
      %v5376 = vpop.f32.mrb[0].mxu0
      %5377 = vmatprep.mubr.bf16.mxu0 %v4693
      %5378 = vmatmul.mubr.bf16.gmra.mrb[0].mxu0 %v4396
      %v5379 = vpop.f32.mrb[0].mxu0
      %v5380 = vadd.f32 0.0, %v5379
      %v5381 = vpop.f32.mrb[0].mxu0
      %v5382 = vpop.f32.mrb[0].mxu0
      %v5383 = vadd.f32 0.0, %v5382
      %v5384 = vpop.f32.mrb[0].mxu0
      %5385 = vmatprep.mubr.bf16.mxu0 %v4696
      %5386 = vmatmul.mubr.bf16.gmra.mrb[0].mxu0 %v4428
      %v5387 = vpop.f32.mrb[0].mxu0
      %v5388 = vadd.f32 0.0, %v5387
      %v5389 = vpop.f32.mrb[0].mxu0
      %v5390 = vpop.f32.mrb[0].mxu0
      %v5391 = vadd.f32 0.0, %v5390
      %v5392 = vpop.f32.mrb[0].mxu0
      %5393 = vmatprep.mubr.bf16.mxu0 %v4699
      %5394 = vmatmul.mubr.bf16.gmra.mrb[0].mxu0 %v4460
      %v5395 = vpop.f32.mrb[0].mxu0
      %v5396 = vadd.f32 0.0, %v5395
      %v5397 = vpop.f32.mrb[0].mxu0
      %v5398 = vpop.f32.mrb[0].mxu0
      %v5399 = vadd.f32 0.0, %v5398
      %v5400 = vpop.f32.mrb[0].mxu0
      %5401 = vmatprep.mubr.bf16.mxu0 %v4702
      %5402 = vmatmul.mubr.bf16.gmra.mrb[0].mxu0 %v4492
      %v5403 = vpop.f32.mrb[0].mxu0
      %v5404 = vadd.f32 0.0, %v5403
      %v5405 = vpop.f32.mrb[0].mxu0
      %v5406 = vpop.f32.mrb[0].mxu0
      %v5407 = vadd.f32 0.0, %v5406
      %v5408 = vpop.f32.mrb[0].mxu0
      %5409 = vmatprep.mubr.bf16.mxu0 %v4705
      %5410 = vmatmul.mubr.bf16.gmra.mrb[0].mxu0 %v4524
      %v5411 = vpop.f32.mrb[0].mxu0
      %v5412 = vadd.f32 0.0, %v5411
      %v5413 = vpop.f32.mrb[0].mxu0
      %v5414 = vpop.f32.mrb[0].mxu0
      %v5415 = vadd.f32 0.0, %v5414
      %v5416 = vpop.f32.mrb[0].mxu0
      %5417 = vmatprep.mubr.bf16.mxu0 %v4708
      %5418 = vmatmul.mubr.bf16.gmra.mrb[0].mxu0 %v4556
      %v5419 = vpop.f32.mrb[0].mxu0
      %v5420 = vadd.f32 0.0, %v5419
      %v5421 = vpop.f32.mrb[0].mxu0
      %v5422 = vpop.f32.mrb[0].mxu0
      %v5423 = vadd.f32 0.0, %v5422
      %v5424 = vpop.f32.mrb[0].mxu0
      %5425 = vmatprep.mubr.bf16.mxu0 %v5271
      %5426 = vmatmul.mubr.bf16.gmra.mrb[0].mxu0 %v5179
      %v5427 = vpop.f32.mrb[0].mxu0
      %v5428 = vadd.f32 0.0, %v5427
      %v5429 = vpop.f32.mrb[0].mxu0
      %v5430 = vpop.f32.mrb[0].mxu0
      %v5431 = vadd.f32 0.0, %v5430
      %v5432 = vpop.f32.mrb[0].mxu0
      %5433 = vdwg.mxu0
      %v5434 = vadd.f32 %v5014, %v5308
      %v5435 = vadd.f32 %v5017, %v5311
      %v5436 = vadd.f32 %v5022, %v5316
      %v5437 = vadd.f32 %v5025, %v5319
      %v5438 = vadd.f32 %v5030, %v5324
      %v5439 = vadd.f32 %v5033, %v5327
      %v5440 = vadd.f32 %v5038, %v5332
      %v5441 = vadd.f32 %v5041, %v5335
      %v5442 = vadd.f32 %v5046, %v5340
      %v5443 = vadd.f32 %v5049, %v5343
      %v5444 = vadd.f32 %v5054, %v5348
      %v5445 = vadd.f32 %v5057, %v5351
      %v5446 = vadd.f32 %v5062, %v5356
      %v5447 = vadd.f32 %v5065, %v5359
      %v5448 = vadd.f32 %v5070, %v5364
      %v5449 = vadd.f32 %v5073, %v5367
      %v5450 = vadd.f32 %v5078, %v5372
      %v5451 = vadd.f32 %v5081, %v5375
      %v5452 = vadd.f32 %v5086, %v5380
      %v5453 = vadd.f32 %v5089, %v5383
      %v5454 = vadd.f32 %v5094, %v5388
      %v5455 = vadd.f32 %v5097, %v5391
      %v5456 = vadd.f32 %v5102, %v5396
      %v5457 = vadd.f32 %v5105, %v5399
      %v5458 = vadd.f32 %v5110, %v5404
      %v5459 = vadd.f32 %v5113, %v5407
      %v5460 = vadd.f32 %v5118, %v5412
      %v5461 = vadd.f32 %v5121, %v5415
      %v5462 = vadd.f32 %v5126, %v5420
      %v5463 = vadd.f32 %v5129, %v5423
      %v5464 = vadd.f32 %v5134, %v5428
      %v5465 = vadd.f32 %v5137, %v5431
      %v5466 = vld [vmem:[%s4] sm:$0x1]
      %v5468 = vlaneseq
      %v5469 = vshrl.u32 %v5468, 7
      %v5470 = vsub.s32 0, %v5469
      %v5471 = vrot.slane %v5466, %v5470
      %v5473 = vadd.f32 %v5434, %v5471
      %v5474 = vadd.f32 %v5435, %v5471
      %v5475 = vadd.f32 %v5436, %v5471
      %v5476 = vadd.f32 %v5437, %v5471
      %v5477 = vadd.f32 %v5438, %v5471
      %v5478 = vadd.f32 %v5439, %v5471
      %v5479 = vadd.f32 %v5440, %v5471
      %v5480 = vadd.f32 %v5441, %v5471
      %v5481 = vadd.f32 %v5442, %v5471
      %v5482 = vadd.f32 %v5443, %v5471
      %v5483 = vadd.f32 %v5444, %v5471
      %v5484 = vadd.f32 %v5445, %v5471
      %v5485 = vadd.f32 %v5446, %v5471
      %v5486 = vadd.f32 %v5447, %v5471
      %v5487 = vadd.f32 %v5448, %v5471
      %v5488 = vadd.f32 %v5449, %v5471
      %v5489 = vadd.f32 %v5450, %v5471
      %v5490 = vadd.f32 %v5451, %v5471
      %v5491 = vadd.f32 %v5452, %v5471
      %v5492 = vadd.f32 %v5453, %v5471
      %v5493 = vadd.f32 %v5454, %v5471
      %v5494 = vadd.f32 %v5455, %v5471
      %v5495 = vadd.f32 %v5456, %v5471
      %v5496 = vadd.f32 %v5457, %v5471
      %v5497 = vadd.f32 %v5458, %v5471
      %v5498 = vadd.f32 %v5459, %v5471
      %v5499 = vadd.f32 %v5460, %v5471
      %v5500 = vadd.f32 %v5461, %v5471
      %v5501 = vadd.f32 %v5462, %v5471
      %v5502 = vadd.f32 %v5463, %v5471
      %v5503 = vadd.f32 %v5464, %v5471
      %v5504 = vadd.f32 %v5465, %v5471
      %v5505 = vmax.f32 %v5473, 0.0
      %v5506 = vmax.f32 %v5474, 0.0
      %v5507 = vmax.f32 %v5475, 0.0
      %v5508 = vmax.f32 %v5476, 0.0
      %v5509 = vmax.f32 %v5477, 0.0
      %v5510 = vmax.f32 %v5478, 0.0
      %v5511 = vmax.f32 %v5479, 0.0
      %v5512 = vmax.f32 %v5480, 0.0
      %v5513 = vmax.f32 %v5481, 0.0
      %v5514 = vmax.f32 %v5482, 0.0
      %v5515 = vmax.f32 %v5483, 0.0
      %v5516 = vmax.f32 %v5484, 0.0
      %v5517 = vmax.f32 %v5485, 0.0
      %v5518 = vmax.f32 %v5486, 0.0
      %v5519 = vmax.f32 %v5487, 0.0
      %v5520 = vmax.f32 %v5488, 0.0
      %v5521 = vmax.f32 %v5489, 0.0
      %v5522 = vmax.f32 %v5490, 0.0
      %v5523 = vmax.f32 %v5491, 0.0
      %v5524 = vmax.f32 %v5492, 0.0
      %v5525 = vmax.f32 %v5493, 0.0
      %v5526 = vmax.f32 %v5494, 0.0
      %v5527 = vmax.f32 %v5495, 0.0
      %v5528 = vmax.f32 %v5496, 0.0
      %v5529 = vmax.f32 %v5497, 0.0
      %v5530 = vmax.f32 %v5498, 0.0
      %v5531 = vmax.f32 %v5499, 0.0
      %v5532 = vmax.f32 %v5500, 0.0
      %v5533 = vmax.f32 %v5501, 0.0
      %v5534 = vmax.f32 %v5502, 0.0
      %v5535 = vmax.f32 %v5503, 0.0
      %v5536 = vmax.f32 %v5504, 0.0
      %v5537 = vpack.c.bf16 %v5506, %v5505
      %v5538 = vpack.c.bf16 %v5508, %v5507
      %v5539 = vpack.c.bf16 %v5510, %v5509
      %v5540 = vpack.c.bf16 %v5512, %v5511
      %v5541 = vpack.c.bf16 %v5514, %v5513
      %v5542 = vpack.c.bf16 %v5516, %v5515
      %v5543 = vpack.c.bf16 %v5518, %v5517
      %v5544 = vpack.c.bf16 %v5520, %v5519
      %v5545 = vpack.c.bf16 %v5522, %v5521
      %v5546 = vpack.c.bf16 %v5524, %v5523
      %v5547 = vpack.c.bf16 %v5526, %v5525
      %v5548 = vpack.c.bf16 %v5528, %v5527
      %v5549 = vpack.c.bf16 %v5530, %v5529
      %v5550 = vpack.c.bf16 %v5532, %v5531
      %v5551 = vpack.c.bf16 %v5534, %v5533
      %v5552 = vpack.c.bf16 %v5536, %v5535
      %v5569 = vrot.slane %v5537, 4
      %v5570 = vrot.slane %v5538, 4
      %v5571 = vrot.slane %v5539, 4
      %v5572 = vrot.slane %v5540, 4
      %v5573 = vrot.slane %v5541, 4
      %v5574 = vrot.slane %v5542, 4
      %v5575 = vrot.slane %v5543, 4
      %v5576 = vrot.slane %v5544, 4
      %v5577 = vrot.slane %v5545, 4
      %v5578 = vrot.slane %v5546, 4
      %v5579 = vrot.slane %v5547, 4
      %v5580 = vrot.slane %v5548, 4
      %v5581 = vrot.slane %v5549, 4
      %v5582 = vrot.slane %v5550, 4
      %v5583 = vrot.slane %v5551, 4
      %v5584 = vrot.slane %v5552, 4
      %s5601 = scalar_lea.vmem [#allocation4], 16
      %5602 = vst [vmem:[%s5601] sm:$0xf0] %v5569
      %5603 = vst [vmem:[%s5601 + $0x8] sm:$0xf] %v5569
      %5604 = vst [vmem:[%s5601 + $0x10] sm:$0xf0] %v5570
      %5605 = vst [vmem:[%s5601 + $0x18] sm:$0xf] %v5570
      %5606 = vst [vmem:[%s5601 + $0x20] sm:$0xf0] %v5571
      %5607 = vst [vmem:[%s5601 + $0x28] sm:$0xf] %v5571
      %5608 = vst [vmem:[%s5601 + $0x30] sm:$0xf0] %v5572
      %5609 = vst [vmem:[%s5601 + $0x38] sm:$0xf] %v5572
      %5610 = vst [vmem:[%s5601 + $0x40] sm:$0xf0] %v5573
      %5611 = vst [vmem:[%s5601 + $0x48] sm:$0xf] %v5573
      %5612 = vst [vmem:[%s5601 + $0x50] sm:$0xf0] %v5574
      %5613 = vst [vmem:[%s5601 + $0x58] sm:$0xf] %v5574
      %5614 = vst [vmem:[%s5601 + $0x60] sm:$0xf0] %v5575
      %5615 = vst [vmem:[%s5601 + $0x68] sm:$0xf] %v5575
      %5616 = vst [vmem:[%s5601 + $0x70] sm:$0xf0] %v5576
      %5617 = vst [vmem:[%s5601 + $0x78] sm:$0xf] %v5576
      %5618 = vst [vmem:[%s5601 + $0x80] sm:$0xf0] %v5577
      %5619 = vst [vmem:[%s5601 + $0x88] sm:$0xf] %v5577
      %5620 = vst [vmem:[%s5601 + $0x90] sm:$0xf0] %v5578
      %5621 = vst [vmem:[%s5601 + $0x98] sm:$0xf] %v5578
      %5622 = vst [vmem:[%s5601 + $0xa0] sm:$0xf0] %v5579
      %5623 = vst [vmem:[%s5601 + $0xa8] sm:$0xf] %v5579
      %5624 = vst [vmem:[%s5601 + $0xb0] sm:$0xf0] %v5580
      %5625 = vst [vmem:[%s5601 + $0xb8] sm:$0xf] %v5580
      %5626 = vst [vmem:[%s5601 + $0xc0] sm:$0xf0] %v5581
      %5627 = vst [vmem:[%s5601 + $0xc8] sm:$0xf] %v5581
      %5628 = vst [vmem:[%s5601 + $0xd0] sm:$0xf0] %v5582
      %5629 = vst [vmem:[%s5601 + $0xd8] sm:$0xf] %v5582
      %5630 = vst [vmem:[%s5601 + $0xe0] sm:$0xf0] %v5583
      %5631 = vst [vmem:[%s5601 + $0xe8] sm:$0xf] %v5583
      %5632 = vst [vmem:[%s5601 + $0xf0] sm:$0xf0] %v5584
      %5633 = vst [vmem:[%s5601 + $0xf8] sm:$0xf] %v5584
      %v5634 = vld [vmem:[#allocation4] sm:$0xf8]
      %v5635 = vld [vmem:[#allocation4 + $0x8] sm:$0xf]
      %v5636 = vld [vmem:[#allocation4 + $0x10] sm:$0xf8]
      %v5637 = vld [vmem:[#allocation4 + $0x18] sm:$0xf]
      %v5638 = vld [vmem:[#allocation4 + $0x20] sm:$0xf8]
      %v5639 = vld [vmem:[#allocation4 + $0x28] sm:$0xf]
      %v5640 = vld [vmem:[#allocation4 + $0x30] sm:$0xf8]
      %v5641 = vld [vmem:[#allocation4 + $0x38] sm:$0xf]
      %v5642 = vld [vmem:[#allocation4 + $0x40] sm:$0xf8]
      %v5643 = vld [vmem:[#allocation4 + $0x48] sm:$0xf]
      %v5644 = vld [vmem:[#allocation4 + $0x50] sm:$0xf8]
      %v5645 = vld [vmem:[#allocation4 + $0x58] sm:$0xf]
      %v5646 = vld [vmem:[#allocation4 + $0x60] sm:$0xf8]
      %v5647 = vld [vmem:[#allocation4 + $0x68] sm:$0xf]
      %v5648 = vld [vmem:[#allocation4 + $0x70] sm:$0xf8]
      %v5649 = vld [vmem:[#allocation4 + $0x78] sm:$0xf]
      %v5650 = vld [vmem:[#allocation4 + $0x80] sm:$0xf8]
      %v5651 = vld [vmem:[#allocation4 + $0x88] sm:$0xf]
      %v5652 = vld [vmem:[#allocation4 + $0x90] sm:$0xf8]
      %v5653 = vld [vmem:[#allocation4 + $0x98] sm:$0xf]
      %v5654 = vld [vmem:[#allocation4 + $0xa0] sm:$0xf8]
      %v5655 = vld [vmem:[#allocation4 + $0xa8] sm:$0xf]
      %v5656 = vld [vmem:[#allocation4 + $0xb0] sm:$0xf8]
      %v5657 = vld [vmem:[#allocation4 + $0xb8] sm:$0xf]
      %v5658 = vld [vmem:[#allocation4 + $0xc0] sm:$0xf8]
      %v5659 = vld [vmem:[#allocation4 + $0xc8] sm:$0xf]
      %v5660 = vld [vmem:[#allocation4 + $0xd0] sm:$0xf8]
      %v5661 = vld [vmem:[#allocation4 + $0xd8] sm:$0xf]
      %v5662 = vld [vmem:[#allocation4 + $0xe0] sm:$0xf8]
      %v5663 = vld [vmem:[#allocation4 + $0xe8] sm:$0xf]
      %v5664 = vld [vmem:[#allocation4 + $0xf0] sm:$0xf8]
      %v5665 = vld [vmem:[#allocation4 + $0xf8] sm:$0xf]
      %v5666 = vld [vmem:[#allocation4 + $0x100] sm:$0xf8]
      %v5667 = vld [vmem:[#allocation4 + $0x108] sm:$0xf]
      %v5668 = vld [vmem:[#allocation4 + $0x110] sm:$0xf8]
      %v5669 = vld [vmem:[#allocation4 + $0x118] sm:$0xf]
      %v5670 = vld [vmem:[#allocation4] sm:$0xf0]
      %v5671 = vld [vmem:[#allocation4 + $0x10] sm:$0xf0]
      %v5672 = vld [vmem:[#allocation4 + $0x20] sm:$0xf0]
      %v5673 = vld [vmem:[#allocation4 + $0x30] sm:$0xf0]
      %v5674 = vld [vmem:[#allocation4 + $0x40] sm:$0xf0]
      %v5675 = vld [vmem:[#allocation4 + $0x50] sm:$0xf0]
      %v5676 = vld [vmem:[#allocation4 + $0x60] sm:$0xf0]
      %v5677 = vld [vmem:[#allocation4 + $0x70] sm:$0xf0]
      %v5678 = vld [vmem:[#allocation4 + $0x80] sm:$0xf0]
      %v5679 = vld [vmem:[#allocation4 + $0x90] sm:$0xf0]
      %v5680 = vld [vmem:[#allocation4 + $0xa0] sm:$0xf0]
      %v5681 = vld [vmem:[#allocation4 + $0xb0] sm:$0xf0]
      %v5682 = vld [vmem:[#allocation4 + $0xc0] sm:$0xf0]
      %v5683 = vld [vmem:[#allocation4 + $0xd0] sm:$0xf0]
      %v5684 = vld [vmem:[#allocation4 + $0xe0] sm:$0xf0]
      %v5685 = vld [vmem:[#allocation4 + $0xf0] sm:$0xf0]
      %v5686 = vld [vmem:[#allocation4 + $0x100] sm:$0xf0]
      %v5687 = vld [vmem:[#allocation4 + $0x110] sm:$0xf0]
      %v5688 = vld [vmem:[#allocation4 + $0x8] sm:$0x1f]
      %v5689 = vld [vmem:[#allocation4 + $0x18] sm:$0x1f]
      %v5690 = vld [vmem:[#allocation4 + $0x28] sm:$0x1f]
      %v5691 = vld [vmem:[#allocation4 + $0x38] sm:$0x1f]
      %v5692 = vld [vmem:[#allocation4 + $0x48] sm:$0x1f]
      %v5693 = vld [vmem:[#allocation4 + $0x58] sm:$0x1f]
      %v5694 = vld [vmem:[#allocation4 + $0x68] sm:$0x1f]
      %v5695 = vld [vmem:[#allocation4 + $0x78] sm:$0x1f]
      %v5696 = vld [vmem:[#allocation4 + $0x88] sm:$0x1f]
      %v5697 = vld [vmem:[#allocation4 + $0x98] sm:$0x1f]
      %v5698 = vld [vmem:[#allocation4 + $0xa8] sm:$0x1f]
      %v5699 = vld [vmem:[#allocation4 + $0xb8] sm:$0x1f]
      %v5700 = vld [vmem:[#allocation4 + $0xc8] sm:$0x1f]
      %v5701 = vld [vmem:[#allocation4 + $0xd8] sm:$0x1f]
      %v5702 = vld [vmem:[#allocation4 + $0xe8] sm:$0x1f]
      %v5703 = vld [vmem:[#allocation4 + $0xf8] sm:$0x1f]
      %v5704 = vld [vmem:[#allocation4 + $0x108] sm:$0x1f]
      %v5705 = vld [vmem:[#allocation4 + $0x118] sm:$0x1f]
      %v5707 = vshrl.u32 %v5670, 16
      %v5709 = vshll.u32 %v5670, 16
      %v5711 = vrot.slane %v5709, 1
      %v5712 = vor.u32 %v5707, %v5711
      %v5714 = vshll.u32 %v5635, 16
      %v5716 = vrot.slane %v5714, 1
      %v5717 = vsel %vm3489, %v5712, %v5716
      %v5718 = vshrl.u32 %v5635, 16
      %v5720 = vor.u32 %v5718, %v5716
      %v5722 = vshrl.u32 %v5671, 16
      %v5724 = vshll.u32 %v5671, 16
      %v5726 = vrot.slane %v5724, 1
      %v5727 = vor.u32 %v5722, %v5726
      %v5729 = vshll.u32 %v5637, 16
      %v5731 = vrot.slane %v5729, 1
      %v5732 = vsel %vm3489, %v5727, %v5731
      %v5733 = vshrl.u32 %v5637, 16
      %v5735 = vor.u32 %v5733, %v5731
      %v5737 = vshrl.u32 %v5672, 16
      %v5739 = vshll.u32 %v5672, 16
      %v5741 = vrot.slane %v5739, 1
      %v5742 = vor.u32 %v5737, %v5741
      %v5744 = vshll.u32 %v5639, 16
      %v5746 = vrot.slane %v5744, 1
      %v5747 = vsel %vm3489, %v5742, %v5746
      %v5748 = vshrl.u32 %v5639, 16
      %v5750 = vor.u32 %v5748, %v5746
      %v5752 = vshrl.u32 %v5673, 16
      %v5754 = vshll.u32 %v5673, 16
      %v5756 = vrot.slane %v5754, 1
      %v5757 = vor.u32 %v5752, %v5756
      %v5759 = vshll.u32 %v5641, 16
      %v5761 = vrot.slane %v5759, 1
      %v5762 = vsel %vm3489, %v5757, %v5761
      %v5763 = vshrl.u32 %v5641, 16
      %v5765 = vor.u32 %v5763, %v5761
      %v5767 = vshrl.u32 %v5674, 16
      %v5769 = vshll.u32 %v5674, 16
      %v5771 = vrot.slane %v5769, 1
      %v5772 = vor.u32 %v5767, %v5771
      %v5774 = vshll.u32 %v5643, 16
      %v5776 = vrot.slane %v5774, 1
      %v5777 = vsel %vm3489, %v5772, %v5776
      %v5778 = vshrl.u32 %v5643, 16
      %v5780 = vor.u32 %v5778, %v5776
      %v5782 = vshrl.u32 %v5675, 16
      %v5784 = vshll.u32 %v5675, 16
      %v5786 = vrot.slane %v5784, 1
      %v5787 = vor.u32 %v5782, %v5786
      %v5789 = vshll.u32 %v5645, 16
      %v5791 = vrot.slane %v5789, 1
      %v5792 = vsel %vm3489, %v5787, %v5791
      %v5793 = vshrl.u32 %v5645, 16
      %v5795 = vor.u32 %v5793, %v5791
      %v5797 = vshrl.u32 %v5676, 16
      %v5799 = vshll.u32 %v5676, 16
      %v5801 = vrot.slane %v5799, 1
      %v5802 = vor.u32 %v5797, %v5801
      %v5804 = vshll.u32 %v5647, 16
      %v5806 = vrot.slane %v5804, 1
      %v5807 = vsel %vm3489, %v5802, %v5806
      %v5808 = vshrl.u32 %v5647, 16
      %v5810 = vor.u32 %v5808, %v5806
      %v5812 = vshrl.u32 %v5677, 16
      %v5814 = vshll.u32 %v5677, 16
      %v5816 = vrot.slane %v5814, 1
      %v5817 = vor.u32 %v5812, %v5816
      %v5819 = vshll.u32 %v5649, 16
      %v5821 = vrot.slane %v5819, 1
      %v5822 = vsel %vm3489, %v5817, %v5821
      %v5823 = vshrl.u32 %v5649, 16
      %v5825 = vor.u32 %v5823, %v5821
      %v5827 = vshrl.u32 %v5678, 16
      %v5829 = vshll.u32 %v5678, 16
      %v5831 = vrot.slane %v5829, 1
      %v5832 = vor.u32 %v5827, %v5831
      %v5834 = vshll.u32 %v5651, 16
      %v5836 = vrot.slane %v5834, 1
      %v5837 = vsel %vm3489, %v5832, %v5836
      %v5838 = vshrl.u32 %v5651, 16
      %v5840 = vor.u32 %v5838, %v5836
      %v5842 = vshrl.u32 %v5679, 16
      %v5844 = vshll.u32 %v5679, 16
      %v5846 = vrot.slane %v5844, 1
      %v5847 = vor.u32 %v5842, %v5846
      %v5849 = vshll.u32 %v5653, 16
      %v5851 = vrot.slane %v5849, 1
      %v5852 = vsel %vm3489, %v5847, %v5851
      %v5853 = vshrl.u32 %v5653, 16
      %v5855 = vor.u32 %v5853, %v5851
      %v5857 = vshrl.u32 %v5680, 16
      %v5859 = vshll.u32 %v5680, 16
      %v5861 = vrot.slane %v5859, 1
      %v5862 = vor.u32 %v5857, %v5861
      %v5864 = vshll.u32 %v5655, 16
      %v5866 = vrot.slane %v5864, 1
      %v5867 = vsel %vm3489, %v5862, %v5866
      %v5868 = vshrl.u32 %v5655, 16
      %v5870 = vor.u32 %v5868, %v5866
      %v5872 = vshrl.u32 %v5681, 16
      %v5874 = vshll.u32 %v5681, 16
      %v5876 = vrot.slane %v5874, 1
      %v5877 = vor.u32 %v5872, %v5876
      %v5879 = vshll.u32 %v5657, 16
      %v5881 = vrot.slane %v5879, 1
      %v5882 = vsel %vm3489, %v5877, %v5881
      %v5883 = vshrl.u32 %v5657, 16
      %v5885 = vor.u32 %v5883, %v5881
      %v5887 = vshrl.u32 %v5682, 16
      %v5889 = vshll.u32 %v5682, 16
      %v5891 = vrot.slane %v5889, 1
      %v5892 = vor.u32 %v5887, %v5891
      %v5894 = vshll.u32 %v5659, 16
      %v5896 = vrot.slane %v5894, 1
      %v5897 = vsel %vm3489, %v5892, %v5896
      %v5898 = vshrl.u32 %v5659, 16
      %v5900 = vor.u32 %v5898, %v5896
      %v5902 = vshrl.u32 %v5683, 16
      %v5904 = vshll.u32 %v5683, 16
      %v5906 = vrot.slane %v5904, 1
      %v5907 = vor.u32 %v5902, %v5906
      %v5909 = vshll.u32 %v5661, 16
      %v5911 = vrot.slane %v5909, 1
      %v5912 = vsel %vm3489, %v5907, %v5911
      %v5913 = vshrl.u32 %v5661, 16
      %v5915 = vor.u32 %v5913, %v5911
      %v5917 = vshrl.u32 %v5684, 16
      %v5919 = vshll.u32 %v5684, 16
      %v5921 = vrot.slane %v5919, 1
      %v5922 = vor.u32 %v5917, %v5921
      %v5924 = vshll.u32 %v5663, 16
      %v5926 = vrot.slane %v5924, 1
      %v5927 = vsel %vm3489, %v5922, %v5926
      %v5928 = vshrl.u32 %v5663, 16
      %v5930 = vor.u32 %v5928, %v5926
      %v5932 = vshrl.u32 %v5685, 16
      %v5934 = vshll.u32 %v5685, 16
      %v5936 = vrot.slane %v5934, 1
      %v5937 = vor.u32 %v5932, %v5936
      %v5939 = vshll.u32 %v5665, 16
      %v5941 = vrot.slane %v5939, 1
      %v5942 = vsel %vm3489, %v5937, %v5941
      %v5943 = vshrl.u32 %v5665, 16
      %v5945 = vor.u32 %v5943, %v5941
      %v5947 = vshrl.u32 %v5686, 16
      %v5949 = vshll.u32 %v5686, 16
      %v5951 = vrot.slane %v5949, 1
      %v5952 = vor.u32 %v5947, %v5951
      %v5954 = vshll.u32 %v5667, 16
      %v5956 = vrot.slane %v5954, 1
      %v5957 = vsel %vm3489, %v5952, %v5956
      %v5958 = vshrl.u32 %v5667, 16
      %v5960 = vor.u32 %v5958, %v5956
      %v5962 = vshrl.u32 %v5687, 16
      %v5964 = vshll.u32 %v5687, 16
      %v5966 = vrot.slane %v5964, 1
      %v5967 = vor.u32 %v5962, %v5966
      %v5969 = vshll.u32 %v5669, 16
      %v5971 = vrot.slane %v5969, 1
      %v5972 = vsel %vm3489, %v5967, %v5971
      %v5973 = vshrl.u32 %v5669, 16
      %v5975 = vor.u32 %v5973, %v5971
      %v6012 = vrot.slane %v5670, 1
      %v6013 = vrot.slane %v5688, 1
      %v6014 = vsel %vm3868, %v6012, %v6013
      %v6015 = vrot.slane %v5671, 1
      %v6016 = vrot.slane %v5689, 1
      %v6017 = vsel %vm3868, %v6015, %v6016
      %v6018 = vrot.slane %v5672, 1
      %v6019 = vrot.slane %v5690, 1
      %v6020 = vsel %vm3868, %v6018, %v6019
      %v6021 = vrot.slane %v5673, 1
      %v6022 = vrot.slane %v5691, 1
      %v6023 = vsel %vm3868, %v6021, %v6022
      %v6024 = vrot.slane %v5674, 1
      %v6025 = vrot.slane %v5692, 1
      %v6026 = vsel %vm3868, %v6024, %v6025
      %v6027 = vrot.slane %v5675, 1
      %v6028 = vrot.slane %v5693, 1
      %v6029 = vsel %vm3868, %v6027, %v6028
      %v6030 = vrot.slane %v5676, 1
      %v6031 = vrot.slane %v5694, 1
      %v6032 = vsel %vm3868, %v6030, %v6031
      %v6033 = vrot.slane %v5677, 1
      %v6034 = vrot.slane %v5695, 1
      %v6035 = vsel %vm3868, %v6033, %v6034
      %v6036 = vrot.slane %v5678, 1
      %v6037 = vrot.slane %v5696, 1
      %v6038 = vsel %vm3868, %v6036, %v6037
      %v6039 = vrot.slane %v5679, 1
      %v6040 = vrot.slane %v5697, 1
      %v6041 = vsel %vm3868, %v6039, %v6040
      %v6042 = vrot.slane %v5680, 1
      %v6043 = vrot.slane %v5698, 1
      %v6044 = vsel %vm3868, %v6042, %v6043
      %v6045 = vrot.slane %v5681, 1
      %v6046 = vrot.slane %v5699, 1
      %v6047 = vsel %vm3868, %v6045, %v6046
      %v6048 = vrot.slane %v5682, 1
      %v6049 = vrot.slane %v5700, 1
      %v6050 = vsel %vm3868, %v6048, %v6049
      %v6051 = vrot.slane %v5683, 1
      %v6052 = vrot.slane %v5701, 1
      %v6053 = vsel %vm3868, %v6051, %v6052
      %v6054 = vrot.slane %v5684, 1
      %v6055 = vrot.slane %v5702, 1
      %v6056 = vsel %vm3868, %v6054, %v6055
      %v6057 = vrot.slane %v5685, 1
      %v6058 = vrot.slane %v5703, 1
      %v6059 = vsel %vm3868, %v6057, %v6058
      %v6060 = vrot.slane %v5686, 1
      %v6061 = vrot.slane %v5704, 1
      %v6062 = vsel %vm3868, %v6060, %v6061
      %v6063 = vrot.slane %v5687, 1
      %v6064 = vrot.slane %v5705, 1
      %v6065 = vsel %vm3868, %v6063, %v6064
      %v6066 = vld [vmem:[%s5] sm:$0xf]
      %v6067 = vld [vmem:[%s5 + $0x4] sm:$0xf]
      %v6068 = vld [vmem:[%s5 + $0x8] sm:$0xf]
      %v6069 = vld [vmem:[%s5 + $0xc] sm:$0xf]
      %v6070 = vld [vmem:[%s5 + $0x10] sm:$0xf]
      %v6071 = vld [vmem:[%s5 + $0x14] sm:$0xf]
      %v6072 = vld [vmem:[%s5 + $0x18] sm:$0xf]
      %v6073 = vld [vmem:[%s5 + $0x1c] sm:$0xf]
      %v6074 = vld [vmem:[%s5 + $0x20] sm:$0xf]
      %v6075 = vld [vmem:[%s5 + $0x24] sm:$0xf]
      %v6076 = vld [vmem:[%s5 + $0x28] sm:$0xf]
      %v6077 = vld [vmem:[%s5 + $0x2c] sm:$0xf]
      %v6078 = vld [vmem:[%s5 + $0x30] sm:$0xf]
      %v6079 = vld [vmem:[%s5 + $0x34] sm:$0xf]
      %v6080 = vld [vmem:[%s5 + $0x38] sm:$0xf]
      %v6081 = vld [vmem:[%s5 + $0x3c] sm:$0xf]
      %v6082 = vld [vmem:[%s5 + $0x40] sm:$0xf]
      %v6083 = vld [vmem:[%s5 + $0x44] sm:$0xf]
      %v6084 = vld [vmem:[%s5 + $0x48] sm:$0xf]
      %v6085 = vld [vmem:[%s5 + $0x4c] sm:$0xf]
      %v6086 = vld [vmem:[%s5 + $0x50] sm:$0xf]
      %v6087 = vld [vmem:[%s5 + $0x54] sm:$0xf]
      %v6088 = vld [vmem:[%s5 + $0x58] sm:$0xf]
      %v6089 = vld [vmem:[%s5 + $0x5c] sm:$0xf]
      %v6090 = vld [vmem:[%s5 + $0x60] sm:$0xf]
      %v6091 = vld [vmem:[%s5 + $0x64] sm:$0xf]
      %v6092 = vld [vmem:[%s5 + $0x68] sm:$0xf]
      %v6093 = vld [vmem:[%s5 + $0x6c] sm:$0xf]
      %v6094 = vld [vmem:[%s5 + $0x70] sm:$0xf]
      %v6095 = vld [vmem:[%s5 + $0x74] sm:$0xf]
      %v6096 = vld [vmem:[%s5 + $0x78] sm:$0xf]
      %v6097 = vld [vmem:[%s5 + $0x7c] sm:$0xf]
      %v6098 = vld [vmem:[%s5 + $0x80] sm:$0xf]
      %v6099 = vld [vmem:[%s5 + $0x84] sm:$0xf]
      %v6100 = vld [vmem:[%s5 + $0x88] sm:$0xf]
      %v6101 = vld [vmem:[%s5 + $0x8c] sm:$0xf]
      %v6102 = vld [vmem:[%s5 + $0x90] sm:$0xf]
      %v6103 = vld [vmem:[%s5 + $0x94] sm:$0xf]
      %v6104 = vld [vmem:[%s5 + $0x98] sm:$0xf]
      %v6105 = vld [vmem:[%s5 + $0x9c] sm:$0xf]
      %v6106 = vld [vmem:[%s5 + $0xa0] sm:$0xf]
      %v6107 = vld [vmem:[%s5 + $0xa4] sm:$0xf]
      %v6108 = vld [vmem:[%s5 + $0xa8] sm:$0xf]
      %v6109 = vld [vmem:[%s5 + $0xac] sm:$0xf]
      %v6110 = vld [vmem:[%s5 + $0xb0] sm:$0xf]
      %v6111 = vld [vmem:[%s5 + $0xb4] sm:$0xf]
      %v6112 = vld [vmem:[%s5 + $0xb8] sm:$0xf]
      %v6113 = vld [vmem:[%s5 + $0xbc] sm:$0xf]
      %s6114 = scalar_lea.vmem %s5, 192
      %v6115 = vld [vmem:[%s6114] sm:$0xf]
      %v6116 = vld [vmem:[%s6114 + $0x4] sm:$0xf]
      %v6117 = vld [vmem:[%s6114 + $0x8] sm:$0xf]
      %v6118 = vld [vmem:[%s6114 + $0xc] sm:$0xf]
      %v6119 = vld [vmem:[%s6114 + $0x10] sm:$0xf]
      %v6120 = vld [vmem:[%s6114 + $0x14] sm:$0xf]
      %v6121 = vld [vmem:[%s6114 + $0x18] sm:$0xf]
      %v6122 = vld [vmem:[%s6114 + $0x1c] sm:$0xf]
      %v6123 = vld [vmem:[%s6114 + $0x20] sm:$0xf]
      %v6124 = vld [vmem:[%s6114 + $0x24] sm:$0xf]
      %v6125 = vld [vmem:[%s6114 + $0x28] sm:$0xf]
      %v6126 = vld [vmem:[%s6114 + $0x2c] sm:$0xf]
      %v6127 = vld [vmem:[%s6114 + $0x30] sm:$0xf]
      %v6128 = vld [vmem:[%s6114 + $0x34] sm:$0xf]
      %v6129 = vld [vmem:[%s6114 + $0x38] sm:$0xf]
      %v6130 = vld [vmem:[%s6114 + $0x3c] sm:$0xf]
      %v6131 = vld [vmem:[%s6114 + $0x40] sm:$0xf]
      %v6132 = vld [vmem:[%s6114 + $0x44] sm:$0xf]
      %v6133 = vld [vmem:[%s6114 + $0x48] sm:$0xf]
      %v6134 = vld [vmem:[%s6114 + $0x4c] sm:$0xf]
      %v6135 = vld [vmem:[%s6114 + $0x50] sm:$0xf]
      %v6136 = vld [vmem:[%s6114 + $0x54] sm:$0xf]
      %v6137 = vld [vmem:[%s6114 + $0x58] sm:$0xf]
      %v6138 = vld [vmem:[%s6114 + $0x5c] sm:$0xf]
      %v6139 = vld [vmem:[%s6114 + $0x60] sm:$0xf]
      %v6140 = vld [vmem:[%s6114 + $0x64] sm:$0xf]
      %v6141 = vld [vmem:[%s6114 + $0x68] sm:$0xf]
      %v6142 = vld [vmem:[%s6114 + $0x6c] sm:$0xf]
      %v6143 = vld [vmem:[%s6114 + $0x70] sm:$0xf]
      %v6144 = vld [vmem:[%s6114 + $0x74] sm:$0xf]
      %v6145 = vld [vmem:[%s6114 + $0x78] sm:$0xf]
      %v6146 = vld [vmem:[%s6114 + $0x7c] sm:$0xf]
      %v6147 = vld [vmem:[%s6114 + $0x80] sm:$0xf]
      %v6148 = vld [vmem:[%s6114 + $0x84] sm:$0xf]
      %v6149 = vld [vmem:[%s6114 + $0x88] sm:$0xf]
      %v6150 = vld [vmem:[%s6114 + $0x8c] sm:$0xf]
      %v6151 = vld [vmem:[%s6114 + $0x90] sm:$0xf]
      %v6152 = vld [vmem:[%s6114 + $0x94] sm:$0xf]
      %v6153 = vld [vmem:[%s6114 + $0x98] sm:$0xf]
      %v6154 = vld [vmem:[%s6114 + $0x9c] sm:$0xf]
      %v6155 = vld [vmem:[%s6114 + $0xa0] sm:$0xf]
      %v6156 = vld [vmem:[%s6114 + $0xa4] sm:$0xf]
      %v6157 = vld [vmem:[%s6114 + $0xa8] sm:$0xf]
      %v6158 = vld [vmem:[%s6114 + $0xac] sm:$0xf]
      %v6159 = vld [vmem:[%s6114 + $0xb0] sm:$0xf]
      %v6160 = vld [vmem:[%s6114 + $0xb4] sm:$0xf]
      %v6161 = vld [vmem:[%s6114 + $0xb8] sm:$0xf]
      %v6162 = vld [vmem:[%s6114 + $0xbc] sm:$0xf]
      %v6164 = vshrl.u32 %v5636, 16
      %v6166 = vrot.slane %v6164, 3
      %v6167 = vshll.u32 %v5636, 16
      %v6169 = vrot.slane %v6167, 4
      %v6170 = vor.u32 %v6166, %v6169
      %v6171 = vrot.slane %v5733, 3
      %v6172 = vrot.slane %v5729, 4
      %v6173 = vor.u32 %v6171, %v6172
      %v6174 = vsel %vm961, %v6170, %v6173
      %v6176 = vshrl.u32 %v5732, 16
      %v6178 = vrot.slane %v6176, 3
      %v6179 = vshll.u32 %v5732, 16
      %v6181 = vrot.slane %v6179, 4
      %v6182 = vor.u32 %v6178, %v6181
      %v6184 = vshrl.u32 %v5735, 16
      %v6186 = vrot.slane %v6184, 3
      %v6187 = vshll.u32 %v5735, 16
      %v6189 = vrot.slane %v6187, 4
      %v6190 = vor.u32 %v6186, %v6189
      %v6191 = vsel %vm961, %v6182, %v6190
      %v6193 = vshrl.u32 %v6017, 16
      %v6195 = vrot.slane %v6193, 3
      %v6196 = vshll.u32 %v6017, 16
      %v6198 = vrot.slane %v6196, 4
      %v6199 = vor.u32 %v6195, %v6198
      %v6201 = vshrl.u32 %v6016, 16
      %v6203 = vrot.slane %v6201, 3
      %v6204 = vshll.u32 %v6016, 16
      %v6206 = vrot.slane %v6204, 4
      %v6207 = vor.u32 %v6203, %v6206
      %v6208 = vsel %vm961, %v6199, %v6207
      %v6210 = vshrl.u32 %v5638, 16
      %v6212 = vrot.slane %v6210, 3
      %v6213 = vshll.u32 %v5638, 16
      %v6215 = vrot.slane %v6213, 4
      %v6216 = vor.u32 %v6212, %v6215
      %v6217 = vrot.slane %v5748, 3
      %v6218 = vrot.slane %v5744, 4
      %v6219 = vor.u32 %v6217, %v6218
      %v6220 = vsel %vm961, %v6216, %v6219
      %v6222 = vshrl.u32 %v5747, 16
      %v6224 = vrot.slane %v6222, 3
      %v6225 = vshll.u32 %v5747, 16
      %v6227 = vrot.slane %v6225, 4
      %v6228 = vor.u32 %v6224, %v6227
      %v6230 = vshrl.u32 %v5750, 16
      %v6232 = vrot.slane %v6230, 3
      %v6233 = vshll.u32 %v5750, 16
      %v6235 = vrot.slane %v6233, 4
      %v6236 = vor.u32 %v6232, %v6235
      %v6237 = vsel %vm961, %v6228, %v6236
      %v6239 = vshrl.u32 %v6020, 16
      %v6241 = vrot.slane %v6239, 3
      %v6242 = vshll.u32 %v6020, 16
      %v6244 = vrot.slane %v6242, 4
      %v6245 = vor.u32 %v6241, %v6244
      %v6247 = vshrl.u32 %v6019, 16
      %v6249 = vrot.slane %v6247, 3
      %v6250 = vshll.u32 %v6019, 16
      %v6252 = vrot.slane %v6250, 4
      %v6253 = vor.u32 %v6249, %v6252
      %v6254 = vsel %vm961, %v6245, %v6253
      %v6256 = vshrl.u32 %v5640, 16
      %v6258 = vrot.slane %v6256, 3
      %v6259 = vshll.u32 %v5640, 16
      %v6261 = vrot.slane %v6259, 4
      %v6262 = vor.u32 %v6258, %v6261
      %v6263 = vrot.slane %v5763, 3
      %v6264 = vrot.slane %v5759, 4
      %v6265 = vor.u32 %v6263, %v6264
      %v6266 = vsel %vm961, %v6262, %v6265
      %v6268 = vshrl.u32 %v5762, 16
      %v6270 = vrot.slane %v6268, 3
      %v6271 = vshll.u32 %v5762, 16
      %v6273 = vrot.slane %v6271, 4
      %v6274 = vor.u32 %v6270, %v6273
      %v6276 = vshrl.u32 %v5765, 16
      %v6278 = vrot.slane %v6276, 3
      %v6279 = vshll.u32 %v5765, 16
      %v6281 = vrot.slane %v6279, 4
      %v6282 = vor.u32 %v6278, %v6281
      %v6283 = vsel %vm961, %v6274, %v6282
      %v6285 = vshrl.u32 %v6023, 16
      %v6287 = vrot.slane %v6285, 3
      %v6288 = vshll.u32 %v6023, 16
      %v6290 = vrot.slane %v6288, 4
      %v6291 = vor.u32 %v6287, %v6290
      %v6293 = vshrl.u32 %v6022, 16
      %v6295 = vrot.slane %v6293, 3
      %v6296 = vshll.u32 %v6022, 16
      %v6298 = vrot.slane %v6296, 4
      %v6299 = vor.u32 %v6295, %v6298
      %v6300 = vsel %vm961, %v6291, %v6299
      %v6302 = vshrl.u32 %v5642, 16
      %v6304 = vrot.slane %v6302, 3
      %v6305 = vshll.u32 %v5642, 16
      %v6307 = vrot.slane %v6305, 4
      %v6308 = vor.u32 %v6304, %v6307
      %v6309 = vrot.slane %v5778, 3
      %v6310 = vrot.slane %v5774, 4
      %v6311 = vor.u32 %v6309, %v6310
      %v6312 = vsel %vm961, %v6308, %v6311
      %v6314 = vshrl.u32 %v5777, 16
      %v6316 = vrot.slane %v6314, 3
      %v6317 = vshll.u32 %v5777, 16
      %v6319 = vrot.slane %v6317, 4
      %v6320 = vor.u32 %v6316, %v6319
      %v6322 = vshrl.u32 %v5780, 16
      %v6324 = vrot.slane %v6322, 3
      %v6325 = vshll.u32 %v5780, 16
      %v6327 = vrot.slane %v6325, 4
      %v6328 = vor.u32 %v6324, %v6327
      %v6329 = vsel %vm961, %v6320, %v6328
      %v6331 = vshrl.u32 %v6026, 16
      %v6333 = vrot.slane %v6331, 3
      %v6334 = vshll.u32 %v6026, 16
      %v6336 = vrot.slane %v6334, 4
      %v6337 = vor.u32 %v6333, %v6336
      %v6339 = vshrl.u32 %v6025, 16
      %v6341 = vrot.slane %v6339, 3
      %v6342 = vshll.u32 %v6025, 16
      %v6344 = vrot.slane %v6342, 4
      %v6345 = vor.u32 %v6341, %v6344
      %v6346 = vsel %vm961, %v6337, %v6345
      %v6348 = vshrl.u32 %v5644, 16
      %v6350 = vrot.slane %v6348, 3
      %v6351 = vshll.u32 %v5644, 16
      %v6353 = vrot.slane %v6351, 4
      %v6354 = vor.u32 %v6350, %v6353
      %v6355 = vrot.slane %v5793, 3
      %v6356 = vrot.slane %v5789, 4
      %v6357 = vor.u32 %v6355, %v6356
      %v6358 = vsel %vm961, %v6354, %v6357
      %v6360 = vshrl.u32 %v5792, 16
      %v6362 = vrot.slane %v6360, 3
      %v6363 = vshll.u32 %v5792, 16
      %v6365 = vrot.slane %v6363, 4
      %v6366 = vor.u32 %v6362, %v6365
      %v6368 = vshrl.u32 %v5795, 16
      %v6370 = vrot.slane %v6368, 3
      %v6371 = vshll.u32 %v5795, 16
      %v6373 = vrot.slane %v6371, 4
      %v6374 = vor.u32 %v6370, %v6373
      %v6375 = vsel %vm961, %v6366, %v6374
      %v6377 = vshrl.u32 %v6029, 16
      %v6379 = vrot.slane %v6377, 3
      %v6380 = vshll.u32 %v6029, 16
      %v6382 = vrot.slane %v6380, 4
      %v6383 = vor.u32 %v6379, %v6382
      %v6385 = vshrl.u32 %v6028, 16
      %v6387 = vrot.slane %v6385, 3
      %v6388 = vshll.u32 %v6028, 16
      %v6390 = vrot.slane %v6388, 4
      %v6391 = vor.u32 %v6387, %v6390
      %v6392 = vsel %vm961, %v6383, %v6391
      %v6394 = vshrl.u32 %v5646, 16
      %v6396 = vrot.slane %v6394, 3
      %v6397 = vshll.u32 %v5646, 16
      %v6399 = vrot.slane %v6397, 4
      %v6400 = vor.u32 %v6396, %v6399
      %v6401 = vrot.slane %v5808, 3
      %v6402 = vrot.slane %v5804, 4
      %v6403 = vor.u32 %v6401, %v6402
      %v6404 = vsel %vm961, %v6400, %v6403
      %v6406 = vshrl.u32 %v5807, 16
      %v6408 = vrot.slane %v6406, 3
      %v6409 = vshll.u32 %v5807, 16
      %v6411 = vrot.slane %v6409, 4
      %v6412 = vor.u32 %v6408, %v6411
      %v6414 = vshrl.u32 %v5810, 16
      %v6416 = vrot.slane %v6414, 3
      %v6417 = vshll.u32 %v5810, 16
      %v6419 = vrot.slane %v6417, 4
      %v6420 = vor.u32 %v6416, %v6419
      %v6421 = vsel %vm961, %v6412, %v6420
      %v6423 = vshrl.u32 %v6032, 16
      %v6425 = vrot.slane %v6423, 3
      %v6426 = vshll.u32 %v6032, 16
      %v6428 = vrot.slane %v6426, 4
      %v6429 = vor.u32 %v6425, %v6428
      %v6431 = vshrl.u32 %v6031, 16
      %v6433 = vrot.slane %v6431, 3
      %v6434 = vshll.u32 %v6031, 16
      %v6436 = vrot.slane %v6434, 4
      %v6437 = vor.u32 %v6433, %v6436
      %v6438 = vsel %vm961, %v6429, %v6437
      %v6440 = vshrl.u32 %v5648, 16
      %v6442 = vrot.slane %v6440, 3
      %v6443 = vshll.u32 %v5648, 16
      %v6445 = vrot.slane %v6443, 4
      %v6446 = vor.u32 %v6442, %v6445
      %v6447 = vrot.slane %v5823, 3
      %v6448 = vrot.slane %v5819, 4
      %v6449 = vor.u32 %v6447, %v6448
      %v6450 = vsel %vm961, %v6446, %v6449
      %v6452 = vshrl.u32 %v5822, 16
      %v6454 = vrot.slane %v6452, 3
      %v6455 = vshll.u32 %v5822, 16
      %v6457 = vrot.slane %v6455, 4
      %v6458 = vor.u32 %v6454, %v6457
      %v6460 = vshrl.u32 %v5825, 16
      %v6462 = vrot.slane %v6460, 3
      %v6463 = vshll.u32 %v5825, 16
      %v6465 = vrot.slane %v6463, 4
      %v6466 = vor.u32 %v6462, %v6465
      %v6467 = vsel %vm961, %v6458, %v6466
      %v6469 = vshrl.u32 %v6035, 16
      %v6471 = vrot.slane %v6469, 3
      %v6472 = vshll.u32 %v6035, 16
      %v6474 = vrot.slane %v6472, 4
      %v6475 = vor.u32 %v6471, %v6474
      %v6477 = vshrl.u32 %v6034, 16
      %v6479 = vrot.slane %v6477, 3
      %v6480 = vshll.u32 %v6034, 16
      %v6482 = vrot.slane %v6480, 4
      %v6483 = vor.u32 %v6479, %v6482
      %v6484 = vsel %vm961, %v6475, %v6483
      %v6486 = vshrl.u32 %v5650, 16
      %v6488 = vrot.slane %v6486, 3
      %v6489 = vshll.u32 %v5650, 16
      %v6491 = vrot.slane %v6489, 4
      %v6492 = vor.u32 %v6488, %v6491
      %v6493 = vrot.slane %v5838, 3
      %v6494 = vrot.slane %v5834, 4
      %v6495 = vor.u32 %v6493, %v6494
      %v6496 = vsel %vm961, %v6492, %v6495
      %v6498 = vshrl.u32 %v5837, 16
      %v6500 = vrot.slane %v6498, 3
      %v6501 = vshll.u32 %v5837, 16
      %v6503 = vrot.slane %v6501, 4
      %v6504 = vor.u32 %v6500, %v6503
      %v6506 = vshrl.u32 %v5840, 16
      %v6508 = vrot.slane %v6506, 3
      %v6509 = vshll.u32 %v5840, 16
      %v6511 = vrot.slane %v6509, 4
      %v6512 = vor.u32 %v6508, %v6511
      %v6513 = vsel %vm961, %v6504, %v6512
      %v6515 = vshrl.u32 %v6038, 16
      %v6517 = vrot.slane %v6515, 3
      %v6518 = vshll.u32 %v6038, 16
      %v6520 = vrot.slane %v6518, 4
      %v6521 = vor.u32 %v6517, %v6520
      %v6523 = vshrl.u32 %v6037, 16
      %v6525 = vrot.slane %v6523, 3
      %v6526 = vshll.u32 %v6037, 16
      %v6528 = vrot.slane %v6526, 4
      %v6529 = vor.u32 %v6525, %v6528
      %v6530 = vsel %vm961, %v6521, %v6529
      %v6532 = vshrl.u32 %v5652, 16
      %v6534 = vrot.slane %v6532, 3
      %v6535 = vshll.u32 %v5652, 16
      %v6537 = vrot.slane %v6535, 4
      %v6538 = vor.u32 %v6534, %v6537
      %v6539 = vrot.slane %v5853, 3
      %v6540 = vrot.slane %v5849, 4
      %v6541 = vor.u32 %v6539, %v6540
      %v6542 = vsel %vm961, %v6538, %v6541
      %v6544 = vshrl.u32 %v5852, 16
      %v6546 = vrot.slane %v6544, 3
      %v6547 = vshll.u32 %v5852, 16
      %v6549 = vrot.slane %v6547, 4
      %v6550 = vor.u32 %v6546, %v6549
      %v6552 = vshrl.u32 %v5855, 16
      %v6554 = vrot.slane %v6552, 3
      %v6555 = vshll.u32 %v5855, 16
      %v6557 = vrot.slane %v6555, 4
      %v6558 = vor.u32 %v6554, %v6557
      %v6559 = vsel %vm961, %v6550, %v6558
      %v6561 = vshrl.u32 %v6041, 16
      %v6563 = vrot.slane %v6561, 3
      %v6564 = vshll.u32 %v6041, 16
      %v6566 = vrot.slane %v6564, 4
      %v6567 = vor.u32 %v6563, %v6566
      %v6569 = vshrl.u32 %v6040, 16
      %v6571 = vrot.slane %v6569, 3
      %v6572 = vshll.u32 %v6040, 16
      %v6574 = vrot.slane %v6572, 4
      %v6575 = vor.u32 %v6571, %v6574
      %v6576 = vsel %vm961, %v6567, %v6575
      %v6578 = vshrl.u32 %v5654, 16
      %v6580 = vrot.slane %v6578, 3
      %v6581 = vshll.u32 %v5654, 16
      %v6583 = vrot.slane %v6581, 4
      %v6584 = vor.u32 %v6580, %v6583
      %v6585 = vrot.slane %v5868, 3
      %v6586 = vrot.slane %v5864, 4
      %v6587 = vor.u32 %v6585, %v6586
      %v6588 = vsel %vm961, %v6584, %v6587
      %v6590 = vshrl.u32 %v5867, 16
      %v6592 = vrot.slane %v6590, 3
      %v6593 = vshll.u32 %v5867, 16
      %v6595 = vrot.slane %v6593, 4
      %v6596 = vor.u32 %v6592, %v6595
      %v6598 = vshrl.u32 %v5870, 16
      %v6600 = vrot.slane %v6598, 3
      %v6601 = vshll.u32 %v5870, 16
      %v6603 = vrot.slane %v6601, 4
      %v6604 = vor.u32 %v6600, %v6603
      %v6605 = vsel %vm961, %v6596, %v6604
      %v6607 = vshrl.u32 %v6044, 16
      %v6609 = vrot.slane %v6607, 3
      %v6610 = vshll.u32 %v6044, 16
      %v6612 = vrot.slane %v6610, 4
      %v6613 = vor.u32 %v6609, %v6612
      %v6615 = vshrl.u32 %v6043, 16
      %v6617 = vrot.slane %v6615, 3
      %v6618 = vshll.u32 %v6043, 16
      %v6620 = vrot.slane %v6618, 4
      %v6621 = vor.u32 %v6617, %v6620
      %v6622 = vsel %vm961, %v6613, %v6621
      %v6624 = vshrl.u32 %v5656, 16
      %v6626 = vrot.slane %v6624, 3
      %v6627 = vshll.u32 %v5656, 16
      %v6629 = vrot.slane %v6627, 4
      %v6630 = vor.u32 %v6626, %v6629
      %v6631 = vrot.slane %v5883, 3
      %v6632 = vrot.slane %v5879, 4
      %v6633 = vor.u32 %v6631, %v6632
      %v6634 = vsel %vm961, %v6630, %v6633
      %v6636 = vshrl.u32 %v5882, 16
      %v6638 = vrot.slane %v6636, 3
      %v6639 = vshll.u32 %v5882, 16
      %v6641 = vrot.slane %v6639, 4
      %v6642 = vor.u32 %v6638, %v6641
      %v6644 = vshrl.u32 %v5885, 16
      %v6646 = vrot.slane %v6644, 3
      %v6647 = vshll.u32 %v5885, 16
      %v6649 = vrot.slane %v6647, 4
      %v6650 = vor.u32 %v6646, %v6649
      %v6651 = vsel %vm961, %v6642, %v6650
      %v6653 = vshrl.u32 %v6047, 16
      %v6655 = vrot.slane %v6653, 3
      %v6656 = vshll.u32 %v6047, 16
      %v6658 = vrot.slane %v6656, 4
      %v6659 = vor.u32 %v6655, %v6658
      %v6661 = vshrl.u32 %v6046, 16
      %v6663 = vrot.slane %v6661, 3
      %v6664 = vshll.u32 %v6046, 16
      %v6666 = vrot.slane %v6664, 4
      %v6667 = vor.u32 %v6663, %v6666
      %v6668 = vsel %vm961, %v6659, %v6667
      %v6670 = vshrl.u32 %v5658, 16
      %v6672 = vrot.slane %v6670, 3
      %v6673 = vshll.u32 %v5658, 16
      %v6675 = vrot.slane %v6673, 4
      %v6676 = vor.u32 %v6672, %v6675
      %v6677 = vrot.slane %v5898, 3
      %v6678 = vrot.slane %v5894, 4
      %v6679 = vor.u32 %v6677, %v6678
      %v6680 = vsel %vm961, %v6676, %v6679
      %v6682 = vshrl.u32 %v5897, 16
      %v6684 = vrot.slane %v6682, 3
      %v6685 = vshll.u32 %v5897, 16
      %v6687 = vrot.slane %v6685, 4
      %v6688 = vor.u32 %v6684, %v6687
      %v6690 = vshrl.u32 %v5900, 16
      %v6692 = vrot.slane %v6690, 3
      %v6693 = vshll.u32 %v5900, 16
      %v6695 = vrot.slane %v6693, 4
      %v6696 = vor.u32 %v6692, %v6695
      %v6697 = vsel %vm961, %v6688, %v6696
      %v6699 = vshrl.u32 %v6050, 16
      %v6701 = vrot.slane %v6699, 3
      %v6702 = vshll.u32 %v6050, 16
      %v6704 = vrot.slane %v6702, 4
      %v6705 = vor.u32 %v6701, %v6704
      %v6707 = vshrl.u32 %v6049, 16
      %v6709 = vrot.slane %v6707, 3
      %v6710 = vshll.u32 %v6049, 16
      %v6712 = vrot.slane %v6710, 4
      %v6713 = vor.u32 %v6709, %v6712
      %v6714 = vsel %vm961, %v6705, %v6713
      %v6716 = vshrl.u32 %v5660, 16
      %v6718 = vrot.slane %v6716, 3
      %v6719 = vshll.u32 %v5660, 16
      %v6721 = vrot.slane %v6719, 4
      %v6722 = vor.u32 %v6718, %v6721
      %v6723 = vrot.slane %v5913, 3
      %v6724 = vrot.slane %v5909, 4
      %v6725 = vor.u32 %v6723, %v6724
      %v6726 = vsel %vm961, %v6722, %v6725
      %v6728 = vshrl.u32 %v5912, 16
      %v6730 = vrot.slane %v6728, 3
      %v6731 = vshll.u32 %v5912, 16
      %v6733 = vrot.slane %v6731, 4
      %v6734 = vor.u32 %v6730, %v6733
      %v6736 = vshrl.u32 %v5915, 16
      %v6738 = vrot.slane %v6736, 3
      %v6739 = vshll.u32 %v5915, 16
      %v6741 = vrot.slane %v6739, 4
      %v6742 = vor.u32 %v6738, %v6741
      %v6743 = vsel %vm961, %v6734, %v6742
      %v6745 = vshrl.u32 %v6053, 16
      %v6747 = vrot.slane %v6745, 3
      %v6748 = vshll.u32 %v6053, 16
      %v6750 = vrot.slane %v6748, 4
      %v6751 = vor.u32 %v6747, %v6750
      %v6753 = vshrl.u32 %v6052, 16
      %v6755 = vrot.slane %v6753, 3
      %v6756 = vshll.u32 %v6052, 16
      %v6758 = vrot.slane %v6756, 4
      %v6759 = vor.u32 %v6755, %v6758
      %v6760 = vsel %vm961, %v6751, %v6759
      %v6762 = vshrl.u32 %v5662, 16
      %v6764 = vrot.slane %v6762, 3
      %v6765 = vshll.u32 %v5662, 16
      %v6767 = vrot.slane %v6765, 4
      %v6768 = vor.u32 %v6764, %v6767
      %v6769 = vrot.slane %v5928, 3
      %v6770 = vrot.slane %v5924, 4
      %v6771 = vor.u32 %v6769, %v6770
      %v6772 = vsel %vm961, %v6768, %v6771
      %v6774 = vshrl.u32 %v5927, 16
      %v6776 = vrot.slane %v6774, 3
      %v6777 = vshll.u32 %v5927, 16
      %v6779 = vrot.slane %v6777, 4
      %v6780 = vor.u32 %v6776, %v6779
      %v6782 = vshrl.u32 %v5930, 16
      %v6784 = vrot.slane %v6782, 3
      %v6785 = vshll.u32 %v5930, 16
      %v6787 = vrot.slane %v6785, 4
      %v6788 = vor.u32 %v6784, %v6787
      %v6789 = vsel %vm961, %v6780, %v6788
      %v6791 = vshrl.u32 %v6056, 16
      %v6793 = vrot.slane %v6791, 3
      %v6794 = vshll.u32 %v6056, 16
      %v6796 = vrot.slane %v6794, 4
      %v6797 = vor.u32 %v6793, %v6796
      %v6799 = vshrl.u32 %v6055, 16
      %v6801 = vrot.slane %v6799, 3
      %v6802 = vshll.u32 %v6055, 16
      %v6804 = vrot.slane %v6802, 4
      %v6805 = vor.u32 %v6801, %v6804
      %v6806 = vsel %vm961, %v6797, %v6805
      %v6808 = vshrl.u32 %v5664, 16
      %v6810 = vrot.slane %v6808, 3
      %v6811 = vshll.u32 %v5664, 16
      %v6813 = vrot.slane %v6811, 4
      %v6814 = vor.u32 %v6810, %v6813
      %v6815 = vrot.slane %v5943, 3
      %v6816 = vrot.slane %v5939, 4
      %v6817 = vor.u32 %v6815, %v6816
      %v6818 = vsel %vm961, %v6814, %v6817
      %v6820 = vshrl.u32 %v5942, 16
      %v6822 = vrot.slane %v6820, 3
      %v6823 = vshll.u32 %v5942, 16
      %v6825 = vrot.slane %v6823, 4
      %v6826 = vor.u32 %v6822, %v6825
      %v6828 = vshrl.u32 %v5945, 16
      %v6830 = vrot.slane %v6828, 3
      %v6831 = vshll.u32 %v5945, 16
      %v6833 = vrot.slane %v6831, 4
      %v6834 = vor.u32 %v6830, %v6833
      %v6835 = vsel %vm961, %v6826, %v6834
      %v6837 = vshrl.u32 %v6059, 16
      %v6839 = vrot.slane %v6837, 3
      %v6840 = vshll.u32 %v6059, 16
      %v6842 = vrot.slane %v6840, 4
      %v6843 = vor.u32 %v6839, %v6842
      %v6845 = vshrl.u32 %v6058, 16
      %v6847 = vrot.slane %v6845, 3
      %v6848 = vshll.u32 %v6058, 16
      %v6850 = vrot.slane %v6848, 4
      %v6851 = vor.u32 %v6847, %v6850
      %v6852 = vsel %vm961, %v6843, %v6851
      %v6854 = vshrl.u32 %v5666, 16
      %v6856 = vrot.slane %v6854, 3
      %v6857 = vshll.u32 %v5666, 16
      %v6859 = vrot.slane %v6857, 4
      %v6860 = vor.u32 %v6856, %v6859
      %v6861 = vrot.slane %v5958, 3
      %v6862 = vrot.slane %v5954, 4
      %v6863 = vor.u32 %v6861, %v6862
      %v6864 = vsel %vm961, %v6860, %v6863
      %v6866 = vshrl.u32 %v5957, 16
      %v6868 = vrot.slane %v6866, 3
      %v6869 = vshll.u32 %v5957, 16
      %v6871 = vrot.slane %v6869, 4
      %v6872 = vor.u32 %v6868, %v6871
      %v6874 = vshrl.u32 %v5960, 16
      %v6876 = vrot.slane %v6874, 3
      %v6877 = vshll.u32 %v5960, 16
      %v6879 = vrot.slane %v6877, 4
      %v6880 = vor.u32 %v6876, %v6879
      %v6881 = vsel %vm961, %v6872, %v6880
      %v6883 = vshrl.u32 %v6062, 16
      %v6885 = vrot.slane %v6883, 3
      %v6886 = vshll.u32 %v6062, 16
      %v6888 = vrot.slane %v6886, 4
      %v6889 = vor.u32 %v6885, %v6888
      %v6891 = vshrl.u32 %v6061, 16
      %v6893 = vrot.slane %v6891, 3
      %v6894 = vshll.u32 %v6061, 16
      %v6896 = vrot.slane %v6894, 4
      %v6897 = vor.u32 %v6893, %v6896
      %v6898 = vsel %vm961, %v6889, %v6897
      %v6995 = vunpack.c.l.b16 %v6115
      %v6996 = vunpack.c.l.b16 %v6116
      %v6997 = vunpack.c.l.b16 %v6117
      %v6998 = vunpack.c.l.b16 %v6118
      %v6999 = vunpack.c.l.b16 %v6119
      %v7000 = vunpack.c.l.b16 %v6120
      %v7001 = vunpack.c.l.b16 %v6121
      %v7002 = vunpack.c.l.b16 %v6122
      %v7003 = vunpack.c.l.b16 %v6123
      %v7004 = vunpack.c.l.b16 %v6124
      %v7005 = vunpack.c.l.b16 %v6125
      %v7006 = vunpack.c.l.b16 %v6126
      %v7007 = vunpack.c.l.b16 %v6127
      %v7008 = vunpack.c.l.b16 %v6128
      %v7009 = vunpack.c.l.b16 %v6129
      %v7010 = vunpack.c.l.b16 %v6130
      %v7011 = vunpack.c.l.b16 %v6131
      %v7012 = vunpack.c.l.b16 %v6132
      %v7013 = vunpack.c.l.b16 %v6133
      %v7014 = vunpack.c.l.b16 %v6134
      %v7015 = vunpack.c.l.b16 %v6135
      %v7016 = vunpack.c.l.b16 %v6136
      %v7017 = vunpack.c.l.b16 %v6137
      %v7018 = vunpack.c.l.b16 %v6138
      %v7019 = vunpack.c.l.b16 %v6139
      %v7020 = vunpack.c.l.b16 %v6140
      %v7021 = vunpack.c.l.b16 %v6141
      %v7022 = vunpack.c.l.b16 %v6142
      %v7023 = vunpack.c.l.b16 %v6143
      %v7024 = vunpack.c.l.b16 %v6144
      %v7025 = vunpack.c.l.b16 %v6145
      %v7026 = vunpack.c.l.b16 %v6146
      %v7027 = vunpack.c.l.b16 %v6147
      %v7028 = vunpack.c.l.b16 %v6148
      %v7029 = vunpack.c.l.b16 %v6149
      %v7030 = vunpack.c.l.b16 %v6150
      %v7031 = vunpack.c.l.b16 %v6151
      %v7032 = vunpack.c.l.b16 %v6152
      %v7033 = vunpack.c.l.b16 %v6153
      %v7034 = vunpack.c.l.b16 %v6154
      %v7035 = vunpack.c.l.b16 %v6155
      %v7036 = vunpack.c.l.b16 %v6156
      %v7037 = vunpack.c.l.b16 %v6157
      %v7038 = vunpack.c.l.b16 %v6158
      %v7039 = vunpack.c.l.b16 %v6159
      %v7040 = vunpack.c.l.b16 %v6160
      %v7041 = vunpack.c.l.b16 %v6161
      %v7042 = vunpack.c.l.b16 %v6162
      %v7043 = vpack.c.b16 %v6996, %v6995
      %v7044 = vpack.c.b16 %v6998, %v6997
      %v7045 = vpack.c.b16 %v7000, %v6999
      %v7046 = vpack.c.b16 %v7002, %v7001
      %v7047 = vpack.c.b16 %v7004, %v7003
      %v7048 = vpack.c.b16 %v7006, %v7005
      %v7049 = vpack.c.b16 %v7008, %v7007
      %v7050 = vpack.c.b16 %v7010, %v7009
      %v7051 = vpack.c.b16 %v7012, %v7011
      %v7052 = vpack.c.b16 %v7014, %v7013
      %v7053 = vpack.c.b16 %v7016, %v7015
      %v7054 = vpack.c.b16 %v7018, %v7017
      %v7055 = vpack.c.b16 %v7020, %v7019
      %v7056 = vpack.c.b16 %v7022, %v7021
      %v7057 = vpack.c.b16 %v7024, %v7023
      %v7058 = vpack.c.b16 %v7026, %v7025
      %v7059 = vpack.c.b16 %v7028, %v7027
      %v7060 = vpack.c.b16 %v7030, %v7029
      %v7061 = vpack.c.b16 %v7032, %v7031
      %v7062 = vpack.c.b16 %v7034, %v7033
      %v7063 = vpack.c.b16 %v7036, %v7035
      %v7064 = vpack.c.b16 %v7038, %v7037
      %v7065 = vpack.c.b16 %v7040, %v7039
      %v7066 = vpack.c.b16 %v7042, %v7041
      %7091 = vmatprep.subr.bf16.mxu0 0
      %7092 = vmatpush1.bf16.msra.mxu0 %v7043
      %7093 = vmatprep.subr.bf16.mxu0 0
      %7094 = vmatpush1.bf16.msra.mxu0 %v7044
      %7095 = vmatprep.subr.bf16.mxu0 0
      %7096 = vmatpush1.bf16.msra.mxu0 %v7045
      %7097 = vmatprep.subr.bf16.mxu0 0
      %7098 = vmatpush1.bf16.msra.mxu0 %v7046
      %7099 = vmatprep.subr.bf16.mxu0 0
      %7100 = vmatpush1.bf16.msra.mxu0 %v7047
      %7101 = vmatprep.subr.bf16.mxu0 0
      %7102 = vmatpush1.bf16.msra.mxu0 %v7048
      %7103 = vmatprep.subr.bf16.mxu0 0
      %7104 = vmatpush1.bf16.msra.mxu0 %v7049
      %7105 = vmatprep.subr.bf16.mxu0 0
      %7106 = vmatpush1.bf16.msra.mxu0 %v7050
      %7107 = vmatprep.subr.bf16.mxu0 0
      %7108 = vmatpush1.bf16.msra.mxu0 %v7051
      %7109 = vmatprep.subr.bf16.mxu0 0
      %7110 = vmatpush1.bf16.msra.mxu0 %v7052
      %7111 = vmatprep.subr.bf16.mxu0 0
      %7112 = vmatpush1.bf16.msra.mxu0 %v7053
      %7113 = vmatprep.subr.bf16.mxu0 0
      %7114 = vmatpush1.bf16.msra.mxu0 %v7054
      %7115 = vmatprep.subr.bf16.mxu0 0
      %7116 = vmatpush1.bf16.msra.mxu0 %v7055
      %7117 = vmatprep.subr.bf16.mxu0 0
      %7118 = vmatpush1.bf16.msra.mxu0 %v7056
      %7119 = vmatprep.subr.bf16.mxu0 0
      %7120 = vmatpush1.bf16.msra.mxu0 %v7057
      %7121 = vmatprep.subr.bf16.mxu0 0
      %7122 = vmatpush1.bf16.msra.mxu0 %v7058
      %7123 = vmatprep.mubr.bf16.mxu0 %v6191
      %7124 = vmatmul.mubr.bf16.gmra.mrb[0].mxu0 %v6174
      %v7125 = vpop.f32.mrb[0].mxu0
      %v7126 = vadd.f32 0.0, %v7125
      %v7127 = vpop.f32.mrb[0].mxu0
      %v7128 = vpop.f32.mrb[0].mxu0
      %v7129 = vadd.f32 0.0, %v7128
      %v7130 = vpop.f32.mrb[0].mxu0
      %7131 = vmatprep.mubr.bf16.mxu0 %v6237
      %7132 = vmatmul.mubr.bf16.gmra.mrb[0].mxu0 %v6220
      %v7133 = vpop.f32.mrb[0].mxu0
      %v7134 = vadd.f32 0.0, %v7133
      %v7135 = vpop.f32.mrb[0].mxu0
      %v7136 = vpop.f32.mrb[0].mxu0
      %v7137 = vadd.f32 0.0, %v7136
      %v7138 = vpop.f32.mrb[0].mxu0
      %7139 = vmatprep.mubr.bf16.mxu0 %v6283
      %7140 = vmatmul.mubr.bf16.gmra.mrb[0].mxu0 %v6266
      %v7141 = vpop.f32.mrb[0].mxu0
      %v7142 = vadd.f32 0.0, %v7141
      %v7143 = vpop.f32.mrb[0].mxu0
      %v7144 = vpop.f32.mrb[0].mxu0
      %v7145 = vadd.f32 0.0, %v7144
      %v7146 = vpop.f32.mrb[0].mxu0
      %7147 = vmatprep.mubr.bf16.mxu0 %v6329
      %7148 = vmatmul.mubr.bf16.gmra.mrb[0].mxu0 %v6312
      %v7149 = vpop.f32.mrb[0].mxu0
      %v7150 = vadd.f32 0.0, %v7149
      %v7151 = vpop.f32.mrb[0].mxu0
      %v7152 = vpop.f32.mrb[0].mxu0
      %v7153 = vadd.f32 0.0, %v7152
      %v7154 = vpop.f32.mrb[0].mxu0
      %7155 = vmatprep.mubr.bf16.mxu0 %v6375
      %7156 = vmatmul.mubr.bf16.gmra.mrb[0].mxu0 %v6358
      %v7157 = vpop.f32.mrb[0].mxu0
      %v7158 = vadd.f32 0.0, %v7157
      %v7159 = vpop.f32.mrb[0].mxu0
      %v7160 = vpop.f32.mrb[0].mxu0
      %v7161 = vadd.f32 0.0, %v7160
      %v7162 = vpop.f32.mrb[0].mxu0
      %7163 = vmatprep.mubr.bf16.mxu0 %v6421
      %7164 = vmatmul.mubr.bf16.gmra.mrb[0].mxu0 %v6404
      %v7165 = vpop.f32.mrb[0].mxu0
      %v7166 = vadd.f32 0.0, %v7165
      %v7167 = vpop.f32.mrb[0].mxu0
      %v7168 = vpop.f32.mrb[0].mxu0
      %v7169 = vadd.f32 0.0, %v7168
      %v7170 = vpop.f32.mrb[0].mxu0
      %7171 = vmatprep.mubr.bf16.mxu0 %v6467
      %7172 = vmatmul.mubr.bf16.gmra.mrb[0].mxu0 %v6450
      %v7173 = vpop.f32.mrb[0].mxu0
      %v7174 = vadd.f32 0.0, %v7173
      %v7175 = vpop.f32.mrb[0].mxu0
      %v7176 = vpop.f32.mrb[0].mxu0
      %v7177 = vadd.f32 0.0, %v7176
      %v7178 = vpop.f32.mrb[0].mxu0
      %7179 = vmatprep.mubr.bf16.mxu0 %v6513
      %7180 = vmatmul.mubr.bf16.gmra.mrb[0].mxu0 %v6496
      %v7181 = vpop.f32.mrb[0].mxu0
      %v7182 = vadd.f32 0.0, %v7181
      %v7183 = vpop.f32.mrb[0].mxu0
      %v7184 = vpop.f32.mrb[0].mxu0
      %v7185 = vadd.f32 0.0, %v7184
      %v7186 = vpop.f32.mrb[0].mxu0
      %7187 = vmatprep.mubr.bf16.mxu0 %v6559
      %7188 = vmatmul.mubr.bf16.gmra.mrb[0].mxu0 %v6542
      %v7189 = vpop.f32.mrb[0].mxu0
      %v7190 = vadd.f32 0.0, %v7189
      %v7191 = vpop.f32.mrb[0].mxu0
      %v7192 = vpop.f32.mrb[0].mxu0
      %v7193 = vadd.f32 0.0, %v7192
      %v7194 = vpop.f32.mrb[0].mxu0
      %7195 = vmatprep.mubr.bf16.mxu0 %v6605
      %7196 = vmatmul.mubr.bf16.gmra.mrb[0].mxu0 %v6588
      %v7197 = vpop.f32.mrb[0].mxu0
      %v7198 = vadd.f32 0.0, %v7197
      %v7199 = vpop.f32.mrb[0].mxu0
      %v7200 = vpop.f32.mrb[0].mxu0
      %v7201 = vadd.f32 0.0, %v7200
      %v7202 = vpop.f32.mrb[0].mxu0
      %7203 = vmatprep.mubr.bf16.mxu0 %v6651
      %7204 = vmatmul.mubr.bf16.gmra.mrb[0].mxu0 %v6634
      %v7205 = vpop.f32.mrb[0].mxu0
      %v7206 = vadd.f32 0.0, %v7205
      %v7207 = vpop.f32.mrb[0].mxu0
      %v7208 = vpop.f32.mrb[0].mxu0
      %v7209 = vadd.f32 0.0, %v7208
      %v7210 = vpop.f32.mrb[0].mxu0
      %7211 = vmatprep.mubr.bf16.mxu0 %v6697
      %7212 = vmatmul.mubr.bf16.gmra.mrb[0].mxu0 %v6680
      %v7213 = vpop.f32.mrb[0].mxu0
      %v7214 = vadd.f32 0.0, %v7213
      %v7215 = vpop.f32.mrb[0].mxu0
      %v7216 = vpop.f32.mrb[0].mxu0
      %v7217 = vadd.f32 0.0, %v7216
      %v7218 = vpop.f32.mrb[0].mxu0
      %7219 = vmatprep.mubr.bf16.mxu0 %v6743
      %7220 = vmatmul.mubr.bf16.gmra.mrb[0].mxu0 %v6726
      %v7221 = vpop.f32.mrb[0].mxu0
      %v7222 = vadd.f32 0.0, %v7221
      %v7223 = vpop.f32.mrb[0].mxu0
      %v7224 = vpop.f32.mrb[0].mxu0
      %v7225 = vadd.f32 0.0, %v7224
      %v7226 = vpop.f32.mrb[0].mxu0
      %7227 = vmatprep.mubr.bf16.mxu0 %v6789
      %7228 = vmatmul.mubr.bf16.gmra.mrb[0].mxu0 %v6772
      %v7229 = vpop.f32.mrb[0].mxu0
      %v7230 = vadd.f32 0.0, %v7229
      %v7231 = vpop.f32.mrb[0].mxu0
      %v7232 = vpop.f32.mrb[0].mxu0
      %v7233 = vadd.f32 0.0, %v7232
      %v7234 = vpop.f32.mrb[0].mxu0
      %7235 = vmatprep.mubr.bf16.mxu0 %v6835
      %7236 = vmatmul.mubr.bf16.gmra.mrb[0].mxu0 %v6818
      %v7237 = vpop.f32.mrb[0].mxu0
      %v7238 = vadd.f32 0.0, %v7237
      %v7239 = vpop.f32.mrb[0].mxu0
      %v7240 = vpop.f32.mrb[0].mxu0
      %v7241 = vadd.f32 0.0, %v7240
      %v7242 = vpop.f32.mrb[0].mxu0
      %7243 = vmatprep.mubr.bf16.mxu0 %v6881
      %7244 = vmatmul.mubr.bf16.gmra.mrb[0].mxu0 %v6864
      %v7245 = vpop.f32.mrb[0].mxu0
      %v7246 = vadd.f32 0.0, %v7245
      %v7247 = vpop.f32.mrb[0].mxu0
      %v7248 = vpop.f32.mrb[0].mxu0
      %v7249 = vadd.f32 0.0, %v7248
      %v7250 = vpop.f32.mrb[0].mxu0
      %7251 = vdwg.mxu0
      %7252 = vmatprep.subr.bf16.mxu0 0
      %7253 = vmatpush1.bf16.msra.mxu0 %v7059
      %7254 = vmatprep.subr.bf16.mxu0 0
      %7255 = vmatpush1.bf16.msra.mxu0 %v7060
      %7256 = vmatprep.subr.bf16.mxu0 0
      %7257 = vmatpush1.bf16.msra.mxu0 %v7061
      %7258 = vmatprep.subr.bf16.mxu0 0
      %7259 = vmatpush1.bf16.msra.mxu0 %v7062
      %7260 = vmatprep.subr.bf16.mxu0 0
      %7261 = vmatpush1.bf16.msra.mxu0 %v7063
      %7262 = vmatprep.subr.bf16.mxu0 0
      %7263 = vmatpush1.bf16.msra.mxu0 %v7064
      %7264 = vmatprep.subr.bf16.mxu0 0
      %7265 = vmatpush1.bf16.msra.mxu0 %v7065
      %7266 = vmatprep.subr.bf16.mxu0 0
      %7267 = vmatpush1.bf16.msra.mxu0 %v7066
      %7268 = vmatprep.subr.bf16.mxu0 0
      %7269 = vmatpush1.bf16.msra.mxu0 0
      %7270 = vmatprep.subr.bf16.mxu0 0
      %7271 = vmatpush1.bf16.msra.mxu0 0
      %7272 = vmatprep.subr.bf16.mxu0 0
      %7273 = vmatpush1.bf16.msra.mxu0 0
      %7274 = vmatprep.subr.bf16.mxu0 0
      %7275 = vmatpush1.bf16.msra.mxu0 0
      %7276 = vmatprep.subr.bf16.mxu0 0
      %7277 = vmatpush1.bf16.msra.mxu0 0
      %7278 = vmatprep.subr.bf16.mxu0 0
      %7279 = vmatpush1.bf16.msra.mxu0 0
      %7280 = vmatprep.subr.bf16.mxu0 0
      %7281 = vmatpush1.bf16.msra.mxu0 0
      %7282 = vmatprep.subr.bf16.mxu0 0
      %7283 = vmatpush1.bf16.msra.mxu0 0
      %7284 = vmatprep.mubr.bf16.mxu0 0
      %7285 = vmatmul.mubr.bf16.gmra.mrb[0].mxu0 %v6208
      %v7286 = vpop.f32.mrb[0].mxu0
      %v7287 = vadd.f32 %v7126, %v7286
      %v7288 = vpop.f32.mrb[0].mxu0
      %v7289 = vpop.f32.mrb[0].mxu0
      %v7290 = vadd.f32 %v7129, %v7289
      %v7291 = vpop.f32.mrb[0].mxu0
      %7292 = vmatprep.mubr.bf16.mxu0 0
      %7293 = vmatmul.mubr.bf16.gmra.mrb[0].mxu0 %v6254
      %v7294 = vpop.f32.mrb[0].mxu0
      %v7295 = vadd.f32 %v7134, %v7294
      %v7296 = vpop.f32.mrb[0].mxu0
      %v7297 = vpop.f32.mrb[0].mxu0
      %v7298 = vadd.f32 %v7137, %v7297
      %v7299 = vpop.f32.mrb[0].mxu0
      %7300 = vmatprep.mubr.bf16.mxu0 0
      %7301 = vmatmul.mubr.bf16.gmra.mrb[0].mxu0 %v6300
      %v7302 = vpop.f32.mrb[0].mxu0
      %v7303 = vadd.f32 %v7142, %v7302
      %v7304 = vpop.f32.mrb[0].mxu0
      %v7305 = vpop.f32.mrb[0].mxu0
      %v7306 = vadd.f32 %v7145, %v7305
      %v7307 = vpop.f32.mrb[0].mxu0
      %7308 = vmatprep.mubr.bf16.mxu0 0
      %7309 = vmatmul.mubr.bf16.gmra.mrb[0].mxu0 %v6346
      %v7310 = vpop.f32.mrb[0].mxu0
      %v7311 = vadd.f32 %v7150, %v7310
      %v7312 = vpop.f32.mrb[0].mxu0
      %v7313 = vpop.f32.mrb[0].mxu0
      %v7314 = vadd.f32 %v7153, %v7313
      %v7315 = vpop.f32.mrb[0].mxu0
      %7316 = vmatprep.mubr.bf16.mxu0 0
      %7317 = vmatmul.mubr.bf16.gmra.mrb[0].mxu0 %v6392
      %v7318 = vpop.f32.mrb[0].mxu0
      %v7319 = vadd.f32 %v7158, %v7318
      %v7320 = vpop.f32.mrb[0].mxu0
      %v7321 = vpop.f32.mrb[0].mxu0
      %v7322 = vadd.f32 %v7161, %v7321
      %v7323 = vpop.f32.mrb[0].mxu0
      %7324 = vmatprep.mubr.bf16.mxu0 0
      %7325 = vmatmul.mubr.bf16.gmra.mrb[0].mxu0 %v6438
      %v7326 = vpop.f32.mrb[0].mxu0
      %v7327 = vadd.f32 %v7166, %v7326
      %v7328 = vpop.f32.mrb[0].mxu0
      %v7329 = vpop.f32.mrb[0].mxu0
      %v7330 = vadd.f32 %v7169, %v7329
      %v7331 = vpop.f32.mrb[0].mxu0
      %7332 = vmatprep.mubr.bf16.mxu0 0
      %7333 = vmatmul.mubr.bf16.gmra.mrb[0].mxu0 %v6484
      %v7334 = vpop.f32.mrb[0].mxu0
      %v7335 = vadd.f32 %v7174, %v7334
      %v7336 = vpop.f32.mrb[0].mxu0
      %v7337 = vpop.f32.mrb[0].mxu0
      %v7338 = vadd.f32 %v7177, %v7337
      %v7339 = vpop.f32.mrb[0].mxu0
      %7340 = vmatprep.mubr.bf16.mxu0 0
      %7341 = vmatmul.mubr.bf16.gmra.mrb[0].mxu0 %v6530
      %v7342 = vpop.f32.mrb[0].mxu0
      %v7343 = vadd.f32 %v7182, %v7342
      %v7344 = vpop.f32.mrb[0].mxu0
      %v7345 = vpop.f32.mrb[0].mxu0
      %v7346 = vadd.f32 %v7185, %v7345
      %v7347 = vpop.f32.mrb[0].mxu0
      %7348 = vmatprep.mubr.bf16.mxu0 0
      %7349 = vmatmul.mubr.bf16.gmra.mrb[0].mxu0 %v6576
      %v7350 = vpop.f32.mrb[0].mxu0
      %v7351 = vadd.f32 %v7190, %v7350
      %v7352 = vpop.f32.mrb[0].mxu0
      %v7353 = vpop.f32.mrb[0].mxu0
      %v7354 = vadd.f32 %v7193, %v7353
      %v7355 = vpop.f32.mrb[0].mxu0
      %7356 = vmatprep.mubr.bf16.mxu0 0
      %7357 = vmatmul.mubr.bf16.gmra.mrb[0].mxu0 %v6622
      %v7358 = vpop.f32.mrb[0].mxu0
      %v7359 = vadd.f32 %v7198, %v7358
      %v7360 = vpop.f32.mrb[0].mxu0
      %v7361 = vpop.f32.mrb[0].mxu0
      %v7362 = vadd.f32 %v7201, %v7361
      %v7363 = vpop.f32.mrb[0].mxu0
      %7364 = vmatprep.mubr.bf16.mxu0 0
      %7365 = vmatmul.mubr.bf16.gmra.mrb[0].mxu0 %v6668
      %v7366 = vpop.f32.mrb[0].mxu0
      %v7367 = vadd.f32 %v7206, %v7366
      %v7368 = vpop.f32.mrb[0].mxu0
      %v7369 = vpop.f32.mrb[0].mxu0
      %v7370 = vadd.f32 %v7209, %v7369
      %v7371 = vpop.f32.mrb[0].mxu0
      %7372 = vmatprep.mubr.bf16.mxu0 0
      %7373 = vmatmul.mubr.bf16.gmra.mrb[0].mxu0 %v6714
      %v7374 = vpop.f32.mrb[0].mxu0
      %v7375 = vadd.f32 %v7214, %v7374
      %v7376 = vpop.f32.mrb[0].mxu0
      %v7377 = vpop.f32.mrb[0].mxu0
      %v7378 = vadd.f32 %v7217, %v7377
      %v7379 = vpop.f32.mrb[0].mxu0
      %7380 = vmatprep.mubr.bf16.mxu0 0
      %7381 = vmatmul.mubr.bf16.gmra.mrb[0].mxu0 %v6760
      %v7382 = vpop.f32.mrb[0].mxu0
      %v7383 = vadd.f32 %v7222, %v7382
      %v7384 = vpop.f32.mrb[0].mxu0
      %v7385 = vpop.f32.mrb[0].mxu0
      %v7386 = vadd.f32 %v7225, %v7385
      %v7387 = vpop.f32.mrb[0].mxu0
      %7388 = vmatprep.mubr.bf16.mxu0 0
      %7389 = vmatmul.mubr.bf16.gmra.mrb[0].mxu0 %v6806
      %v7390 = vpop.f32.mrb[0].mxu0
      %v7391 = vadd.f32 %v7230, %v7390
      %v7392 = vpop.f32.mrb[0].mxu0
      %v7393 = vpop.f32.mrb[0].mxu0
      %v7394 = vadd.f32 %v7233, %v7393
      %v7395 = vpop.f32.mrb[0].mxu0
      %7396 = vmatprep.mubr.bf16.mxu0 0
      %7397 = vmatmul.mubr.bf16.gmra.mrb[0].mxu0 %v6852
      %v7398 = vpop.f32.mrb[0].mxu0
      %v7399 = vadd.f32 %v7238, %v7398
      %v7400 = vpop.f32.mrb[0].mxu0
      %v7401 = vpop.f32.mrb[0].mxu0
      %v7402 = vadd.f32 %v7241, %v7401
      %v7403 = vpop.f32.mrb[0].mxu0
      %7404 = vmatprep.mubr.bf16.mxu0 0
      %7405 = vmatmul.mubr.bf16.gmra.mrb[0].mxu0 %v6898
      %v7406 = vpop.f32.mrb[0].mxu0
      %v7407 = vadd.f32 %v7246, %v7406
      %v7408 = vpop.f32.mrb[0].mxu0
      %v7409 = vpop.f32.mrb[0].mxu0
      %v7410 = vadd.f32 %v7249, %v7409
      %v7411 = vpop.f32.mrb[0].mxu0
      %7412 = vdwg.mxu0
      %v7414 = vshrl.u32 %v5634, 16
      %v7416 = vrot.slane %v7414, 3
      %v7417 = vshll.u32 %v5634, 16
      %v7419 = vrot.slane %v7417, 4
      %v7420 = vor.u32 %v7416, %v7419
      %v7421 = vrot.slane %v5718, 3
      %v7422 = vrot.slane %v5714, 4
      %v7423 = vor.u32 %v7421, %v7422
      %v7424 = vsel %vm961, %v7420, %v7423
      %v7426 = vshrl.u32 %v5717, 16
      %v7428 = vrot.slane %v7426, 3
      %v7429 = vshll.u32 %v5717, 16
      %v7431 = vrot.slane %v7429, 4
      %v7432 = vor.u32 %v7428, %v7431
      %v7434 = vshrl.u32 %v5720, 16
      %v7436 = vrot.slane %v7434, 3
      %v7437 = vshll.u32 %v5720, 16
      %v7439 = vrot.slane %v7437, 4
      %v7440 = vor.u32 %v7436, %v7439
      %v7441 = vsel %vm961, %v7432, %v7440
      %v7443 = vshrl.u32 %v6014, 16
      %v7445 = vrot.slane %v7443, 3
      %v7446 = vshll.u32 %v6014, 16
      %v7448 = vrot.slane %v7446, 4
      %v7449 = vor.u32 %v7445, %v7448
      %v7451 = vshrl.u32 %v6013, 16
      %v7453 = vrot.slane %v7451, 3
      %v7454 = vshll.u32 %v6013, 16
      %v7456 = vrot.slane %v7454, 4
      %v7457 = vor.u32 %v7453, %v7456
      %v7458 = vsel %vm961, %v7449, %v7457
      %v7510 = vunpack.c.l.b16 %v6066
      %v7511 = vunpack.c.l.b16 %v6067
      %v7512 = vunpack.c.l.b16 %v6068
      %v7513 = vunpack.c.l.b16 %v6069
      %v7514 = vunpack.c.l.b16 %v6070
      %v7515 = vunpack.c.l.b16 %v6071
      %v7516 = vunpack.c.l.b16 %v6072
      %v7517 = vunpack.c.l.b16 %v6073
      %v7518 = vunpack.c.l.b16 %v6074
      %v7519 = vunpack.c.l.b16 %v6075
      %v7520 = vunpack.c.l.b16 %v6076
      %v7521 = vunpack.c.l.b16 %v6077
      %v7522 = vunpack.c.l.b16 %v6078
      %v7523 = vunpack.c.l.b16 %v6079
      %v7524 = vunpack.c.l.b16 %v6080
      %v7525 = vunpack.c.l.b16 %v6081
      %v7526 = vunpack.c.l.b16 %v6082
      %v7527 = vunpack.c.l.b16 %v6083
      %v7528 = vunpack.c.l.b16 %v6084
      %v7529 = vunpack.c.l.b16 %v6085
      %v7530 = vunpack.c.l.b16 %v6086
      %v7531 = vunpack.c.l.b16 %v6087
      %v7532 = vunpack.c.l.b16 %v6088
      %v7533 = vunpack.c.l.b16 %v6089
      %v7534 = vunpack.c.l.b16 %v6090
      %v7535 = vunpack.c.l.b16 %v6091
      %v7536 = vunpack.c.l.b16 %v6092
      %v7537 = vunpack.c.l.b16 %v6093
      %v7538 = vunpack.c.l.b16 %v6094
      %v7539 = vunpack.c.l.b16 %v6095
      %v7540 = vunpack.c.l.b16 %v6096
      %v7541 = vunpack.c.l.b16 %v6097
      %v7542 = vunpack.c.l.b16 %v6098
      %v7543 = vunpack.c.l.b16 %v6099
      %v7544 = vunpack.c.l.b16 %v6100
      %v7545 = vunpack.c.l.b16 %v6101
      %v7546 = vunpack.c.l.b16 %v6102
      %v7547 = vunpack.c.l.b16 %v6103
      %v7548 = vunpack.c.l.b16 %v6104
      %v7549 = vunpack.c.l.b16 %v6105
      %v7550 = vunpack.c.l.b16 %v6106
      %v7551 = vunpack.c.l.b16 %v6107
      %v7552 = vunpack.c.l.b16 %v6108
      %v7553 = vunpack.c.l.b16 %v6109
      %v7554 = vunpack.c.l.b16 %v6110
      %v7555 = vunpack.c.l.b16 %v6111
      %v7556 = vunpack.c.l.b16 %v6112
      %v7557 = vunpack.c.l.b16 %v6113
      %v7558 = vpack.c.b16 %v7511, %v7510
      %v7559 = vpack.c.b16 %v7513, %v7512
      %v7560 = vpack.c.b16 %v7515, %v7514
      %v7561 = vpack.c.b16 %v7517, %v7516
      %v7562 = vpack.c.b16 %v7519, %v7518
      %v7563 = vpack.c.b16 %v7521, %v7520
      %v7564 = vpack.c.b16 %v7523, %v7522
      %v7565 = vpack.c.b16 %v7525, %v7524
      %v7566 = vpack.c.b16 %v7527, %v7526
      %v7567 = vpack.c.b16 %v7529, %v7528
      %v7568 = vpack.c.b16 %v7531, %v7530
      %v7569 = vpack.c.b16 %v7533, %v7532
      %v7570 = vpack.c.b16 %v7535, %v7534
      %v7571 = vpack.c.b16 %v7537, %v7536
      %v7572 = vpack.c.b16 %v7539, %v7538
      %v7573 = vpack.c.b16 %v7541, %v7540
      %v7574 = vpack.c.b16 %v7543, %v7542
      %v7575 = vpack.c.b16 %v7545, %v7544
      %v7576 = vpack.c.b16 %v7547, %v7546
      %v7577 = vpack.c.b16 %v7549, %v7548
      %v7578 = vpack.c.b16 %v7551, %v7550
      %v7579 = vpack.c.b16 %v7553, %v7552
      %v7580 = vpack.c.b16 %v7555, %v7554
      %v7581 = vpack.c.b16 %v7557, %v7556
      %7606 = vmatprep.subr.bf16.mxu0 0
      %7607 = vmatpush1.bf16.msra.mxu0 %v7558
      %7608 = vmatprep.subr.bf16.mxu0 0
      %7609 = vmatpush1.bf16.msra.mxu0 %v7559
      %7610 = vmatprep.subr.bf16.mxu0 0
      %7611 = vmatpush1.bf16.msra.mxu0 %v7560
      %7612 = vmatprep.subr.bf16.mxu0 0
      %7613 = vmatpush1.bf16.msra.mxu0 %v7561
      %7614 = vmatprep.subr.bf16.mxu0 0
      %7615 = vmatpush1.bf16.msra.mxu0 %v7562
      %7616 = vmatprep.subr.bf16.mxu0 0
      %7617 = vmatpush1.bf16.msra.mxu0 %v7563
      %7618 = vmatprep.subr.bf16.mxu0 0
      %7619 = vmatpush1.bf16.msra.mxu0 %v7564
      %7620 = vmatprep.subr.bf16.mxu0 0
      %7621 = vmatpush1.bf16.msra.mxu0 %v7565
      %7622 = vmatprep.subr.bf16.mxu0 0
      %7623 = vmatpush1.bf16.msra.mxu0 %v7566
      %7624 = vmatprep.subr.bf16.mxu0 0
      %7625 = vmatpush1.bf16.msra.mxu0 %v7567
      %7626 = vmatprep.subr.bf16.mxu0 0
      %7627 = vmatpush1.bf16.msra.mxu0 %v7568
      %7628 = vmatprep.subr.bf16.mxu0 0
      %7629 = vmatpush1.bf16.msra.mxu0 %v7569
      %7630 = vmatprep.subr.bf16.mxu0 0
      %7631 = vmatpush1.bf16.msra.mxu0 %v7570
      %7632 = vmatprep.subr.bf16.mxu0 0
      %7633 = vmatpush1.bf16.msra.mxu0 %v7571
      %7634 = vmatprep.subr.bf16.mxu0 0
      %7635 = vmatpush1.bf16.msra.mxu0 %v7572
      %7636 = vmatprep.subr.bf16.mxu0 0
      %7637 = vmatpush1.bf16.msra.mxu0 %v7573
      %7638 = vmatprep.mubr.bf16.mxu0 %v7441
      %7639 = vmatmul.mubr.bf16.gmra.mrb[0].mxu0 %v7424
      %v7640 = vpop.f32.mrb[0].mxu0
      %v7641 = vadd.f32 %v7287, %v7640
      %v7642 = vpop.f32.mrb[0].mxu0
      %v7643 = vpop.f32.mrb[0].mxu0
      %v7644 = vadd.f32 %v7290, %v7643
      %v7645 = vpop.f32.mrb[0].mxu0
      %7646 = vmatprep.mubr.bf16.mxu0 %v6191
      %7647 = vmatmul.mubr.bf16.gmra.mrb[0].mxu0 %v6174
      %v7648 = vpop.f32.mrb[0].mxu0
      %v7649 = vadd.f32 %v7295, %v7648
      %v7650 = vpop.f32.mrb[0].mxu0
      %v7651 = vpop.f32.mrb[0].mxu0
      %v7652 = vadd.f32 %v7298, %v7651
      %v7653 = vpop.f32.mrb[0].mxu0
      %7654 = vmatprep.mubr.bf16.mxu0 %v6237
      %7655 = vmatmul.mubr.bf16.gmra.mrb[0].mxu0 %v6220
      %v7656 = vpop.f32.mrb[0].mxu0
      %v7657 = vadd.f32 %v7303, %v7656
      %v7658 = vpop.f32.mrb[0].mxu0
      %v7659 = vpop.f32.mrb[0].mxu0
      %v7660 = vadd.f32 %v7306, %v7659
      %v7661 = vpop.f32.mrb[0].mxu0
      %7662 = vmatprep.mubr.bf16.mxu0 %v6283
      %7663 = vmatmul.mubr.bf16.gmra.mrb[0].mxu0 %v6266
      %v7664 = vpop.f32.mrb[0].mxu0
      %v7665 = vadd.f32 %v7311, %v7664
      %v7666 = vpop.f32.mrb[0].mxu0
      %v7667 = vpop.f32.mrb[0].mxu0
      %v7668 = vadd.f32 %v7314, %v7667
      %v7669 = vpop.f32.mrb[0].mxu0
      %7670 = vmatprep.mubr.bf16.mxu0 %v6329
      %7671 = vmatmul.mubr.bf16.gmra.mrb[0].mxu0 %v6312
      %v7672 = vpop.f32.mrb[0].mxu0
      %v7673 = vadd.f32 %v7319, %v7672
      %v7674 = vpop.f32.mrb[0].mxu0
      %v7675 = vpop.f32.mrb[0].mxu0
      %v7676 = vadd.f32 %v7322, %v7675
      %v7677 = vpop.f32.mrb[0].mxu0
      %7678 = vmatprep.mubr.bf16.mxu0 %v6375
      %7679 = vmatmul.mubr.bf16.gmra.mrb[0].mxu0 %v6358
      %v7680 = vpop.f32.mrb[0].mxu0
      %v7681 = vadd.f32 %v7327, %v7680
      %v7682 = vpop.f32.mrb[0].mxu0
      %v7683 = vpop.f32.mrb[0].mxu0
      %v7684 = vadd.f32 %v7330, %v7683
      %v7685 = vpop.f32.mrb[0].mxu0
      %7686 = vmatprep.mubr.bf16.mxu0 %v6421
      %7687 = vmatmul.mubr.bf16.gmra.mrb[0].mxu0 %v6404
      %v7688 = vpop.f32.mrb[0].mxu0
      %v7689 = vadd.f32 %v7335, %v7688
      %v7690 = vpop.f32.mrb[0].mxu0
      %v7691 = vpop.f32.mrb[0].mxu0
      %v7692 = vadd.f32 %v7338, %v7691
      %v7693 = vpop.f32.mrb[0].mxu0
      %7694 = vmatprep.mubr.bf16.mxu0 %v6467
      %7695 = vmatmul.mubr.bf16.gmra.mrb[0].mxu0 %v6450
      %v7696 = vpop.f32.mrb[0].mxu0
      %v7697 = vadd.f32 %v7343, %v7696
      %v7698 = vpop.f32.mrb[0].mxu0
      %v7699 = vpop.f32.mrb[0].mxu0
      %v7700 = vadd.f32 %v7346, %v7699
      %v7701 = vpop.f32.mrb[0].mxu0
      %7702 = vmatprep.mubr.bf16.mxu0 %v6513
      %7703 = vmatmul.mubr.bf16.gmra.mrb[0].mxu0 %v6496
      %v7704 = vpop.f32.mrb[0].mxu0
      %v7705 = vadd.f32 %v7351, %v7704
      %v7706 = vpop.f32.mrb[0].mxu0
      %v7707 = vpop.f32.mrb[0].mxu0
      %v7708 = vadd.f32 %v7354, %v7707
      %v7709 = vpop.f32.mrb[0].mxu0
      %7710 = vmatprep.mubr.bf16.mxu0 %v6559
      %7711 = vmatmul.mubr.bf16.gmra.mrb[0].mxu0 %v6542
      %v7712 = vpop.f32.mrb[0].mxu0
      %v7713 = vadd.f32 %v7359, %v7712
      %v7714 = vpop.f32.mrb[0].mxu0
      %v7715 = vpop.f32.mrb[0].mxu0
      %v7716 = vadd.f32 %v7362, %v7715
      %v7717 = vpop.f32.mrb[0].mxu0
      %7718 = vmatprep.mubr.bf16.mxu0 %v6605
      %7719 = vmatmul.mubr.bf16.gmra.mrb[0].mxu0 %v6588
      %v7720 = vpop.f32.mrb[0].mxu0
      %v7721 = vadd.f32 %v7367, %v7720
      %v7722 = vpop.f32.mrb[0].mxu0
      %v7723 = vpop.f32.mrb[0].mxu0
      %v7724 = vadd.f32 %v7370, %v7723
      %v7725 = vpop.f32.mrb[0].mxu0
      %7726 = vmatprep.mubr.bf16.mxu0 %v6651
      %7727 = vmatmul.mubr.bf16.gmra.mrb[0].mxu0 %v6634
      %v7728 = vpop.f32.mrb[0].mxu0
      %v7729 = vadd.f32 %v7375, %v7728
      %v7730 = vpop.f32.mrb[0].mxu0
      %v7731 = vpop.f32.mrb[0].mxu0
      %v7732 = vadd.f32 %v7378, %v7731
      %v7733 = vpop.f32.mrb[0].mxu0
      %7734 = vmatprep.mubr.bf16.mxu0 %v6697
      %7735 = vmatmul.mubr.bf16.gmra.mrb[0].mxu0 %v6680
      %v7736 = vpop.f32.mrb[0].mxu0
      %v7737 = vadd.f32 %v7383, %v7736
      %v7738 = vpop.f32.mrb[0].mxu0
      %v7739 = vpop.f32.mrb[0].mxu0
      %v7740 = vadd.f32 %v7386, %v7739
      %v7741 = vpop.f32.mrb[0].mxu0
      %7742 = vmatprep.mubr.bf16.mxu0 %v6743
      %7743 = vmatmul.mubr.bf16.gmra.mrb[0].mxu0 %v6726
      %v7744 = vpop.f32.mrb[0].mxu0
      %v7745 = vadd.f32 %v7391, %v7744
      %v7746 = vpop.f32.mrb[0].mxu0
      %v7747 = vpop.f32.mrb[0].mxu0
      %v7748 = vadd.f32 %v7394, %v7747
      %v7749 = vpop.f32.mrb[0].mxu0
      %7750 = vmatprep.mubr.bf16.mxu0 %v6789
      %7751 = vmatmul.mubr.bf16.gmra.mrb[0].mxu0 %v6772
      %v7752 = vpop.f32.mrb[0].mxu0
      %v7753 = vadd.f32 %v7399, %v7752
      %v7754 = vpop.f32.mrb[0].mxu0
      %v7755 = vpop.f32.mrb[0].mxu0
      %v7756 = vadd.f32 %v7402, %v7755
      %v7757 = vpop.f32.mrb[0].mxu0
      %7758 = vmatprep.mubr.bf16.mxu0 %v6835
      %7759 = vmatmul.mubr.bf16.gmra.mrb[0].mxu0 %v6818
      %v7760 = vpop.f32.mrb[0].mxu0
      %v7761 = vadd.f32 %v7407, %v7760
      %v7762 = vpop.f32.mrb[0].mxu0
      %v7763 = vpop.f32.mrb[0].mxu0
      %v7764 = vadd.f32 %v7410, %v7763
      %v7765 = vpop.f32.mrb[0].mxu0
      %7766 = vdwg.mxu0
      %7767 = vmatprep.subr.bf16.mxu0 0
      %7768 = vmatpush1.bf16.msra.mxu0 %v7574
      %7769 = vmatprep.subr.bf16.mxu0 0
      %7770 = vmatpush1.bf16.msra.mxu0 %v7575
      %7771 = vmatprep.subr.bf16.mxu0 0
      %7772 = vmatpush1.bf16.msra.mxu0 %v7576
      %7773 = vmatprep.subr.bf16.mxu0 0
      %7774 = vmatpush1.bf16.msra.mxu0 %v7577
      %7775 = vmatprep.subr.bf16.mxu0 0
      %7776 = vmatpush1.bf16.msra.mxu0 %v7578
      %7777 = vmatprep.subr.bf16.mxu0 0
      %7778 = vmatpush1.bf16.msra.mxu0 %v7579
      %7779 = vmatprep.subr.bf16.mxu0 0
      %7780 = vmatpush1.bf16.msra.mxu0 %v7580
      %7781 = vmatprep.subr.bf16.mxu0 0
      %7782 = vmatpush1.bf16.msra.mxu0 %v7581
      %7783 = vmatprep.subr.bf16.mxu0 0
      %7784 = vmatpush1.bf16.msra.mxu0 0
      %7785 = vmatprep.subr.bf16.mxu0 0
      %7786 = vmatpush1.bf16.msra.mxu0 0
      %7787 = vmatprep.subr.bf16.mxu0 0
      %7788 = vmatpush1.bf16.msra.mxu0 0
      %7789 = vmatprep.subr.bf16.mxu0 0
      %7790 = vmatpush1.bf16.msra.mxu0 0
      %7791 = vmatprep.subr.bf16.mxu0 0
      %7792 = vmatpush1.bf16.msra.mxu0 0
      %7793 = vmatprep.subr.bf16.mxu0 0
      %7794 = vmatpush1.bf16.msra.mxu0 0
      %7795 = vmatprep.subr.bf16.mxu0 0
      %7796 = vmatpush1.bf16.msra.mxu0 0
      %7797 = vmatprep.subr.bf16.mxu0 0
      %7798 = vmatpush1.bf16.msra.mxu0 0
      %7799 = vmatprep.mubr.bf16.mxu0 0
      %7800 = vmatmul.mubr.bf16.gmra.mrb[0].mxu0 %v7458
      %v7801 = vpop.f32.mrb[0].mxu0
      %v7802 = vadd.f32 %v7641, %v7801
      %v7803 = vpop.f32.mrb[0].mxu0
      %v7804 = vpop.f32.mrb[0].mxu0
      %v7805 = vadd.f32 %v7644, %v7804
      %v7806 = vpop.f32.mrb[0].mxu0
      %7807 = vmatprep.mubr.bf16.mxu0 0
      %7808 = vmatmul.mubr.bf16.gmra.mrb[0].mxu0 %v6208
      %v7809 = vpop.f32.mrb[0].mxu0
      %v7810 = vadd.f32 %v7649, %v7809
      %v7811 = vpop.f32.mrb[0].mxu0
      %v7812 = vpop.f32.mrb[0].mxu0
      %v7813 = vadd.f32 %v7652, %v7812
      %v7814 = vpop.f32.mrb[0].mxu0
      %7815 = vmatprep.mubr.bf16.mxu0 0
      %7816 = vmatmul.mubr.bf16.gmra.mrb[0].mxu0 %v6254
      %v7817 = vpop.f32.mrb[0].mxu0
      %v7818 = vadd.f32 %v7657, %v7817
      %v7819 = vpop.f32.mrb[0].mxu0
      %v7820 = vpop.f32.mrb[0].mxu0
      %v7821 = vadd.f32 %v7660, %v7820
      %v7822 = vpop.f32.mrb[0].mxu0
      %7823 = vmatprep.mubr.bf16.mxu0 0
      %7824 = vmatmul.mubr.bf16.gmra.mrb[0].mxu0 %v6300
      %v7825 = vpop.f32.mrb[0].mxu0
      %v7826 = vadd.f32 %v7665, %v7825
      %v7827 = vpop.f32.mrb[0].mxu0
      %v7828 = vpop.f32.mrb[0].mxu0
      %v7829 = vadd.f32 %v7668, %v7828
      %v7830 = vpop.f32.mrb[0].mxu0
      %7831 = vmatprep.mubr.bf16.mxu0 0
      %7832 = vmatmul.mubr.bf16.gmra.mrb[0].mxu0 %v6346
      %v7833 = vpop.f32.mrb[0].mxu0
      %v7834 = vadd.f32 %v7673, %v7833
      %v7835 = vpop.f32.mrb[0].mxu0
      %v7836 = vpop.f32.mrb[0].mxu0
      %v7837 = vadd.f32 %v7676, %v7836
      %v7838 = vpop.f32.mrb[0].mxu0
      %7839 = vmatprep.mubr.bf16.mxu0 0
      %7840 = vmatmul.mubr.bf16.gmra.mrb[0].mxu0 %v6392
      %v7841 = vpop.f32.mrb[0].mxu0
      %v7842 = vadd.f32 %v7681, %v7841
      %v7843 = vpop.f32.mrb[0].mxu0
      %v7844 = vpop.f32.mrb[0].mxu0
      %v7845 = vadd.f32 %v7684, %v7844
      %v7846 = vpop.f32.mrb[0].mxu0
      %7847 = vmatprep.mubr.bf16.mxu0 0
      %7848 = vmatmul.mubr.bf16.gmra.mrb[0].mxu0 %v6438
      %v7849 = vpop.f32.mrb[0].mxu0
      %v7850 = vadd.f32 %v7689, %v7849
      %v7851 = vpop.f32.mrb[0].mxu0
      %v7852 = vpop.f32.mrb[0].mxu0
      %v7853 = vadd.f32 %v7692, %v7852
      %v7854 = vpop.f32.mrb[0].mxu0
      %7855 = vmatprep.mubr.bf16.mxu0 0
      %7856 = vmatmul.mubr.bf16.gmra.mrb[0].mxu0 %v6484
      %v7857 = vpop.f32.mrb[0].mxu0
      %v7858 = vadd.f32 %v7697, %v7857
      %v7859 = vpop.f32.mrb[0].mxu0
      %v7860 = vpop.f32.mrb[0].mxu0
      %v7861 = vadd.f32 %v7700, %v7860
      %v7862 = vpop.f32.mrb[0].mxu0
      %7863 = vmatprep.mubr.bf16.mxu0 0
      %7864 = vmatmul.mubr.bf16.gmra.mrb[0].mxu0 %v6530
      %v7865 = vpop.f32.mrb[0].mxu0
      %v7866 = vadd.f32 %v7705, %v7865
      %v7867 = vpop.f32.mrb[0].mxu0
      %v7868 = vpop.f32.mrb[0].mxu0
      %v7869 = vadd.f32 %v7708, %v7868
      %v7870 = vpop.f32.mrb[0].mxu0
      %7871 = vmatprep.mubr.bf16.mxu0 0
      %7872 = vmatmul.mubr.bf16.gmra.mrb[0].mxu0 %v6576
      %v7873 = vpop.f32.mrb[0].mxu0
      %v7874 = vadd.f32 %v7713, %v7873
      %v7875 = vpop.f32.mrb[0].mxu0
      %v7876 = vpop.f32.mrb[0].mxu0
      %v7877 = vadd.f32 %v7716, %v7876
      %v7878 = vpop.f32.mrb[0].mxu0
      %7879 = vmatprep.mubr.bf16.mxu0 0
      %7880 = vmatmul.mubr.bf16.gmra.mrb[0].mxu0 %v6622
      %v7881 = vpop.f32.mrb[0].mxu0
      %v7882 = vadd.f32 %v7721, %v7881
      %v7883 = vpop.f32.mrb[0].mxu0
      %v7884 = vpop.f32.mrb[0].mxu0
      %v7885 = vadd.f32 %v7724, %v7884
      %v7886 = vpop.f32.mrb[0].mxu0
      %7887 = vmatprep.mubr.bf16.mxu0 0
      %7888 = vmatmul.mubr.bf16.gmra.mrb[0].mxu0 %v6668
      %v7889 = vpop.f32.mrb[0].mxu0
      %v7890 = vadd.f32 %v7729, %v7889
      %v7891 = vpop.f32.mrb[0].mxu0
      %v7892 = vpop.f32.mrb[0].mxu0
      %v7893 = vadd.f32 %v7732, %v7892
      %v7894 = vpop.f32.mrb[0].mxu0
      %7895 = vmatprep.mubr.bf16.mxu0 0
      %7896 = vmatmul.mubr.bf16.gmra.mrb[0].mxu0 %v6714
      %v7897 = vpop.f32.mrb[0].mxu0
      %v7898 = vadd.f32 %v7737, %v7897
      %v7899 = vpop.f32.mrb[0].mxu0
      %v7900 = vpop.f32.mrb[0].mxu0
      %v7901 = vadd.f32 %v7740, %v7900
      %v7902 = vpop.f32.mrb[0].mxu0
      %7903 = vmatprep.mubr.bf16.mxu0 0
      %7904 = vmatmul.mubr.bf16.gmra.mrb[0].mxu0 %v6760
      %v7905 = vpop.f32.mrb[0].mxu0
      %v7906 = vadd.f32 %v7745, %v7905
      %v7907 = vpop.f32.mrb[0].mxu0
      %v7908 = vpop.f32.mrb[0].mxu0
      %v7909 = vadd.f32 %v7748, %v7908
      %v7910 = vpop.f32.mrb[0].mxu0
      %7911 = vmatprep.mubr.bf16.mxu0 0
      %7912 = vmatmul.mubr.bf16.gmra.mrb[0].mxu0 %v6806
      %v7913 = vpop.f32.mrb[0].mxu0
      %v7914 = vadd.f32 %v7753, %v7913
      %v7915 = vpop.f32.mrb[0].mxu0
      %v7916 = vpop.f32.mrb[0].mxu0
      %v7917 = vadd.f32 %v7756, %v7916
      %v7918 = vpop.f32.mrb[0].mxu0
      %7919 = vmatprep.mubr.bf16.mxu0 0
      %7920 = vmatmul.mubr.bf16.gmra.mrb[0].mxu0 %v6852
      %v7921 = vpop.f32.mrb[0].mxu0
      %v7922 = vadd.f32 %v7761, %v7921
      %v7923 = vpop.f32.mrb[0].mxu0
      %v7924 = vpop.f32.mrb[0].mxu0
      %v7925 = vadd.f32 %v7764, %v7924
      %v7926 = vpop.f32.mrb[0].mxu0
      %7927 = vdwg.mxu0
      %s7928 = scalar_lea.vmem %s5, 384
      %v7929 = vld [vmem:[%s7928] sm:$0xf]
      %v7930 = vld [vmem:[%s7928 + $0x4] sm:$0xf]
      %v7931 = vld [vmem:[%s7928 + $0x8] sm:$0xf]
      %v7932 = vld [vmem:[%s7928 + $0xc] sm:$0xf]
      %v7933 = vld [vmem:[%s7928 + $0x10] sm:$0xf]
      %v7934 = vld [vmem:[%s7928 + $0x14] sm:$0xf]
      %v7935 = vld [vmem:[%s7928 + $0x18] sm:$0xf]
      %v7936 = vld [vmem:[%s7928 + $0x1c] sm:$0xf]
      %v7937 = vld [vmem:[%s7928 + $0x20] sm:$0xf]
      %v7938 = vld [vmem:[%s7928 + $0x24] sm:$0xf]
      %v7939 = vld [vmem:[%s7928 + $0x28] sm:$0xf]
      %v7940 = vld [vmem:[%s7928 + $0x2c] sm:$0xf]
      %v7941 = vld [vmem:[%s7928 + $0x30] sm:$0xf]
      %v7942 = vld [vmem:[%s7928 + $0x34] sm:$0xf]
      %v7943 = vld [vmem:[%s7928 + $0x38] sm:$0xf]
      %v7944 = vld [vmem:[%s7928 + $0x3c] sm:$0xf]
      %v7945 = vld [vmem:[%s7928 + $0x40] sm:$0xf]
      %v7946 = vld [vmem:[%s7928 + $0x44] sm:$0xf]
      %v7947 = vld [vmem:[%s7928 + $0x48] sm:$0xf]
      %v7948 = vld [vmem:[%s7928 + $0x4c] sm:$0xf]
      %v7949 = vld [vmem:[%s7928 + $0x50] sm:$0xf]
      %v7950 = vld [vmem:[%s7928 + $0x54] sm:$0xf]
      %v7951 = vld [vmem:[%s7928 + $0x58] sm:$0xf]
      %v7952 = vld [vmem:[%s7928 + $0x5c] sm:$0xf]
      %v7953 = vld [vmem:[%s7928 + $0x60] sm:$0xf]
      %v7954 = vld [vmem:[%s7928 + $0x64] sm:$0xf]
      %v7955 = vld [vmem:[%s7928 + $0x68] sm:$0xf]
      %v7956 = vld [vmem:[%s7928 + $0x6c] sm:$0xf]
      %v7957 = vld [vmem:[%s7928 + $0x70] sm:$0xf]
      %v7958 = vld [vmem:[%s7928 + $0x74] sm:$0xf]
      %v7959 = vld [vmem:[%s7928 + $0x78] sm:$0xf]
      %v7960 = vld [vmem:[%s7928 + $0x7c] sm:$0xf]
      %v7961 = vld [vmem:[%s7928 + $0x80] sm:$0xf]
      %v7962 = vld [vmem:[%s7928 + $0x84] sm:$0xf]
      %v7963 = vld [vmem:[%s7928 + $0x88] sm:$0xf]
      %v7964 = vld [vmem:[%s7928 + $0x8c] sm:$0xf]
      %v7965 = vld [vmem:[%s7928 + $0x90] sm:$0xf]
      %v7966 = vld [vmem:[%s7928 + $0x94] sm:$0xf]
      %v7967 = vld [vmem:[%s7928 + $0x98] sm:$0xf]
      %v7968 = vld [vmem:[%s7928 + $0x9c] sm:$0xf]
      %v7969 = vld [vmem:[%s7928 + $0xa0] sm:$0xf]
      %v7970 = vld [vmem:[%s7928 + $0xa4] sm:$0xf]
      %v7971 = vld [vmem:[%s7928 + $0xa8] sm:$0xf]
      %v7972 = vld [vmem:[%s7928 + $0xac] sm:$0xf]
      %v7973 = vld [vmem:[%s7928 + $0xb0] sm:$0xf]
      %v7974 = vld [vmem:[%s7928 + $0xb4] sm:$0xf]
      %v7975 = vld [vmem:[%s7928 + $0xb8] sm:$0xf]
      %v7976 = vld [vmem:[%s7928 + $0xbc] sm:$0xf]
      %v7978 = vshrl.u32 %v5668, 16
      %v7980 = vrot.slane %v7978, 3
      %v7981 = vshll.u32 %v5668, 16
      %v7983 = vrot.slane %v7981, 4
      %v7984 = vor.u32 %v7980, %v7983
      %v7985 = vrot.slane %v5973, 3
      %v7986 = vrot.slane %v5969, 4
      %v7987 = vor.u32 %v7985, %v7986
      %v7988 = vsel %vm961, %v7984, %v7987
      %v7990 = vshrl.u32 %v5972, 16
      %v7992 = vrot.slane %v7990, 3
      %v7993 = vshll.u32 %v5972, 16
      %v7995 = vrot.slane %v7993, 4
      %v7996 = vor.u32 %v7992, %v7995
      %v7998 = vshrl.u32 %v5975, 16
      %v8000 = vrot.slane %v7998, 3
      %v8001 = vshll.u32 %v5975, 16
      %v8003 = vrot.slane %v8001, 4
      %v8004 = vor.u32 %v8000, %v8003
      %v8005 = vsel %vm961, %v7996, %v8004
      %v8007 = vshrl.u32 %v6065, 16
      %v8009 = vrot.slane %v8007, 3
      %v8010 = vshll.u32 %v6065, 16
      %v8012 = vrot.slane %v8010, 4
      %v8013 = vor.u32 %v8009, %v8012
      %v8015 = vshrl.u32 %v6064, 16
      %v8017 = vrot.slane %v8015, 3
      %v8018 = vshll.u32 %v6064, 16
      %v8020 = vrot.slane %v8018, 4
      %v8021 = vor.u32 %v8017, %v8020
      %v8022 = vsel %vm961, %v8013, %v8021
      %v8074 = vunpack.c.l.b16 %v7929
      %v8075 = vunpack.c.l.b16 %v7930
      %v8076 = vunpack.c.l.b16 %v7931
      %v8077 = vunpack.c.l.b16 %v7932
      %v8078 = vunpack.c.l.b16 %v7933
      %v8079 = vunpack.c.l.b16 %v7934
      %v8080 = vunpack.c.l.b16 %v7935
      %v8081 = vunpack.c.l.b16 %v7936
      %v8082 = vunpack.c.l.b16 %v7937
      %v8083 = vunpack.c.l.b16 %v7938
      %v8084 = vunpack.c.l.b16 %v7939
      %v8085 = vunpack.c.l.b16 %v7940
      %v8086 = vunpack.c.l.b16 %v7941
      %v8087 = vunpack.c.l.b16 %v7942
      %v8088 = vunpack.c.l.b16 %v7943
      %v8089 = vunpack.c.l.b16 %v7944
      %v8090 = vunpack.c.l.b16 %v7945
      %v8091 = vunpack.c.l.b16 %v7946
      %v8092 = vunpack.c.l.b16 %v7947
      %v8093 = vunpack.c.l.b16 %v7948
      %v8094 = vunpack.c.l.b16 %v7949
      %v8095 = vunpack.c.l.b16 %v7950
      %v8096 = vunpack.c.l.b16 %v7951
      %v8097 = vunpack.c.l.b16 %v7952
      %v8098 = vunpack.c.l.b16 %v7953
      %v8099 = vunpack.c.l.b16 %v7954
      %v8100 = vunpack.c.l.b16 %v7955
      %v8101 = vunpack.c.l.b16 %v7956
      %v8102 = vunpack.c.l.b16 %v7957
      %v8103 = vunpack.c.l.b16 %v7958
      %v8104 = vunpack.c.l.b16 %v7959
      %v8105 = vunpack.c.l.b16 %v7960
      %v8106 = vunpack.c.l.b16 %v7961
      %v8107 = vunpack.c.l.b16 %v7962
      %v8108 = vunpack.c.l.b16 %v7963
      %v8109 = vunpack.c.l.b16 %v7964
      %v8110 = vunpack.c.l.b16 %v7965
      %v8111 = vunpack.c.l.b16 %v7966
      %v8112 = vunpack.c.l.b16 %v7967
      %v8113 = vunpack.c.l.b16 %v7968
      %v8114 = vunpack.c.l.b16 %v7969
      %v8115 = vunpack.c.l.b16 %v7970
      %v8116 = vunpack.c.l.b16 %v7971
      %v8117 = vunpack.c.l.b16 %v7972
      %v8118 = vunpack.c.l.b16 %v7973
      %v8119 = vunpack.c.l.b16 %v7974
      %v8120 = vunpack.c.l.b16 %v7975
      %v8121 = vunpack.c.l.b16 %v7976
      %v8122 = vpack.c.b16 %v8075, %v8074
      %v8123 = vpack.c.b16 %v8077, %v8076
      %v8124 = vpack.c.b16 %v8079, %v8078
      %v8125 = vpack.c.b16 %v8081, %v8080
      %v8126 = vpack.c.b16 %v8083, %v8082
      %v8127 = vpack.c.b16 %v8085, %v8084
      %v8128 = vpack.c.b16 %v8087, %v8086
      %v8129 = vpack.c.b16 %v8089, %v8088
      %v8130 = vpack.c.b16 %v8091, %v8090
      %v8131 = vpack.c.b16 %v8093, %v8092
      %v8132 = vpack.c.b16 %v8095, %v8094
      %v8133 = vpack.c.b16 %v8097, %v8096
      %v8134 = vpack.c.b16 %v8099, %v8098
      %v8135 = vpack.c.b16 %v8101, %v8100
      %v8136 = vpack.c.b16 %v8103, %v8102
      %v8137 = vpack.c.b16 %v8105, %v8104
      %v8138 = vpack.c.b16 %v8107, %v8106
      %v8139 = vpack.c.b16 %v8109, %v8108
      %v8140 = vpack.c.b16 %v8111, %v8110
      %v8141 = vpack.c.b16 %v8113, %v8112
      %v8142 = vpack.c.b16 %v8115, %v8114
      %v8143 = vpack.c.b16 %v8117, %v8116
      %v8144 = vpack.c.b16 %v8119, %v8118
      %v8145 = vpack.c.b16 %v8121, %v8120
      %8170 = vmatprep.subr.bf16.mxu0 0
      %8171 = vmatpush1.bf16.msra.mxu0 %v8122
      %8172 = vmatprep.subr.bf16.mxu0 0
      %8173 = vmatpush1.bf16.msra.mxu0 %v8123
      %8174 = vmatprep.subr.bf16.mxu0 0
      %8175 = vmatpush1.bf16.msra.mxu0 %v8124
      %8176 = vmatprep.subr.bf16.mxu0 0
      %8177 = vmatpush1.bf16.msra.mxu0 %v8125
      %8178 = vmatprep.subr.bf16.mxu0 0
      %8179 = vmatpush1.bf16.msra.mxu0 %v8126
      %8180 = vmatprep.subr.bf16.mxu0 0
      %8181 = vmatpush1.bf16.msra.mxu0 %v8127
      %8182 = vmatprep.subr.bf16.mxu0 0
      %8183 = vmatpush1.bf16.msra.mxu0 %v8128
      %8184 = vmatprep.subr.bf16.mxu0 0
      %8185 = vmatpush1.bf16.msra.mxu0 %v8129
      %8186 = vmatprep.subr.bf16.mxu0 0
      %8187 = vmatpush1.bf16.msra.mxu0 %v8130
      %8188 = vmatprep.subr.bf16.mxu0 0
      %8189 = vmatpush1.bf16.msra.mxu0 %v8131
      %8190 = vmatprep.subr.bf16.mxu0 0
      %8191 = vmatpush1.bf16.msra.mxu0 %v8132
      %8192 = vmatprep.subr.bf16.mxu0 0
      %8193 = vmatpush1.bf16.msra.mxu0 %v8133
      %8194 = vmatprep.subr.bf16.mxu0 0
      %8195 = vmatpush1.bf16.msra.mxu0 %v8134
      %8196 = vmatprep.subr.bf16.mxu0 0
      %8197 = vmatpush1.bf16.msra.mxu0 %v8135
      %8198 = vmatprep.subr.bf16.mxu0 0
      %8199 = vmatpush1.bf16.msra.mxu0 %v8136
      %8200 = vmatprep.subr.bf16.mxu0 0
      %8201 = vmatpush1.bf16.msra.mxu0 %v8137
      %8202 = vmatprep.mubr.bf16.mxu0 %v6237
      %8203 = vmatmul.mubr.bf16.gmra.mrb[0].mxu0 %v6220
      %v8204 = vpop.f32.mrb[0].mxu0
      %v8205 = vadd.f32 0.0, %v8204
      %v8206 = vpop.f32.mrb[0].mxu0
      %v8207 = vpop.f32.mrb[0].mxu0
      %v8208 = vadd.f32 0.0, %v8207
      %v8209 = vpop.f32.mrb[0].mxu0
      %8210 = vmatprep.mubr.bf16.mxu0 %v6283
      %8211 = vmatmul.mubr.bf16.gmra.mrb[0].mxu0 %v6266
      %v8212 = vpop.f32.mrb[0].mxu0
      %v8213 = vadd.f32 0.0, %v8212
      %v8214 = vpop.f32.mrb[0].mxu0
      %v8215 = vpop.f32.mrb[0].mxu0
      %v8216 = vadd.f32 0.0, %v8215
      %v8217 = vpop.f32.mrb[0].mxu0
      %8218 = vmatprep.mubr.bf16.mxu0 %v6329
      %8219 = vmatmul.mubr.bf16.gmra.mrb[0].mxu0 %v6312
      %v8220 = vpop.f32.mrb[0].mxu0
      %v8221 = vadd.f32 0.0, %v8220
      %v8222 = vpop.f32.mrb[0].mxu0
      %v8223 = vpop.f32.mrb[0].mxu0
      %v8224 = vadd.f32 0.0, %v8223
      %v8225 = vpop.f32.mrb[0].mxu0
      %8226 = vmatprep.mubr.bf16.mxu0 %v6375
      %8227 = vmatmul.mubr.bf16.gmra.mrb[0].mxu0 %v6358
      %v8228 = vpop.f32.mrb[0].mxu0
      %v8229 = vadd.f32 0.0, %v8228
      %v8230 = vpop.f32.mrb[0].mxu0
      %v8231 = vpop.f32.mrb[0].mxu0
      %v8232 = vadd.f32 0.0, %v8231
      %v8233 = vpop.f32.mrb[0].mxu0
      %8234 = vmatprep.mubr.bf16.mxu0 %v6421
      %8235 = vmatmul.mubr.bf16.gmra.mrb[0].mxu0 %v6404
      %v8236 = vpop.f32.mrb[0].mxu0
      %v8237 = vadd.f32 0.0, %v8236
      %v8238 = vpop.f32.mrb[0].mxu0
      %v8239 = vpop.f32.mrb[0].mxu0
      %v8240 = vadd.f32 0.0, %v8239
      %v8241 = vpop.f32.mrb[0].mxu0
      %8242 = vmatprep.mubr.bf16.mxu0 %v6467
      %8243 = vmatmul.mubr.bf16.gmra.mrb[0].mxu0 %v6450
      %v8244 = vpop.f32.mrb[0].mxu0
      %v8245 = vadd.f32 0.0, %v8244
      %v8246 = vpop.f32.mrb[0].mxu0
      %v8247 = vpop.f32.mrb[0].mxu0
      %v8248 = vadd.f32 0.0, %v8247
      %v8249 = vpop.f32.mrb[0].mxu0
      %8250 = vmatprep.mubr.bf16.mxu0 %v6513
      %8251 = vmatmul.mubr.bf16.gmra.mrb[0].mxu0 %v6496
      %v8252 = vpop.f32.mrb[0].mxu0
      %v8253 = vadd.f32 0.0, %v8252
      %v8254 = vpop.f32.mrb[0].mxu0
      %v8255 = vpop.f32.mrb[0].mxu0
      %v8256 = vadd.f32 0.0, %v8255
      %v8257 = vpop.f32.mrb[0].mxu0
      %8258 = vmatprep.mubr.bf16.mxu0 %v6559
      %8259 = vmatmul.mubr.bf16.gmra.mrb[0].mxu0 %v6542
      %v8260 = vpop.f32.mrb[0].mxu0
      %v8261 = vadd.f32 0.0, %v8260
      %v8262 = vpop.f32.mrb[0].mxu0
      %v8263 = vpop.f32.mrb[0].mxu0
      %v8264 = vadd.f32 0.0, %v8263
      %v8265 = vpop.f32.mrb[0].mxu0
      %8266 = vmatprep.mubr.bf16.mxu0 %v6605
      %8267 = vmatmul.mubr.bf16.gmra.mrb[0].mxu0 %v6588
      %v8268 = vpop.f32.mrb[0].mxu0
      %v8269 = vadd.f32 0.0, %v8268
      %v8270 = vpop.f32.mrb[0].mxu0
      %v8271 = vpop.f32.mrb[0].mxu0
      %v8272 = vadd.f32 0.0, %v8271
      %v8273 = vpop.f32.mrb[0].mxu0
      %8274 = vmatprep.mubr.bf16.mxu0 %v6651
      %8275 = vmatmul.mubr.bf16.gmra.mrb[0].mxu0 %v6634
      %v8276 = vpop.f32.mrb[0].mxu0
      %v8277 = vadd.f32 0.0, %v8276
      %v8278 = vpop.f32.mrb[0].mxu0
      %v8279 = vpop.f32.mrb[0].mxu0
      %v8280 = vadd.f32 0.0, %v8279
      %v8281 = vpop.f32.mrb[0].mxu0
      %8282 = vmatprep.mubr.bf16.mxu0 %v6697
      %8283 = vmatmul.mubr.bf16.gmra.mrb[0].mxu0 %v6680
      %v8284 = vpop.f32.mrb[0].mxu0
      %v8285 = vadd.f32 0.0, %v8284
      %v8286 = vpop.f32.mrb[0].mxu0
      %v8287 = vpop.f32.mrb[0].mxu0
      %v8288 = vadd.f32 0.0, %v8287
      %v8289 = vpop.f32.mrb[0].mxu0
      %8290 = vmatprep.mubr.bf16.mxu0 %v6743
      %8291 = vmatmul.mubr.bf16.gmra.mrb[0].mxu0 %v6726
      %v8292 = vpop.f32.mrb[0].mxu0
      %v8293 = vadd.f32 0.0, %v8292
      %v8294 = vpop.f32.mrb[0].mxu0
      %v8295 = vpop.f32.mrb[0].mxu0
      %v8296 = vadd.f32 0.0, %v8295
      %v8297 = vpop.f32.mrb[0].mxu0
      %8298 = vmatprep.mubr.bf16.mxu0 %v6789
      %8299 = vmatmul.mubr.bf16.gmra.mrb[0].mxu0 %v6772
      %v8300 = vpop.f32.mrb[0].mxu0
      %v8301 = vadd.f32 0.0, %v8300
      %v8302 = vpop.f32.mrb[0].mxu0
      %v8303 = vpop.f32.mrb[0].mxu0
      %v8304 = vadd.f32 0.0, %v8303
      %v8305 = vpop.f32.mrb[0].mxu0
      %8306 = vmatprep.mubr.bf16.mxu0 %v6835
      %8307 = vmatmul.mubr.bf16.gmra.mrb[0].mxu0 %v6818
      %v8308 = vpop.f32.mrb[0].mxu0
      %v8309 = vadd.f32 0.0, %v8308
      %v8310 = vpop.f32.mrb[0].mxu0
      %v8311 = vpop.f32.mrb[0].mxu0
      %v8312 = vadd.f32 0.0, %v8311
      %v8313 = vpop.f32.mrb[0].mxu0
      %8314 = vmatprep.mubr.bf16.mxu0 %v6881
      %8315 = vmatmul.mubr.bf16.gmra.mrb[0].mxu0 %v6864
      %v8316 = vpop.f32.mrb[0].mxu0
      %v8317 = vadd.f32 0.0, %v8316
      %v8318 = vpop.f32.mrb[0].mxu0
      %v8319 = vpop.f32.mrb[0].mxu0
      %v8320 = vadd.f32 0.0, %v8319
      %v8321 = vpop.f32.mrb[0].mxu0
      %8322 = vmatprep.mubr.bf16.mxu0 %v8005
      %8323 = vmatmul.mubr.bf16.gmra.mrb[0].mxu0 %v7988
      %v8324 = vpop.f32.mrb[0].mxu0
      %v8325 = vadd.f32 0.0, %v8324
      %v8326 = vpop.f32.mrb[0].mxu0
      %v8327 = vpop.f32.mrb[0].mxu0
      %v8328 = vadd.f32 0.0, %v8327
      %v8329 = vpop.f32.mrb[0].mxu0
      %8330 = vdwg.mxu0
      %8331 = vmatprep.subr.bf16.mxu0 0
      %8332 = vmatpush1.bf16.msra.mxu0 %v8138
      %8333 = vmatprep.subr.bf16.mxu0 0
      %8334 = vmatpush1.bf16.msra.mxu0 %v8139
      %8335 = vmatprep.subr.bf16.mxu0 0
      %8336 = vmatpush1.bf16.msra.mxu0 %v8140
      %8337 = vmatprep.subr.bf16.mxu0 0
      %8338 = vmatpush1.bf16.msra.mxu0 %v8141
      %8339 = vmatprep.subr.bf16.mxu0 0
      %8340 = vmatpush1.bf16.msra.mxu0 %v8142
      %8341 = vmatprep.subr.bf16.mxu0 0
      %8342 = vmatpush1.bf16.msra.mxu0 %v8143
      %8343 = vmatprep.subr.bf16.mxu0 0
      %8344 = vmatpush1.bf16.msra.mxu0 %v8144
      %8345 = vmatprep.subr.bf16.mxu0 0
      %8346 = vmatpush1.bf16.msra.mxu0 %v8145
      %8347 = vmatprep.subr.bf16.mxu0 0
      %8348 = vmatpush1.bf16.msra.mxu0 0
      %8349 = vmatprep.subr.bf16.mxu0 0
      %8350 = vmatpush1.bf16.msra.mxu0 0
      %8351 = vmatprep.subr.bf16.mxu0 0
      %8352 = vmatpush1.bf16.msra.mxu0 0
      %8353 = vmatprep.subr.bf16.mxu0 0
      %8354 = vmatpush1.bf16.msra.mxu0 0
      %8355 = vmatprep.subr.bf16.mxu0 0
      %8356 = vmatpush1.bf16.msra.mxu0 0
      %8357 = vmatprep.subr.bf16.mxu0 0
      %8358 = vmatpush1.bf16.msra.mxu0 0
      %8359 = vmatprep.subr.bf16.mxu0 0
      %8360 = vmatpush1.bf16.msra.mxu0 0
      %8361 = vmatprep.subr.bf16.mxu0 0
      %8362 = vmatpush1.bf16.msra.mxu0 0
      %8363 = vmatprep.mubr.bf16.mxu0 0
      %8364 = vmatmul.mubr.bf16.gmra.mrb[0].mxu0 %v6254
      %v8365 = vpop.f32.mrb[0].mxu0
      %v8366 = vadd.f32 %v8205, %v8365
      %v8367 = vpop.f32.mrb[0].mxu0
      %v8368 = vpop.f32.mrb[0].mxu0
      %v8369 = vadd.f32 %v8208, %v8368
      %v8370 = vpop.f32.mrb[0].mxu0
      %8371 = vmatprep.mubr.bf16.mxu0 0
      %8372 = vmatmul.mubr.bf16.gmra.mrb[0].mxu0 %v6300
      %v8373 = vpop.f32.mrb[0].mxu0
      %v8374 = vadd.f32 %v8213, %v8373
      %v8375 = vpop.f32.mrb[0].mxu0
      %v8376 = vpop.f32.mrb[0].mxu0
      %v8377 = vadd.f32 %v8216, %v8376
      %v8378 = vpop.f32.mrb[0].mxu0
      %8379 = vmatprep.mubr.bf16.mxu0 0
      %8380 = vmatmul.mubr.bf16.gmra.mrb[0].mxu0 %v6346
      %v8381 = vpop.f32.mrb[0].mxu0
      %v8382 = vadd.f32 %v8221, %v8381
      %v8383 = vpop.f32.mrb[0].mxu0
      %v8384 = vpop.f32.mrb[0].mxu0
      %v8385 = vadd.f32 %v8224, %v8384
      %v8386 = vpop.f32.mrb[0].mxu0
      %8387 = vmatprep.mubr.bf16.mxu0 0
      %8388 = vmatmul.mubr.bf16.gmra.mrb[0].mxu0 %v6392
      %v8389 = vpop.f32.mrb[0].mxu0
      %v8390 = vadd.f32 %v8229, %v8389
      %v8391 = vpop.f32.mrb[0].mxu0
      %v8392 = vpop.f32.mrb[0].mxu0
      %v8393 = vadd.f32 %v8232, %v8392
      %v8394 = vpop.f32.mrb[0].mxu0
      %8395 = vmatprep.mubr.bf16.mxu0 0
      %8396 = vmatmul.mubr.bf16.gmra.mrb[0].mxu0 %v6438
      %v8397 = vpop.f32.mrb[0].mxu0
      %v8398 = vadd.f32 %v8237, %v8397
      %v8399 = vpop.f32.mrb[0].mxu0
      %v8400 = vpop.f32.mrb[0].mxu0
      %v8401 = vadd.f32 %v8240, %v8400
      %v8402 = vpop.f32.mrb[0].mxu0
      %8403 = vmatprep.mubr.bf16.mxu0 0
      %8404 = vmatmul.mubr.bf16.gmra.mrb[0].mxu0 %v6484
      %v8405 = vpop.f32.mrb[0].mxu0
      %v8406 = vadd.f32 %v8245, %v8405
      %v8407 = vpop.f32.mrb[0].mxu0
      %v8408 = vpop.f32.mrb[0].mxu0
      %v8409 = vadd.f32 %v8248, %v8408
      %v8410 = vpop.f32.mrb[0].mxu0
      %8411 = vmatprep.mubr.bf16.mxu0 0
      %8412 = vmatmul.mubr.bf16.gmra.mrb[0].mxu0 %v6530
      %v8413 = vpop.f32.mrb[0].mxu0
      %v8414 = vadd.f32 %v8253, %v8413
      %v8415 = vpop.f32.mrb[0].mxu0
      %v8416 = vpop.f32.mrb[0].mxu0
      %v8417 = vadd.f32 %v8256, %v8416
      %v8418 = vpop.f32.mrb[0].mxu0
      %8419 = vmatprep.mubr.bf16.mxu0 0
      %8420 = vmatmul.mubr.bf16.gmra.mrb[0].mxu0 %v6576
      %v8421 = vpop.f32.mrb[0].mxu0
      %v8422 = vadd.f32 %v8261, %v8421
      %v8423 = vpop.f32.mrb[0].mxu0
      %v8424 = vpop.f32.mrb[0].mxu0
      %v8425 = vadd.f32 %v8264, %v8424
      %v8426 = vpop.f32.mrb[0].mxu0
      %8427 = vmatprep.mubr.bf16.mxu0 0
      %8428 = vmatmul.mubr.bf16.gmra.mrb[0].mxu0 %v6622
      %v8429 = vpop.f32.mrb[0].mxu0
      %v8430 = vadd.f32 %v8269, %v8429
      %v8431 = vpop.f32.mrb[0].mxu0
      %v8432 = vpop.f32.mrb[0].mxu0
      %v8433 = vadd.f32 %v8272, %v8432
      %v8434 = vpop.f32.mrb[0].mxu0
      %8435 = vmatprep.mubr.bf16.mxu0 0
      %8436 = vmatmul.mubr.bf16.gmra.mrb[0].mxu0 %v6668
      %v8437 = vpop.f32.mrb[0].mxu0
      %v8438 = vadd.f32 %v8277, %v8437
      %v8439 = vpop.f32.mrb[0].mxu0
      %v8440 = vpop.f32.mrb[0].mxu0
      %v8441 = vadd.f32 %v8280, %v8440
      %v8442 = vpop.f32.mrb[0].mxu0
      %8443 = vmatprep.mubr.bf16.mxu0 0
      %8444 = vmatmul.mubr.bf16.gmra.mrb[0].mxu0 %v6714
      %v8445 = vpop.f32.mrb[0].mxu0
      %v8446 = vadd.f32 %v8285, %v8445
      %v8447 = vpop.f32.mrb[0].mxu0
      %v8448 = vpop.f32.mrb[0].mxu0
      %v8449 = vadd.f32 %v8288, %v8448
      %v8450 = vpop.f32.mrb[0].mxu0
      %8451 = vmatprep.mubr.bf16.mxu0 0
      %8452 = vmatmul.mubr.bf16.gmra.mrb[0].mxu0 %v6760
      %v8453 = vpop.f32.mrb[0].mxu0
      %v8454 = vadd.f32 %v8293, %v8453
      %v8455 = vpop.f32.mrb[0].mxu0
      %v8456 = vpop.f32.mrb[0].mxu0
      %v8457 = vadd.f32 %v8296, %v8456
      %v8458 = vpop.f32.mrb[0].mxu0
      %8459 = vmatprep.mubr.bf16.mxu0 0
      %8460 = vmatmul.mubr.bf16.gmra.mrb[0].mxu0 %v6806
      %v8461 = vpop.f32.mrb[0].mxu0
      %v8462 = vadd.f32 %v8301, %v8461
      %v8463 = vpop.f32.mrb[0].mxu0
      %v8464 = vpop.f32.mrb[0].mxu0
      %v8465 = vadd.f32 %v8304, %v8464
      %v8466 = vpop.f32.mrb[0].mxu0
      %8467 = vmatprep.mubr.bf16.mxu0 0
      %8468 = vmatmul.mubr.bf16.gmra.mrb[0].mxu0 %v6852
      %v8469 = vpop.f32.mrb[0].mxu0
      %v8470 = vadd.f32 %v8309, %v8469
      %v8471 = vpop.f32.mrb[0].mxu0
      %v8472 = vpop.f32.mrb[0].mxu0
      %v8473 = vadd.f32 %v8312, %v8472
      %v8474 = vpop.f32.mrb[0].mxu0
      %8475 = vmatprep.mubr.bf16.mxu0 0
      %8476 = vmatmul.mubr.bf16.gmra.mrb[0].mxu0 %v6898
      %v8477 = vpop.f32.mrb[0].mxu0
      %v8478 = vadd.f32 %v8317, %v8477
      %v8479 = vpop.f32.mrb[0].mxu0
      %v8480 = vpop.f32.mrb[0].mxu0
      %v8481 = vadd.f32 %v8320, %v8480
      %v8482 = vpop.f32.mrb[0].mxu0
      %8483 = vmatprep.mubr.bf16.mxu0 0
      %8484 = vmatmul.mubr.bf16.gmra.mrb[0].mxu0 %v8022
      %v8485 = vpop.f32.mrb[0].mxu0
      %v8486 = vadd.f32 %v8325, %v8485
      %v8487 = vpop.f32.mrb[0].mxu0
      %v8488 = vpop.f32.mrb[0].mxu0
      %v8489 = vadd.f32 %v8328, %v8488
      %v8490 = vpop.f32.mrb[0].mxu0
      %8491 = vdwg.mxu0
      %v8492 = vadd.f32 %v7802, %v8366
      %v8493 = vadd.f32 %v7805, %v8369
      %v8494 = vadd.f32 %v7810, %v8374
      %v8495 = vadd.f32 %v7813, %v8377
      %v8496 = vadd.f32 %v7818, %v8382
      %v8497 = vadd.f32 %v7821, %v8385
      %v8498 = vadd.f32 %v7826, %v8390
      %v8499 = vadd.f32 %v7829, %v8393
      %v8500 = vadd.f32 %v7834, %v8398
      %v8501 = vadd.f32 %v7837, %v8401
      %v8502 = vadd.f32 %v7842, %v8406
      %v8503 = vadd.f32 %v7845, %v8409
      %v8504 = vadd.f32 %v7850, %v8414
      %v8505 = vadd.f32 %v7853, %v8417
      %v8506 = vadd.f32 %v7858, %v8422
      %v8507 = vadd.f32 %v7861, %v8425
      %v8508 = vadd.f32 %v7866, %v8430
      %v8509 = vadd.f32 %v7869, %v8433
      %v8510 = vadd.f32 %v7874, %v8438
      %v8511 = vadd.f32 %v7877, %v8441
      %v8512 = vadd.f32 %v7882, %v8446
      %v8513 = vadd.f32 %v7885, %v8449
      %v8514 = vadd.f32 %v7890, %v8454
      %v8515 = vadd.f32 %v7893, %v8457
      %v8516 = vadd.f32 %v7898, %v8462
      %v8517 = vadd.f32 %v7901, %v8465
      %v8518 = vadd.f32 %v7906, %v8470
      %v8519 = vadd.f32 %v7909, %v8473
      %v8520 = vadd.f32 %v7914, %v8478
      %v8521 = vadd.f32 %v7917, %v8481
      %v8522 = vadd.f32 %v7922, %v8486
      %v8523 = vadd.f32 %v7925, %v8489
      %v8524 = vld [vmem:[%s6] sm:$0x1]
      %v8526 = vlaneseq
      %v8527 = vshrl.u32 %v8526, 7
      %v8528 = vsub.s32 0, %v8527
      %v8529 = vrot.slane %v8524, %v8528
      %v8531 = vadd.f32 %v8492, %v8529
      %v8532 = vadd.f32 %v8493, %v8529
      %v8533 = vadd.f32 %v8494, %v8529
      %v8534 = vadd.f32 %v8495, %v8529
      %v8535 = vadd.f32 %v8496, %v8529
      %v8536 = vadd.f32 %v8497, %v8529
      %v8537 = vadd.f32 %v8498, %v8529
      %v8538 = vadd.f32 %v8499, %v8529
      %v8539 = vadd.f32 %v8500, %v8529
      %v8540 = vadd.f32 %v8501, %v8529
      %v8541 = vadd.f32 %v8502, %v8529
      %v8542 = vadd.f32 %v8503, %v8529
      %v8543 = vadd.f32 %v8504, %v8529
      %v8544 = vadd.f32 %v8505, %v8529
      %v8545 = vadd.f32 %v8506, %v8529
      %v8546 = vadd.f32 %v8507, %v8529
      %v8547 = vadd.f32 %v8508, %v8529
      %v8548 = vadd.f32 %v8509, %v8529
      %v8549 = vadd.f32 %v8510, %v8529
      %v8550 = vadd.f32 %v8511, %v8529
      %v8551 = vadd.f32 %v8512, %v8529
      %v8552 = vadd.f32 %v8513, %v8529
      %v8553 = vadd.f32 %v8514, %v8529
      %v8554 = vadd.f32 %v8515, %v8529
      %v8555 = vadd.f32 %v8516, %v8529
      %v8556 = vadd.f32 %v8517, %v8529
      %v8557 = vadd.f32 %v8518, %v8529
      %v8558 = vadd.f32 %v8519, %v8529
      %v8559 = vadd.f32 %v8520, %v8529
      %v8560 = vadd.f32 %v8521, %v8529
      %v8561 = vadd.f32 %v8522, %v8529
      %v8562 = vadd.f32 %v8523, %v8529
      %v8563 = vmax.f32 %v8531, 0.0
      %v8564 = vmax.f32 %v8532, 0.0
      %v8565 = vmax.f32 %v8533, 0.0
      %v8566 = vmax.f32 %v8534, 0.0
      %v8567 = vmax.f32 %v8535, 0.0
      %v8568 = vmax.f32 %v8536, 0.0
      %v8569 = vmax.f32 %v8537, 0.0
      %v8570 = vmax.f32 %v8538, 0.0
      %v8571 = vmax.f32 %v8539, 0.0
      %v8572 = vmax.f32 %v8540, 0.0
      %v8573 = vmax.f32 %v8541, 0.0
      %v8574 = vmax.f32 %v8542, 0.0
      %v8575 = vmax.f32 %v8543, 0.0
      %v8576 = vmax.f32 %v8544, 0.0
      %v8577 = vmax.f32 %v8545, 0.0
      %v8578 = vmax.f32 %v8546, 0.0
      %v8579 = vmax.f32 %v8547, 0.0
      %v8580 = vmax.f32 %v8548, 0.0
      %v8581 = vmax.f32 %v8549, 0.0
      %v8582 = vmax.f32 %v8550, 0.0
      %v8583 = vmax.f32 %v8551, 0.0
      %v8584 = vmax.f32 %v8552, 0.0
      %v8585 = vmax.f32 %v8553, 0.0
      %v8586 = vmax.f32 %v8554, 0.0
      %v8587 = vmax.f32 %v8555, 0.0
      %v8588 = vmax.f32 %v8556, 0.0
      %v8589 = vmax.f32 %v8557, 0.0
      %v8590 = vmax.f32 %v8558, 0.0
      %v8591 = vmax.f32 %v8559, 0.0
      %v8592 = vmax.f32 %v8560, 0.0
      %v8593 = vmax.f32 %v8561, 0.0
      %v8594 = vmax.f32 %v8562, 0.0
      %v8595 = vpack.c.bf16 %v8564, %v8563
      %v8596 = vpack.c.bf16 %v8566, %v8565
      %v8597 = vpack.c.bf16 %v8568, %v8567
      %v8598 = vpack.c.bf16 %v8570, %v8569
      %v8599 = vpack.c.bf16 %v8572, %v8571
      %v8600 = vpack.c.bf16 %v8574, %v8573
      %v8601 = vpack.c.bf16 %v8576, %v8575
      %v8602 = vpack.c.bf16 %v8578, %v8577
      %v8603 = vpack.c.bf16 %v8580, %v8579
      %v8604 = vpack.c.bf16 %v8582, %v8581
      %v8605 = vpack.c.bf16 %v8584, %v8583
      %v8606 = vpack.c.bf16 %v8586, %v8585
      %v8607 = vpack.c.bf16 %v8588, %v8587
      %v8608 = vpack.c.bf16 %v8590, %v8589
      %v8609 = vpack.c.bf16 %v8592, %v8591
      %v8610 = vpack.c.bf16 %v8594, %v8593
      %v8627 = vrot.slane %v8595, 4
      %v8628 = vrot.slane %v8596, 4
      %v8629 = vrot.slane %v8597, 4
      %v8630 = vrot.slane %v8598, 4
      %v8631 = vrot.slane %v8599, 4
      %v8632 = vrot.slane %v8600, 4
      %v8633 = vrot.slane %v8601, 4
      %v8634 = vrot.slane %v8602, 4
      %v8635 = vrot.slane %v8603, 4
      %v8636 = vrot.slane %v8604, 4
      %v8637 = vrot.slane %v8605, 4
      %v8638 = vrot.slane %v8606, 4
      %v8639 = vrot.slane %v8607, 4
      %v8640 = vrot.slane %v8608, 4
      %v8641 = vrot.slane %v8609, 4
      %v8642 = vrot.slane %v8610, 4
      %8659 = vst.msk [vmem:[%s3384] sm:$0xf0] %vm403, %v8627
      %8660 = vst.msk [vmem:[%s3384 + $0x8] sm:$0xf] %vm384, %v8627
      %8661 = vst.msk [vmem:[%s3384 + $0x10] sm:$0xf0] %vm403, %v8628
      %8662 = vst.msk [vmem:[%s3384 + $0x18] sm:$0xf] %vm384, %v8628
      %8663 = vst.msk [vmem:[%s3384 + $0x20] sm:$0xf0] %vm403, %v8629
      %8664 = vst.msk [vmem:[%s3384 + $0x28] sm:$0xf] %vm384, %v8629
      %8665 = vst.msk [vmem:[%s3384 + $0x30] sm:$0xf0] %vm403, %v8630
      %8666 = vst.msk [vmem:[%s3384 + $0x38] sm:$0xf] %vm384, %v8630
      %8667 = vst.msk [vmem:[%s3384 + $0x40] sm:$0xf0] %vm403, %v8631
      %8668 = vst.msk [vmem:[%s3384 + $0x48] sm:$0xf] %vm384, %v8631
      %8669 = vst.msk [vmem:[%s3384 + $0x50] sm:$0xf0] %vm403, %v8632
      %8670 = vst.msk [vmem:[%s3384 + $0x58] sm:$0xf] %vm384, %v8632
      %8671 = vst.msk [vmem:[%s3384 + $0x60] sm:$0xf0] %vm403, %v8633
      %8672 = vst.msk [vmem:[%s3384 + $0x68] sm:$0xf] %vm384, %v8633
      %8673 = vst.msk [vmem:[%s3384 + $0x70] sm:$0xf0] %vm403, %v8634
      %8674 = vst.msk [vmem:[%s3384 + $0x78] sm:$0xf] %vm384, %v8634
      %8675 = vst.msk [vmem:[%s3384 + $0x80] sm:$0xf0] %vm403, %v8635
      %8676 = vst.msk [vmem:[%s3384 + $0x88] sm:$0xf] %vm384, %v8635
      %8677 = vst.msk [vmem:[%s3384 + $0x90] sm:$0xf0] %vm403, %v8636
      %8678 = vst.msk [vmem:[%s3384 + $0x98] sm:$0xf] %vm384, %v8636
      %8679 = vst.msk [vmem:[%s3384 + $0xa0] sm:$0xf0] %vm403, %v8637
      %8680 = vst.msk [vmem:[%s3384 + $0xa8] sm:$0xf] %vm384, %v8637
      %8681 = vst.msk [vmem:[%s3384 + $0xb0] sm:$0xf0] %vm403, %v8638
      %8682 = vst.msk [vmem:[%s3384 + $0xb8] sm:$0xf] %vm384, %v8638
      %8683 = vst.msk [vmem:[%s3384 + $0xc0] sm:$0xf0] %vm403, %v8639
      %8684 = vst.msk [vmem:[%s3384 + $0xc8] sm:$0xf] %vm384, %v8639
      %8685 = vst.msk [vmem:[%s3384 + $0xd0] sm:$0xf0] %vm403, %v8640
      %8686 = vst.msk [vmem:[%s3384 + $0xd8] sm:$0xf] %vm384, %v8640
      %8687 = vst.msk [vmem:[%s3384 + $0xe0] sm:$0xf0] %vm403, %v8641
      %8688 = vst.msk [vmem:[%s3384 + $0xe8] sm:$0xf] %vm384, %v8641
      %8689 = vst.msk [vmem:[%s3384 + $0xf0] sm:$0xf0] %vm403, %v8642
      %8690 = vst.msk [vmem:[%s3384 + $0xf8] sm:$0xf] %vm384, %v8642
      %v8691 = vld [vmem:[#allocation3] sm:$0xf8]
      %v8692 = vld [vmem:[#allocation3 + $0x8] sm:$0xf]
      %v8693 = vld [vmem:[#allocation3 + $0x10] sm:$0xf8]
      %v8694 = vld [vmem:[#allocation3 + $0x18] sm:$0xf]
      %v8695 = vld [vmem:[#allocation3 + $0x20] sm:$0xf8]
      %v8696 = vld [vmem:[#allocation3 + $0x28] sm:$0xf]
      %v8697 = vld [vmem:[#allocation3 + $0x30] sm:$0xf8]
      %v8698 = vld [vmem:[#allocation3 + $0x38] sm:$0xf]
      %v8699 = vld [vmem:[#allocation3 + $0x40] sm:$0xf8]
      %v8700 = vld [vmem:[#allocation3 + $0x48] sm:$0xf]
      %v8701 = vld [vmem:[#allocation3 + $0x50] sm:$0xf8]
      %v8702 = vld [vmem:[#allocation3 + $0x58] sm:$0xf]
      %v8703 = vld [vmem:[#allocation3 + $0x60] sm:$0xf8]
      %v8704 = vld [vmem:[#allocation3 + $0x68] sm:$0xf]
      %v8705 = vld [vmem:[#allocation3 + $0x70] sm:$0xf8]
      %v8706 = vld [vmem:[#allocation3 + $0x78] sm:$0xf]
      %v8707 = vld [vmem:[#allocation3 + $0x80] sm:$0xf8]
      %v8708 = vld [vmem:[#allocation3 + $0x88] sm:$0xf]
      %v8709 = vld [vmem:[#allocation3 + $0x90] sm:$0xf8]
      %v8710 = vld [vmem:[#allocation3 + $0x98] sm:$0xf]
      %v8711 = vld [vmem:[#allocation3 + $0xa0] sm:$0xf8]
      %v8712 = vld [vmem:[#allocation3 + $0xa8] sm:$0xf]
      %v8713 = vld [vmem:[#allocation3 + $0xb0] sm:$0xf8]
      %v8714 = vld [vmem:[#allocation3 + $0xb8] sm:$0xf]
      %v8715 = vld [vmem:[#allocation3 + $0xc0] sm:$0xf8]
      %v8716 = vld [vmem:[#allocation3 + $0xc8] sm:$0xf]
      %v8717 = vld [vmem:[#allocation3 + $0xd0] sm:$0xf8]
      %v8718 = vld [vmem:[#allocation3 + $0xd8] sm:$0xf]
      %v8719 = vld [vmem:[#allocation3 + $0xe0] sm:$0xf8]
      %v8720 = vld [vmem:[#allocation3 + $0xe8] sm:$0xf]
      %v8721 = vld [vmem:[#allocation3 + $0xf0] sm:$0xf8]
      %v8722 = vld [vmem:[#allocation3 + $0xf8] sm:$0xf]
      %v8723 = vld [vmem:[#allocation3 + $0x100] sm:$0xf8]
      %v8724 = vld [vmem:[#allocation3 + $0x108] sm:$0xf]
      %v8725 = vld [vmem:[#allocation3 + $0x110] sm:$0xf8]
      %v8726 = vld [vmem:[#allocation3 + $0x118] sm:$0xf]
      %v8727 = vld [vmem:[#allocation3] sm:$0xf0]
      %v8728 = vld [vmem:[#allocation3 + $0x10] sm:$0xf0]
      %v8729 = vld [vmem:[#allocation3 + $0x20] sm:$0xf0]
      %v8730 = vld [vmem:[#allocation3 + $0x30] sm:$0xf0]
      %v8731 = vld [vmem:[#allocation3 + $0x40] sm:$0xf0]
      %v8732 = vld [vmem:[#allocation3 + $0x50] sm:$0xf0]
      %v8733 = vld [vmem:[#allocation3 + $0x60] sm:$0xf0]
      %v8734 = vld [vmem:[#allocation3 + $0x70] sm:$0xf0]
      %v8735 = vld [vmem:[#allocation3 + $0x80] sm:$0xf0]
      %v8736 = vld [vmem:[#allocation3 + $0x90] sm:$0xf0]
      %v8737 = vld [vmem:[#allocation3 + $0xa0] sm:$0xf0]
      %v8738 = vld [vmem:[#allocation3 + $0xb0] sm:$0xf0]
      %v8739 = vld [vmem:[#allocation3 + $0xc0] sm:$0xf0]
      %v8740 = vld [vmem:[#allocation3 + $0xd0] sm:$0xf0]
      %v8741 = vld [vmem:[#allocation3 + $0xe0] sm:$0xf0]
      %v8742 = vld [vmem:[#allocation3 + $0xf0] sm:$0xf0]
      %v8743 = vld [vmem:[#allocation3 + $0x100] sm:$0xf0]
      %v8744 = vld [vmem:[#allocation3 + $0x110] sm:$0xf0]
      %v8745 = vld [vmem:[#allocation3 + $0x8] sm:$0x1f]
      %v8746 = vld [vmem:[#allocation3 + $0x18] sm:$0x1f]
      %v8747 = vld [vmem:[#allocation3 + $0x28] sm:$0x1f]
      %v8748 = vld [vmem:[#allocation3 + $0x38] sm:$0x1f]
      %v8749 = vld [vmem:[#allocation3 + $0x48] sm:$0x1f]
      %v8750 = vld [vmem:[#allocation3 + $0x58] sm:$0x1f]
      %v8751 = vld [vmem:[#allocation3 + $0x68] sm:$0x1f]
      %v8752 = vld [vmem:[#allocation3 + $0x78] sm:$0x1f]
      %v8753 = vld [vmem:[#allocation3 + $0x88] sm:$0x1f]
      %v8754 = vld [vmem:[#allocation3 + $0x98] sm:$0x1f]
      %v8755 = vld [vmem:[#allocation3 + $0xa8] sm:$0x1f]
      %v8756 = vld [vmem:[#allocation3 + $0xb8] sm:$0x1f]
      %v8757 = vld [vmem:[#allocation3 + $0xc8] sm:$0x1f]
      %v8758 = vld [vmem:[#allocation3 + $0xd8] sm:$0x1f]
      %v8759 = vld [vmem:[#allocation3 + $0xe8] sm:$0x1f]
      %v8760 = vld [vmem:[#allocation3 + $0xf8] sm:$0x1f]
      %v8761 = vld [vmem:[#allocation3 + $0x108] sm:$0x1f]
      %v8762 = vld [vmem:[#allocation3 + $0x118] sm:$0x1f]
      %v8764 = vshrl.u32 %v8727, 16
      %v8766 = vshll.u32 %v8727, 16
      %v8768 = vrot.slane %v8766, 1
      %v8769 = vor.u32 %v8764, %v8768
      %v8771 = vshll.u32 %v8692, 16
      %v8773 = vrot.slane %v8771, 1
      %v8774 = vsel %vm3489, %v8769, %v8773
      %v8775 = vshrl.u32 %v8692, 16
      %v8777 = vor.u32 %v8775, %v8773
      %v8779 = vshrl.u32 %v8728, 16
      %v8781 = vshll.u32 %v8728, 16
      %v8783 = vrot.slane %v8781, 1
      %v8784 = vor.u32 %v8779, %v8783
      %v8786 = vshll.u32 %v8694, 16
      %v8788 = vrot.slane %v8786, 1
      %v8789 = vsel %vm3489, %v8784, %v8788
      %v8790 = vshrl.u32 %v8694, 16
      %v8792 = vor.u32 %v8790, %v8788
      %v8794 = vshrl.u32 %v8729, 16
      %v8796 = vshll.u32 %v8729, 16
      %v8798 = vrot.slane %v8796, 1
      %v8799 = vor.u32 %v8794, %v8798
      %v8801 = vshll.u32 %v8696, 16
      %v8803 = vrot.slane %v8801, 1
      %v8804 = vsel %vm3489, %v8799, %v8803
      %v8805 = vshrl.u32 %v8696, 16
      %v8807 = vor.u32 %v8805, %v8803
      %v8809 = vshrl.u32 %v8730, 16
      %v8811 = vshll.u32 %v8730, 16
      %v8813 = vrot.slane %v8811, 1
      %v8814 = vor.u32 %v8809, %v8813
      %v8816 = vshll.u32 %v8698, 16
      %v8818 = vrot.slane %v8816, 1
      %v8819 = vsel %vm3489, %v8814, %v8818
      %v8820 = vshrl.u32 %v8698, 16
      %v8822 = vor.u32 %v8820, %v8818
      %v8824 = vshrl.u32 %v8731, 16
      %v8826 = vshll.u32 %v8731, 16
      %v8828 = vrot.slane %v8826, 1
      %v8829 = vor.u32 %v8824, %v8828
      %v8831 = vshll.u32 %v8700, 16
      %v8833 = vrot.slane %v8831, 1
      %v8834 = vsel %vm3489, %v8829, %v8833
      %v8835 = vshrl.u32 %v8700, 16
      %v8837 = vor.u32 %v8835, %v8833
      %v8839 = vshrl.u32 %v8732, 16
      %v8841 = vshll.u32 %v8732, 16
      %v8843 = vrot.slane %v8841, 1
      %v8844 = vor.u32 %v8839, %v8843
      %v8846 = vshll.u32 %v8702, 16
      %v8848 = vrot.slane %v8846, 1
      %v8849 = vsel %vm3489, %v8844, %v8848
      %v8850 = vshrl.u32 %v8702, 16
      %v8852 = vor.u32 %v8850, %v8848
      %v8854 = vshrl.u32 %v8733, 16
      %v8856 = vshll.u32 %v8733, 16
      %v8858 = vrot.slane %v8856, 1
      %v8859 = vor.u32 %v8854, %v8858
      %v8861 = vshll.u32 %v8704, 16
      %v8863 = vrot.slane %v8861, 1
      %v8864 = vsel %vm3489, %v8859, %v8863
      %v8865 = vshrl.u32 %v8704, 16
      %v8867 = vor.u32 %v8865, %v8863
      %v8869 = vshrl.u32 %v8734, 16
      %v8871 = vshll.u32 %v8734, 16
      %v8873 = vrot.slane %v8871, 1
      %v8874 = vor.u32 %v8869, %v8873
      %v8876 = vshll.u32 %v8706, 16
      %v8878 = vrot.slane %v8876, 1
      %v8879 = vsel %vm3489, %v8874, %v8878
      %v8880 = vshrl.u32 %v8706, 16
      %v8882 = vor.u32 %v8880, %v8878
      %v8884 = vshrl.u32 %v8735, 16
      %v8886 = vshll.u32 %v8735, 16
      %v8888 = vrot.slane %v8886, 1
      %v8889 = vor.u32 %v8884, %v8888
      %v8891 = vshll.u32 %v8708, 16
      %v8893 = vrot.slane %v8891, 1
      %v8894 = vsel %vm3489, %v8889, %v8893
      %v8895 = vshrl.u32 %v8708, 16
      %v8897 = vor.u32 %v8895, %v8893
      %v8899 = vshrl.u32 %v8736, 16
      %v8901 = vshll.u32 %v8736, 16
      %v8903 = vrot.slane %v8901, 1
      %v8904 = vor.u32 %v8899, %v8903
      %v8906 = vshll.u32 %v8710, 16
      %v8908 = vrot.slane %v8906, 1
      %v8909 = vsel %vm3489, %v8904, %v8908
      %v8910 = vshrl.u32 %v8710, 16
      %v8912 = vor.u32 %v8910, %v8908
      %v8914 = vshrl.u32 %v8737, 16
      %v8916 = vshll.u32 %v8737, 16
      %v8918 = vrot.slane %v8916, 1
      %v8919 = vor.u32 %v8914, %v8918
      %v8921 = vshll.u32 %v8712, 16
      %v8923 = vrot.slane %v8921, 1
      %v8924 = vsel %vm3489, %v8919, %v8923
      %v8925 = vshrl.u32 %v8712, 16
      %v8927 = vor.u32 %v8925, %v8923
      %v8929 = vshrl.u32 %v8738, 16
      %v8931 = vshll.u32 %v8738, 16
      %v8933 = vrot.slane %v8931, 1
      %v8934 = vor.u32 %v8929, %v8933
      %v8936 = vshll.u32 %v8714, 16
      %v8938 = vrot.slane %v8936, 1
      %v8939 = vsel %vm3489, %v8934, %v8938
      %v8940 = vshrl.u32 %v8714, 16
      %v8942 = vor.u32 %v8940, %v8938
      %v8944 = vshrl.u32 %v8739, 16
      %v8946 = vshll.u32 %v8739, 16
      %v8948 = vrot.slane %v8946, 1
      %v8949 = vor.u32 %v8944, %v8948
      %v8951 = vshll.u32 %v8716, 16
      %v8953 = vrot.slane %v8951, 1
      %v8954 = vsel %vm3489, %v8949, %v8953
      %v8955 = vshrl.u32 %v8716, 16
      %v8957 = vor.u32 %v8955, %v8953
      %v8959 = vshrl.u32 %v8740, 16
      %v8961 = vshll.u32 %v8740, 16
      %v8963 = vrot.slane %v8961, 1
      %v8964 = vor.u32 %v8959, %v8963
      %v8966 = vshll.u32 %v8718, 16
      %v8968 = vrot.slane %v8966, 1
      %v8969 = vsel %vm3489, %v8964, %v8968
      %v8970 = vshrl.u32 %v8718, 16
      %v8972 = vor.u32 %v8970, %v8968
      %v8974 = vshrl.u32 %v8741, 16
      %v8976 = vshll.u32 %v8741, 16
      %v8978 = vrot.slane %v8976, 1
      %v8979 = vor.u32 %v8974, %v8978
      %v8981 = vshll.u32 %v8720, 16
      %v8983 = vrot.slane %v8981, 1
      %v8984 = vsel %vm3489, %v8979, %v8983
      %v8985 = vshrl.u32 %v8720, 16
      %v8987 = vor.u32 %v8985, %v8983
      %v8989 = vshrl.u32 %v8742, 16
      %v8991 = vshll.u32 %v8742, 16
      %v8993 = vrot.slane %v8991, 1
      %v8994 = vor.u32 %v8989, %v8993
      %v8996 = vshll.u32 %v8722, 16
      %v8998 = vrot.slane %v8996, 1
      %v8999 = vsel %vm3489, %v8994, %v8998
      %v9000 = vshrl.u32 %v8722, 16
      %v9002 = vor.u32 %v9000, %v8998
      %v9004 = vshrl.u32 %v8743, 16
      %v9006 = vshll.u32 %v8743, 16
      %v9008 = vrot.slane %v9006, 1
      %v9009 = vor.u32 %v9004, %v9008
      %v9011 = vshll.u32 %v8724, 16
      %v9013 = vrot.slane %v9011, 1
      %v9014 = vsel %vm3489, %v9009, %v9013
      %v9015 = vshrl.u32 %v8724, 16
      %v9017 = vor.u32 %v9015, %v9013
      %v9019 = vshrl.u32 %v8744, 16
      %v9021 = vshll.u32 %v8744, 16
      %v9023 = vrot.slane %v9021, 1
      %v9024 = vor.u32 %v9019, %v9023
      %v9026 = vshll.u32 %v8726, 16
      %v9028 = vrot.slane %v9026, 1
      %v9029 = vsel %vm3489, %v9024, %v9028
      %v9030 = vshrl.u32 %v8726, 16
      %v9032 = vor.u32 %v9030, %v9028
      %9033 = vrot.lane.b32.xlu0 %v8774, 64
      %v9034 = vpop.permute.xlu0 %9033
      %9035 = vrot.lane.b32.xlu0 %v8777, 64
      %v9036 = vpop.permute.xlu0 %9035
      %9037 = vrot.lane.b32.xlu0 %v8789, 64
      %v9038 = vpop.permute.xlu0 %9037
      %9039 = vrot.lane.b32.xlu0 %v8792, 64
      %v9040 = vpop.permute.xlu0 %9039
      %9041 = vrot.lane.b32.xlu0 %v8804, 64
      %v9042 = vpop.permute.xlu0 %9041
      %9043 = vrot.lane.b32.xlu0 %v8807, 64
      %v9044 = vpop.permute.xlu0 %9043
      %9045 = vrot.lane.b32.xlu0 %v8819, 64
      %v9046 = vpop.permute.xlu0 %9045
      %9047 = vrot.lane.b32.xlu0 %v8822, 64
      %v9048 = vpop.permute.xlu0 %9047
      %9049 = vrot.lane.b32.xlu0 %v8834, 64
      %v9050 = vpop.permute.xlu0 %9049
      %9051 = vrot.lane.b32.xlu0 %v8837, 64
      %v9052 = vpop.permute.xlu0 %9051
      %9053 = vrot.lane.b32.xlu0 %v8849, 64
      %v9054 = vpop.permute.xlu0 %9053
      %9055 = vrot.lane.b32.xlu0 %v8852, 64
      %v9056 = vpop.permute.xlu0 %9055
      %9057 = vrot.lane.b32.xlu0 %v8864, 64
      %v9058 = vpop.permute.xlu0 %9057
      %9059 = vrot.lane.b32.xlu0 %v8867, 64
      %v9060 = vpop.permute.xlu0 %9059
      %9061 = vrot.lane.b32.xlu0 %v8879, 64
      %v9062 = vpop.permute.xlu0 %9061
      %9063 = vrot.lane.b32.xlu0 %v8882, 64
      %v9064 = vpop.permute.xlu0 %9063
      %9065 = vrot.lane.b32.xlu0 %v8894, 64
      %v9066 = vpop.permute.xlu0 %9065
      %9067 = vrot.lane.b32.xlu0 %v8897, 64
      %v9068 = vpop.permute.xlu0 %9067
      %9069 = vrot.lane.b32.xlu0 %v8909, 64
      %v9070 = vpop.permute.xlu0 %9069
      %9071 = vrot.lane.b32.xlu0 %v8912, 64
      %v9072 = vpop.permute.xlu0 %9071
      %9073 = vrot.lane.b32.xlu0 %v8924, 64
      %v9074 = vpop.permute.xlu0 %9073
      %9075 = vrot.lane.b32.xlu0 %v8927, 64
      %v9076 = vpop.permute.xlu0 %9075
      %9077 = vrot.lane.b32.xlu0 %v8939, 64
      %v9078 = vpop.permute.xlu0 %9077
      %9079 = vrot.lane.b32.xlu0 %v8942, 64
      %v9080 = vpop.permute.xlu0 %9079
      %9081 = vrot.lane.b32.xlu0 %v8954, 64
      %v9082 = vpop.permute.xlu0 %9081
      %9083 = vrot.lane.b32.xlu0 %v8957, 64
      %v9084 = vpop.permute.xlu0 %9083
      %9085 = vrot.lane.b32.xlu0 %v8969, 64
      %v9086 = vpop.permute.xlu0 %9085
      %9087 = vrot.lane.b32.xlu0 %v8972, 64
      %v9088 = vpop.permute.xlu0 %9087
      %9089 = vrot.lane.b32.xlu0 %v8984, 64
      %v9090 = vpop.permute.xlu0 %9089
      %9091 = vrot.lane.b32.xlu0 %v8987, 64
      %v9092 = vpop.permute.xlu0 %9091
      %9093 = vrot.lane.b32.xlu0 %v8999, 64
      %v9094 = vpop.permute.xlu0 %9093
      %9095 = vrot.lane.b32.xlu0 %v9002, 64
      %v9096 = vpop.permute.xlu0 %9095
      %9097 = vrot.lane.b32.xlu0 %v9014, 64
      %v9098 = vpop.permute.xlu0 %9097
      %9099 = vrot.lane.b32.xlu0 %v9017, 64
      %v9100 = vpop.permute.xlu0 %9099
      %9101 = vrot.lane.b32.xlu0 %v9029, 64
      %v9102 = vpop.permute.xlu0 %9101
      %9103 = vrot.lane.b32.xlu0 %v9032, 64
      %v9104 = vpop.permute.xlu0 %9103
      %v9141 = vrot.slane %v8727, 1
      %v9142 = vrot.slane %v8745, 1
      %v9143 = vsel %vm3868, %v9141, %v9142
      %v9144 = vrot.slane %v8728, 1
      %v9145 = vrot.slane %v8746, 1
      %v9146 = vsel %vm3868, %v9144, %v9145
      %v9147 = vrot.slane %v8729, 1
      %v9148 = vrot.slane %v8747, 1
      %v9149 = vsel %vm3868, %v9147, %v9148
      %v9150 = vrot.slane %v8730, 1
      %v9151 = vrot.slane %v8748, 1
      %v9152 = vsel %vm3868, %v9150, %v9151
      %v9153 = vrot.slane %v8731, 1
      %v9154 = vrot.slane %v8749, 1
      %v9155 = vsel %vm3868, %v9153, %v9154
      %v9156 = vrot.slane %v8732, 1
      %v9157 = vrot.slane %v8750, 1
      %v9158 = vsel %vm3868, %v9156, %v9157
      %v9159 = vrot.slane %v8733, 1
      %v9160 = vrot.slane %v8751, 1
      %v9161 = vsel %vm3868, %v9159, %v9160
      %v9162 = vrot.slane %v8734, 1
      %v9163 = vrot.slane %v8752, 1
      %v9164 = vsel %vm3868, %v9162, %v9163
      %v9165 = vrot.slane %v8735, 1
      %v9166 = vrot.slane %v8753, 1
      %v9167 = vsel %vm3868, %v9165, %v9166
      %v9168 = vrot.slane %v8736, 1
      %v9169 = vrot.slane %v8754, 1
      %v9170 = vsel %vm3868, %v9168, %v9169
      %v9171 = vrot.slane %v8737, 1
      %v9172 = vrot.slane %v8755, 1
      %v9173 = vsel %vm3868, %v9171, %v9172
      %v9174 = vrot.slane %v8738, 1
      %v9175 = vrot.slane %v8756, 1
      %v9176 = vsel %vm3868, %v9174, %v9175
      %v9177 = vrot.slane %v8739, 1
      %v9178 = vrot.slane %v8757, 1
      %v9179 = vsel %vm3868, %v9177, %v9178
      %v9180 = vrot.slane %v8740, 1
      %v9181 = vrot.slane %v8758, 1
      %v9182 = vsel %vm3868, %v9180, %v9181
      %v9183 = vrot.slane %v8741, 1
      %v9184 = vrot.slane %v8759, 1
      %v9185 = vsel %vm3868, %v9183, %v9184
      %v9186 = vrot.slane %v8742, 1
      %v9187 = vrot.slane %v8760, 1
      %v9188 = vsel %vm3868, %v9186, %v9187
      %v9189 = vrot.slane %v8743, 1
      %v9190 = vrot.slane %v8761, 1
      %v9191 = vsel %vm3868, %v9189, %v9190
      %v9192 = vrot.slane %v8744, 1
      %v9193 = vrot.slane %v8762, 1
      %v9194 = vsel %vm3868, %v9192, %v9193
      %v9197 = vsel %vm378, %v8691, %v9034
      %v9199 = vsel %vm378, %v8692, %v9036
      %v9202 = vsel %vm378, %v8693, %v9038
      %v9204 = vsel %vm378, %v8694, %v9040
      %v9207 = vsel %vm378, %v8695, %v9042
      %v9209 = vsel %vm378, %v8696, %v9044
      %v9212 = vsel %vm378, %v8697, %v9046
      %v9214 = vsel %vm378, %v8698, %v9048
      %v9217 = vsel %vm378, %v8699, %v9050
      %v9219 = vsel %vm378, %v8700, %v9052
      %v9222 = vsel %vm378, %v8701, %v9054
      %v9224 = vsel %vm378, %v8702, %v9056
      %v9227 = vsel %vm378, %v8703, %v9058
      %v9229 = vsel %vm378, %v8704, %v9060
      %v9232 = vsel %vm378, %v8705, %v9062
      %v9234 = vsel %vm378, %v8706, %v9064
      %v9237 = vsel %vm378, %v8707, %v9066
      %v9239 = vsel %vm378, %v8708, %v9068
      %v9242 = vsel %vm378, %v8709, %v9070
      %v9244 = vsel %vm378, %v8710, %v9072
      %v9247 = vsel %vm378, %v8711, %v9074
      %v9249 = vsel %vm378, %v8712, %v9076
      %v9252 = vsel %vm378, %v8713, %v9078
      %v9254 = vsel %vm378, %v8714, %v9080
      %v9257 = vsel %vm378, %v8715, %v9082
      %v9259 = vsel %vm378, %v8716, %v9084
      %v9262 = vsel %vm378, %v8717, %v9086
      %v9264 = vsel %vm378, %v8718, %v9088
      %v9267 = vsel %vm378, %v8719, %v9090
      %v9269 = vsel %vm378, %v8720, %v9092
      %v9272 = vsel %vm378, %v8721, %v9094
      %v9274 = vsel %vm378, %v8722, %v9096
      %v9277 = vsel %vm378, %v8723, %v9098
      %v9279 = vsel %vm378, %v8724, %v9100
      %v9282 = vsel %vm378, %v8725, %v9102
      %v9284 = vsel %vm378, %v8726, %v9104
      %v9285 = vld [vmem:[%s7] sm:$0xf]
      %v9286 = vld [vmem:[%s7 + $0x4] sm:$0xf]
      %v9287 = vld [vmem:[%s7 + $0x8] sm:$0xf]
      %v9288 = vld [vmem:[%s7 + $0xc] sm:$0xf]
      %v9289 = vld [vmem:[%s7 + $0x10] sm:$0xf]
      %v9290 = vld [vmem:[%s7 + $0x14] sm:$0xf]
      %v9291 = vld [vmem:[%s7 + $0x18] sm:$0xf]
      %v9292 = vld [vmem:[%s7 + $0x1c] sm:$0xf]
      %v9293 = vld [vmem:[%s7 + $0x20] sm:$0xf]
      %v9294 = vld [vmem:[%s7 + $0x24] sm:$0xf]
      %v9295 = vld [vmem:[%s7 + $0x28] sm:$0xf]
      %v9296 = vld [vmem:[%s7 + $0x2c] sm:$0xf]
      %v9297 = vld [vmem:[%s7 + $0x30] sm:$0xf]
      %v9298 = vld [vmem:[%s7 + $0x34] sm:$0xf]
      %v9299 = vld [vmem:[%s7 + $0x38] sm:$0xf]
      %v9300 = vld [vmem:[%s7 + $0x3c] sm:$0xf]
      %v9301 = vld [vmem:[%s7 + $0x40] sm:$0xf]
      %v9302 = vld [vmem:[%s7 + $0x44] sm:$0xf]
      %v9303 = vld [vmem:[%s7 + $0x48] sm:$0xf]
      %v9304 = vld [vmem:[%s7 + $0x4c] sm:$0xf]
      %v9305 = vld [vmem:[%s7 + $0x50] sm:$0xf]
      %v9306 = vld [vmem:[%s7 + $0x54] sm:$0xf]
      %v9307 = vld [vmem:[%s7 + $0x58] sm:$0xf]
      %v9308 = vld [vmem:[%s7 + $0x5c] sm:$0xf]
      %s9309 = scalar_lea.vmem %s7, 96
      %v9310 = vld [vmem:[%s9309] sm:$0xf]
      %v9311 = vld [vmem:[%s9309 + $0x4] sm:$0xf]
      %v9312 = vld [vmem:[%s9309 + $0x8] sm:$0xf]
      %v9313 = vld [vmem:[%s9309 + $0xc] sm:$0xf]
      %v9314 = vld [vmem:[%s9309 + $0x10] sm:$0xf]
      %v9315 = vld [vmem:[%s9309 + $0x14] sm:$0xf]
      %v9316 = vld [vmem:[%s9309 + $0x18] sm:$0xf]
      %v9317 = vld [vmem:[%s9309 + $0x1c] sm:$0xf]
      %v9318 = vld [vmem:[%s9309 + $0x20] sm:$0xf]
      %v9319 = vld [vmem:[%s9309 + $0x24] sm:$0xf]
      %v9320 = vld [vmem:[%s9309 + $0x28] sm:$0xf]
      %v9321 = vld [vmem:[%s9309 + $0x2c] sm:$0xf]
      %v9322 = vld [vmem:[%s9309 + $0x30] sm:$0xf]
      %v9323 = vld [vmem:[%s9309 + $0x34] sm:$0xf]
      %v9324 = vld [vmem:[%s9309 + $0x38] sm:$0xf]
      %v9325 = vld [vmem:[%s9309 + $0x3c] sm:$0xf]
      %v9326 = vld [vmem:[%s9309 + $0x40] sm:$0xf]
      %v9327 = vld [vmem:[%s9309 + $0x44] sm:$0xf]
      %v9328 = vld [vmem:[%s9309 + $0x48] sm:$0xf]
      %v9329 = vld [vmem:[%s9309 + $0x4c] sm:$0xf]
      %v9330 = vld [vmem:[%s9309 + $0x50] sm:$0xf]
      %v9331 = vld [vmem:[%s9309 + $0x54] sm:$0xf]
      %v9332 = vld [vmem:[%s9309 + $0x58] sm:$0xf]
      %v9333 = vld [vmem:[%s9309 + $0x5c] sm:$0xf]
      %v9334 = vshrl.u32 %v9202, 16
      %v9336 = vrot.slane %v9334, 3
      %v9337 = vshll.u32 %v9202, 16
      %v9339 = vrot.slane %v9337, 4
      %v9340 = vor.u32 %v9336, %v9339
      %v9341 = vshrl.u32 %v9204, 16
      %v9343 = vrot.slane %v9341, 3
      %v9344 = vshll.u32 %v9204, 16
      %v9346 = vrot.slane %v9344, 4
      %v9347 = vor.u32 %v9343, %v9346
      %v9348 = vsel %vm961, %v9340, %v9347
      %v9350 = vshrl.u32 %v9146, 16
      %v9352 = vrot.slane %v9350, 3
      %v9353 = vshll.u32 %v9146, 16
      %v9355 = vrot.slane %v9353, 4
      %v9356 = vor.u32 %v9352, %v9355
      %v9358 = vshrl.u32 %v9145, 16
      %v9360 = vrot.slane %v9358, 3
      %v9361 = vshll.u32 %v9145, 16
      %v9363 = vrot.slane %v9361, 4
      %v9364 = vor.u32 %v9360, %v9363
      %v9365 = vsel %vm961, %v9356, %v9364
      %v9366 = vshrl.u32 %v9207, 16
      %v9368 = vrot.slane %v9366, 3
      %v9369 = vshll.u32 %v9207, 16
      %v9371 = vrot.slane %v9369, 4
      %v9372 = vor.u32 %v9368, %v9371
      %v9373 = vshrl.u32 %v9209, 16
      %v9375 = vrot.slane %v9373, 3
      %v9376 = vshll.u32 %v9209, 16
      %v9378 = vrot.slane %v9376, 4
      %v9379 = vor.u32 %v9375, %v9378
      %v9380 = vsel %vm961, %v9372, %v9379
      %v9382 = vshrl.u32 %v9149, 16
      %v9384 = vrot.slane %v9382, 3
      %v9385 = vshll.u32 %v9149, 16
      %v9387 = vrot.slane %v9385, 4
      %v9388 = vor.u32 %v9384, %v9387
      %v9390 = vshrl.u32 %v9148, 16
      %v9392 = vrot.slane %v9390, 3
      %v9393 = vshll.u32 %v9148, 16
      %v9395 = vrot.slane %v9393, 4
      %v9396 = vor.u32 %v9392, %v9395
      %v9397 = vsel %vm961, %v9388, %v9396
      %v9398 = vshrl.u32 %v9212, 16
      %v9400 = vrot.slane %v9398, 3
      %v9401 = vshll.u32 %v9212, 16
      %v9403 = vrot.slane %v9401, 4
      %v9404 = vor.u32 %v9400, %v9403
      %v9405 = vshrl.u32 %v9214, 16
      %v9407 = vrot.slane %v9405, 3
      %v9408 = vshll.u32 %v9214, 16
      %v9410 = vrot.slane %v9408, 4
      %v9411 = vor.u32 %v9407, %v9410
      %v9412 = vsel %vm961, %v9404, %v9411
      %v9414 = vshrl.u32 %v9152, 16
      %v9416 = vrot.slane %v9414, 3
      %v9417 = vshll.u32 %v9152, 16
      %v9419 = vrot.slane %v9417, 4
      %v9420 = vor.u32 %v9416, %v9419
      %v9422 = vshrl.u32 %v9151, 16
      %v9424 = vrot.slane %v9422, 3
      %v9425 = vshll.u32 %v9151, 16
      %v9427 = vrot.slane %v9425, 4
      %v9428 = vor.u32 %v9424, %v9427
      %v9429 = vsel %vm961, %v9420, %v9428
      %v9430 = vshrl.u32 %v9217, 16
      %v9432 = vrot.slane %v9430, 3
      %v9433 = vshll.u32 %v9217, 16
      %v9435 = vrot.slane %v9433, 4
      %v9436 = vor.u32 %v9432, %v9435
      %v9437 = vshrl.u32 %v9219, 16
      %v9439 = vrot.slane %v9437, 3
      %v9440 = vshll.u32 %v9219, 16
      %v9442 = vrot.slane %v9440, 4
      %v9443 = vor.u32 %v9439, %v9442
      %v9444 = vsel %vm961, %v9436, %v9443
      %v9446 = vshrl.u32 %v9155, 16
      %v9448 = vrot.slane %v9446, 3
      %v9449 = vshll.u32 %v9155, 16
      %v9451 = vrot.slane %v9449, 4
      %v9452 = vor.u32 %v9448, %v9451
      %v9454 = vshrl.u32 %v9154, 16
      %v9456 = vrot.slane %v9454, 3
      %v9457 = vshll.u32 %v9154, 16
      %v9459 = vrot.slane %v9457, 4
      %v9460 = vor.u32 %v9456, %v9459
      %v9461 = vsel %vm961, %v9452, %v9460
      %v9462 = vshrl.u32 %v9222, 16
      %v9464 = vrot.slane %v9462, 3
      %v9465 = vshll.u32 %v9222, 16
      %v9467 = vrot.slane %v9465, 4
      %v9468 = vor.u32 %v9464, %v9467
      %v9469 = vshrl.u32 %v9224, 16
      %v9471 = vrot.slane %v9469, 3
      %v9472 = vshll.u32 %v9224, 16
      %v9474 = vrot.slane %v9472, 4
      %v9475 = vor.u32 %v9471, %v9474
      %v9476 = vsel %vm961, %v9468, %v9475
      %v9478 = vshrl.u32 %v9158, 16
      %v9480 = vrot.slane %v9478, 3
      %v9481 = vshll.u32 %v9158, 16
      %v9483 = vrot.slane %v9481, 4
      %v9484 = vor.u32 %v9480, %v9483
      %v9486 = vshrl.u32 %v9157, 16
      %v9488 = vrot.slane %v9486, 3
      %v9489 = vshll.u32 %v9157, 16
      %v9491 = vrot.slane %v9489, 4
      %v9492 = vor.u32 %v9488, %v9491
      %v9493 = vsel %vm961, %v9484, %v9492
      %v9494 = vshrl.u32 %v9227, 16
      %v9496 = vrot.slane %v9494, 3
      %v9497 = vshll.u32 %v9227, 16
      %v9499 = vrot.slane %v9497, 4
      %v9500 = vor.u32 %v9496, %v9499
      %v9501 = vshrl.u32 %v9229, 16
      %v9503 = vrot.slane %v9501, 3
      %v9504 = vshll.u32 %v9229, 16
      %v9506 = vrot.slane %v9504, 4
      %v9507 = vor.u32 %v9503, %v9506
      %v9508 = vsel %vm961, %v9500, %v9507
      %v9510 = vshrl.u32 %v9161, 16
      %v9512 = vrot.slane %v9510, 3
      %v9513 = vshll.u32 %v9161, 16
      %v9515 = vrot.slane %v9513, 4
      %v9516 = vor.u32 %v9512, %v9515
      %v9518 = vshrl.u32 %v9160, 16
      %v9520 = vrot.slane %v9518, 3
      %v9521 = vshll.u32 %v9160, 16
      %v9523 = vrot.slane %v9521, 4
      %v9524 = vor.u32 %v9520, %v9523
      %v9525 = vsel %vm961, %v9516, %v9524
      %v9526 = vshrl.u32 %v9232, 16
      %v9528 = vrot.slane %v9526, 3
      %v9529 = vshll.u32 %v9232, 16
      %v9531 = vrot.slane %v9529, 4
      %v9532 = vor.u32 %v9528, %v9531
      %v9533 = vshrl.u32 %v9234, 16
      %v9535 = vrot.slane %v9533, 3
      %v9536 = vshll.u32 %v9234, 16
      %v9538 = vrot.slane %v9536, 4
      %v9539 = vor.u32 %v9535, %v9538
      %v9540 = vsel %vm961, %v9532, %v9539
      %v9542 = vshrl.u32 %v9164, 16
      %v9544 = vrot.slane %v9542, 3
      %v9545 = vshll.u32 %v9164, 16
      %v9547 = vrot.slane %v9545, 4
      %v9548 = vor.u32 %v9544, %v9547
      %v9550 = vshrl.u32 %v9163, 16
      %v9552 = vrot.slane %v9550, 3
      %v9553 = vshll.u32 %v9163, 16
      %v9555 = vrot.slane %v9553, 4
      %v9556 = vor.u32 %v9552, %v9555
      %v9557 = vsel %vm961, %v9548, %v9556
      %v9558 = vshrl.u32 %v9237, 16
      %v9560 = vrot.slane %v9558, 3
      %v9561 = vshll.u32 %v9237, 16
      %v9563 = vrot.slane %v9561, 4
      %v9564 = vor.u32 %v9560, %v9563
      %v9565 = vshrl.u32 %v9239, 16
      %v9567 = vrot.slane %v9565, 3
      %v9568 = vshll.u32 %v9239, 16
      %v9570 = vrot.slane %v9568, 4
      %v9571 = vor.u32 %v9567, %v9570
      %v9572 = vsel %vm961, %v9564, %v9571
      %v9574 = vshrl.u32 %v9167, 16
      %v9576 = vrot.slane %v9574, 3
      %v9577 = vshll.u32 %v9167, 16
      %v9579 = vrot.slane %v9577, 4
      %v9580 = vor.u32 %v9576, %v9579
      %v9582 = vshrl.u32 %v9166, 16
      %v9584 = vrot.slane %v9582, 3
      %v9585 = vshll.u32 %v9166, 16
      %v9587 = vrot.slane %v9585, 4
      %v9588 = vor.u32 %v9584, %v9587
      %v9589 = vsel %vm961, %v9580, %v9588
      %v9590 = vshrl.u32 %v9242, 16
      %v9592 = vrot.slane %v9590, 3
      %v9593 = vshll.u32 %v9242, 16
      %v9595 = vrot.slane %v9593, 4
      %v9596 = vor.u32 %v9592, %v9595
      %v9597 = vshrl.u32 %v9244, 16
      %v9599 = vrot.slane %v9597, 3
      %v9600 = vshll.u32 %v9244, 16
      %v9602 = vrot.slane %v9600, 4
      %v9603 = vor.u32 %v9599, %v9602
      %v9604 = vsel %vm961, %v9596, %v9603
      %v9606 = vshrl.u32 %v9170, 16
      %v9608 = vrot.slane %v9606, 3
      %v9609 = vshll.u32 %v9170, 16
      %v9611 = vrot.slane %v9609, 4
      %v9612 = vor.u32 %v9608, %v9611
      %v9614 = vshrl.u32 %v9169, 16
      %v9616 = vrot.slane %v9614, 3
      %v9617 = vshll.u32 %v9169, 16
      %v9619 = vrot.slane %v9617, 4
      %v9620 = vor.u32 %v9616, %v9619
      %v9621 = vsel %vm961, %v9612, %v9620
      %v9622 = vshrl.u32 %v9247, 16
      %v9624 = vrot.slane %v9622, 3
      %v9625 = vshll.u32 %v9247, 16
      %v9627 = vrot.slane %v9625, 4
      %v9628 = vor.u32 %v9624, %v9627
      %v9629 = vshrl.u32 %v9249, 16
      %v9631 = vrot.slane %v9629, 3
      %v9632 = vshll.u32 %v9249, 16
      %v9634 = vrot.slane %v9632, 4
      %v9635 = vor.u32 %v9631, %v9634
      %v9636 = vsel %vm961, %v9628, %v9635
      %v9638 = vshrl.u32 %v9173, 16
      %v9640 = vrot.slane %v9638, 3
      %v9641 = vshll.u32 %v9173, 16
      %v9643 = vrot.slane %v9641, 4
      %v9644 = vor.u32 %v9640, %v9643
      %v9646 = vshrl.u32 %v9172, 16
      %v9648 = vrot.slane %v9646, 3
      %v9649 = vshll.u32 %v9172, 16
      %v9651 = vrot.slane %v9649, 4
      %v9652 = vor.u32 %v9648, %v9651
      %v9653 = vsel %vm961, %v9644, %v9652
      %v9654 = vshrl.u32 %v9252, 16
      %v9656 = vrot.slane %v9654, 3
      %v9657 = vshll.u32 %v9252, 16
      %v9659 = vrot.slane %v9657, 4
      %v9660 = vor.u32 %v9656, %v9659
      %v9661 = vshrl.u32 %v9254, 16
      %v9663 = vrot.slane %v9661, 3
      %v9664 = vshll.u32 %v9254, 16
      %v9666 = vrot.slane %v9664, 4
      %v9667 = vor.u32 %v9663, %v9666
      %v9668 = vsel %vm961, %v9660, %v9667
      %v9670 = vshrl.u32 %v9176, 16
      %v9672 = vrot.slane %v9670, 3
      %v9673 = vshll.u32 %v9176, 16
      %v9675 = vrot.slane %v9673, 4
      %v9676 = vor.u32 %v9672, %v9675
      %v9678 = vshrl.u32 %v9175, 16
      %v9680 = vrot.slane %v9678, 3
      %v9681 = vshll.u32 %v9175, 16
      %v9683 = vrot.slane %v9681, 4
      %v9684 = vor.u32 %v9680, %v9683
      %v9685 = vsel %vm961, %v9676, %v9684
      %v9686 = vshrl.u32 %v9257, 16
      %v9688 = vrot.slane %v9686, 3
      %v9689 = vshll.u32 %v9257, 16
      %v9691 = vrot.slane %v9689, 4
      %v9692 = vor.u32 %v9688, %v9691
      %v9693 = vshrl.u32 %v9259, 16
      %v9695 = vrot.slane %v9693, 3
      %v9696 = vshll.u32 %v9259, 16
      %v9698 = vrot.slane %v9696, 4
      %v9699 = vor.u32 %v9695, %v9698
      %v9700 = vsel %vm961, %v9692, %v9699
      %v9702 = vshrl.u32 %v9179, 16
      %v9704 = vrot.slane %v9702, 3
      %v9705 = vshll.u32 %v9179, 16
      %v9707 = vrot.slane %v9705, 4
      %v9708 = vor.u32 %v9704, %v9707
      %v9710 = vshrl.u32 %v9178, 16
      %v9712 = vrot.slane %v9710, 3
      %v9713 = vshll.u32 %v9178, 16
      %v9715 = vrot.slane %v9713, 4
      %v9716 = vor.u32 %v9712, %v9715
      %v9717 = vsel %vm961, %v9708, %v9716
      %v9718 = vshrl.u32 %v9262, 16
      %v9720 = vrot.slane %v9718, 3
      %v9721 = vshll.u32 %v9262, 16
      %v9723 = vrot.slane %v9721, 4
      %v9724 = vor.u32 %v9720, %v9723
      %v9725 = vshrl.u32 %v9264, 16
      %v9727 = vrot.slane %v9725, 3
      %v9728 = vshll.u32 %v9264, 16
      %v9730 = vrot.slane %v9728, 4
      %v9731 = vor.u32 %v9727, %v9730
      %v9732 = vsel %vm961, %v9724, %v9731
      %v9734 = vshrl.u32 %v9182, 16
      %v9736 = vrot.slane %v9734, 3
      %v9737 = vshll.u32 %v9182, 16
      %v9739 = vrot.slane %v9737, 4
      %v9740 = vor.u32 %v9736, %v9739
      %v9742 = vshrl.u32 %v9181, 16
      %v9744 = vrot.slane %v9742, 3
      %v9745 = vshll.u32 %v9181, 16
      %v9747 = vrot.slane %v9745, 4
      %v9748 = vor.u32 %v9744, %v9747
      %v9749 = vsel %vm961, %v9740, %v9748
      %v9750 = vshrl.u32 %v9267, 16
      %v9752 = vrot.slane %v9750, 3
      %v9753 = vshll.u32 %v9267, 16
      %v9755 = vrot.slane %v9753, 4
      %v9756 = vor.u32 %v9752, %v9755
      %v9757 = vshrl.u32 %v9269, 16
      %v9759 = vrot.slane %v9757, 3
      %v9760 = vshll.u32 %v9269, 16
      %v9762 = vrot.slane %v9760, 4
      %v9763 = vor.u32 %v9759, %v9762
      %v9764 = vsel %vm961, %v9756, %v9763
      %v9766 = vshrl.u32 %v9185, 16
      %v9768 = vrot.slane %v9766, 3
      %v9769 = vshll.u32 %v9185, 16
      %v9771 = vrot.slane %v9769, 4
      %v9772 = vor.u32 %v9768, %v9771
      %v9774 = vshrl.u32 %v9184, 16
      %v9776 = vrot.slane %v9774, 3
      %v9777 = vshll.u32 %v9184, 16
      %v9779 = vrot.slane %v9777, 4
      %v9780 = vor.u32 %v9776, %v9779
      %v9781 = vsel %vm961, %v9772, %v9780
      %v9782 = vshrl.u32 %v9272, 16
      %v9784 = vrot.slane %v9782, 3
      %v9785 = vshll.u32 %v9272, 16
      %v9787 = vrot.slane %v9785, 4
      %v9788 = vor.u32 %v9784, %v9787
      %v9789 = vshrl.u32 %v9274, 16
      %v9791 = vrot.slane %v9789, 3
      %v9792 = vshll.u32 %v9274, 16
      %v9794 = vrot.slane %v9792, 4
      %v9795 = vor.u32 %v9791, %v9794
      %v9796 = vsel %vm961, %v9788, %v9795
      %v9798 = vshrl.u32 %v9188, 16
      %v9800 = vrot.slane %v9798, 3
      %v9801 = vshll.u32 %v9188, 16
      %v9803 = vrot.slane %v9801, 4
      %v9804 = vor.u32 %v9800, %v9803
      %v9806 = vshrl.u32 %v9187, 16
      %v9808 = vrot.slane %v9806, 3
      %v9809 = vshll.u32 %v9187, 16
      %v9811 = vrot.slane %v9809, 4
      %v9812 = vor.u32 %v9808, %v9811
      %v9813 = vsel %vm961, %v9804, %v9812
      %v9814 = vshrl.u32 %v9277, 16
      %v9816 = vrot.slane %v9814, 3
      %v9817 = vshll.u32 %v9277, 16
      %v9819 = vrot.slane %v9817, 4
      %v9820 = vor.u32 %v9816, %v9819
      %v9821 = vshrl.u32 %v9279, 16
      %v9823 = vrot.slane %v9821, 3
      %v9824 = vshll.u32 %v9279, 16
      %v9826 = vrot.slane %v9824, 4
      %v9827 = vor.u32 %v9823, %v9826
      %v9828 = vsel %vm961, %v9820, %v9827
      %v9830 = vshrl.u32 %v9191, 16
      %v9832 = vrot.slane %v9830, 3
      %v9833 = vshll.u32 %v9191, 16
      %v9835 = vrot.slane %v9833, 4
      %v9836 = vor.u32 %v9832, %v9835
      %v9838 = vshrl.u32 %v9190, 16
      %v9840 = vrot.slane %v9838, 3
      %v9841 = vshll.u32 %v9190, 16
      %v9843 = vrot.slane %v9841, 4
      %v9844 = vor.u32 %v9840, %v9843
      %v9845 = vsel %vm961, %v9836, %v9844
      %v9886 = vunpack.c.l.b16 %v9310
      %v9887 = vunpack.c.l.b16 %v9311
      %v9888 = vunpack.c.l.b16 %v9312
      %v9889 = vunpack.c.l.b16 %v9313
      %v9890 = vunpack.c.l.b16 %v9314
      %v9891 = vunpack.c.l.b16 %v9315
      %v9892 = vunpack.c.l.b16 %v9316
      %v9893 = vunpack.c.l.b16 %v9317
      %v9894 = vunpack.c.l.b16 %v9318
      %v9895 = vunpack.c.l.b16 %v9319
      %v9896 = vunpack.c.l.b16 %v9320
      %v9897 = vunpack.c.l.b16 %v9321
      %v9898 = vunpack.c.l.b16 %v9322
      %v9899 = vunpack.c.l.b16 %v9323
      %v9900 = vunpack.c.l.b16 %v9324
      %v9901 = vunpack.c.l.b16 %v9325
      %v9902 = vunpack.c.l.b16 %v9326
      %v9903 = vunpack.c.l.b16 %v9327
      %v9904 = vunpack.c.l.b16 %v9328
      %v9905 = vunpack.c.l.b16 %v9329
      %v9906 = vunpack.c.l.b16 %v9330
      %v9907 = vunpack.c.l.b16 %v9331
      %v9908 = vunpack.c.l.b16 %v9332
      %v9909 = vunpack.c.l.b16 %v9333
      %v9910 = vpack.c.b16 %v9887, %v9886
      %v9911 = vpack.c.b16 %v9889, %v9888
      %v9912 = vpack.c.b16 %v9891, %v9890
      %v9913 = vpack.c.b16 %v9893, %v9892
      %v9914 = vpack.c.b16 %v9895, %v9894
      %v9915 = vpack.c.b16 %v9897, %v9896
      %v9916 = vpack.c.b16 %v9899, %v9898
      %v9917 = vpack.c.b16 %v9901, %v9900
      %v9918 = vpack.c.b16 %v9903, %v9902
      %v9919 = vpack.c.b16 %v9905, %v9904
      %v9920 = vpack.c.b16 %v9907, %v9906
      %v9921 = vpack.c.b16 %v9909, %v9908
      %v9935 = vsel %vm378, %v9365, 0
      %v9938 = vsel %vm378, %v9397, 0
      %v9941 = vsel %vm378, %v9429, 0
      %v9944 = vsel %vm378, %v9461, 0
      %v9947 = vsel %vm378, %v9493, 0
      %v9950 = vsel %vm378, %v9525, 0
      %v9953 = vsel %vm378, %v9557, 0
      %v9956 = vsel %vm378, %v9589, 0
      %v9959 = vsel %vm378, %v9621, 0
      %v9962 = vsel %vm378, %v9653, 0
      %v9965 = vsel %vm378, %v9685, 0
      %v9968 = vsel %vm378, %v9717, 0
      %v9971 = vsel %vm378, %v9749, 0
      %v9974 = vsel %vm378, %v9781, 0
      %v9977 = vsel %vm378, %v9813, 0
      %v9980 = vsel %vm378, %v9845, 0
      %9982 = vmatprep.subr.bf16.mxu0 0
      %9983 = vmatpush1.bf16.msra.mxu0 %v9910
      %9984 = vmatprep.subr.bf16.mxu0 0
      %9985 = vmatpush1.bf16.msra.mxu0 %v9911
      %9986 = vmatprep.subr.bf16.mxu0 0
      %9987 = vmatpush1.bf16.msra.mxu0 %v9912
      %9988 = vmatprep.subr.bf16.mxu0 0
      %9989 = vmatpush1.bf16.msra.mxu0 %v9913
      %9990 = vmatprep.subr.bf16.mxu0 0
      %9991 = vmatpush1.bf16.msra.mxu0 %v9914
      %9992 = vmatprep.subr.bf16.mxu0 0
      %9993 = vmatpush1.bf16.msra.mxu0 %v9915
      %9994 = vmatprep.subr.bf16.mxu0 0
      %9995 = vmatpush1.bf16.msra.mxu0 %v9916
      %9996 = vmatprep.subr.bf16.mxu0 0
      %9997 = vmatpush1.bf16.msra.mxu0 %v9917
      %9998 = vmatprep.subr.bf16.mxu0 0
      %9999 = vmatpush1.bf16.msra.mxu0 %v9918
      %10000 = vmatprep.subr.bf16.mxu0 0
      %10001 = vmatpush1.bf16.msra.mxu0 %v9919
      %10002 = vmatprep.subr.bf16.mxu0 0
      %10003 = vmatpush1.bf16.msra.mxu0 %v9920
      %10004 = vmatprep.subr.bf16.mxu0 0
      %10005 = vmatpush1.bf16.msra.mxu0 %v9921
      %10006 = vmatprep.subr.bf16.mxu0 0
      %10007 = vmatpush1.bf16.msra.mxu0 0
      %10008 = vmatprep.subr.bf16.mxu0 0
      %10009 = vmatpush1.bf16.msra.mxu0 0
      %10010 = vmatprep.subr.bf16.mxu0 0
      %10011 = vmatpush1.bf16.msra.mxu0 0
      %10012 = vmatprep.subr.bf16.mxu0 0
      %10013 = vmatpush1.bf16.msra.mxu0 0
      %10014 = vmatprep.mubr.bf16.mxu0 %v9935
      %10015 = vmatmul.mubr.bf16.gmra.mrb[0].mxu0 %v9348
      %v10016 = vpop.f32.mrb[0].mxu0
      %v10017 = vadd.f32 0.0, %v10016
      %v10018 = vpop.f32.mrb[0].mxu0
      %v10019 = vpop.f32.mrb[0].mxu0
      %v10020 = vadd.f32 0.0, %v10019
      %v10021 = vpop.f32.mrb[0].mxu0
      %10022 = vmatprep.mubr.bf16.mxu0 %v9938
      %10023 = vmatmul.mubr.bf16.gmra.mrb[0].mxu0 %v9380
      %v10024 = vpop.f32.mrb[0].mxu0
      %v10025 = vadd.f32 0.0, %v10024
      %v10026 = vpop.f32.mrb[0].mxu0
      %v10027 = vpop.f32.mrb[0].mxu0
      %v10028 = vadd.f32 0.0, %v10027
      %v10029 = vpop.f32.mrb[0].mxu0
      %10030 = vmatprep.mubr.bf16.mxu0 %v9941
      %10031 = vmatmul.mubr.bf16.gmra.mrb[0].mxu0 %v9412
      %v10032 = vpop.f32.mrb[0].mxu0
      %v10033 = vadd.f32 0.0, %v10032
      %v10034 = vpop.f32.mrb[0].mxu0
      %v10035 = vpop.f32.mrb[0].mxu0
      %v10036 = vadd.f32 0.0, %v10035
      %v10037 = vpop.f32.mrb[0].mxu0
      %10038 = vmatprep.mubr.bf16.mxu0 %v9944
      %10039 = vmatmul.mubr.bf16.gmra.mrb[0].mxu0 %v9444
      %v10040 = vpop.f32.mrb[0].mxu0
      %v10041 = vadd.f32 0.0, %v10040
      %v10042 = vpop.f32.mrb[0].mxu0
      %v10043 = vpop.f32.mrb[0].mxu0
      %v10044 = vadd.f32 0.0, %v10043
      %v10045 = vpop.f32.mrb[0].mxu0
      %10046 = vmatprep.mubr.bf16.mxu0 %v9947
      %10047 = vmatmul.mubr.bf16.gmra.mrb[0].mxu0 %v9476
      %v10048 = vpop.f32.mrb[0].mxu0
      %v10049 = vadd.f32 0.0, %v10048
      %v10050 = vpop.f32.mrb[0].mxu0
      %v10051 = vpop.f32.mrb[0].mxu0
      %v10052 = vadd.f32 0.0, %v10051
      %v10053 = vpop.f32.mrb[0].mxu0
      %10054 = vmatprep.mubr.bf16.mxu0 %v9950
      %10055 = vmatmul.mubr.bf16.gmra.mrb[0].mxu0 %v9508
      %v10056 = vpop.f32.mrb[0].mxu0
      %v10057 = vadd.f32 0.0, %v10056
      %v10058 = vpop.f32.mrb[0].mxu0
      %v10059 = vpop.f32.mrb[0].mxu0
      %v10060 = vadd.f32 0.0, %v10059
      %v10061 = vpop.f32.mrb[0].mxu0
      %10062 = vmatprep.mubr.bf16.mxu0 %v9953
      %10063 = vmatmul.mubr.bf16.gmra.mrb[0].mxu0 %v9540
      %v10064 = vpop.f32.mrb[0].mxu0
      %v10065 = vadd.f32 0.0, %v10064
      %v10066 = vpop.f32.mrb[0].mxu0
      %v10067 = vpop.f32.mrb[0].mxu0
      %v10068 = vadd.f32 0.0, %v10067
      %v10069 = vpop.f32.mrb[0].mxu0
      %10070 = vmatprep.mubr.bf16.mxu0 %v9956
      %10071 = vmatmul.mubr.bf16.gmra.mrb[0].mxu0 %v9572
      %v10072 = vpop.f32.mrb[0].mxu0
      %v10073 = vadd.f32 0.0, %v10072
      %v10074 = vpop.f32.mrb[0].mxu0
      %v10075 = vpop.f32.mrb[0].mxu0
      %v10076 = vadd.f32 0.0, %v10075
      %v10077 = vpop.f32.mrb[0].mxu0
      %10078 = vmatprep.mubr.bf16.mxu0 %v9959
      %10079 = vmatmul.mubr.bf16.gmra.mrb[0].mxu0 %v9604
      %v10080 = vpop.f32.mrb[0].mxu0
      %v10081 = vadd.f32 0.0, %v10080
      %v10082 = vpop.f32.mrb[0].mxu0
      %v10083 = vpop.f32.mrb[0].mxu0
      %v10084 = vadd.f32 0.0, %v10083
      %v10085 = vpop.f32.mrb[0].mxu0
      %10086 = vmatprep.mubr.bf16.mxu0 %v9962
      %10087 = vmatmul.mubr.bf16.gmra.mrb[0].mxu0 %v9636
      %v10088 = vpop.f32.mrb[0].mxu0
      %v10089 = vadd.f32 0.0, %v10088
      %v10090 = vpop.f32.mrb[0].mxu0
      %v10091 = vpop.f32.mrb[0].mxu0
      %v10092 = vadd.f32 0.0, %v10091
      %v10093 = vpop.f32.mrb[0].mxu0
      %10094 = vmatprep.mubr.bf16.mxu0 %v9965
      %10095 = vmatmul.mubr.bf16.gmra.mrb[0].mxu0 %v9668
      %v10096 = vpop.f32.mrb[0].mxu0
      %v10097 = vadd.f32 0.0, %v10096
      %v10098 = vpop.f32.mrb[0].mxu0
      %v10099 = vpop.f32.mrb[0].mxu0
      %v10100 = vadd.f32 0.0, %v10099
      %v10101 = vpop.f32.mrb[0].mxu0
      %10102 = vmatprep.mubr.bf16.mxu0 %v9968
      %10103 = vmatmul.mubr.bf16.gmra.mrb[0].mxu0 %v9700
      %v10104 = vpop.f32.mrb[0].mxu0
      %v10105 = vadd.f32 0.0, %v10104
      %v10106 = vpop.f32.mrb[0].mxu0
      %v10107 = vpop.f32.mrb[0].mxu0
      %v10108 = vadd.f32 0.0, %v10107
      %v10109 = vpop.f32.mrb[0].mxu0
      %10110 = vmatprep.mubr.bf16.mxu0 %v9971
      %10111 = vmatmul.mubr.bf16.gmra.mrb[0].mxu0 %v9732
      %v10112 = vpop.f32.mrb[0].mxu0
      %v10113 = vadd.f32 0.0, %v10112
      %v10114 = vpop.f32.mrb[0].mxu0
      %v10115 = vpop.f32.mrb[0].mxu0
      %v10116 = vadd.f32 0.0, %v10115
      %v10117 = vpop.f32.mrb[0].mxu0
      %10118 = vmatprep.mubr.bf16.mxu0 %v9974
      %10119 = vmatmul.mubr.bf16.gmra.mrb[0].mxu0 %v9764
      %v10120 = vpop.f32.mrb[0].mxu0
      %v10121 = vadd.f32 0.0, %v10120
      %v10122 = vpop.f32.mrb[0].mxu0
      %v10123 = vpop.f32.mrb[0].mxu0
      %v10124 = vadd.f32 0.0, %v10123
      %v10125 = vpop.f32.mrb[0].mxu0
      %10126 = vmatprep.mubr.bf16.mxu0 %v9977
      %10127 = vmatmul.mubr.bf16.gmra.mrb[0].mxu0 %v9796
      %v10128 = vpop.f32.mrb[0].mxu0
      %v10129 = vadd.f32 0.0, %v10128
      %v10130 = vpop.f32.mrb[0].mxu0
      %v10131 = vpop.f32.mrb[0].mxu0
      %v10132 = vadd.f32 0.0, %v10131
      %v10133 = vpop.f32.mrb[0].mxu0
      %10134 = vmatprep.mubr.bf16.mxu0 %v9980
      %10135 = vmatmul.mubr.bf16.gmra.mrb[0].mxu0 %v9828
      %v10136 = vpop.f32.mrb[0].mxu0
      %v10137 = vadd.f32 0.0, %v10136
      %v10138 = vpop.f32.mrb[0].mxu0
      %v10139 = vpop.f32.mrb[0].mxu0
      %v10140 = vadd.f32 0.0, %v10139
      %v10141 = vpop.f32.mrb[0].mxu0
      %10142 = vdwg.mxu0
      %v10143 = vshrl.u32 %v9197, 16
      %v10145 = vrot.slane %v10143, 3
      %v10146 = vshll.u32 %v9197, 16
      %v10148 = vrot.slane %v10146, 4
      %v10149 = vor.u32 %v10145, %v10148
      %v10150 = vshrl.u32 %v9199, 16
      %v10152 = vrot.slane %v10150, 3
      %v10153 = vshll.u32 %v9199, 16
      %v10155 = vrot.slane %v10153, 4
      %v10156 = vor.u32 %v10152, %v10155
      %v10157 = vsel %vm961, %v10149, %v10156
      %v10159 = vshrl.u32 %v9143, 16
      %v10161 = vrot.slane %v10159, 3
      %v10162 = vshll.u32 %v9143, 16
      %v10164 = vrot.slane %v10162, 4
      %v10165 = vor.u32 %v10161, %v10164
      %v10167 = vshrl.u32 %v9142, 16
      %v10169 = vrot.slane %v10167, 3
      %v10170 = vshll.u32 %v9142, 16
      %v10172 = vrot.slane %v10170, 4
      %v10173 = vor.u32 %v10169, %v10172
      %v10174 = vsel %vm961, %v10165, %v10173
      %v10200 = vunpack.c.l.b16 %v9285
      %v10201 = vunpack.c.l.b16 %v9286
      %v10202 = vunpack.c.l.b16 %v9287
      %v10203 = vunpack.c.l.b16 %v9288
      %v10204 = vunpack.c.l.b16 %v9289
      %v10205 = vunpack.c.l.b16 %v9290
      %v10206 = vunpack.c.l.b16 %v9291
      %v10207 = vunpack.c.l.b16 %v9292
      %v10208 = vunpack.c.l.b16 %v9293
      %v10209 = vunpack.c.l.b16 %v9294
      %v10210 = vunpack.c.l.b16 %v9295
      %v10211 = vunpack.c.l.b16 %v9296
      %v10212 = vunpack.c.l.b16 %v9297
      %v10213 = vunpack.c.l.b16 %v9298
      %v10214 = vunpack.c.l.b16 %v9299
      %v10215 = vunpack.c.l.b16 %v9300
      %v10216 = vunpack.c.l.b16 %v9301
      %v10217 = vunpack.c.l.b16 %v9302
      %v10218 = vunpack.c.l.b16 %v9303
      %v10219 = vunpack.c.l.b16 %v9304
      %v10220 = vunpack.c.l.b16 %v9305
      %v10221 = vunpack.c.l.b16 %v9306
      %v10222 = vunpack.c.l.b16 %v9307
      %v10223 = vunpack.c.l.b16 %v9308
      %v10224 = vpack.c.b16 %v10201, %v10200
      %v10225 = vpack.c.b16 %v10203, %v10202
      %v10226 = vpack.c.b16 %v10205, %v10204
      %v10227 = vpack.c.b16 %v10207, %v10206
      %v10228 = vpack.c.b16 %v10209, %v10208
      %v10229 = vpack.c.b16 %v10211, %v10210
      %v10230 = vpack.c.b16 %v10213, %v10212
      %v10231 = vpack.c.b16 %v10215, %v10214
      %v10232 = vpack.c.b16 %v10217, %v10216
      %v10233 = vpack.c.b16 %v10219, %v10218
      %v10234 = vpack.c.b16 %v10221, %v10220
      %v10235 = vpack.c.b16 %v10223, %v10222
      %v10249 = vsel %vm378, %v10174, 0
      %10251 = vmatprep.subr.bf16.mxu0 0
      %10252 = vmatpush1.bf16.msra.mxu0 %v10224
      %10253 = vmatprep.subr.bf16.mxu0 0
      %10254 = vmatpush1.bf16.msra.mxu0 %v10225
      %10255 = vmatprep.subr.bf16.mxu0 0
      %10256 = vmatpush1.bf16.msra.mxu0 %v10226
      %10257 = vmatprep.subr.bf16.mxu0 0
      %10258 = vmatpush1.bf16.msra.mxu0 %v10227
      %10259 = vmatprep.subr.bf16.mxu0 0
      %10260 = vmatpush1.bf16.msra.mxu0 %v10228
      %10261 = vmatprep.subr.bf16.mxu0 0
      %10262 = vmatpush1.bf16.msra.mxu0 %v10229
      %10263 = vmatprep.subr.bf16.mxu0 0
      %10264 = vmatpush1.bf16.msra.mxu0 %v10230
      %10265 = vmatprep.subr.bf16.mxu0 0
      %10266 = vmatpush1.bf16.msra.mxu0 %v10231
      %10267 = vmatprep.subr.bf16.mxu0 0
      %10268 = vmatpush1.bf16.msra.mxu0 %v10232
      %10269 = vmatprep.subr.bf16.mxu0 0
      %10270 = vmatpush1.bf16.msra.mxu0 %v10233
      %10271 = vmatprep.subr.bf16.mxu0 0
      %10272 = vmatpush1.bf16.msra.mxu0 %v10234
      %10273 = vmatprep.subr.bf16.mxu0 0
      %10274 = vmatpush1.bf16.msra.mxu0 %v10235
      %10275 = vmatprep.subr.bf16.mxu0 0
      %10276 = vmatpush1.bf16.msra.mxu0 0
      %10277 = vmatprep.subr.bf16.mxu0 0
      %10278 = vmatpush1.bf16.msra.mxu0 0
      %10279 = vmatprep.subr.bf16.mxu0 0
      %10280 = vmatpush1.bf16.msra.mxu0 0
      %10281 = vmatprep.subr.bf16.mxu0 0
      %10282 = vmatpush1.bf16.msra.mxu0 0
      %10283 = vmatprep.mubr.bf16.mxu0 %v10249
      %10284 = vmatmul.mubr.bf16.gmra.mrb[0].mxu0 %v10157
      %v10285 = vpop.f32.mrb[0].mxu0
      %v10286 = vadd.f32 %v10017, %v10285
      %v10287 = vpop.f32.mrb[0].mxu0
      %v10288 = vpop.f32.mrb[0].mxu0
      %v10289 = vadd.f32 %v10020, %v10288
      %v10290 = vpop.f32.mrb[0].mxu0
      %10291 = vmatprep.mubr.bf16.mxu0 %v9935
      %10292 = vmatmul.mubr.bf16.gmra.mrb[0].mxu0 %v9348
      %v10293 = vpop.f32.mrb[0].mxu0
      %v10294 = vadd.f32 %v10025, %v10293
      %v10295 = vpop.f32.mrb[0].mxu0
      %v10296 = vpop.f32.mrb[0].mxu0
      %v10297 = vadd.f32 %v10028, %v10296
      %v10298 = vpop.f32.mrb[0].mxu0
      %10299 = vmatprep.mubr.bf16.mxu0 %v9938
      %10300 = vmatmul.mubr.bf16.gmra.mrb[0].mxu0 %v9380
      %v10301 = vpop.f32.mrb[0].mxu0
      %v10302 = vadd.f32 %v10033, %v10301
      %v10303 = vpop.f32.mrb[0].mxu0
      %v10304 = vpop.f32.mrb[0].mxu0
      %v10305 = vadd.f32 %v10036, %v10304
      %v10306 = vpop.f32.mrb[0].mxu0
      %10307 = vmatprep.mubr.bf16.mxu0 %v9941
      %10308 = vmatmul.mubr.bf16.gmra.mrb[0].mxu0 %v9412
      %v10309 = vpop.f32.mrb[0].mxu0
      %v10310 = vadd.f32 %v10041, %v10309
      %v10311 = vpop.f32.mrb[0].mxu0
      %v10312 = vpop.f32.mrb[0].mxu0
      %v10313 = vadd.f32 %v10044, %v10312
      %v10314 = vpop.f32.mrb[0].mxu0
      %10315 = vmatprep.mubr.bf16.mxu0 %v9944
      %10316 = vmatmul.mubr.bf16.gmra.mrb[0].mxu0 %v9444
      %v10317 = vpop.f32.mrb[0].mxu0
      %v10318 = vadd.f32 %v10049, %v10317
      %v10319 = vpop.f32.mrb[0].mxu0
      %v10320 = vpop.f32.mrb[0].mxu0
      %v10321 = vadd.f32 %v10052, %v10320
      %v10322 = vpop.f32.mrb[0].mxu0
      %10323 = vmatprep.mubr.bf16.mxu0 %v9947
      %10324 = vmatmul.mubr.bf16.gmra.mrb[0].mxu0 %v9476
      %v10325 = vpop.f32.mrb[0].mxu0
      %v10326 = vadd.f32 %v10057, %v10325
      %v10327 = vpop.f32.mrb[0].mxu0
      %v10328 = vpop.f32.mrb[0].mxu0
      %v10329 = vadd.f32 %v10060, %v10328
      %v10330 = vpop.f32.mrb[0].mxu0
      %10331 = vmatprep.mubr.bf16.mxu0 %v9950
      %10332 = vmatmul.mubr.bf16.gmra.mrb[0].mxu0 %v9508
      %v10333 = vpop.f32.mrb[0].mxu0
      %v10334 = vadd.f32 %v10065, %v10333
      %v10335 = vpop.f32.mrb[0].mxu0
      %v10336 = vpop.f32.mrb[0].mxu0
      %v10337 = vadd.f32 %v10068, %v10336
      %v10338 = vpop.f32.mrb[0].mxu0
      %10339 = vmatprep.mubr.bf16.mxu0 %v9953
      %10340 = vmatmul.mubr.bf16.gmra.mrb[0].mxu0 %v9540
      %v10341 = vpop.f32.mrb[0].mxu0
      %v10342 = vadd.f32 %v10073, %v10341
      %v10343 = vpop.f32.mrb[0].mxu0
      %v10344 = vpop.f32.mrb[0].mxu0
      %v10345 = vadd.f32 %v10076, %v10344
      %v10346 = vpop.f32.mrb[0].mxu0
      %10347 = vmatprep.mubr.bf16.mxu0 %v9956
      %10348 = vmatmul.mubr.bf16.gmra.mrb[0].mxu0 %v9572
      %v10349 = vpop.f32.mrb[0].mxu0
      %v10350 = vadd.f32 %v10081, %v10349
      %v10351 = vpop.f32.mrb[0].mxu0
      %v10352 = vpop.f32.mrb[0].mxu0
      %v10353 = vadd.f32 %v10084, %v10352
      %v10354 = vpop.f32.mrb[0].mxu0
      %10355 = vmatprep.mubr.bf16.mxu0 %v9959
      %10356 = vmatmul.mubr.bf16.gmra.mrb[0].mxu0 %v9604
      %v10357 = vpop.f32.mrb[0].mxu0
      %v10358 = vadd.f32 %v10089, %v10357
      %v10359 = vpop.f32.mrb[0].mxu0
      %v10360 = vpop.f32.mrb[0].mxu0
      %v10361 = vadd.f32 %v10092, %v10360
      %v10362 = vpop.f32.mrb[0].mxu0
      %10363 = vmatprep.mubr.bf16.mxu0 %v9962
      %10364 = vmatmul.mubr.bf16.gmra.mrb[0].mxu0 %v9636
      %v10365 = vpop.f32.mrb[0].mxu0
      %v10366 = vadd.f32 %v10097, %v10365
      %v10367 = vpop.f32.mrb[0].mxu0
      %v10368 = vpop.f32.mrb[0].mxu0
      %v10369 = vadd.f32 %v10100, %v10368
      %v10370 = vpop.f32.mrb[0].mxu0
      %10371 = vmatprep.mubr.bf16.mxu0 %v9965
      %10372 = vmatmul.mubr.bf16.gmra.mrb[0].mxu0 %v9668
      %v10373 = vpop.f32.mrb[0].mxu0
      %v10374 = vadd.f32 %v10105, %v10373
      %v10375 = vpop.f32.mrb[0].mxu0
      %v10376 = vpop.f32.mrb[0].mxu0
      %v10377 = vadd.f32 %v10108, %v10376
      %v10378 = vpop.f32.mrb[0].mxu0
      %10379 = vmatprep.mubr.bf16.mxu0 %v9968
      %10380 = vmatmul.mubr.bf16.gmra.mrb[0].mxu0 %v9700
      %v10381 = vpop.f32.mrb[0].mxu0
      %v10382 = vadd.f32 %v10113, %v10381
      %v10383 = vpop.f32.mrb[0].mxu0
      %v10384 = vpop.f32.mrb[0].mxu0
      %v10385 = vadd.f32 %v10116, %v10384
      %v10386 = vpop.f32.mrb[0].mxu0
      %10387 = vmatprep.mubr.bf16.mxu0 %v9971
      %10388 = vmatmul.mubr.bf16.gmra.mrb[0].mxu0 %v9732
      %v10389 = vpop.f32.mrb[0].mxu0
      %v10390 = vadd.f32 %v10121, %v10389
      %v10391 = vpop.f32.mrb[0].mxu0
      %v10392 = vpop.f32.mrb[0].mxu0
      %v10393 = vadd.f32 %v10124, %v10392
      %v10394 = vpop.f32.mrb[0].mxu0
      %10395 = vmatprep.mubr.bf16.mxu0 %v9974
      %10396 = vmatmul.mubr.bf16.gmra.mrb[0].mxu0 %v9764
      %v10397 = vpop.f32.mrb[0].mxu0
      %v10398 = vadd.f32 %v10129, %v10397
      %v10399 = vpop.f32.mrb[0].mxu0
      %v10400 = vpop.f32.mrb[0].mxu0
      %v10401 = vadd.f32 %v10132, %v10400
      %v10402 = vpop.f32.mrb[0].mxu0
      %10403 = vmatprep.mubr.bf16.mxu0 %v9977
      %10404 = vmatmul.mubr.bf16.gmra.mrb[0].mxu0 %v9796
      %v10405 = vpop.f32.mrb[0].mxu0
      %v10406 = vadd.f32 %v10137, %v10405
      %v10407 = vpop.f32.mrb[0].mxu0
      %v10408 = vpop.f32.mrb[0].mxu0
      %v10409 = vadd.f32 %v10140, %v10408
      %v10410 = vpop.f32.mrb[0].mxu0
      %10411 = vdwg.mxu0
      %s10412 = scalar_lea.vmem %s7, 192
      %v10413 = vld [vmem:[%s10412] sm:$0xf]
      %v10414 = vld [vmem:[%s10412 + $0x4] sm:$0xf]
      %v10415 = vld [vmem:[%s10412 + $0x8] sm:$0xf]
      %v10416 = vld [vmem:[%s10412 + $0xc] sm:$0xf]
      %v10417 = vld [vmem:[%s10412 + $0x10] sm:$0xf]
      %v10418 = vld [vmem:[%s10412 + $0x14] sm:$0xf]
      %v10419 = vld [vmem:[%s10412 + $0x18] sm:$0xf]
      %v10420 = vld [vmem:[%s10412 + $0x1c] sm:$0xf]
      %v10421 = vld [vmem:[%s10412 + $0x20] sm:$0xf]
      %v10422 = vld [vmem:[%s10412 + $0x24] sm:$0xf]
      %v10423 = vld [vmem:[%s10412 + $0x28] sm:$0xf]
      %v10424 = vld [vmem:[%s10412 + $0x2c] sm:$0xf]
      %v10425 = vld [vmem:[%s10412 + $0x30] sm:$0xf]
      %v10426 = vld [vmem:[%s10412 + $0x34] sm:$0xf]
      %v10427 = vld [vmem:[%s10412 + $0x38] sm:$0xf]
      %v10428 = vld [vmem:[%s10412 + $0x3c] sm:$0xf]
      %v10429 = vld [vmem:[%s10412 + $0x40] sm:$0xf]
      %v10430 = vld [vmem:[%s10412 + $0x44] sm:$0xf]
      %v10431 = vld [vmem:[%s10412 + $0x48] sm:$0xf]
      %v10432 = vld [vmem:[%s10412 + $0x4c] sm:$0xf]
      %v10433 = vld [vmem:[%s10412 + $0x50] sm:$0xf]
      %v10434 = vld [vmem:[%s10412 + $0x54] sm:$0xf]
      %v10435 = vld [vmem:[%s10412 + $0x58] sm:$0xf]
      %v10436 = vld [vmem:[%s10412 + $0x5c] sm:$0xf]
      %v10437 = vshrl.u32 %v9282, 16
      %v10439 = vrot.slane %v10437, 3
      %v10440 = vshll.u32 %v9282, 16
      %v10442 = vrot.slane %v10440, 4
      %v10443 = vor.u32 %v10439, %v10442
      %v10444 = vshrl.u32 %v9284, 16
      %v10446 = vrot.slane %v10444, 3
      %v10447 = vshll.u32 %v9284, 16
      %v10449 = vrot.slane %v10447, 4
      %v10450 = vor.u32 %v10446, %v10449
      %v10451 = vsel %vm961, %v10443, %v10450
      %v10453 = vshrl.u32 %v9194, 16
      %v10455 = vrot.slane %v10453, 3
      %v10456 = vshll.u32 %v9194, 16
      %v10458 = vrot.slane %v10456, 4
      %v10459 = vor.u32 %v10455, %v10458
      %v10461 = vshrl.u32 %v9193, 16
      %v10463 = vrot.slane %v10461, 3
      %v10464 = vshll.u32 %v9193, 16
      %v10466 = vrot.slane %v10464, 4
      %v10467 = vor.u32 %v10463, %v10466
      %v10468 = vsel %vm961, %v10459, %v10467
      %v10494 = vunpack.c.l.b16 %v10413
      %v10495 = vunpack.c.l.b16 %v10414
      %v10496 = vunpack.c.l.b16 %v10415
      %v10497 = vunpack.c.l.b16 %v10416
      %v10498 = vunpack.c.l.b16 %v10417
      %v10499 = vunpack.c.l.b16 %v10418
      %v10500 = vunpack.c.l.b16 %v10419
      %v10501 = vunpack.c.l.b16 %v10420
      %v10502 = vunpack.c.l.b16 %v10421
      %v10503 = vunpack.c.l.b16 %v10422
      %v10504 = vunpack.c.l.b16 %v10423
      %v10505 = vunpack.c.l.b16 %v10424
      %v10506 = vunpack.c.l.b16 %v10425
      %v10507 = vunpack.c.l.b16 %v10426
      %v10508 = vunpack.c.l.b16 %v10427
      %v10509 = vunpack.c.l.b16 %v10428
      %v10510 = vunpack.c.l.b16 %v10429
      %v10511 = vunpack.c.l.b16 %v10430
      %v10512 = vunpack.c.l.b16 %v10431
      %v10513 = vunpack.c.l.b16 %v10432
      %v10514 = vunpack.c.l.b16 %v10433
      %v10515 = vunpack.c.l.b16 %v10434
      %v10516 = vunpack.c.l.b16 %v10435
      %v10517 = vunpack.c.l.b16 %v10436
      %v10518 = vpack.c.b16 %v10495, %v10494
      %v10519 = vpack.c.b16 %v10497, %v10496
      %v10520 = vpack.c.b16 %v10499, %v10498
      %v10521 = vpack.c.b16 %v10501, %v10500
      %v10522 = vpack.c.b16 %v10503, %v10502
      %v10523 = vpack.c.b16 %v10505, %v10504
      %v10524 = vpack.c.b16 %v10507, %v10506
      %v10525 = vpack.c.b16 %v10509, %v10508
      %v10526 = vpack.c.b16 %v10511, %v10510
      %v10527 = vpack.c.b16 %v10513, %v10512
      %v10528 = vpack.c.b16 %v10515, %v10514
      %v10529 = vpack.c.b16 %v10517, %v10516
      %v10543 = vsel %vm378, %v10468, 0
      %10545 = vmatprep.subr.bf16.mxu0 0
      %10546 = vmatpush1.bf16.msra.mxu0 %v10518
      %10547 = vmatprep.subr.bf16.mxu0 0
      %10548 = vmatpush1.bf16.msra.mxu0 %v10519
      %10549 = vmatprep.subr.bf16.mxu0 0
      %10550 = vmatpush1.bf16.msra.mxu0 %v10520
      %10551 = vmatprep.subr.bf16.mxu0 0
      %10552 = vmatpush1.bf16.msra.mxu0 %v10521
      %10553 = vmatprep.subr.bf16.mxu0 0
      %10554 = vmatpush1.bf16.msra.mxu0 %v10522
      %10555 = vmatprep.subr.bf16.mxu0 0
      %10556 = vmatpush1.bf16.msra.mxu0 %v10523
      %10557 = vmatprep.subr.bf16.mxu0 0
      %10558 = vmatpush1.bf16.msra.mxu0 %v10524
      %10559 = vmatprep.subr.bf16.mxu0 0
      %10560 = vmatpush1.bf16.msra.mxu0 %v10525
      %10561 = vmatprep.subr.bf16.mxu0 0
      %10562 = vmatpush1.bf16.msra.mxu0 %v10526
      %10563 = vmatprep.subr.bf16.mxu0 0
      %10564 = vmatpush1.bf16.msra.mxu0 %v10527
      %10565 = vmatprep.subr.bf16.mxu0 0
      %10566 = vmatpush1.bf16.msra.mxu0 %v10528
      %10567 = vmatprep.subr.bf16.mxu0 0
      %10568 = vmatpush1.bf16.msra.mxu0 %v10529
      %10569 = vmatprep.subr.bf16.mxu0 0
      %10570 = vmatpush1.bf16.msra.mxu0 0
      %10571 = vmatprep.subr.bf16.mxu0 0
      %10572 = vmatpush1.bf16.msra.mxu0 0
      %10573 = vmatprep.subr.bf16.mxu0 0
      %10574 = vmatpush1.bf16.msra.mxu0 0
      %10575 = vmatprep.subr.bf16.mxu0 0
      %10576 = vmatpush1.bf16.msra.mxu0 0
      %10577 = vmatprep.mubr.bf16.mxu0 %v9938
      %10578 = vmatmul.mubr.bf16.gmra.mrb[0].mxu0 %v9380
      %v10579 = vpop.f32.mrb[0].mxu0
      %v10580 = vadd.f32 0.0, %v10579
      %v10581 = vpop.f32.mrb[0].mxu0
      %v10582 = vpop.f32.mrb[0].mxu0
      %v10583 = vadd.f32 0.0, %v10582
      %v10584 = vpop.f32.mrb[0].mxu0
      %10585 = vmatprep.mubr.bf16.mxu0 %v9941
      %10586 = vmatmul.mubr.bf16.gmra.mrb[0].mxu0 %v9412
      %v10587 = vpop.f32.mrb[0].mxu0
      %v10588 = vadd.f32 0.0, %v10587
      %v10589 = vpop.f32.mrb[0].mxu0
      %v10590 = vpop.f32.mrb[0].mxu0
      %v10591 = vadd.f32 0.0, %v10590
      %v10592 = vpop.f32.mrb[0].mxu0
      %10593 = vmatprep.mubr.bf16.mxu0 %v9944
      %10594 = vmatmul.mubr.bf16.gmra.mrb[0].mxu0 %v9444
      %v10595 = vpop.f32.mrb[0].mxu0
      %v10596 = vadd.f32 0.0, %v10595
      %v10597 = vpop.f32.mrb[0].mxu0
      %v10598 = vpop.f32.mrb[0].mxu0
      %v10599 = vadd.f32 0.0, %v10598
      %v10600 = vpop.f32.mrb[0].mxu0
      %10601 = vmatprep.mubr.bf16.mxu0 %v9947
      %10602 = vmatmul.mubr.bf16.gmra.mrb[0].mxu0 %v9476
      %v10603 = vpop.f32.mrb[0].mxu0
      %v10604 = vadd.f32 0.0, %v10603
      %v10605 = vpop.f32.mrb[0].mxu0
      %v10606 = vpop.f32.mrb[0].mxu0
      %v10607 = vadd.f32 0.0, %v10606
      %v10608 = vpop.f32.mrb[0].mxu0
      %10609 = vmatprep.mubr.bf16.mxu0 %v9950
      %10610 = vmatmul.mubr.bf16.gmra.mrb[0].mxu0 %v9508
      %v10611 = vpop.f32.mrb[0].mxu0
      %v10612 = vadd.f32 0.0, %v10611
      %v10613 = vpop.f32.mrb[0].mxu0
      %v10614 = vpop.f32.mrb[0].mxu0
      %v10615 = vadd.f32 0.0, %v10614
      %v10616 = vpop.f32.mrb[0].mxu0
      %10617 = vmatprep.mubr.bf16.mxu0 %v9953
      %10618 = vmatmul.mubr.bf16.gmra.mrb[0].mxu0 %v9540
      %v10619 = vpop.f32.mrb[0].mxu0
      %v10620 = vadd.f32 0.0, %v10619
      %v10621 = vpop.f32.mrb[0].mxu0
      %v10622 = vpop.f32.mrb[0].mxu0
      %v10623 = vadd.f32 0.0, %v10622
      %v10624 = vpop.f32.mrb[0].mxu0
      %10625 = vmatprep.mubr.bf16.mxu0 %v9956
      %10626 = vmatmul.mubr.bf16.gmra.mrb[0].mxu0 %v9572
      %v10627 = vpop.f32.mrb[0].mxu0
      %v10628 = vadd.f32 0.0, %v10627
      %v10629 = vpop.f32.mrb[0].mxu0
      %v10630 = vpop.f32.mrb[0].mxu0
      %v10631 = vadd.f32 0.0, %v10630
      %v10632 = vpop.f32.mrb[0].mxu0
      %10633 = vmatprep.mubr.bf16.mxu0 %v9959
      %10634 = vmatmul.mubr.bf16.gmra.mrb[0].mxu0 %v9604
      %v10635 = vpop.f32.mrb[0].mxu0
      %v10636 = vadd.f32 0.0, %v10635
      %v10637 = vpop.f32.mrb[0].mxu0
      %v10638 = vpop.f32.mrb[0].mxu0
      %v10639 = vadd.f32 0.0, %v10638
      %v10640 = vpop.f32.mrb[0].mxu0
      %10641 = vmatprep.mubr.bf16.mxu0 %v9962
      %10642 = vmatmul.mubr.bf16.gmra.mrb[0].mxu0 %v9636
      %v10643 = vpop.f32.mrb[0].mxu0
      %v10644 = vadd.f32 0.0, %v10643
      %v10645 = vpop.f32.mrb[0].mxu0
      %v10646 = vpop.f32.mrb[0].mxu0
      %v10647 = vadd.f32 0.0, %v10646
      %v10648 = vpop.f32.mrb[0].mxu0
      %10649 = vmatprep.mubr.bf16.mxu0 %v9965
      %10650 = vmatmul.mubr.bf16.gmra.mrb[0].mxu0 %v9668
      %v10651 = vpop.f32.mrb[0].mxu0
      %v10652 = vadd.f32 0.0, %v10651
      %v10653 = vpop.f32.mrb[0].mxu0
      %v10654 = vpop.f32.mrb[0].mxu0
      %v10655 = vadd.f32 0.0, %v10654
      %v10656 = vpop.f32.mrb[0].mxu0
      %10657 = vmatprep.mubr.bf16.mxu0 %v9968
      %10658 = vmatmul.mubr.bf16.gmra.mrb[0].mxu0 %v9700
      %v10659 = vpop.f32.mrb[0].mxu0
      %v10660 = vadd.f32 0.0, %v10659
      %v10661 = vpop.f32.mrb[0].mxu0
      %v10662 = vpop.f32.mrb[0].mxu0
      %v10663 = vadd.f32 0.0, %v10662
      %v10664 = vpop.f32.mrb[0].mxu0
      %10665 = vmatprep.mubr.bf16.mxu0 %v9971
      %10666 = vmatmul.mubr.bf16.gmra.mrb[0].mxu0 %v9732
      %v10667 = vpop.f32.mrb[0].mxu0
      %v10668 = vadd.f32 0.0, %v10667
      %v10669 = vpop.f32.mrb[0].mxu0
      %v10670 = vpop.f32.mrb[0].mxu0
      %v10671 = vadd.f32 0.0, %v10670
      %v10672 = vpop.f32.mrb[0].mxu0
      %10673 = vmatprep.mubr.bf16.mxu0 %v9974
      %10674 = vmatmul.mubr.bf16.gmra.mrb[0].mxu0 %v9764
      %v10675 = vpop.f32.mrb[0].mxu0
      %v10676 = vadd.f32 0.0, %v10675
      %v10677 = vpop.f32.mrb[0].mxu0
      %v10678 = vpop.f32.mrb[0].mxu0
      %v10679 = vadd.f32 0.0, %v10678
      %v10680 = vpop.f32.mrb[0].mxu0
      %10681 = vmatprep.mubr.bf16.mxu0 %v9977
      %10682 = vmatmul.mubr.bf16.gmra.mrb[0].mxu0 %v9796
      %v10683 = vpop.f32.mrb[0].mxu0
      %v10684 = vadd.f32 0.0, %v10683
      %v10685 = vpop.f32.mrb[0].mxu0
      %v10686 = vpop.f32.mrb[0].mxu0
      %v10687 = vadd.f32 0.0, %v10686
      %v10688 = vpop.f32.mrb[0].mxu0
      %10689 = vmatprep.mubr.bf16.mxu0 %v9980
      %10690 = vmatmul.mubr.bf16.gmra.mrb[0].mxu0 %v9828
      %v10691 = vpop.f32.mrb[0].mxu0
      %v10692 = vadd.f32 0.0, %v10691
      %v10693 = vpop.f32.mrb[0].mxu0
      %v10694 = vpop.f32.mrb[0].mxu0
      %v10695 = vadd.f32 0.0, %v10694
      %v10696 = vpop.f32.mrb[0].mxu0
      %10697 = vmatprep.mubr.bf16.mxu0 %v10543
      %10698 = vmatmul.mubr.bf16.gmra.mrb[0].mxu0 %v10451
      %v10699 = vpop.f32.mrb[0].mxu0
      %v10700 = vadd.f32 0.0, %v10699
      %v10701 = vpop.f32.mrb[0].mxu0
      %v10702 = vpop.f32.mrb[0].mxu0
      %v10703 = vadd.f32 0.0, %v10702
      %v10704 = vpop.f32.mrb[0].mxu0
      %10705 = vdwg.mxu0
      %v10706 = vadd.f32 %v10286, %v10580
      %v10707 = vadd.f32 %v10289, %v10583
      %v10708 = vadd.f32 %v10294, %v10588
      %v10709 = vadd.f32 %v10297, %v10591
      %v10710 = vadd.f32 %v10302, %v10596
      %v10711 = vadd.f32 %v10305, %v10599
      %v10712 = vadd.f32 %v10310, %v10604
      %v10713 = vadd.f32 %v10313, %v10607
      %v10714 = vadd.f32 %v10318, %v10612
      %v10715 = vadd.f32 %v10321, %v10615
      %v10716 = vadd.f32 %v10326, %v10620
      %v10717 = vadd.f32 %v10329, %v10623
      %v10718 = vadd.f32 %v10334, %v10628
      %v10719 = vadd.f32 %v10337, %v10631
      %v10720 = vadd.f32 %v10342, %v10636
      %v10721 = vadd.f32 %v10345, %v10639
      %v10722 = vadd.f32 %v10350, %v10644
      %v10723 = vadd.f32 %v10353, %v10647
      %v10724 = vadd.f32 %v10358, %v10652
      %v10725 = vadd.f32 %v10361, %v10655
      %v10726 = vadd.f32 %v10366, %v10660
      %v10727 = vadd.f32 %v10369, %v10663
      %v10728 = vadd.f32 %v10374, %v10668
      %v10729 = vadd.f32 %v10377, %v10671
      %v10730 = vadd.f32 %v10382, %v10676
      %v10731 = vadd.f32 %v10385, %v10679
      %v10732 = vadd.f32 %v10390, %v10684
      %v10733 = vadd.f32 %v10393, %v10687
      %v10734 = vadd.f32 %v10398, %v10692
      %v10735 = vadd.f32 %v10401, %v10695
      %v10736 = vadd.f32 %v10406, %v10700
      %v10737 = vadd.f32 %v10409, %v10703
      %v10738 = vld [vmem:[%s8] sm:$0x1]
      %v10740 = vlaneseq
      %v10741 = vshrl.u32 %v10740, 7
      %v10742 = vsub.s32 0, %v10741
      %v10743 = vrot.slane %v10738, %v10742
      %v10745 = vadd.f32 %v10706, %v10743
      %v10746 = vadd.f32 %v10707, %v10743
      %v10747 = vadd.f32 %v10708, %v10743
      %v10748 = vadd.f32 %v10709, %v10743
      %v10749 = vadd.f32 %v10710, %v10743
      %v10750 = vadd.f32 %v10711, %v10743
      %v10751 = vadd.f32 %v10712, %v10743
      %v10752 = vadd.f32 %v10713, %v10743
      %v10753 = vadd.f32 %v10714, %v10743
      %v10754 = vadd.f32 %v10715, %v10743
      %v10755 = vadd.f32 %v10716, %v10743
      %v10756 = vadd.f32 %v10717, %v10743
      %v10757 = vadd.f32 %v10718, %v10743
      %v10758 = vadd.f32 %v10719, %v10743
      %v10759 = vadd.f32 %v10720, %v10743
      %v10760 = vadd.f32 %v10721, %v10743
      %v10761 = vadd.f32 %v10722, %v10743
      %v10762 = vadd.f32 %v10723, %v10743
      %v10763 = vadd.f32 %v10724, %v10743
      %v10764 = vadd.f32 %v10725, %v10743
      %v10765 = vadd.f32 %v10726, %v10743
      %v10766 = vadd.f32 %v10727, %v10743
      %v10767 = vadd.f32 %v10728, %v10743
      %v10768 = vadd.f32 %v10729, %v10743
      %v10769 = vadd.f32 %v10730, %v10743
      %v10770 = vadd.f32 %v10731, %v10743
      %v10771 = vadd.f32 %v10732, %v10743
      %v10772 = vadd.f32 %v10733, %v10743
      %v10773 = vadd.f32 %v10734, %v10743
      %v10774 = vadd.f32 %v10735, %v10743
      %v10775 = vadd.f32 %v10736, %v10743
      %v10776 = vadd.f32 %v10737, %v10743
      %vm10777 = vcmask 23552
      %10778 = vst.msk [vmem:[%s332] sm:$0xff] %vm10777, %v10745
      %10779 = vst.msk [vmem:[%s332 + $0x8] sm:$0xff] %vm10777, %v10746
      %10780 = vst.msk [vmem:[%s332 + $0x10] sm:$0xff] %vm10777, %v10747
      %10781 = vst.msk [vmem:[%s332 + $0x18] sm:$0xff] %vm10777, %v10748
      %10782 = vst.msk [vmem:[%s332 + $0x20] sm:$0xff] %vm10777, %v10749
      %10783 = vst.msk [vmem:[%s332 + $0x28] sm:$0xff] %vm10777, %v10750
      %10784 = vst.msk [vmem:[%s332 + $0x30] sm:$0xff] %vm10777, %v10751
      %10785 = vst.msk [vmem:[%s332 + $0x38] sm:$0xff] %vm10777, %v10752
      %10786 = vst.msk [vmem:[%s332 + $0x40] sm:$0xff] %vm10777, %v10753
      %10787 = vst.msk [vmem:[%s332 + $0x48] sm:$0xff] %vm10777, %v10754
      %10788 = vst.msk [vmem:[%s332 + $0x50] sm:$0xff] %vm10777, %v10755
      %10789 = vst.msk [vmem:[%s332 + $0x58] sm:$0xff] %vm10777, %v10756
      %10790 = vst.msk [vmem:[%s332 + $0x60] sm:$0xff] %vm10777, %v10757
      %10791 = vst.msk [vmem:[%s332 + $0x68] sm:$0xff] %vm10777, %v10758
      %10792 = vst.msk [vmem:[%s332 + $0x70] sm:$0xff] %vm10777, %v10759
      %10793 = vst.msk [vmem:[%s332 + $0x78] sm:$0xff] %vm10777, %v10760
      %10794 = vst.msk [vmem:[%s332 + $0x80] sm:$0xff] %vm10777, %v10761
      %10795 = vst.msk [vmem:[%s332 + $0x88] sm:$0xff] %vm10777, %v10762
      %10796 = vst.msk [vmem:[%s332 + $0x90] sm:$0xff] %vm10777, %v10763
      %10797 = vst.msk [vmem:[%s332 + $0x98] sm:$0xff] %vm10777, %v10764
      %10798 = vst.msk [vmem:[%s332 + $0xa0] sm:$0xff] %vm10777, %v10765
      %10799 = vst.msk [vmem:[%s332 + $0xa8] sm:$0xff] %vm10777, %v10766
      %10800 = vst.msk [vmem:[%s332 + $0xb0] sm:$0xff] %vm10777, %v10767
      %10801 = vst.msk [vmem:[%s332 + $0xb8] sm:$0xff] %vm10777, %v10768
      %10802 = vst.msk [vmem:[%s332 + $0xc0] sm:$0xff] %vm10777, %v10769
      %10803 = vst.msk [vmem:[%s332 + $0xc8] sm:$0xff] %vm10777, %v10770
      %10804 = vst.msk [vmem:[%s332 + $0xd0] sm:$0xff] %vm10777, %v10771
      %10805 = vst.msk [vmem:[%s332 + $0xd8] sm:$0xff] %vm10777, %v10772
      %10806 = vst.msk [vmem:[%s332 + $0xe0] sm:$0xff] %vm10777, %v10773
      %10807 = vst.msk [vmem:[%s332 + $0xe8] sm:$0xff] %vm10777, %v10774
      %10808 = vst.msk [vmem:[%s332 + $0xf0] sm:$0xff] %vm10777, %v10775
      %10809 = vst.msk [vmem:[%s332 + $0xf8] sm:$0xff] %vm10777, %v10776
      %p10810 = scmp.lt.s32.totalorder %s20, 1
      %s10811 = scalar_select %p10810, %s20, 1
      %s10812 = smul.addr %s10811, 32
      %s10813 = smul.addr %s10812, 8
      %s10814 = scalar_lea.vmem %s9, %s10813
      // Predicated region
      $region57: #{stereo_net_forward.1} parent=55 // pred_check
        %p10815 = pneg %p232
      $region58: #{stereo_net_forward.1} parent=55 // pred_check_branch
        %10817 = sbr.rel (%p10815) target = $region60
      $region59: #{stereo_net_forward.1} parent=55 // pred_region
        _
      $region60: #{stereo_net_forward.1} parent=55 // pred_fallthru
        _
    $region56: #{stereo_net_forward.1} parent=5 // pred_fallthru
      _
    %p10818 = scmp.le.s32.totalorder 2, %s15
    // Predicated region
    $region61: #{stereo_net_forward.1} parent=5 // pred_check
      %p10819 = pneg %p10818
    $region62: #{stereo_net_forward.1} parent=5 // pred_check_branch
      %10821 = sbr.rel (%p10819) target = $region64
    $region63: #{stereo_net_forward.1} parent=5 // pred_region
      %s10822 = ssub.s32 %s15, 2
      // Predicated region
      $region65: #{stereo_net_forward.1} parent=63 // pred_check
        %p10823 = pneg %p238
      $region66: #{stereo_net_forward.1} parent=63 // pred_check_branch
        %10825 = sbr.rel (%p10823) target = $region68
      $region67: #{stereo_net_forward.1} parent=63 // pred_region
        %p10826 = scmp.lt.s32.totalorder %s21, 1
        %s10827 = scalar_select %p10826, %s21, 1
        %s10828 = smul.addr %s10827, 32
        %s10829 = smul.addr %s10828, 8
        %s10830 = scalar_lea.vmem %s9, %s10829
      $region68: #{stereo_net_forward.1} parent=63 // pred_fallthru
        _
    $region64: #{stereo_net_forward.1} parent=5 // pred_fallthru
      _
  $region6: #{stereo_net_forward.1} parent=0 // loop_footer
    %s19 = sadd.s32 1, %s15
  $region7: #{stereo_net_forward.1} parent=0 // loop_footer_branch
    %14 = sbr.rel target = $region3
  $region8: #{stereo_net_forward.1} parent=0 // loop_exit
    _

</llo_original>
